<compile_context>
chip_gen: v7x
topology: tpu7x:2x2x1
jax: 0.10.0
libtpu: 0.0.40
codegen_flags: <defaults>
</compile_context>

<pallas_src>
import functools

import jax
import jax.numpy as jnp
import numpy as np
from jax import lax
from jax.experimental import pallas as pl
from jax.experimental.pallas import tpu as pltpu


_ROW_GROUP = 8  # f32 sublane group; statically-unrolled inner row chunk


def _round_up(x, m):
    return ((x + m - 1) // m) * m


def _default_softmax_dtype():
    """bf16 softmax phase on bf16-native VPU/EUP chips (v6e/v7x); f32 on v5e and older."""
    try:
        kind = jax.devices()[0].device_kind.lower()
    except Exception:
        return jnp.float32
    if ("v6" in kind) or ("v7" in kind):
        return jnp.bfloat16
    return jnp.float32


def cab_kernel(g_ref, mo_ref, sq_ref,
               wq_ref, bq_ref, wkv_ref, bkv_ref, wfc_ref, bfc_ref,
               out_ref,
               q_buf, k_buf, m_buf, v_buf, wm_buf,
               *, hid_dim, block_m, sm_dtype):
    H = hid_dim
    TM = block_m
    G = _ROW_GROUP
    n_groups = TM // G
    inv_scale = 1.0 / float(np.sqrt(H))      # scale = sqrt(hid_dim // n_heads), n_heads = 1
    t_dims = (((1,), (1,)), ((), ()))        # y = x @ W.T  (PyTorch (out, in) weight layout)
    red_dims = (((1,), (0,)), ((), ()))      # (2, Hj) x (Hj, Hi) -> (2, Hi)
    ones_row = jnp.ones((1, H), dtype=sm_dtype)   # hoisted: no per-iteration broadcast

    def att(q_in, kv_in):
        # ---- projections: full (TM,H) x (H,*) MXU matmuls, weights loaded at point of use ----
        Q = lax.dot_general(q_in, wq_ref[...], t_dims,
                            preferred_element_type=jnp.float32) + bq_ref[...]
        KV = lax.dot_general(kv_in, wkv_ref[...], t_dims,
                             preferred_element_type=jnp.float32) + bkv_ref[...]
        Ks = KV[:, :H] * inv_scale           # (TM, H)   K / sqrt(H)
        V = KV[:, H:]                        # (TM, H)

        # Analytic softmax max: energy row i is Q_i * Ks, so max_j = Q_i*max(Ks) or Q_i*min(Ks).
        kmax = jnp.max(Ks, axis=1, keepdims=True)            # (TM, 1)
        kmin = jnp.min(Ks, axis=1, keepdims=True)            # (TM, 1)
        m_rows = jnp.where(Q >= 0.0, Q * kmax, Q * kmin)     # (TM, H)

        # Stage in VMEM so the softmax loop never holds whole-tile values in vregs.
        q_buf[...] = Q.astype(sm_dtype)
        k_buf[...] = Ks                       # f32 (transposed per 8-row group below)
        m_buf[...] = m_rows.astype(sm_dtype)
        v_buf[...] = V.astype(sm_dtype)

        def group_body(gi, carry):
            r0 = pl.multiple_of(gi * G, G)
            qg = q_buf[pl.ds(r0, G), :]                       # (G, H)
            mg = m_buf[pl.ds(r0, G), :]                       # (G, H)
            vg = v_buf[pl.ds(r0, G), :]                       # (G, H)
            # One (G,H)->(H,G) XLU transpose per group: each row's K becomes a static lane slice.
            kgT = k_buf[pl.ds(r0, G), :].T.astype(sm_dtype)   # (H, G), j on sublanes
            rows = []
            for s in range(G):                                # static: 8 independent row streams
                k_col = kgT[:, s:s + 1]                       # (H, 1)
                q_row = qg[s:s + 1, :]                        # (1, H)
                # e[j, i] = K_j * Q_i / sqrt(H) - m_i   (rank-1 outer product, VPU broadcast)
                eT = k_col * q_row - mg[s:s + 1, :]           # (H, H)
                p = jnp.exp(eT)                               # EUP
                # [numer; denom] on the MXU: row 0 = sum_j V_j p_ji, row 1 = sum_j p_ji.
                lhs = jnp.concatenate([vg[s:s + 1, :], ones_row], axis=0)   # (2, H)
                nd = lax.dot_general(lhs, p, red_dims,
                                     preferred_element_type=jnp.float32)    # (2, H) f32
                rows.append(nd[0:1, :] * pl.reciprocal(nd[1:2, :], approx=True))
            # Aligned (8, H) unmasked store (no per-row masked vst).
            wm_buf[pl.ds(r0, G), :] = jnp.concatenate(rows, axis=0)
            return carry

        lax.fori_loop(0, n_groups, group_body, 0)

        # fc: wm @ wfc.T + bfc
        return lax.dot_general(wm_buf[...], wfc_ref[...], t_dims,
                               preferred_element_type=jnp.float32) + bfc_ref[...]

    # graph = graph + att(morgan, graph, graph); graph = att(graph, graph, graph)
    # output = att(graph, sequence, sequence)
    g1 = g_ref[...] + att(mo_ref[...], g_ref[...])
    g2 = att(g1, g1)
    out_ref[...] = att(g2, sq_ref[...]).astype(out_ref.dtype)
    # TODO(synk): nn.Dropout is stochastic in train mode; implemented as identity (eval mode).


def cross_attention_block(graph, morgan, seq, params, *, block_m=128, softmax_dtype=None):
    """block_m: batch rows per grid step (128 is a good default; 256 on v6e/v7x)."""
    B, H = graph.shape
    if softmax_dtype is None:
        softmax_dtype = _default_softmax_dtype()
    assert block_m % _ROW_GROUP == 0
    TM = min(block_m, _round_up(B, _ROW_GROUP))
    Bp = _round_up(B, TM)
    pad = Bp - B
    if pad:
        padding = ((0, pad), (0, 0))
        graph = jnp.pad(graph, padding)
        morgan = jnp.pad(morgan, padding)
        seq = jnp.pad(seq, padding)

    wq, bq = params["wq"], params["bq"].reshape(1, H)
    wkv = jnp.concatenate([params["wk"], params["wv"]], axis=0)               # (2H, H)
    bkv = jnp.concatenate([params["bk"], params["bv"]]).reshape(1, 2 * H)     # (1, 2H)
    wfc, bfc = params["wfc"], params["bfc"].reshape(1, H)

    feat_spec = pl.BlockSpec((TM, H), lambda b: (b, 0))
    const = lambda shape: pl.BlockSpec(shape, lambda b: (0, 0))   # VMEM-resident across steps

    out = pl.pallas_call(
        functools.partial(cab_kernel, hid_dim=H, block_m=TM, sm_dtype=softmax_dtype),
        out_shape=jax.ShapeDtypeStruct((Bp, H), jnp.float32),
        grid_spec=pltpu.PrefetchScalarGridSpec(
            num_scalar_prefetch=0,
            grid=(Bp // TM,),
            in_specs=[feat_spec, feat_spec, feat_spec,
                      const((H, H)), const((1, H)),               # f_q
                      const((2 * H, H)), const((1, 2 * H)),       # f_k | f_v fused
                      const((H, H)), const((1, H))],              # fc
            out_specs=feat_spec,
            scratch_shapes=[pltpu.VMEM((TM, H), softmax_dtype),   # Q
                            pltpu.VMEM((TM, H), jnp.float32),     # K/sqrt(H) (f32 for transpose)
                            pltpu.VMEM((TM, H), softmax_dtype),   # analytic row max
                            pltpu.VMEM((TM, H), softmax_dtype),   # V
                            pltpu.VMEM((TM, H), jnp.float32)],    # softmax(QK) @ V
        ),
        compiler_params=pltpu.CompilerParams(dimension_semantics=("parallel",)),
    )(graph, morgan, seq, wq, bq, wkv, bkv, wfc, bfc)
    return out[:B] if pad else out


# ---------------- pure-JAX reference (for correctness check) ----------------
def _att_ref(q, k, v, p, H):
    Q = q @ p["wq"].T + p["bq"]
    K = k @ p["wk"].T + p["bk"]
    V = v @ p["wv"].T + p["bv"]
    energy = Q[:, :, None] * K[:, None, :] / np.sqrt(H)   # (B, H, H)
    attn = jax.nn.softmax(energy, axis=-1)
    wm = jnp.einsum("bij,bj->bi", attn, V)
    return wm @ p["wfc"].T + p["bfc"]


def _cab_ref(g, mo, sq, p, H):
    g = g + _att_ref(mo, g, g, p, H)
    g = _att_ref(g, g, g, p, H)
    return _att_ref(g, sq, sq, p, H)


if __name__ == "__main__":
    B, H = 40, 128   # batch, args.hidden_size

    key = jax.random.PRNGKey(0)
    keys = jax.random.split(key, 11)
    scale = 1.0 / np.sqrt(H)

    params = {
        "wq": jax.random.normal(keys[0], (H, H), jnp.float32) * scale,   # (out, in) layout
        "bq": jax.random.normal(keys[1], (H,), jnp.float32) * scale,
        "wk": jax.random.normal(keys[2], (H, H), jnp.float32) * scale,
        "bk": jax.random.normal(keys[3], (H,), jnp.float32) * scale,
        "wv": jax.random.normal(keys[4], (H, H), jnp.float32) * scale,
        "bv": jax.random.normal(keys[5], (H,), jnp.float32) * scale,
        "wfc": jax.random.normal(keys[6], (H, H), jnp.float32) * scale,
        "bfc": jax.random.normal(keys[7], (H,), jnp.float32) * scale,
    }

    graph_feature = jax.random.normal(keys[8], (B, H), jnp.float32)
    morgan_feature = jax.random.normal(keys[9], (B, H), jnp.float32)
    sequence_feature = jax.random.normal(keys[10], (B, H), jnp.float32)

    # block_m=16 keeps the demo small while exercising padding (40 -> 48), a 3-step grid,
    # and the 8-row group loop; production use just calls with the default block_m.
    out = cross_attention_block(graph_feature, morgan_feature, sequence_feature, params,
                                block_m=16)
    out = jax.block_until_ready(out)

    ref = _cab_ref(graph_feature, morgan_feature, sequence_feature, params, H)
    # Tolerance sized for the bf16 softmax-phase path (v6e/v7x); the f32-softmax path
    # (v5e/older) matches to ~1e-3.
    np.testing.assert_allclose(np.asarray(out), np.asarray(ref), rtol=2e-2, atol=2e-2)

    print("KERNEL_OK")
</pallas_src>

<mosaic_0001>
module attributes {stable_mosaic.version = 11 : i64} {
  func.func @cab_kernel(%arg0: i32, %arg1: memref<16x128xf32, #tpu.memory_space<vmem>>, %arg2: memref<16x128xf32, #tpu.memory_space<vmem>>, %arg3: memref<16x128xf32, #tpu.memory_space<vmem>>, %arg4: memref<128x128xf32, #tpu.memory_space<vmem>>, %arg5: memref<1x128xf32, #tpu.memory_space<vmem>>, %arg6: memref<256x128xf32, #tpu.memory_space<vmem>>, %arg7: memref<1x256xf32, #tpu.memory_space<vmem>>, %arg8: memref<128x128xf32, #tpu.memory_space<vmem>>, %arg9: memref<1x128xf32, #tpu.memory_space<vmem>>, %arg10: memref<16x128xf32, #tpu.memory_space<vmem>>, %arg11: memref<16x128xf32, #tpu.memory_space<vmem>>, %arg12: memref<16x128xf32, #tpu.memory_space<vmem>>, %arg13: memref<16x128xf32, #tpu.memory_space<vmem>>, %arg14: memref<16x128xf32, #tpu.memory_space<vmem>>, %arg15: memref<16x128xf32, #tpu.memory_space<vmem>>) attributes {dimension_semantics = [#tpu.dimension_semantics<parallel>], iteration_bounds = array<i64: 3>, scalar_prefetch = 0 : i64, scratch_operands = 5 : i64, tpu.core_type = #tpu.core_type<tc>, window_params = [{transform_indices = @transform_0, window_bounds = array<i64: 16, 128>}, {transform_indices = @transform_1, window_bounds = array<i64: 16, 128>}, {transform_indices = @transform_2, window_bounds = array<i64: 16, 128>}, {pipeline_mode = #tpu.pipeline_mode<synchronous>, transform_indices = @transform_3, window_bounds = array<i64: 128, 128>}, {pipeline_mode = #tpu.pipeline_mode<synchronous>, transform_indices = @transform_4, window_bounds = array<i64: 1, 128>}, {pipeline_mode = #tpu.pipeline_mode<synchronous>, transform_indices = @transform_5, window_bounds = array<i64: 256, 128>}, {pipeline_mode = #tpu.pipeline_mode<synchronous>, transform_indices = @transform_6, window_bounds = array<i64: 1, 256>}, {pipeline_mode = #tpu.pipeline_mode<synchronous>, transform_indices = @transform_7, window_bounds = array<i64: 128, 128>}, {pipeline_mode = #tpu.pipeline_mode<synchronous>, transform_indices = @transform_8, window_bounds = array<i64: 1, 128>}, {transform_indices = @transform_9, window_bounds = array<i64: 16, 128>}]} {
    %cst = arith.constant 1.000000e+00 : f32
    %0 = vector.broadcast %cst : f32 to vector<1x128xf32>
    %c0 = arith.constant 0 : index
    %c0_0 = arith.constant 0 : index
    %1 = vector.load %arg1[%c0, %c0_0] : memref<16x128xf32, #tpu.memory_space<vmem>>, vector<16x128xf32>
    %c0_1 = arith.constant 0 : index
    %c0_2 = arith.constant 0 : index
    %2 = vector.load %arg2[%c0_1, %c0_2] : memref<16x128xf32, #tpu.memory_space<vmem>>, vector<16x128xf32>
    %c0_3 = arith.constant 0 : index
    %c0_4 = arith.constant 0 : index
    %3 = vector.load %arg1[%c0_3, %c0_4] : memref<16x128xf32, #tpu.memory_space<vmem>>, vector<16x128xf32>
    %c0_5 = arith.constant 0 : index
    %c0_6 = arith.constant 0 : index
    %4 = vector.load %arg4[%c0_5, %c0_6] : memref<128x128xf32, #tpu.memory_space<vmem>>, vector<128x128xf32>
    %cst_7 = arith.constant dense<0.000000e+00> : vector<16x128xf32>
    %5 = tpu.matmul %2, %4, %cst_7 {dimension_numbers = #tpu.dot_dimension_numbers<[1], [1], [0], [0], [0, 0, 1, 0], [], []>} : vector<16x128xf32>, vector<128x128xf32>, vector<16x128xf32> -> vector<16x128xf32>
    %c0_8 = arith.constant 0 : index
    %c0_9 = arith.constant 0 : index
    %6 = vector.load %arg5[%c0_8, %c0_9] : memref<1x128xf32, #tpu.memory_space<vmem>>, vector<1x128xf32>
    %7 = vector.broadcast %6 : vector<1x128xf32> to vector<16x128xf32>
    %8 = arith.addf %5, %7 : vector<16x128xf32>
    %c0_10 = arith.constant 0 : index
    %c0_11 = arith.constant 0 : index
    %9 = vector.load %arg6[%c0_10, %c0_11] : memref<256x128xf32, #tpu.memory_space<vmem>>, vector<256x128xf32>
    %cst_12 = arith.constant dense<0.000000e+00> : vector<16x256xf32>
    %10 = tpu.matmul %3, %9, %cst_12 {dimension_numbers = #tpu.dot_dimension_numbers<[1], [1], [0], [0], [0, 0, 1, 0], [], []>} : vector<16x128xf32>, vector<256x128xf32>, vector<16x256xf32> -> vector<16x256xf32>
    %c0_13 = arith.constant 0 : index
    %c0_14 = arith.constant 0 : index
    %11 = vector.load %arg7[%c0_13, %c0_14] : memref<1x256xf32, #tpu.memory_space<vmem>>, vector<1x256xf32>
    %12 = vector.broadcast %11 : vector<1x256xf32> to vector<16x256xf32>
    %13 = arith.addf %10, %12 : vector<16x256xf32>
    %14 = vector.extract_strided_slice %13 {offsets = [0, 0], sizes = [16, 128], strides = [1, 1]} : vector<16x256xf32> to vector<16x128xf32>
    %cst_15 = arith.constant 0.0883883461 : f32
    %15 = vector.broadcast %cst_15 : f32 to vector<16x128xf32>
    %16 = arith.mulf %14, %15 : vector<16x128xf32>
    %17 = vector.extract_strided_slice %13 {offsets = [0, 128], sizes = [16, 128], strides = [1, 1]} : vector<16x256xf32> to vector<16x128xf32>
    %cst_16 = arith.constant dense<0xFF800000> : vector<16xf32>
    %18 = vector.multi_reduction <maximumf>, %16, %cst_16 [1] : vector<16x128xf32> to vector<16xf32>
    %19 = vector.shape_cast %18 : vector<16xf32> to vector<16x1xf32>
    %cst_17 = arith.constant dense<0x7F800000> : vector<16xf32>
    %20 = vector.multi_reduction <minimumf>, %16, %cst_17 [1] : vector<16x128xf32> to vector<16xf32>
    %21 = vector.shape_cast %20 : vector<16xf32> to vector<16x1xf32>
    %cst_18 = arith.constant 0.000000e+00 : f32
    %22 = vector.broadcast %cst_18 : f32 to vector<16x128xf32>
    %23 = arith.cmpf oge, %8, %22 : vector<16x128xf32>
    %24 = vector.broadcast %19 : vector<16x1xf32> to vector<16x128xf32>
    %25 = arith.mulf %8, %24 : vector<16x128xf32>
    %26 = vector.broadcast %21 : vector<16x1xf32> to vector<16x128xf32>
    %27 = arith.mulf %8, %26 : vector<16x128xf32>
    %28 = arith.select %23, %25, %27 : vector<16x128xi1>, vector<16x128xf32>
    %c0_19 = arith.constant 0 : index
    %c0_20 = arith.constant 0 : index
    %29 = vector.load %arg11[%c0_19, %c0_20] : memref<16x128xf32, #tpu.memory_space<vmem>>, vector<16x128xf32>
    tpu.vector_store %arg11[%c0_19, %c0_20], %8 {strides = array<i32>} : memref<16x128xf32, #tpu.memory_space<vmem>>, vector<16x128xf32>,
    %c0_21 = arith.constant 0 : index
    %c0_22 = arith.constant 0 : index
    %30 = vector.load %arg12[%c0_21, %c0_22] : memref<16x128xf32, #tpu.memory_space<vmem>>, vector<16x128xf32>
    tpu.vector_store %arg12[%c0_21, %c0_22], %16 {strides = array<i32>} : memref<16x128xf32, #tpu.memory_space<vmem>>, vector<16x128xf32>,
    %c0_23 = arith.constant 0 : index
    %c0_24 = arith.constant 0 : index
    %31 = vector.load %arg13[%c0_23, %c0_24] : memref<16x128xf32, #tpu.memory_space<vmem>>, vector<16x128xf32>
    tpu.vector_store %arg13[%c0_23, %c0_24], %28 {strides = array<i32>} : memref<16x128xf32, #tpu.memory_space<vmem>>, vector<16x128xf32>,
    %c0_25 = arith.constant 0 : index
    %c0_26 = arith.constant 0 : index
    %32 = vector.load %arg14[%c0_25, %c0_26] : memref<16x128xf32, #tpu.memory_space<vmem>>, vector<16x128xf32>
    tpu.vector_store %arg14[%c0_25, %c0_26], %17 {strides = array<i32>} : memref<16x128xf32, #tpu.memory_space<vmem>>, vector<16x128xf32>,
    %c0_i32 = arith.constant 0 : i32
    %c2_i32 = arith.constant 2 : i32
    %33 = arith.addi %c0_i32, %c2_i32 : i32
    %c1_i32 = arith.constant 1 : i32
    scf.for %arg16 = %c0_i32 to %33 step %c1_i32  : i32 {
      %c8_i32 = arith.constant 8 : i32
      %115 = arith.muli %arg16, %c8_i32 : i32
      %116 = tpu.assume_multiple %115, 8 : i32
      %117 = arith.index_cast %116 : i32 to index
      %c0_105 = arith.constant 0 : index
      %118 = vector.load %arg11[%117, %c0_105] : memref<16x128xf32, #tpu.memory_space<vmem>>, vector<8x128xf32>
      %119 = arith.index_cast %116 : i32 to index
      %c0_106 = arith.constant 0 : index
      %120 = vector.load %arg13[%119, %c0_106] : memref<16x128xf32, #tpu.memory_space<vmem>>, vector<8x128xf32>
      %121 = arith.index_cast %116 : i32 to index
      %c0_107 = arith.constant 0 : index
      %122 = vector.load %arg14[%121, %c0_107] : memref<16x128xf32, #tpu.memory_space<vmem>>, vector<8x128xf32>
      %123 = arith.index_cast %116 : i32 to index
      %c0_108 = arith.constant 0 : index
      %124 = vector.load %arg12[%123, %c0_108] : memref<16x128xf32, #tpu.memory_space<vmem>>, vector<8x128xf32>
      %125 = tpu.transpose %124, [1, 0] : vector<8x128xf32> -> vector<128x8xf32>
      %126 = vector.extract_strided_slice %125 {offsets = [0, 0], sizes = [128, 1], strides = [1, 1]} : vector<128x8xf32> to vector<128x1xf32>
      %127 = vector.extract_strided_slice %118 {offsets = [0, 0], sizes = [1, 128], strides = [1, 1]} : vector<8x128xf32> to vector<1x128xf32>
      %128 = vector.broadcast %126 : vector<128x1xf32> to vector<128x128xf32>
      %129 = vector.broadcast %127 : vector<1x128xf32> to vector<128x128xf32>
      %130 = arith.mulf %128, %129 : vector<128x128xf32>
      %131 = vector.extract_strided_slice %120 {offsets = [0, 0], sizes = [1, 128], strides = [1, 1]} : vector<8x128xf32> to vector<1x128xf32>
      %132 = vector.broadcast %131 : vector<1x128xf32> to vector<128x128xf32>
      %133 = arith.subf %130, %132 : vector<128x128xf32>
      %134 = math.exp %133 : vector<128x128xf32>
      %135 = vector.extract_strided_slice %122 {offsets = [0, 0], sizes = [1, 128], strides = [1, 1]} : vector<8x128xf32> to vector<1x128xf32>
      %136 = tpu.concatenate %135, %0 in 0 : vector<1x128xf32>, vector<1x128xf32> -> vector<2x128xf32>
      %cst_109 = arith.constant dense<0.000000e+00> : vector<2x128xf32>
      %137 = tpu.matmul %136, %134, %cst_109 {dimension_numbers = #tpu.dot_dimension_numbers<[1], [0], [0], [1], [0, 0, 1, 1], [], []>} : vector<2x128xf32>, vector<128x128xf32>, vector<2x128xf32> -> vector<2x128xf32>
      %138 = vector.extract_strided_slice %137 {offsets = [0, 0], sizes = [1, 128], strides = [1, 1]} : vector<2x128xf32> to vector<1x128xf32>
      %139 = vector.extract_strided_slice %137 {offsets = [1, 0], sizes = [1, 128], strides = [1, 1]} : vector<2x128xf32> to vector<1x128xf32>
      %140 = tpu.reciprocal %139 {approx = true} : vector<1x128xf32> -> vector<1x128xf32>
      %141 = arith.mulf %138, %140 : vector<1x128xf32>
      %142 = vector.extract_strided_slice %125 {offsets = [0, 1], sizes = [128, 1], strides = [1, 1]} : vector<128x8xf32> to vector<128x1xf32>
      %143 = vector.extract_strided_slice %118 {offsets = [1, 0], sizes = [1, 128], strides = [1, 1]} : vector<8x128xf32> to vector<1x128xf32>
      %144 = vector.broadcast %142 : vector<128x1xf32> to vector<128x128xf32>
      %145 = vector.broadcast %143 : vector<1x128xf32> to vector<128x128xf32>
      %146 = arith.mulf %144, %145 : vector<128x128xf32>
      %147 = vector.extract_strided_slice %120 {offsets = [1, 0], sizes = [1, 128], strides = [1, 1]} : vector<8x128xf32> to vector<1x128xf32>
      %148 = vector.broadcast %147 : vector<1x128xf32> to vector<128x128xf32>
      %149 = arith.subf %146, %148 : vector<128x128xf32>
      %150 = math.exp %149 : vector<128x128xf32>
      %151 = vector.extract_strided_slice %122 {offsets = [1, 0], sizes = [1, 128], strides = [1, 1]} : vector<8x128xf32> to vector<1x128xf32>
      %152 = tpu.concatenate %151, %0 in 0 : vector<1x128xf32>, vector<1x128xf32> -> vector<2x128xf32>
      %cst_110 = arith.constant dense<0.000000e+00> : vector<2x128xf32>
      %153 = tpu.matmul %152, %150, %cst_110 {dimension_numbers = #tpu.dot_dimension_numbers<[1], [0], [0], [1], [0, 0, 1, 1], [], []>} : vector<2x128xf32>, vector<128x128xf32>, vector<2x128xf32> -> vector<2x128xf32>
      %154 = vector.extract_strided_slice %153 {offsets = [0, 0], sizes = [1, 128], strides = [1, 1]} : vector<2x128xf32> to vector<1x128xf32>
      %155 = vector.extract_strided_slice %153 {offsets = [1, 0], sizes = [1, 128], strides = [1, 1]} : vector<2x128xf32> to vector<1x128xf32>
      %156 = tpu.reciprocal %155 {approx = true} : vector<1x128xf32> -> vector<1x128xf32>
      %157 = arith.mulf %154, %156 : vector<1x128xf32>
      %158 = vector.extract_strided_slice %125 {offsets = [0, 2], sizes = [128, 1], strides = [1, 1]} : vector<128x8xf32> to vector<128x1xf32>
      %159 = vector.extract_strided_slice %118 {offsets = [2, 0], sizes = [1, 128], strides = [1, 1]} : vector<8x128xf32> to vector<1x128xf32>
      %160 = vector.broadcast %158 : vector<128x1xf32> to vector<128x128xf32>
      %161 = vector.broadcast %159 : vector<1x128xf32> to vector<128x128xf32>
      %162 = arith.mulf %160, %161 : vector<128x128xf32>
      %163 = vector.extract_strided_slice %120 {offsets = [2, 0], sizes = [1, 128], strides = [1, 1]} : vector<8x128xf32> to vector<1x128xf32>
      %164 = vector.broadcast %163 : vector<1x128xf32> to vector<128x128xf32>
      %165 = arith.subf %162, %164 : vector<128x128xf32>
      %166 = math.exp %165 : vector<128x128xf32>
      %167 = vector.extract_strided_slice %122 {offsets = [2, 0], sizes = [1, 128], strides = [1, 1]} : vector<8x128xf32> to vector<1x128xf32>
      %168 = tpu.concatenate %167, %0 in 0 : vector<1x128xf32>, vector<1x128xf32> -> vector<2x128xf32>
      %cst_111 = arith.constant dense<0.000000e+00> : vector<2x128xf32>
      %169 = tpu.matmul %168, %166, %cst_111 {dimension_numbers = #tpu.dot_dimension_numbers<[1], [0], [0], [1], [0, 0, 1, 1], [], []>} : vector<2x128xf32>, vector<128x128xf32>, vector<2x128xf32> -> vector<2x128xf32>
      %170 = vector.extract_strided_slice %169 {offsets = [0, 0], sizes = [1, 128], strides = [1, 1]} : vector<2x128xf32> to vector<1x128xf32>
      %171 = vector.extract_strided_slice %169 {offsets = [1, 0], sizes = [1, 128], strides = [1, 1]} : vector<2x128xf32> to vector<1x128xf32>
      %172 = tpu.reciprocal %171 {approx = true} : vector<1x128xf32> -> vector<1x128xf32>
      %173 = arith.mulf %170, %172 : vector<1x128xf32>
      %174 = vector.extract_strided_slice %125 {offsets = [0, 3], sizes = [128, 1], strides = [1, 1]} : vector<128x8xf32> to vector<128x1xf32>
      %175 = vector.extract_strided_slice %118 {offsets = [3, 0], sizes = [1, 128], strides = [1, 1]} : vector<8x128xf32> to vector<1x128xf32>
      %176 = vector.broadcast %174 : vector<128x1xf32> to vector<128x128xf32>
      %177 = vector.broadcast %175 : vector<1x128xf32> to vector<128x128xf32>
      %178 = arith.mulf %176, %177 : vector<128x128xf32>
      %179 = vector.extract_strided_slice %120 {offsets = [3, 0], sizes = [1, 128], strides = [1, 1]} : vector<8x128xf32> to vector<1x128xf32>
      %180 = vector.broadcast %179 : vector<1x128xf32> to vector<128x128xf32>
      %181 = arith.subf %178, %180 : vector<128x128xf32>
      %182 = math.exp %181 : vector<128x128xf32>
      %183 = vector.extract_strided_slice %122 {offsets = [3, 0], sizes = [1, 128], strides = [1, 1]} : vector<8x128xf32> to vector<1x128xf32>
      %184 = tpu.concatenate %183, %0 in 0 : vector<1x128xf32>, vector<1x128xf32> -> vector<2x128xf32>
      %cst_112 = arith.constant dense<0.000000e+00> : vector<2x128xf32>
      %185 = tpu.matmul %184, %182, %cst_112 {dimension_numbers = #tpu.dot_dimension_numbers<[1], [0], [0], [1], [0, 0, 1, 1], [], []>} : vector<2x128xf32>, vector<128x128xf32>, vector<2x128xf32> -> vector<2x128xf32>
      %186 = vector.extract_strided_slice %185 {offsets = [0, 0], sizes = [1, 128], strides = [1, 1]} : vector<2x128xf32> to vector<1x128xf32>
      %187 = vector.extract_strided_slice %185 {offsets = [1, 0], sizes = [1, 128], strides = [1, 1]} : vector<2x128xf32> to vector<1x128xf32>
      %188 = tpu.reciprocal %187 {approx = true} : vector<1x128xf32> -> vector<1x128xf32>
      %189 = arith.mulf %186, %188 : vector<1x128xf32>
      %190 = vector.extract_strided_slice %125 {offsets = [0, 4], sizes = [128, 1], strides = [1, 1]} : vector<128x8xf32> to vector<128x1xf32>
      %191 = vector.extract_strided_slice %118 {offsets = [4, 0], sizes = [1, 128], strides = [1, 1]} : vector<8x128xf32> to vector<1x128xf32>
      %192 = vector.broadcast %190 : vector<128x1xf32> to vector<128x128xf32>
      %193 = vector.broadcast %191 : vector<1x128xf32> to vector<128x128xf32>
      %194 = arith.mulf %192, %193 : vector<128x128xf32>
      %195 = vector.extract_strided_slice %120 {offsets = [4, 0], sizes = [1, 128], strides = [1, 1]} : vector<8x128xf32> to vector<1x128xf32>
      %196 = vector.broadcast %195 : vector<1x128xf32> to vector<128x128xf32>
      %197 = arith.subf %194, %196 : vector<128x128xf32>
      %198 = math.exp %197 : vector<128x128xf32>
      %199 = vector.extract_strided_slice %122 {offsets = [4, 0], sizes = [1, 128], strides = [1, 1]} : vector<8x128xf32> to vector<1x128xf32>
      %200 = tpu.concatenate %199, %0 in 0 : vector<1x128xf32>, vector<1x128xf32> -> vector<2x128xf32>
      %cst_113 = arith.constant dense<0.000000e+00> : vector<2x128xf32>
      %201 = tpu.matmul %200, %198, %cst_113 {dimension_numbers = #tpu.dot_dimension_numbers<[1], [0], [0], [1], [0, 0, 1, 1], [], []>} : vector<2x128xf32>, vector<128x128xf32>, vector<2x128xf32> -> vector<2x128xf32>
      %202 = vector.extract_strided_slice %201 {offsets = [0, 0], sizes = [1, 128], strides = [1, 1]} : vector<2x128xf32> to vector<1x128xf32>
      %203 = vector.extract_strided_slice %201 {offsets = [1, 0], sizes = [1, 128], strides = [1, 1]} : vector<2x128xf32> to vector<1x128xf32>
      %204 = tpu.reciprocal %203 {approx = true} : vector<1x128xf32> -> vector<1x128xf32>
      %205 = arith.mulf %202, %204 : vector<1x128xf32>
      %206 = vector.extract_strided_slice %125 {offsets = [0, 5], sizes = [128, 1], strides = [1, 1]} : vector<128x8xf32> to vector<128x1xf32>
      %207 = vector.extract_strided_slice %118 {offsets = [5, 0], sizes = [1, 128], strides = [1, 1]} : vector<8x128xf32> to vector<1x128xf32>
      %208 = vector.broadcast %206 : vector<128x1xf32> to vector<128x128xf32>
      %209 = vector.broadcast %207 : vector<1x128xf32> to vector<128x128xf32>
      %210 = arith.mulf %208, %209 : vector<128x128xf32>
      %211 = vector.extract_strided_slice %120 {offsets = [5, 0], sizes = [1, 128], strides = [1, 1]} : vector<8x128xf32> to vector<1x128xf32>
      %212 = vector.broadcast %211 : vector<1x128xf32> to vector<128x128xf32>
      %213 = arith.subf %210, %212 : vector<128x128xf32>
      %214 = math.exp %213 : vector<128x128xf32>
      %215 = vector.extract_strided_slice %122 {offsets = [5, 0], sizes = [1, 128], strides = [1, 1]} : vector<8x128xf32> to vector<1x128xf32>
      %216 = tpu.concatenate %215, %0 in 0 : vector<1x128xf32>, vector<1x128xf32> -> vector<2x128xf32>
      %cst_114 = arith.constant dense<0.000000e+00> : vector<2x128xf32>
      %217 = tpu.matmul %216, %214, %cst_114 {dimension_numbers = #tpu.dot_dimension_numbers<[1], [0], [0], [1], [0, 0, 1, 1], [], []>} : vector<2x128xf32>, vector<128x128xf32>, vector<2x128xf32> -> vector<2x128xf32>
      %218 = vector.extract_strided_slice %217 {offsets = [0, 0], sizes = [1, 128], strides = [1, 1]} : vector<2x128xf32> to vector<1x128xf32>
      %219 = vector.extract_strided_slice %217 {offsets = [1, 0], sizes = [1, 128], strides = [1, 1]} : vector<2x128xf32> to vector<1x128xf32>
      %220 = tpu.reciprocal %219 {approx = true} : vector<1x128xf32> -> vector<1x128xf32>
      %221 = arith.mulf %218, %220 : vector<1x128xf32>
      %222 = vector.extract_strided_slice %125 {offsets = [0, 6], sizes = [128, 1], strides = [1, 1]} : vector<128x8xf32> to vector<128x1xf32>
      %223 = vector.extract_strided_slice %118 {offsets = [6, 0], sizes = [1, 128], strides = [1, 1]} : vector<8x128xf32> to vector<1x128xf32>
      %224 = vector.broadcast %222 : vector<128x1xf32> to vector<128x128xf32>
      %225 = vector.broadcast %223 : vector<1x128xf32> to vector<128x128xf32>
      %226 = arith.mulf %224, %225 : vector<128x128xf32>
      %227 = vector.extract_strided_slice %120 {offsets = [6, 0], sizes = [1, 128], strides = [1, 1]} : vector<8x128xf32> to vector<1x128xf32>
      %228 = vector.broadcast %227 : vector<1x128xf32> to vector<128x128xf32>
      %229 = arith.subf %226, %228 : vector<128x128xf32>
      %230 = math.exp %229 : vector<128x128xf32>
      %231 = vector.extract_strided_slice %122 {offsets = [6, 0], sizes = [1, 128], strides = [1, 1]} : vector<8x128xf32> to vector<1x128xf32>
      %232 = tpu.concatenate %231, %0 in 0 : vector<1x128xf32>, vector<1x128xf32> -> vector<2x128xf32>
      %cst_115 = arith.constant dense<0.000000e+00> : vector<2x128xf32>
      %233 = tpu.matmul %232, %230, %cst_115 {dimension_numbers = #tpu.dot_dimension_numbers<[1], [0], [0], [1], [0, 0, 1, 1], [], []>} : vector<2x128xf32>, vector<128x128xf32>, vector<2x128xf32> -> vector<2x128xf32>
      %234 = vector.extract_strided_slice %233 {offsets = [0, 0], sizes = [1, 128], strides = [1, 1]} : vector<2x128xf32> to vector<1x128xf32>
      %235 = vector.extract_strided_slice %233 {offsets = [1, 0], sizes = [1, 128], strides = [1, 1]} : vector<2x128xf32> to vector<1x128xf32>
      %236 = tpu.reciprocal %235 {approx = true} : vector<1x128xf32> -> vector<1x128xf32>
      %237 = arith.mulf %234, %236 : vector<1x128xf32>
      %238 = vector.extract_strided_slice %125 {offsets = [0, 7], sizes = [128, 1], strides = [1, 1]} : vector<128x8xf32> to vector<128x1xf32>
      %239 = vector.extract_strided_slice %118 {offsets = [7, 0], sizes = [1, 128], strides = [1, 1]} : vector<8x128xf32> to vector<1x128xf32>
      %240 = vector.broadcast %238 : vector<128x1xf32> to vector<128x128xf32>
      %241 = vector.broadcast %239 : vector<1x128xf32> to vector<128x128xf32>
      %242 = arith.mulf %240, %241 : vector<128x128xf32>
      %243 = vector.extract_strided_slice %120 {offsets = [7, 0], sizes = [1, 128], strides = [1, 1]} : vector<8x128xf32> to vector<1x128xf32>
      %244 = vector.broadcast %243 : vector<1x128xf32> to vector<128x128xf32>
      %245 = arith.subf %242, %244 : vector<128x128xf32>
      %246 = math.exp %245 : vector<128x128xf32>
      %247 = vector.extract_strided_slice %122 {offsets = [7, 0], sizes = [1, 128], strides = [1, 1]} : vector<8x128xf32> to vector<1x128xf32>
      %248 = tpu.concatenate %247, %0 in 0 : vector<1x128xf32>, vector<1x128xf32> -> vector<2x128xf32>
      %cst_116 = arith.constant dense<0.000000e+00> : vector<2x128xf32>
      %249 = tpu.matmul %248, %246, %cst_116 {dimension_numbers = #tpu.dot_dimension_numbers<[1], [0], [0], [1], [0, 0, 1, 1], [], []>} : vector<2x128xf32>, vector<128x128xf32>, vector<2x128xf32> -> vector<2x128xf32>
      %250 = vector.extract_strided_slice %249 {offsets = [0, 0], sizes = [1, 128], strides = [1, 1]} : vector<2x128xf32> to vector<1x128xf32>
      %251 = vector.extract_strided_slice %249 {offsets = [1, 0], sizes = [1, 128], strides = [1, 1]} : vector<2x128xf32> to vector<1x128xf32>
      %252 = tpu.reciprocal %251 {approx = true} : vector<1x128xf32> -> vector<1x128xf32>
      %253 = arith.mulf %250, %252 : vector<1x128xf32>
      %254 = tpu.concatenate %141, %157, %173, %189, %205, %221, %237, %253 in 0 : vector<1x128xf32>, vector<1x128xf32>, vector<1x128xf32>, vector<1x128xf32>, vector<1x128xf32>, vector<1x128xf32>, vector<1x128xf32>, vector<1x128xf32> -> vector<8x128xf32>
      %255 = arith.index_cast %116 : i32 to index
      %c0_117 = arith.constant 0 : index
      %256 = vector.load %arg15[%255, %c0_117] : memref<16x128xf32, #tpu.memory_space<vmem>>, vector<8x128xf32>
      tpu.vector_store %arg15[%255, %c0_117], %254 {strides = array<i32>} : memref<16x128xf32, #tpu.memory_space<vmem>>, vector<8x128xf32>,
    }
    %c2_i32_27 = arith.constant 2 : i32
    %c0_28 = arith.constant 0 : index
    %c0_29 = arith.constant 0 : index
    %34 = vector.load %arg15[%c0_28, %c0_29] : memref<16x128xf32, #tpu.memory_space<vmem>>, vector<16x128xf32>
    %c0_30 = arith.constant 0 : index
    %c0_31 = arith.constant 0 : index
    %35 = vector.load %arg8[%c0_30, %c0_31] : memref<128x128xf32, #tpu.memory_space<vmem>>, vector<128x128xf32>
    %cst_32 = arith.constant dense<0.000000e+00> : vector<16x128xf32>
    %36 = tpu.matmul %34, %35, %cst_32 {dimension_numbers = #tpu.dot_dimension_numbers<[1], [1], [0], [0], [0, 0, 1, 0], [], []>} : vector<16x128xf32>, vector<128x128xf32>, vector<16x128xf32> -> vector<16x128xf32>
    %c0_33 = arith.constant 0 : index
    %c0_34 = arith.constant 0 : index
    %37 = vector.load %arg9[%c0_33, %c0_34] : memref<1x128xf32, #tpu.memory_space<vmem>>, vector<1x128xf32>
    %38 = vector.broadcast %37 : vector<1x128xf32> to vector<16x128xf32>
    %39 = arith.addf %36, %38 : vector<16x128xf32>
    %40 = arith.addf %1, %39 : vector<16x128xf32>
    %c0_35 = arith.constant 0 : index
    %c0_36 = arith.constant 0 : index
    %41 = vector.load %arg4[%c0_35, %c0_36] : memref<128x128xf32, #tpu.memory_space<vmem>>, vector<128x128xf32>
    %cst_37 = arith.constant dense<0.000000e+00> : vector<16x128xf32>
    %42 = tpu.matmul %40, %41, %cst_37 {dimension_numbers = #tpu.dot_dimension_numbers<[1], [1], [0], [0], [0, 0, 1, 0], [], []>} : vector<16x128xf32>, vector<128x128xf32>, vector<16x128xf32> -> vector<16x128xf32>
    %c0_38 = arith.constant 0 : index
    %c0_39 = arith.constant 0 : index
    %43 = vector.load %arg5[%c0_38, %c0_39] : memref<1x128xf32, #tpu.memory_space<vmem>>, vector<1x128xf32>
    %44 = vector.broadcast %43 : vector<1x128xf32> to vector<16x128xf32>
    %45 = arith.addf %42, %44 : vector<16x128xf32>
    %c0_40 = arith.constant 0 : index
    %c0_41 = arith.constant 0 : index
    %46 = vector.load %arg6[%c0_40, %c0_41] : memref<256x128xf32, #tpu.memory_space<vmem>>, vector<256x128xf32>
    %cst_42 = arith.constant dense<0.000000e+00> : vector<16x256xf32>
    %47 = tpu.matmul %40, %46, %cst_42 {dimension_numbers = #tpu.dot_dimension_numbers<[1], [1], [0], [0], [0, 0, 1, 0], [], []>} : vector<16x128xf32>, vector<256x128xf32>, vector<16x256xf32> -> vector<16x256xf32>
    %c0_43 = arith.constant 0 : index
    %c0_44 = arith.constant 0 : index
    %48 = vector.load %arg7[%c0_43, %c0_44] : memref<1x256xf32, #tpu.memory_space<vmem>>, vector<1x256xf32>
    %49 = vector.broadcast %48 : vector<1x256xf32> to vector<16x256xf32>
    %50 = arith.addf %47, %49 : vector<16x256xf32>
    %51 = vector.extract_strided_slice %50 {offsets = [0, 0], sizes = [16, 128], strides = [1, 1]} : vector<16x256xf32> to vector<16x128xf32>
    %cst_45 = arith.constant 0.0883883461 : f32
    %52 = vector.broadcast %cst_45 : f32 to vector<16x128xf32>
    %53 = arith.mulf %51, %52 : vector<16x128xf32>
    %54 = vector.extract_strided_slice %50 {offsets = [0, 128], sizes = [16, 128], strides = [1, 1]} : vector<16x256xf32> to vector<16x128xf32>
    %cst_46 = arith.constant dense<0xFF800000> : vector<16xf32>
    %55 = vector.multi_reduction <maximumf>, %53, %cst_46 [1] : vector<16x128xf32> to vector<16xf32>
    %56 = vector.shape_cast %55 : vector<16xf32> to vector<16x1xf32>
    %cst_47 = arith.constant dense<0x7F800000> : vector<16xf32>
    %57 = vector.multi_reduction <minimumf>, %53, %cst_47 [1] : vector<16x128xf32> to vector<16xf32>
    %58 = vector.shape_cast %57 : vector<16xf32> to vector<16x1xf32>
    %cst_48 = arith.constant 0.000000e+00 : f32
    %59 = vector.broadcast %cst_48 : f32 to vector<16x128xf32>
    %60 = arith.cmpf oge, %45, %59 : vector<16x128xf32>
    %61 = vector.broadcast %56 : vector<16x1xf32> to vector<16x128xf32>
    %62 = arith.mulf %45, %61 : vector<16x128xf32>
    %63 = vector.broadcast %58 : vector<16x1xf32> to vector<16x128xf32>
    %64 = arith.mulf %45, %63 : vector<16x128xf32>
    %65 = arith.select %60, %62, %64 : vector<16x128xi1>, vector<16x128xf32>
    %c0_49 = arith.constant 0 : index
    %c0_50 = arith.constant 0 : index
    %66 = vector.load %arg11[%c0_49, %c0_50] : memref<16x128xf32, #tpu.memory_space<vmem>>, vector<16x128xf32>
    tpu.vector_store %arg11[%c0_49, %c0_50], %45 {strides = array<i32>} : memref<16x128xf32, #tpu.memory_space<vmem>>, vector<16x128xf32>,
    %c0_51 = arith.constant 0 : index
    %c0_52 = arith.constant 0 : index
    %67 = vector.load %arg12[%c0_51, %c0_52] : memref<16x128xf32, #tpu.memory_space<vmem>>, vector<16x128xf32>
    tpu.vector_store %arg12[%c0_51, %c0_52], %53 {strides = array<i32>} : memref<16x128xf32, #tpu.memory_space<vmem>>, vector<16x128xf32>,
    %c0_53 = arith.constant 0 : index
    %c0_54 = arith.constant 0 : index
    %68 = vector.load %arg13[%c0_53, %c0_54] : memref<16x128xf32, #tpu.memory_space<vmem>>, vector<16x128xf32>
    tpu.vector_store %arg13[%c0_53, %c0_54], %65 {strides = array<i32>} : memref<16x128xf32, #tpu.memory_space<vmem>>, vector<16x128xf32>,
    %c0_55 = arith.constant 0 : index
    %c0_56 = arith.constant 0 : index
    %69 = vector.load %arg14[%c0_55, %c0_56] : memref<16x128xf32, #tpu.memory_space<vmem>>, vector<16x128xf32>
    tpu.vector_store %arg14[%c0_55, %c0_56], %54 {strides = array<i32>} : memref<16x128xf32, #tpu.memory_space<vmem>>, vector<16x128xf32>,
    %c0_i32_57 = arith.constant 0 : i32
    %c2_i32_58 = arith.constant 2 : i32
    %70 = arith.addi %c0_i32_57, %c2_i32_58 : i32
    %c1_i32_59 = arith.constant 1 : i32
    scf.for %arg16 = %c0_i32_57 to %70 step %c1_i32_59  : i32 {
      %c8_i32 = arith.constant 8 : i32
      %115 = arith.muli %arg16, %c8_i32 : i32
      %116 = tpu.assume_multiple %115, 8 : i32
      %117 = arith.index_cast %116 : i32 to index
      %c0_105 = arith.constant 0 : index
      %118 = vector.load %arg11[%117, %c0_105] : memref<16x128xf32, #tpu.memory_space<vmem>>, vector<8x128xf32>
      %119 = arith.index_cast %116 : i32 to index
      %c0_106 = arith.constant 0 : index
      %120 = vector.load %arg13[%119, %c0_106] : memref<16x128xf32, #tpu.memory_space<vmem>>, vector<8x128xf32>
      %121 = arith.index_cast %116 : i32 to index
      %c0_107 = arith.constant 0 : index
      %122 = vector.load %arg14[%121, %c0_107] : memref<16x128xf32, #tpu.memory_space<vmem>>, vector<8x128xf32>
      %123 = arith.index_cast %116 : i32 to index
      %c0_108 = arith.constant 0 : index
      %124 = vector.load %arg12[%123, %c0_108] : memref<16x128xf32, #tpu.memory_space<vmem>>, vector<8x128xf32>
      %125 = tpu.transpose %124, [1, 0] : vector<8x128xf32> -> vector<128x8xf32>
      %126 = vector.extract_strided_slice %125 {offsets = [0, 0], sizes = [128, 1], strides = [1, 1]} : vector<128x8xf32> to vector<128x1xf32>
      %127 = vector.extract_strided_slice %118 {offsets = [0, 0], sizes = [1, 128], strides = [1, 1]} : vector<8x128xf32> to vector<1x128xf32>
      %128 = vector.broadcast %126 : vector<128x1xf32> to vector<128x128xf32>
      %129 = vector.broadcast %127 : vector<1x128xf32> to vector<128x128xf32>
      %130 = arith.mulf %128, %129 : vector<128x128xf32>
      %131 = vector.extract_strided_slice %120 {offsets = [0, 0], sizes = [1, 128], strides = [1, 1]} : vector<8x128xf32> to vector<1x128xf32>
      %132 = vector.broadcast %131 : vector<1x128xf32> to vector<128x128xf32>
      %133 = arith.subf %130, %132 : vector<128x128xf32>
      %134 = math.exp %133 : vector<128x128xf32>
      %135 = vector.extract_strided_slice %122 {offsets = [0, 0], sizes = [1, 128], strides = [1, 1]} : vector<8x128xf32> to vector<1x128xf32>
      %136 = tpu.concatenate %135, %0 in 0 : vector<1x128xf32>, vector<1x128xf32> -> vector<2x128xf32>
      %cst_109 = arith.constant dense<0.000000e+00> : vector<2x128xf32>
      %137 = tpu.matmul %136, %134, %cst_109 {dimension_numbers = #tpu.dot_dimension_numbers<[1], [0], [0], [1], [0, 0, 1, 1], [], []>} : vector<2x128xf32>, vector<128x128xf32>, vector<2x128xf32> -> vector<2x128xf32>
      %138 = vector.extract_strided_slice %137 {offsets = [0, 0], sizes = [1, 128], strides = [1, 1]} : vector<2x128xf32> to vector<1x128xf32>
      %139 = vector.extract_strided_slice %137 {offsets = [1, 0], sizes = [1, 128], strides = [1, 1]} : vector<2x128xf32> to vector<1x128xf32>
      %140 = tpu.reciprocal %139 {approx = true} : vector<1x128xf32> -> vector<1x128xf32>
      %141 = arith.mulf %138, %140 : vector<1x128xf32>
      %142 = vector.extract_strided_slice %125 {offsets = [0, 1], sizes = [128, 1], strides = [1, 1]} : vector<128x8xf32> to vector<128x1xf32>
      %143 = vector.extract_strided_slice %118 {offsets = [1, 0], sizes = [1, 128], strides = [1, 1]} : vector<8x128xf32> to vector<1x128xf32>
      %144 = vector.broadcast %142 : vector<128x1xf32> to vector<128x128xf32>
      %145 = vector.broadcast %143 : vector<1x128xf32> to vector<128x128xf32>
      %146 = arith.mulf %144, %145 : vector<128x128xf32>
      %147 = vector.extract_strided_slice %120 {offsets = [1, 0], sizes = [1, 128], strides = [1, 1]} : vector<8x128xf32> to vector<1x128xf32>
      %148 = vector.broadcast %147 : vector<1x128xf32> to vector<128x128xf32>
      %149 = arith.subf %146, %148 : vector<128x128xf32>
      %150 = math.exp %149 : vector<128x128xf32>
      %151 = vector.extract_strided_slice %122 {offsets = [1, 0], sizes = [1, 128], strides = [1, 1]} : vector<8x128xf32> to vector<1x128xf32>
      %152 = tpu.concatenate %151, %0 in 0 : vector<1x128xf32>, vector<1x128xf32> -> vector<2x128xf32>
      %cst_110 = arith.constant dense<0.000000e+00> : vector<2x128xf32>
      %153 = tpu.matmul %152, %150, %cst_110 {dimension_numbers = #tpu.dot_dimension_numbers<[1], [0], [0], [1], [0, 0, 1, 1], [], []>} : vector<2x128xf32>, vector<128x128xf32>, vector<2x128xf32> -> vector<2x128xf32>
      %154 = vector.extract_strided_slice %153 {offsets = [0, 0], sizes = [1, 128], strides = [1, 1]} : vector<2x128xf32> to vector<1x128xf32>
      %155 = vector.extract_strided_slice %153 {offsets = [1, 0], sizes = [1, 128], strides = [1, 1]} : vector<2x128xf32> to vector<1x128xf32>
      %156 = tpu.reciprocal %155 {approx = true} : vector<1x128xf32> -> vector<1x128xf32>
      %157 = arith.mulf %154, %156 : vector<1x128xf32>
      %158 = vector.extract_strided_slice %125 {offsets = [0, 2], sizes = [128, 1], strides = [1, 1]} : vector<128x8xf32> to vector<128x1xf32>
      %159 = vector.extract_strided_slice %118 {offsets = [2, 0], sizes = [1, 128], strides = [1, 1]} : vector<8x128xf32> to vector<1x128xf32>
      %160 = vector.broadcast %158 : vector<128x1xf32> to vector<128x128xf32>
      %161 = vector.broadcast %159 : vector<1x128xf32> to vector<128x128xf32>
      %162 = arith.mulf %160, %161 : vector<128x128xf32>
      %163 = vector.extract_strided_slice %120 {offsets = [2, 0], sizes = [1, 128], strides = [1, 1]} : vector<8x128xf32> to vector<1x128xf32>
      %164 = vector.broadcast %163 : vector<1x128xf32> to vector<128x128xf32>
      %165 = arith.subf %162, %164 : vector<128x128xf32>
      %166 = math.exp %165 : vector<128x128xf32>
      %167 = vector.extract_strided_slice %122 {offsets = [2, 0], sizes = [1, 128], strides = [1, 1]} : vector<8x128xf32> to vector<1x128xf32>
      %168 = tpu.concatenate %167, %0 in 0 : vector<1x128xf32>, vector<1x128xf32> -> vector<2x128xf32>
      %cst_111 = arith.constant dense<0.000000e+00> : vector<2x128xf32>
      %169 = tpu.matmul %168, %166, %cst_111 {dimension_numbers = #tpu.dot_dimension_numbers<[1], [0], [0], [1], [0, 0, 1, 1], [], []>} : vector<2x128xf32>, vector<128x128xf32>, vector<2x128xf32> -> vector<2x128xf32>
      %170 = vector.extract_strided_slice %169 {offsets = [0, 0], sizes = [1, 128], strides = [1, 1]} : vector<2x128xf32> to vector<1x128xf32>
      %171 = vector.extract_strided_slice %169 {offsets = [1, 0], sizes = [1, 128], strides = [1, 1]} : vector<2x128xf32> to vector<1x128xf32>
      %172 = tpu.reciprocal %171 {approx = true} : vector<1x128xf32> -> vector<1x128xf32>
      %173 = arith.mulf %170, %172 : vector<1x128xf32>
      %174 = vector.extract_strided_slice %125 {offsets = [0, 3], sizes = [128, 1], strides = [1, 1]} : vector<128x8xf32> to vector<128x1xf32>
      %175 = vector.extract_strided_slice %118 {offsets = [3, 0], sizes = [1, 128], strides = [1, 1]} : vector<8x128xf32> to vector<1x128xf32>
      %176 = vector.broadcast %174 : vector<128x1xf32> to vector<128x128xf32>
      %177 = vector.broadcast %175 : vector<1x128xf32> to vector<128x128xf32>
      %178 = arith.mulf %176, %177 : vector<128x128xf32>
      %179 = vector.extract_strided_slice %120 {offsets = [3, 0], sizes = [1, 128], strides = [1, 1]} : vector<8x128xf32> to vector<1x128xf32>
      %180 = vector.broadcast %179 : vector<1x128xf32> to vector<128x128xf32>
      %181 = arith.subf %178, %180 : vector<128x128xf32>
      %182 = math.exp %181 : vector<128x128xf32>
      %183 = vector.extract_strided_slice %122 {offsets = [3, 0], sizes = [1, 128], strides = [1, 1]} : vector<8x128xf32> to vector<1x128xf32>
      %184 = tpu.concatenate %183, %0 in 0 : vector<1x128xf32>, vector<1x128xf32> -> vector<2x128xf32>
      %cst_112 = arith.constant dense<0.000000e+00> : vector<2x128xf32>
      %185 = tpu.matmul %184, %182, %cst_112 {dimension_numbers = #tpu.dot_dimension_numbers<[1], [0], [0], [1], [0, 0, 1, 1], [], []>} : vector<2x128xf32>, vector<128x128xf32>, vector<2x128xf32> -> vector<2x128xf32>
      %186 = vector.extract_strided_slice %185 {offsets = [0, 0], sizes = [1, 128], strides = [1, 1]} : vector<2x128xf32> to vector<1x128xf32>
      %187 = vector.extract_strided_slice %185 {offsets = [1, 0], sizes = [1, 128], strides = [1, 1]} : vector<2x128xf32> to vector<1x128xf32>
      %188 = tpu.reciprocal %187 {approx = true} : vector<1x128xf32> -> vector<1x128xf32>
      %189 = arith.mulf %186, %188 : vector<1x128xf32>
      %190 = vector.extract_strided_slice %125 {offsets = [0, 4], sizes = [128, 1], strides = [1, 1]} : vector<128x8xf32> to vector<128x1xf32>
      %191 = vector.extract_strided_slice %118 {offsets = [4, 0], sizes = [1, 128], strides = [1, 1]} : vector<8x128xf32> to vector<1x128xf32>
      %192 = vector.broadcast %190 : vector<128x1xf32> to vector<128x128xf32>
      %193 = vector.broadcast %191 : vector<1x128xf32> to vector<128x128xf32>
      %194 = arith.mulf %192, %193 : vector<128x128xf32>
      %195 = vector.extract_strided_slice %120 {offsets = [4, 0], sizes = [1, 128], strides = [1, 1]} : vector<8x128xf32> to vector<1x128xf32>
      %196 = vector.broadcast %195 : vector<1x128xf32> to vector<128x128xf32>
      %197 = arith.subf %194, %196 : vector<128x128xf32>
      %198 = math.exp %197 : vector<128x128xf32>
      %199 = vector.extract_strided_slice %122 {offsets = [4, 0], sizes = [1, 128], strides = [1, 1]} : vector<8x128xf32> to vector<1x128xf32>
      %200 = tpu.concatenate %199, %0 in 0 : vector<1x128xf32>, vector<1x128xf32> -> vector<2x128xf32>
      %cst_113 = arith.constant dense<0.000000e+00> : vector<2x128xf32>
      %201 = tpu.matmul %200, %198, %cst_113 {dimension_numbers = #tpu.dot_dimension_numbers<[1], [0], [0], [1], [0, 0, 1, 1], [], []>} : vector<2x128xf32>, vector<128x128xf32>, vector<2x128xf32> -> vector<2x128xf32>
      %202 = vector.extract_strided_slice %201 {offsets = [0, 0], sizes = [1, 128], strides = [1, 1]} : vector<2x128xf32> to vector<1x128xf32>
      %203 = vector.extract_strided_slice %201 {offsets = [1, 0], sizes = [1, 128], strides = [1, 1]} : vector<2x128xf32> to vector<1x128xf32>
      %204 = tpu.reciprocal %203 {approx = true} : vector<1x128xf32> -> vector<1x128xf32>
      %205 = arith.mulf %202, %204 : vector<1x128xf32>
      %206 = vector.extract_strided_slice %125 {offsets = [0, 5], sizes = [128, 1], strides = [1, 1]} : vector<128x8xf32> to vector<128x1xf32>
      %207 = vector.extract_strided_slice %118 {offsets = [5, 0], sizes = [1, 128], strides = [1, 1]} : vector<8x128xf32> to vector<1x128xf32>
      %208 = vector.broadcast %206 : vector<128x1xf32> to vector<128x128xf32>
      %209 = vector.broadcast %207 : vector<1x128xf32> to vector<128x128xf32>
      %210 = arith.mulf %208, %209 : vector<128x128xf32>
      %211 = vector.extract_strided_slice %120 {offsets = [5, 0], sizes = [1, 128], strides = [1, 1]} : vector<8x128xf32> to vector<1x128xf32>
      %212 = vector.broadcast %211 : vector<1x128xf32> to vector<128x128xf32>
      %213 = arith.subf %210, %212 : vector<128x128xf32>
      %214 = math.exp %213 : vector<128x128xf32>
      %215 = vector.extract_strided_slice %122 {offsets = [5, 0], sizes = [1, 128], strides = [1, 1]} : vector<8x128xf32> to vector<1x128xf32>
      %216 = tpu.concatenate %215, %0 in 0 : vector<1x128xf32>, vector<1x128xf32> -> vector<2x128xf32>
      %cst_114 = arith.constant dense<0.000000e+00> : vector<2x128xf32>
      %217 = tpu.matmul %216, %214, %cst_114 {dimension_numbers = #tpu.dot_dimension_numbers<[1], [0], [0], [1], [0, 0, 1, 1], [], []>} : vector<2x128xf32>, vector<128x128xf32>, vector<2x128xf32> -> vector<2x128xf32>
      %218 = vector.extract_strided_slice %217 {offsets = [0, 0], sizes = [1, 128], strides = [1, 1]} : vector<2x128xf32> to vector<1x128xf32>
      %219 = vector.extract_strided_slice %217 {offsets = [1, 0], sizes = [1, 128], strides = [1, 1]} : vector<2x128xf32> to vector<1x128xf32>
      %220 = tpu.reciprocal %219 {approx = true} : vector<1x128xf32> -> vector<1x128xf32>
      %221 = arith.mulf %218, %220 : vector<1x128xf32>
      %222 = vector.extract_strided_slice %125 {offsets = [0, 6], sizes = [128, 1], strides = [1, 1]} : vector<128x8xf32> to vector<128x1xf32>
      %223 = vector.extract_strided_slice %118 {offsets = [6, 0], sizes = [1, 128], strides = [1, 1]} : vector<8x128xf32> to vector<1x128xf32>
      %224 = vector.broadcast %222 : vector<128x1xf32> to vector<128x128xf32>
      %225 = vector.broadcast %223 : vector<1x128xf32> to vector<128x128xf32>
      %226 = arith.mulf %224, %225 : vector<128x128xf32>
      %227 = vector.extract_strided_slice %120 {offsets = [6, 0], sizes = [1, 128], strides = [1, 1]} : vector<8x128xf32> to vector<1x128xf32>
      %228 = vector.broadcast %227 : vector<1x128xf32> to vector<128x128xf32>
      %229 = arith.subf %226, %228 : vector<128x128xf32>
      %230 = math.exp %229 : vector<128x128xf32>
      %231 = vector.extract_strided_slice %122 {offsets = [6, 0], sizes = [1, 128], strides = [1, 1]} : vector<8x128xf32> to vector<1x128xf32>
      %232 = tpu.concatenate %231, %0 in 0 : vector<1x128xf32>, vector<1x128xf32> -> vector<2x128xf32>
      %cst_115 = arith.constant dense<0.000000e+00> : vector<2x128xf32>
      %233 = tpu.matmul %232, %230, %cst_115 {dimension_numbers = #tpu.dot_dimension_numbers<[1], [0], [0], [1], [0, 0, 1, 1], [], []>} : vector<2x128xf32>, vector<128x128xf32>, vector<2x128xf32> -> vector<2x128xf32>
      %234 = vector.extract_strided_slice %233 {offsets = [0, 0], sizes = [1, 128], strides = [1, 1]} : vector<2x128xf32> to vector<1x128xf32>
      %235 = vector.extract_strided_slice %233 {offsets = [1, 0], sizes = [1, 128], strides = [1, 1]} : vector<2x128xf32> to vector<1x128xf32>
      %236 = tpu.reciprocal %235 {approx = true} : vector<1x128xf32> -> vector<1x128xf32>
      %237 = arith.mulf %234, %236 : vector<1x128xf32>
      %238 = vector.extract_strided_slice %125 {offsets = [0, 7], sizes = [128, 1], strides = [1, 1]} : vector<128x8xf32> to vector<128x1xf32>
      %239 = vector.extract_strided_slice %118 {offsets = [7, 0], sizes = [1, 128], strides = [1, 1]} : vector<8x128xf32> to vector<1x128xf32>
      %240 = vector.broadcast %238 : vector<128x1xf32> to vector<128x128xf32>
      %241 = vector.broadcast %239 : vector<1x128xf32> to vector<128x128xf32>
      %242 = arith.mulf %240, %241 : vector<128x128xf32>
      %243 = vector.extract_strided_slice %120 {offsets = [7, 0], sizes = [1, 128], strides = [1, 1]} : vector<8x128xf32> to vector<1x128xf32>
      %244 = vector.broadcast %243 : vector<1x128xf32> to vector<128x128xf32>
      %245 = arith.subf %242, %244 : vector<128x128xf32>
      %246 = math.exp %245 : vector<128x128xf32>
      %247 = vector.extract_strided_slice %122 {offsets = [7, 0], sizes = [1, 128], strides = [1, 1]} : vector<8x128xf32> to vector<1x128xf32>
      %248 = tpu.concatenate %247, %0 in 0 : vector<1x128xf32>, vector<1x128xf32> -> vector<2x128xf32>
      %cst_116 = arith.constant dense<0.000000e+00> : vector<2x128xf32>
      %249 = tpu.matmul %248, %246, %cst_116 {dimension_numbers = #tpu.dot_dimension_numbers<[1], [0], [0], [1], [0, 0, 1, 1], [], []>} : vector<2x128xf32>, vector<128x128xf32>, vector<2x128xf32> -> vector<2x128xf32>
      %250 = vector.extract_strided_slice %249 {offsets = [0, 0], sizes = [1, 128], strides = [1, 1]} : vector<2x128xf32> to vector<1x128xf32>
      %251 = vector.extract_strided_slice %249 {offsets = [1, 0], sizes = [1, 128], strides = [1, 1]} : vector<2x128xf32> to vector<1x128xf32>
      %252 = tpu.reciprocal %251 {approx = true} : vector<1x128xf32> -> vector<1x128xf32>
      %253 = arith.mulf %250, %252 : vector<1x128xf32>
      %254 = tpu.concatenate %141, %157, %173, %189, %205, %221, %237, %253 in 0 : vector<1x128xf32>, vector<1x128xf32>, vector<1x128xf32>, vector<1x128xf32>, vector<1x128xf32>, vector<1x128xf32>, vector<1x128xf32>, vector<1x128xf32> -> vector<8x128xf32>
      %255 = arith.index_cast %116 : i32 to index
      %c0_117 = arith.constant 0 : index
      %256 = vector.load %arg15[%255, %c0_117] : memref<16x128xf32, #tpu.memory_space<vmem>>, vector<8x128xf32>
      tpu.vector_store %arg15[%255, %c0_117], %254 {strides = array<i32>} : memref<16x128xf32, #tpu.memory_space<vmem>>, vector<8x128xf32>,
    }
    %c2_i32_60 = arith.constant 2 : i32
    %c0_61 = arith.constant 0 : index
    %c0_62 = arith.constant 0 : index
    %71 = vector.load %arg15[%c0_61, %c0_62] : memref<16x128xf32, #tpu.memory_space<vmem>>, vector<16x128xf32>
    %c0_63 = arith.constant 0 : index
    %c0_64 = arith.constant 0 : index
    %72 = vector.load %arg8[%c0_63, %c0_64] : memref<128x128xf32, #tpu.memory_space<vmem>>, vector<128x128xf32>
    %cst_65 = arith.constant dense<0.000000e+00> : vector<16x128xf32>
    %73 = tpu.matmul %71, %72, %cst_65 {dimension_numbers = #tpu.dot_dimension_numbers<[1], [1], [0], [0], [0, 0, 1, 0], [], []>} : vector<16x128xf32>, vector<128x128xf32>, vector<16x128xf32> -> vector<16x128xf32>
    %c0_66 = arith.constant 0 : index
    %c0_67 = arith.constant 0 : index
    %74 = vector.load %arg9[%c0_66, %c0_67] : memref<1x128xf32, #tpu.memory_space<vmem>>, vector<1x128xf32>
    %75 = vector.broadcast %74 : vector<1x128xf32> to vector<16x128xf32>
    %76 = arith.addf %73, %75 : vector<16x128xf32>
    %c0_68 = arith.constant 0 : index
    %c0_69 = arith.constant 0 : index
    %77 = vector.load %arg3[%c0_68, %c0_69] : memref<16x128xf32, #tpu.memory_space<vmem>>, vector<16x128xf32>
    %c0_70 = arith.constant 0 : index
    %c0_71 = arith.constant 0 : index
    %78 = vector.load %arg4[%c0_70, %c0_71] : memref<128x128xf32, #tpu.memory_space<vmem>>, vector<128x128xf32>
    %cst_72 = arith.constant dense<0.000000e+00> : vector<16x128xf32>
    %79 = tpu.matmul %76, %78, %cst_72 {dimension_numbers = #tpu.dot_dimension_numbers<[1], [1], [0], [0], [0, 0, 1, 0], [], []>} : vector<16x128xf32>, vector<128x128xf32>, vector<16x128xf32> -> vector<16x128xf32>
    %c0_73 = arith.constant 0 : index
    %c0_74 = arith.constant 0 : index
    %80 = vector.load %arg5[%c0_73, %c0_74] : memref<1x128xf32, #tpu.memory_space<vmem>>, vector<1x128xf32>
    %81 = vector.broadcast %80 : vector<1x128xf32> to vector<16x128xf32>
    %82 = arith.addf %79, %81 : vector<16x128xf32>
    %c0_75 = arith.constant 0 : index
    %c0_76 = arith.constant 0 : index
    %83 = vector.load %arg6[%c0_75, %c0_76] : memref<256x128xf32, #tpu.memory_space<vmem>>, vector<256x128xf32>
    %cst_77 = arith.constant dense<0.000000e+00> : vector<16x256xf32>
    %84 = tpu.matmul %77, %83, %cst_77 {dimension_numbers = #tpu.dot_dimension_numbers<[1], [1], [0], [0], [0, 0, 1, 0], [], []>} : vector<16x128xf32>, vector<256x128xf32>, vector<16x256xf32> -> vector<16x256xf32>
    %c0_78 = arith.constant 0 : index
    %c0_79 = arith.constant 0 : index
    %85 = vector.load %arg7[%c0_78, %c0_79] : memref<1x256xf32, #tpu.memory_space<vmem>>, vector<1x256xf32>
    %86 = vector.broadcast %85 : vector<1x256xf32> to vector<16x256xf32>
    %87 = arith.addf %84, %86 : vector<16x256xf32>
    %88 = vector.extract_strided_slice %87 {offsets = [0, 0], sizes = [16, 128], strides = [1, 1]} : vector<16x256xf32> to vector<16x128xf32>
    %cst_80 = arith.constant 0.0883883461 : f32
    %89 = vector.broadcast %cst_80 : f32 to vector<16x128xf32>
    %90 = arith.mulf %88, %89 : vector<16x128xf32>
    %91 = vector.extract_strided_slice %87 {offsets = [0, 128], sizes = [16, 128], strides = [1, 1]} : vector<16x256xf32> to vector<16x128xf32>
    %cst_81 = arith.constant dense<0xFF800000> : vector<16xf32>
    %92 = vector.multi_reduction <maximumf>, %90, %cst_81 [1] : vector<16x128xf32> to vector<16xf32>
    %93 = vector.shape_cast %92 : vector<16xf32> to vector<16x1xf32>
    %cst_82 = arith.constant dense<0x7F800000> : vector<16xf32>
    %94 = vector.multi_reduction <minimumf>, %90, %cst_82 [1] : vector<16x128xf32> to vector<16xf32>
    %95 = vector.shape_cast %94 : vector<16xf32> to vector<16x1xf32>
    %cst_83 = arith.constant 0.000000e+00 : f32
    %96 = vector.broadcast %cst_83 : f32 to vector<16x128xf32>
    %97 = arith.cmpf oge, %82, %96 : vector<16x128xf32>
    %98 = vector.broadcast %93 : vector<16x1xf32> to vector<16x128xf32>
    %99 = arith.mulf %82, %98 : vector<16x128xf32>
    %100 = vector.broadcast %95 : vector<16x1xf32> to vector<16x128xf32>
    %101 = arith.mulf %82, %100 : vector<16x128xf32>
    %102 = arith.select %97, %99, %101 : vector<16x128xi1>, vector<16x128xf32>
    %c0_84 = arith.constant 0 : index
    %c0_85 = arith.constant 0 : index
    %103 = vector.load %arg11[%c0_84, %c0_85] : memref<16x128xf32, #tpu.memory_space<vmem>>, vector<16x128xf32>
    tpu.vector_store %arg11[%c0_84, %c0_85], %82 {strides = array<i32>} : memref<16x128xf32, #tpu.memory_space<vmem>>, vector<16x128xf32>,
    %c0_86 = arith.constant 0 : index
    %c0_87 = arith.constant 0 : index
    %104 = vector.load %arg12[%c0_86, %c0_87] : memref<16x128xf32, #tpu.memory_space<vmem>>, vector<16x128xf32>
    tpu.vector_store %arg12[%c0_86, %c0_87], %90 {strides = array<i32>} : memref<16x128xf32, #tpu.memory_space<vmem>>, vector<16x128xf32>,
    %c0_88 = arith.constant 0 : index
    %c0_89 = arith.constant 0 : index
    %105 = vector.load %arg13[%c0_88, %c0_89] : memref<16x128xf32, #tpu.memory_space<vmem>>, vector<16x128xf32>
    tpu.vector_store %arg13[%c0_88, %c0_89], %102 {strides = array<i32>} : memref<16x128xf32, #tpu.memory_space<vmem>>, vector<16x128xf32>,
    %c0_90 = arith.constant 0 : index
    %c0_91 = arith.constant 0 : index
    %106 = vector.load %arg14[%c0_90, %c0_91] : memref<16x128xf32, #tpu.memory_space<vmem>>, vector<16x128xf32>
    tpu.vector_store %arg14[%c0_90, %c0_91], %91 {strides = array<i32>} : memref<16x128xf32, #tpu.memory_space<vmem>>, vector<16x128xf32>,
    %c0_i32_92 = arith.constant 0 : i32
    %c2_i32_93 = arith.constant 2 : i32
    %107 = arith.addi %c0_i32_92, %c2_i32_93 : i32
    %c1_i32_94 = arith.constant 1 : i32
    scf.for %arg16 = %c0_i32_92 to %107 step %c1_i32_94  : i32 {
      %c8_i32 = arith.constant 8 : i32
      %115 = arith.muli %arg16, %c8_i32 : i32
      %116 = tpu.assume_multiple %115, 8 : i32
      %117 = arith.index_cast %116 : i32 to index
      %c0_105 = arith.constant 0 : index
      %118 = vector.load %arg11[%117, %c0_105] : memref<16x128xf32, #tpu.memory_space<vmem>>, vector<8x128xf32>
      %119 = arith.index_cast %116 : i32 to index
      %c0_106 = arith.constant 0 : index
      %120 = vector.load %arg13[%119, %c0_106] : memref<16x128xf32, #tpu.memory_space<vmem>>, vector<8x128xf32>
      %121 = arith.index_cast %116 : i32 to index
      %c0_107 = arith.constant 0 : index
      %122 = vector.load %arg14[%121, %c0_107] : memref<16x128xf32, #tpu.memory_space<vmem>>, vector<8x128xf32>
      %123 = arith.index_cast %116 : i32 to index
      %c0_108 = arith.constant 0 : index
      %124 = vector.load %arg12[%123, %c0_108] : memref<16x128xf32, #tpu.memory_space<vmem>>, vector<8x128xf32>
      %125 = tpu.transpose %124, [1, 0] : vector<8x128xf32> -> vector<128x8xf32>
      %126 = vector.extract_strided_slice %125 {offsets = [0, 0], sizes = [128, 1], strides = [1, 1]} : vector<128x8xf32> to vector<128x1xf32>
      %127 = vector.extract_strided_slice %118 {offsets = [0, 0], sizes = [1, 128], strides = [1, 1]} : vector<8x128xf32> to vector<1x128xf32>
      %128 = vector.broadcast %126 : vector<128x1xf32> to vector<128x128xf32>
      %129 = vector.broadcast %127 : vector<1x128xf32> to vector<128x128xf32>
      %130 = arith.mulf %128, %129 : vector<128x128xf32>
      %131 = vector.extract_strided_slice %120 {offsets = [0, 0], sizes = [1, 128], strides = [1, 1]} : vector<8x128xf32> to vector<1x128xf32>
      %132 = vector.broadcast %131 : vector<1x128xf32> to vector<128x128xf32>
      %133 = arith.subf %130, %132 : vector<128x128xf32>
      %134 = math.exp %133 : vector<128x128xf32>
      %135 = vector.extract_strided_slice %122 {offsets = [0, 0], sizes = [1, 128], strides = [1, 1]} : vector<8x128xf32> to vector<1x128xf32>
      %136 = tpu.concatenate %135, %0 in 0 : vector<1x128xf32>, vector<1x128xf32> -> vector<2x128xf32>
      %cst_109 = arith.constant dense<0.000000e+00> : vector<2x128xf32>
      %137 = tpu.matmul %136, %134, %cst_109 {dimension_numbers = #tpu.dot_dimension_numbers<[1], [0], [0], [1], [0, 0, 1, 1], [], []>} : vector<2x128xf32>, vector<128x128xf32>, vector<2x128xf32> -> vector<2x128xf32>
      %138 = vector.extract_strided_slice %137 {offsets = [0, 0], sizes = [1, 128], strides = [1, 1]} : vector<2x128xf32> to vector<1x128xf32>
      %139 = vector.extract_strided_slice %137 {offsets = [1, 0], sizes = [1, 128], strides = [1, 1]} : vector<2x128xf32> to vector<1x128xf32>
      %140 = tpu.reciprocal %139 {approx = true} : vector<1x128xf32> -> vector<1x128xf32>
      %141 = arith.mulf %138, %140 : vector<1x128xf32>
      %142 = vector.extract_strided_slice %125 {offsets = [0, 1], sizes = [128, 1], strides = [1, 1]} : vector<128x8xf32> to vector<128x1xf32>
      %143 = vector.extract_strided_slice %118 {offsets = [1, 0], sizes = [1, 128], strides = [1, 1]} : vector<8x128xf32> to vector<1x128xf32>
      %144 = vector.broadcast %142 : vector<128x1xf32> to vector<128x128xf32>
      %145 = vector.broadcast %143 : vector<1x128xf32> to vector<128x128xf32>
      %146 = arith.mulf %144, %145 : vector<128x128xf32>
      %147 = vector.extract_strided_slice %120 {offsets = [1, 0], sizes = [1, 128], strides = [1, 1]} : vector<8x128xf32> to vector<1x128xf32>
      %148 = vector.broadcast %147 : vector<1x128xf32> to vector<128x128xf32>
      %149 = arith.subf %146, %148 : vector<128x128xf32>
      %150 = math.exp %149 : vector<128x128xf32>
      %151 = vector.extract_strided_slice %122 {offsets = [1, 0], sizes = [1, 128], strides = [1, 1]} : vector<8x128xf32> to vector<1x128xf32>
      %152 = tpu.concatenate %151, %0 in 0 : vector<1x128xf32>, vector<1x128xf32> -> vector<2x128xf32>
      %cst_110 = arith.constant dense<0.000000e+00> : vector<2x128xf32>
      %153 = tpu.matmul %152, %150, %cst_110 {dimension_numbers = #tpu.dot_dimension_numbers<[1], [0], [0], [1], [0, 0, 1, 1], [], []>} : vector<2x128xf32>, vector<128x128xf32>, vector<2x128xf32> -> vector<2x128xf32>
      %154 = vector.extract_strided_slice %153 {offsets = [0, 0], sizes = [1, 128], strides = [1, 1]} : vector<2x128xf32> to vector<1x128xf32>
      %155 = vector.extract_strided_slice %153 {offsets = [1, 0], sizes = [1, 128], strides = [1, 1]} : vector<2x128xf32> to vector<1x128xf32>
      %156 = tpu.reciprocal %155 {approx = true} : vector<1x128xf32> -> vector<1x128xf32>
      %157 = arith.mulf %154, %156 : vector<1x128xf32>
      %158 = vector.extract_strided_slice %125 {offsets = [0, 2], sizes = [128, 1], strides = [1, 1]} : vector<128x8xf32> to vector<128x1xf32>
      %159 = vector.extract_strided_slice %118 {offsets = [2, 0], sizes = [1, 128], strides = [1, 1]} : vector<8x128xf32> to vector<1x128xf32>
      %160 = vector.broadcast %158 : vector<128x1xf32> to vector<128x128xf32>
      %161 = vector.broadcast %159 : vector<1x128xf32> to vector<128x128xf32>
      %162 = arith.mulf %160, %161 : vector<128x128xf32>
      %163 = vector.extract_strided_slice %120 {offsets = [2, 0], sizes = [1, 128], strides = [1, 1]} : vector<8x128xf32> to vector<1x128xf32>
      %164 = vector.broadcast %163 : vector<1x128xf32> to vector<128x128xf32>
      %165 = arith.subf %162, %164 : vector<128x128xf32>
      %166 = math.exp %165 : vector<128x128xf32>
      %167 = vector.extract_strided_slice %122 {offsets = [2, 0], sizes = [1, 128], strides = [1, 1]} : vector<8x128xf32> to vector<1x128xf32>
      %168 = tpu.concatenate %167, %0 in 0 : vector<1x128xf32>, vector<1x128xf32> -> vector<2x128xf32>
      %cst_111 = arith.constant dense<0.000000e+00> : vector<2x128xf32>
      %169 = tpu.matmul %168, %166, %cst_111 {dimension_numbers = #tpu.dot_dimension_numbers<[1], [0], [0], [1], [0, 0, 1, 1], [], []>} : vector<2x128xf32>, vector<128x128xf32>, vector<2x128xf32> -> vector<2x128xf32>
      %170 = vector.extract_strided_slice %169 {offsets = [0, 0], sizes = [1, 128], strides = [1, 1]} : vector<2x128xf32> to vector<1x128xf32>
      %171 = vector.extract_strided_slice %169 {offsets = [1, 0], sizes = [1, 128], strides = [1, 1]} : vector<2x128xf32> to vector<1x128xf32>
      %172 = tpu.reciprocal %171 {approx = true} : vector<1x128xf32> -> vector<1x128xf32>
      %173 = arith.mulf %170, %172 : vector<1x128xf32>
      %174 = vector.extract_strided_slice %125 {offsets = [0, 3], sizes = [128, 1], strides = [1, 1]} : vector<128x8xf32> to vector<128x1xf32>
      %175 = vector.extract_strided_slice %118 {offsets = [3, 0], sizes = [1, 128], strides = [1, 1]} : vector<8x128xf32> to vector<1x128xf32>
      %176 = vector.broadcast %174 : vector<128x1xf32> to vector<128x128xf32>
      %177 = vector.broadcast %175 : vector<1x128xf32> to vector<128x128xf32>
      %178 = arith.mulf %176, %177 : vector<128x128xf32>
      %179 = vector.extract_strided_slice %120 {offsets = [3, 0], sizes = [1, 128], strides = [1, 1]} : vector<8x128xf32> to vector<1x128xf32>
      %180 = vector.broadcast %179 : vector<1x128xf32> to vector<128x128xf32>
      %181 = arith.subf %178, %180 : vector<128x128xf32>
      %182 = math.exp %181 : vector<128x128xf32>
      %183 = vector.extract_strided_slice %122 {offsets = [3, 0], sizes = [1, 128], strides = [1, 1]} : vector<8x128xf32> to vector<1x128xf32>
      %184 = tpu.concatenate %183, %0 in 0 : vector<1x128xf32>, vector<1x128xf32> -> vector<2x128xf32>
      %cst_112 = arith.constant dense<0.000000e+00> : vector<2x128xf32>
      %185 = tpu.matmul %184, %182, %cst_112 {dimension_numbers = #tpu.dot_dimension_numbers<[1], [0], [0], [1], [0, 0, 1, 1], [], []>} : vector<2x128xf32>, vector<128x128xf32>, vector<2x128xf32> -> vector<2x128xf32>
      %186 = vector.extract_strided_slice %185 {offsets = [0, 0], sizes = [1, 128], strides = [1, 1]} : vector<2x128xf32> to vector<1x128xf32>
      %187 = vector.extract_strided_slice %185 {offsets = [1, 0], sizes = [1, 128], strides = [1, 1]} : vector<2x128xf32> to vector<1x128xf32>
      %188 = tpu.reciprocal %187 {approx = true} : vector<1x128xf32> -> vector<1x128xf32>
      %189 = arith.mulf %186, %188 : vector<1x128xf32>
      %190 = vector.extract_strided_slice %125 {offsets = [0, 4], sizes = [128, 1], strides = [1, 1]} : vector<128x8xf32> to vector<128x1xf32>
      %191 = vector.extract_strided_slice %118 {offsets = [4, 0], sizes = [1, 128], strides = [1, 1]} : vector<8x128xf32> to vector<1x128xf32>
      %192 = vector.broadcast %190 : vector<128x1xf32> to vector<128x128xf32>
      %193 = vector.broadcast %191 : vector<1x128xf32> to vector<128x128xf32>
      %194 = arith.mulf %192, %193 : vector<128x128xf32>
      %195 = vector.extract_strided_slice %120 {offsets = [4, 0], sizes = [1, 128], strides = [1, 1]} : vector<8x128xf32> to vector<1x128xf32>
      %196 = vector.broadcast %195 : vector<1x128xf32> to vector<128x128xf32>
      %197 = arith.subf %194, %196 : vector<128x128xf32>
      %198 = math.exp %197 : vector<128x128xf32>
      %199 = vector.extract_strided_slice %122 {offsets = [4, 0], sizes = [1, 128], strides = [1, 1]} : vector<8x128xf32> to vector<1x128xf32>
      %200 = tpu.concatenate %199, %0 in 0 : vector<1x128xf32>, vector<1x128xf32> -> vector<2x128xf32>
      %cst_113 = arith.constant dense<0.000000e+00> : vector<2x128xf32>
      %201 = tpu.matmul %200, %198, %cst_113 {dimension_numbers = #tpu.dot_dimension_numbers<[1], [0], [0], [1], [0, 0, 1, 1], [], []>} : vector<2x128xf32>, vector<128x128xf32>, vector<2x128xf32> -> vector<2x128xf32>
      %202 = vector.extract_strided_slice %201 {offsets = [0, 0], sizes = [1, 128], strides = [1, 1]} : vector<2x128xf32> to vector<1x128xf32>
      %203 = vector.extract_strided_slice %201 {offsets = [1, 0], sizes = [1, 128], strides = [1, 1]} : vector<2x128xf32> to vector<1x128xf32>
      %204 = tpu.reciprocal %203 {approx = true} : vector<1x128xf32> -> vector<1x128xf32>
      %205 = arith.mulf %202, %204 : vector<1x128xf32>
      %206 = vector.extract_strided_slice %125 {offsets = [0, 5], sizes = [128, 1], strides = [1, 1]} : vector<128x8xf32> to vector<128x1xf32>
      %207 = vector.extract_strided_slice %118 {offsets = [5, 0], sizes = [1, 128], strides = [1, 1]} : vector<8x128xf32> to vector<1x128xf32>
      %208 = vector.broadcast %206 : vector<128x1xf32> to vector<128x128xf32>
      %209 = vector.broadcast %207 : vector<1x128xf32> to vector<128x128xf32>
      %210 = arith.mulf %208, %209 : vector<128x128xf32>
      %211 = vector.extract_strided_slice %120 {offsets = [5, 0], sizes = [1, 128], strides = [1, 1]} : vector<8x128xf32> to vector<1x128xf32>
      %212 = vector.broadcast %211 : vector<1x128xf32> to vector<128x128xf32>
      %213 = arith.subf %210, %212 : vector<128x128xf32>
      %214 = math.exp %213 : vector<128x128xf32>
      %215 = vector.extract_strided_slice %122 {offsets = [5, 0], sizes = [1, 128], strides = [1, 1]} : vector<8x128xf32> to vector<1x128xf32>
      %216 = tpu.concatenate %215, %0 in 0 : vector<1x128xf32>, vector<1x128xf32> -> vector<2x128xf32>
      %cst_114 = arith.constant dense<0.000000e+00> : vector<2x128xf32>
      %217 = tpu.matmul %216, %214, %cst_114 {dimension_numbers = #tpu.dot_dimension_numbers<[1], [0], [0], [1], [0, 0, 1, 1], [], []>} : vector<2x128xf32>, vector<128x128xf32>, vector<2x128xf32> -> vector<2x128xf32>
      %218 = vector.extract_strided_slice %217 {offsets = [0, 0], sizes = [1, 128], strides = [1, 1]} : vector<2x128xf32> to vector<1x128xf32>
      %219 = vector.extract_strided_slice %217 {offsets = [1, 0], sizes = [1, 128], strides = [1, 1]} : vector<2x128xf32> to vector<1x128xf32>
      %220 = tpu.reciprocal %219 {approx = true} : vector<1x128xf32> -> vector<1x128xf32>
      %221 = arith.mulf %218, %220 : vector<1x128xf32>
      %222 = vector.extract_strided_slice %125 {offsets = [0, 6], sizes = [128, 1], strides = [1, 1]} : vector<128x8xf32> to vector<128x1xf32>
      %223 = vector.extract_strided_slice %118 {offsets = [6, 0], sizes = [1, 128], strides = [1, 1]} : vector<8x128xf32> to vector<1x128xf32>
      %224 = vector.broadcast %222 : vector<128x1xf32> to vector<128x128xf32>
      %225 = vector.broadcast %223 : vector<1x128xf32> to vector<128x128xf32>
      %226 = arith.mulf %224, %225 : vector<128x128xf32>
      %227 = vector.extract_strided_slice %120 {offsets = [6, 0], sizes = [1, 128], strides = [1, 1]} : vector<8x128xf32> to vector<1x128xf32>
      %228 = vector.broadcast %227 : vector<1x128xf32> to vector<128x128xf32>
      %229 = arith.subf %226, %228 : vector<128x128xf32>
      %230 = math.exp %229 : vector<128x128xf32>
      %231 = vector.extract_strided_slice %122 {offsets = [6, 0], sizes = [1, 128], strides = [1, 1]} : vector<8x128xf32> to vector<1x128xf32>
      %232 = tpu.concatenate %231, %0 in 0 : vector<1x128xf32>, vector<1x128xf32> -> vector<2x128xf32>
      %cst_115 = arith.constant dense<0.000000e+00> : vector<2x128xf32>
      %233 = tpu.matmul %232, %230, %cst_115 {dimension_numbers = #tpu.dot_dimension_numbers<[1], [0], [0], [1], [0, 0, 1, 1], [], []>} : vector<2x128xf32>, vector<128x128xf32>, vector<2x128xf32> -> vector<2x128xf32>
      %234 = vector.extract_strided_slice %233 {offsets = [0, 0], sizes = [1, 128], strides = [1, 1]} : vector<2x128xf32> to vector<1x128xf32>
      %235 = vector.extract_strided_slice %233 {offsets = [1, 0], sizes = [1, 128], strides = [1, 1]} : vector<2x128xf32> to vector<1x128xf32>
      %236 = tpu.reciprocal %235 {approx = true} : vector<1x128xf32> -> vector<1x128xf32>
      %237 = arith.mulf %234, %236 : vector<1x128xf32>
      %238 = vector.extract_strided_slice %125 {offsets = [0, 7], sizes = [128, 1], strides = [1, 1]} : vector<128x8xf32> to vector<128x1xf32>
      %239 = vector.extract_strided_slice %118 {offsets = [7, 0], sizes = [1, 128], strides = [1, 1]} : vector<8x128xf32> to vector<1x128xf32>
      %240 = vector.broadcast %238 : vector<128x1xf32> to vector<128x128xf32>
      %241 = vector.broadcast %239 : vector<1x128xf32> to vector<128x128xf32>
      %242 = arith.mulf %240, %241 : vector<128x128xf32>
      %243 = vector.extract_strided_slice %120 {offsets = [7, 0], sizes = [1, 128], strides = [1, 1]} : vector<8x128xf32> to vector<1x128xf32>
      %244 = vector.broadcast %243 : vector<1x128xf32> to vector<128x128xf32>
      %245 = arith.subf %242, %244 : vector<128x128xf32>
      %246 = math.exp %245 : vector<128x128xf32>
      %247 = vector.extract_strided_slice %122 {offsets = [7, 0], sizes = [1, 128], strides = [1, 1]} : vector<8x128xf32> to vector<1x128xf32>
      %248 = tpu.concatenate %247, %0 in 0 : vector<1x128xf32>, vector<1x128xf32> -> vector<2x128xf32>
      %cst_116 = arith.constant dense<0.000000e+00> : vector<2x128xf32>
      %249 = tpu.matmul %248, %246, %cst_116 {dimension_numbers = #tpu.dot_dimension_numbers<[1], [0], [0], [1], [0, 0, 1, 1], [], []>} : vector<2x128xf32>, vector<128x128xf32>, vector<2x128xf32> -> vector<2x128xf32>
      %250 = vector.extract_strided_slice %249 {offsets = [0, 0], sizes = [1, 128], strides = [1, 1]} : vector<2x128xf32> to vector<1x128xf32>
      %251 = vector.extract_strided_slice %249 {offsets = [1, 0], sizes = [1, 128], strides = [1, 1]} : vector<2x128xf32> to vector<1x128xf32>
      %252 = tpu.reciprocal %251 {approx = true} : vector<1x128xf32> -> vector<1x128xf32>
      %253 = arith.mulf %250, %252 : vector<1x128xf32>
      %254 = tpu.concatenate %141, %157, %173, %189, %205, %221, %237, %253 in 0 : vector<1x128xf32>, vector<1x128xf32>, vector<1x128xf32>, vector<1x128xf32>, vector<1x128xf32>, vector<1x128xf32>, vector<1x128xf32>, vector<1x128xf32> -> vector<8x128xf32>
      %255 = arith.index_cast %116 : i32 to index
      %c0_117 = arith.constant 0 : index
      %256 = vector.load %arg15[%255, %c0_117] : memref<16x128xf32, #tpu.memory_space<vmem>>, vector<8x128xf32>
      tpu.vector_store %arg15[%255, %c0_117], %254 {strides = array<i32>} : memref<16x128xf32, #tpu.memory_space<vmem>>, vector<8x128xf32>,
    }
    %c2_i32_95 = arith.constant 2 : i32
    %c0_96 = arith.constant 0 : index
    %c0_97 = arith.constant 0 : index
    %108 = vector.load %arg15[%c0_96, %c0_97] : memref<16x128xf32, #tpu.memory_space<vmem>>, vector<16x128xf32>
    %c0_98 = arith.constant 0 : index
    %c0_99 = arith.constant 0 : index
    %109 = vector.load %arg8[%c0_98, %c0_99] : memref<128x128xf32, #tpu.memory_space<vmem>>, vector<128x128xf32>
    %cst_100 = arith.constant dense<0.000000e+00> : vector<16x128xf32>
    %110 = tpu.matmul %108, %109, %cst_100 {dimension_numbers = #tpu.dot_dimension_numbers<[1], [1], [0], [0], [0, 0, 1, 0], [], []>} : vector<16x128xf32>, vector<128x128xf32>, vector<16x128xf32> -> vector<16x128xf32>
    %c0_101 = arith.constant 0 : index
    %c0_102 = arith.constant 0 : index
    %111 = vector.load %arg9[%c0_101, %c0_102] : memref<1x128xf32, #tpu.memory_space<vmem>>, vector<1x128xf32>
    %112 = vector.broadcast %111 : vector<1x128xf32> to vector<16x128xf32>
    %113 = arith.addf %110, %112 : vector<16x128xf32>
    %c0_103 = arith.constant 0 : index
    %c0_104 = arith.constant 0 : index
    %114 = vector.load %arg10[%c0_103, %c0_104] : memref<16x128xf32, #tpu.memory_space<vmem>>, vector<16x128xf32>
    tpu.vector_store %arg10[%c0_103, %c0_104], %113 {strides = array<i32>} : memref<16x128xf32, #tpu.memory_space<vmem>>, vector<16x128xf32>,
    return
  }
  func.func @transform_0(%arg0: i32) -> (i32, i32) {
    %c0_i32 = arith.constant 0 : i32
    %c0_i32_0 = arith.constant 0 : i32
    return %arg0, %c0_i32 : i32, i32
  }
  func.func @transform_1(%arg0: i32) -> (i32, i32) {
    %c0_i32 = arith.constant 0 : i32
    %c0_i32_0 = arith.constant 0 : i32
    return %arg0, %c0_i32 : i32, i32
  }
  func.func @transform_2(%arg0: i32) -> (i32, i32) {
    %c0_i32 = arith.constant 0 : i32
    %c0_i32_0 = arith.constant 0 : i32
    return %arg0, %c0_i32 : i32, i32
  }
  func.func @transform_3(%arg0: i32) -> (i32, i32) {
    %c0_i32 = arith.constant 0 : i32
    %c0_i32_0 = arith.constant 0 : i32
    %c0_i32_1 = arith.constant 0 : i32
    return %c0_i32, %c0_i32_0 : i32, i32
  }
  func.func @transform_4(%arg0: i32) -> (i32, i32) {
    %c0_i32 = arith.constant 0 : i32
    %c0_i32_0 = arith.constant 0 : i32
    %c0_i32_1 = arith.constant 0 : i32
    return %c0_i32, %c0_i32_0 : i32, i32
  }
  func.func @transform_5(%arg0: i32) -> (i32, i32) {
    %c0_i32 = arith.constant 0 : i32
    %c0_i32_0 = arith.constant 0 : i32
    %c0_i32_1 = arith.constant 0 : i32
    return %c0_i32, %c0_i32_0 : i32, i32
  }
  func.func @transform_6(%arg0: i32) -> (i32, i32) {
    %c0_i32 = arith.constant 0 : i32
    %c0_i32_0 = arith.constant 0 : i32
    %c0_i32_1 = arith.constant 0 : i32
    return %c0_i32, %c0_i32_0 : i32, i32
  }
  func.func @transform_7(%arg0: i32) -> (i32, i32) {
    %c0_i32 = arith.constant 0 : i32
    %c0_i32_0 = arith.constant 0 : i32
    %c0_i32_1 = arith.constant 0 : i32
    return %c0_i32, %c0_i32_0 : i32, i32
  }
  func.func @transform_8(%arg0: i32) -> (i32, i32) {
    %c0_i32 = arith.constant 0 : i32
    %c0_i32_0 = arith.constant 0 : i32
    %c0_i32_1 = arith.constant 0 : i32
    return %c0_i32, %c0_i32_0 : i32, i32
  }
  func.func @transform_9(%arg0: i32) -> (i32, i32) {
    %c0_i32 = arith.constant 0 : i32
    %c0_i32_0 = arith.constant 0 : i32
    return %arg0, %c0_i32 : i32, i32
  }
}

</mosaic_0001>

<llo_original>
// kernel: tpu_custom_call.1
$region0: #{tpu_custom_call.1}
  #allocation0 [shape = 'u32[]', space=smem, size = 0x4, offset = 0x4, fixed_abs, tag = 'smem constant byte address 0x4 - core index']
  #allocation1 [shape = 'u32[144,128]{1,0:T(1,128)}', space=vmem, size = 0x12000, scoped, tag = 'internal scratch']
  #allocation2 [shape = 'f32[16,128]{1,0:T(8,128)}', space=vmem, size = 0x2000, scoped, tag = 'scratch operand']
  #allocation3 [shape = 'f32[16,128]{1,0:T(8,128)}', space=vmem, size = 0x2000, scoped, tag = 'scratch operand']
  #allocation4 [shape = 'f32[16,128]{1,0:T(8,128)}', space=vmem, size = 0x2000, scoped, tag = 'scratch operand']
  #allocation5 [shape = 'f32[16,128]{1,0:T(8,128)}', space=vmem, size = 0x2000, scoped, tag = 'scratch operand']
  #allocation6 [shape = 'f32[16,128]{1,0:T(8,128)}', space=vmem, size = 0x2000, scoped, tag = 'scratch operand']
  %s0 = inlined_call_operand.hbm [shape: f32[48,128], index: 0, kind: input, shape index: {}]
  %s1 = inlined_call_operand.hbm [shape: f32[48,128], index: 1, kind: input, shape index: {}]
  %s2 = inlined_call_operand.hbm [shape: f32[48,128], index: 2, kind: input, shape index: {}]
  %s3 = inlined_call_operand.hbm [shape: f32[128,128], index: 3, kind: input, shape index: {}]
  %s4 = inlined_call_operand.vmem [shape: f32[1,128], index: 4, kind: input, shape index: {}]
  %s5 = inlined_call_operand.hbm [shape: f32[256,128], index: 5, kind: input, shape index: {}]
  %s6 = inlined_call_operand.vmem [shape: f32[1,256], index: 6, kind: input, shape index: {}]
  %s7 = inlined_call_operand.hbm [shape: f32[128,128], index: 7, kind: input, shape index: {}]
  %s8 = inlined_call_operand.vmem [shape: f32[1,128], index: 8, kind: input, shape index: {}]
  %s9 = inlined_call_operand.hbm [shape: f32[48,128], index: 9, kind: output, shape index: {}]
  %s10 = sld [smem:[#allocation0]]
  $region114: #{tpu_custom_call.1} parent=0
    _
  %s12 = ssub.s32 1, %s10
  %s13 = scalar_select 0, %s12, %s10
  $region1: #{tpu_custom_call.1} parent=0
    #allocation7 [shape = 'u8[16384]{0}', space=vmem, size = 0x4000, scoped, tag = 'input window, operand 0']
    #allocation8 [shape = 's32[2]{0}', space=sflag, size = 0x8, scoped, tag = 'scoped memory for tpu_custom_call.1']
    #allocation9 [shape = 's32[2]{0}', space=sflag, size = 0x8, scoped, tag = 'scoped memory for tpu_custom_call.1']
    #allocation10 [shape = 'u8[16384]{0}', space=vmem, size = 0x4000, scoped, tag = 'input window, operand 1']
    #allocation11 [shape = 's32[2]{0}', space=sflag, size = 0x8, scoped, tag = 'scoped memory for tpu_custom_call.1']
    #allocation12 [shape = 'u8[16384]{0}', space=vmem, size = 0x4000, scoped, tag = 'input window, operand 2']
    #allocation13 [shape = 'u8[65536]{0}', space=vmem, size = 0x10000, scoped, tag = 'input window, operand 3, single buffered']
    #allocation14 [shape = 's32[1]{0}', space=sflag, size = 0x4, scoped, tag = 'scoped memory for tpu_custom_call.1']
    #allocation15 [shape = 'u8[131072]{0}', space=vmem, size = 0x20000, scoped, tag = 'input window, operand 5, single buffered']
    #allocation16 [shape = 'u8[65536]{0}', space=vmem, size = 0x10000, scoped, tag = 'input window, operand 7, single buffered']
    #allocation17 [shape = 's32[1]{0}', space=sflag, size = 0x4, scoped, tag = 'scoped memory for tpu_custom_call.1']
    #allocation18 [shape = 'u8[16384]{0}', space=vmem, size = 0x4000, scoped, tag = 'output window, operand 0']
    %14 = vsyncpa [#allocation8], 0
    %s15 = scalar_lea.sflag [#allocation8], 1
    %16 = vsyncpa %s15, 0
    %17 = vsyncpa [#allocation11], 0
    %s18 = scalar_lea.sflag [#allocation11], 1
    %19 = vsyncpa %s18, 0
    %20 = vsyncpa [#allocation14], 0
    %21 = vsyncpa [#allocation17], 0
    %22 = vsyncpa [#allocation9], 0
    %s23 = scalar_lea.sflag [#allocation9], 1
    %24 = vsyncpa %s23, 0
    loop: start=0, step=1, limit=5
    $region2: #{tpu_custom_call.1} parent=1 // loop_pre_header
      _
    $region3: #{tpu_custom_call.1} parent=1 // loop_header
      %s26 = sphi 0, %s30
      %p27 = scmp.ge.s32.totalorder %s26, 5
      %s36 = sphi 0, %s38
      %s39 = sphi 0, %s36
      %s40 = sphi 0, %s39
      %s56 = sphi 0, %s40
      %s62 = sphi 0, %s64
      %s65 = sphi 0, %s62
      %s66 = sphi 0, %s65
      %s82 = sphi 0, %s66
      %s88 = sphi 0, %s90
      %s91 = sphi 0, %s88
      %s92 = sphi 0, %s91
      %s108 = sphi 0, %s92
      %s112 = sphi 0, %s112
      %s114 = sphi 0, %s112
      %s115 = sphi 0, %s114
      %s129 = sphi 0, %s115
      %s133 = sphi 0, %s133
      %s135 = sphi 0, %s133
      %s136 = sphi 0, %s135
      %s150 = sphi 0, %s136
      %s154 = sphi 0, %s154
      %s156 = sphi 0, %s154
      %s157 = sphi 0, %s156
      %s171 = sphi 0, %s157
      %s175 = sphi 0, %s175
      %s177 = sphi 0, %s175
      %s178 = sphi 0, %s177
      %s192 = sphi 0, %s178
      %s196 = sphi 0, %s196
      %s198 = sphi 0, %s196
      %s199 = sphi 0, %s198
      %s213 = sphi 0, %s199
      %s217 = sphi 0, %s217
      %s219 = sphi 0, %s217
      %s220 = sphi 0, %s219
      %s234 = sphi 0, %s220
      %s240 = sphi 0, %s242
      %s243 = sphi 0, %s240
      %s244 = sphi 0, %s243
      %s260 = sphi 0, %s244
    $region4: #{tpu_custom_call.1} parent=1 // loop_header_branch
      %29 = sbr.rel (%p27) target = $region8
    $region5: #{tpu_custom_call.1} parent=1 // loop_body
      %s31 = ssub.s32 %s26, 1
      %s32 = ssub.s32 %s26, 2
      %s33 = sadd.s32 %s26, 1
      %s34 = ssub.s32 %s26, %s33
      %p35 = scmp.eq.s32.totalorder %s34, 0
      %s37 = sadd.s32 %s36, 1
      %s38 = scalar_select %p35, %s36, %s37
      %p41 = pneg %p35
      %p42 = scmp.eq.s32.totalorder %s26, 2
      %p43 = por %p41, %p42
      %p44 = scmp.ne.s32.totalorder %s36, %s39
      %p45 = scmp.eq.s32.totalorder %s26, 0
      %p46 = por %p44, %p45
      %p47 = scmp.ne.s32.totalorder %s36, %s39
      %p48 = scmp.eq.s32.totalorder %s31, 2
      %p49 = por %p47, %p48
      %p50 = scmp.ne.s32.totalorder %s39, %s40
      %p51 = scmp.eq.s32.totalorder %s31, 0
      %p52 = por %p50, %p51
      %p53 = scmp.ne.s32.totalorder %s39, %s40
      %p54 = scmp.eq.s32.totalorder %s32, 2
      %p55 = por %p53, %p54
      %p57 = scmp.ne.s32.totalorder %s40, %s56
      %p58 = scmp.eq.s32.totalorder %s32, 0
      %p59 = por %p57, %p58
      %s60 = ssub.s32 %s26, %s33
      %p61 = scmp.eq.s32.totalorder %s60, 0
      %s63 = sadd.s32 %s62, 1
      %s64 = scalar_select %p61, %s62, %s63
      %p67 = pneg %p61
      %p68 = scmp.eq.s32.totalorder %s26, 2
      %p69 = por %p67, %p68
      %p70 = scmp.ne.s32.totalorder %s62, %s65
      %p71 = scmp.eq.s32.totalorder %s26, 0
      %p72 = por %p70, %p71
      %p73 = scmp.ne.s32.totalorder %s62, %s65
      %p74 = scmp.eq.s32.totalorder %s31, 2
      %p75 = por %p73, %p74
      %p76 = scmp.ne.s32.totalorder %s65, %s66
      %p77 = scmp.eq.s32.totalorder %s31, 0
      %p78 = por %p76, %p77
      %p79 = scmp.ne.s32.totalorder %s65, %s66
      %p80 = scmp.eq.s32.totalorder %s32, 2
      %p81 = por %p79, %p80
      %p83 = scmp.ne.s32.totalorder %s66, %s82
      %p84 = scmp.eq.s32.totalorder %s32, 0
      %p85 = por %p83, %p84
      %s86 = ssub.s32 %s26, %s33
      %p87 = scmp.eq.s32.totalorder %s86, 0
      %s89 = sadd.s32 %s88, 1
      %s90 = scalar_select %p87, %s88, %s89
      %p93 = pneg %p87
      %p94 = scmp.eq.s32.totalorder %s26, 2
      %p95 = por %p93, %p94
      %p96 = scmp.ne.s32.totalorder %s88, %s91
      %p97 = scmp.eq.s32.totalorder %s26, 0
      %p98 = por %p96, %p97
      %p99 = scmp.ne.s32.totalorder %s88, %s91
      %p100 = scmp.eq.s32.totalorder %s31, 2
      %p101 = por %p99, %p100
      %p102 = scmp.ne.s32.totalorder %s91, %s92
      %p103 = scmp.eq.s32.totalorder %s31, 0
      %p104 = por %p102, %p103
      %p105 = scmp.ne.s32.totalorder %s91, %s92
      %p106 = scmp.eq.s32.totalorder %s32, 2
      %p107 = por %p105, %p106
      %p109 = scmp.ne.s32.totalorder %s92, %s108
      %p110 = scmp.eq.s32.totalorder %s32, 0
      %p111 = por %p109, %p110
      %s113 = sadd.s32 %s112, 1
      %p116 = scmp.eq.s32.totalorder %s26, 2
      %p117 = scmp.ne.s32.totalorder %s112, %s114
      %p118 = scmp.eq.s32.totalorder %s26, 0
      %p119 = por %p117, %p118
      %p120 = scmp.ne.s32.totalorder %s112, %s114
      %p121 = scmp.eq.s32.totalorder %s31, 2
      %p122 = por %p120, %p121
      %p123 = scmp.ne.s32.totalorder %s114, %s115
      %p124 = scmp.eq.s32.totalorder %s31, 0
      %p125 = por %p123, %p124
      %p126 = scmp.ne.s32.totalorder %s114, %s115
      %p127 = scmp.eq.s32.totalorder %s32, 2
      %p128 = por %p126, %p127
      %p130 = scmp.ne.s32.totalorder %s115, %s129
      %p131 = scmp.eq.s32.totalorder %s32, 0
      %p132 = por %p130, %p131
      %s134 = sadd.s32 %s133, 1
      %p137 = scmp.eq.s32.totalorder %s26, 2
      %p138 = scmp.ne.s32.totalorder %s133, %s135
      %p139 = scmp.eq.s32.totalorder %s26, 0
      %p140 = por %p138, %p139
      %p141 = scmp.ne.s32.totalorder %s133, %s135
      %p142 = scmp.eq.s32.totalorder %s31, 2
      %p143 = por %p141, %p142
      %p144 = scmp.ne.s32.totalorder %s135, %s136
      %p145 = scmp.eq.s32.totalorder %s31, 0
      %p146 = por %p144, %p145
      %p147 = scmp.ne.s32.totalorder %s135, %s136
      %p148 = scmp.eq.s32.totalorder %s32, 2
      %p149 = por %p147, %p148
      %p151 = scmp.ne.s32.totalorder %s136, %s150
      %p152 = scmp.eq.s32.totalorder %s32, 0
      %p153 = por %p151, %p152
      %s155 = sadd.s32 %s154, 1
      %p158 = scmp.eq.s32.totalorder %s26, 2
      %p159 = scmp.ne.s32.totalorder %s154, %s156
      %p160 = scmp.eq.s32.totalorder %s26, 0
      %p161 = por %p159, %p160
      %p162 = scmp.ne.s32.totalorder %s154, %s156
      %p163 = scmp.eq.s32.totalorder %s31, 2
      %p164 = por %p162, %p163
      %p165 = scmp.ne.s32.totalorder %s156, %s157
      %p166 = scmp.eq.s32.totalorder %s31, 0
      %p167 = por %p165, %p166
      %p168 = scmp.ne.s32.totalorder %s156, %s157
      %p169 = scmp.eq.s32.totalorder %s32, 2
      %p170 = por %p168, %p169
      %p172 = scmp.ne.s32.totalorder %s157, %s171
      %p173 = scmp.eq.s32.totalorder %s32, 0
      %p174 = por %p172, %p173
      %s176 = sadd.s32 %s175, 1
      %p179 = scmp.eq.s32.totalorder %s26, 2
      %p180 = scmp.ne.s32.totalorder %s175, %s177
      %p181 = scmp.eq.s32.totalorder %s26, 0
      %p182 = por %p180, %p181
      %p183 = scmp.ne.s32.totalorder %s175, %s177
      %p184 = scmp.eq.s32.totalorder %s31, 2
      %p185 = por %p183, %p184
      %p186 = scmp.ne.s32.totalorder %s177, %s178
      %p187 = scmp.eq.s32.totalorder %s31, 0
      %p188 = por %p186, %p187
      %p189 = scmp.ne.s32.totalorder %s177, %s178
      %p190 = scmp.eq.s32.totalorder %s32, 2
      %p191 = por %p189, %p190
      %p193 = scmp.ne.s32.totalorder %s178, %s192
      %p194 = scmp.eq.s32.totalorder %s32, 0
      %p195 = por %p193, %p194
      %s197 = sadd.s32 %s196, 1
      %p200 = scmp.eq.s32.totalorder %s26, 2
      %p201 = scmp.ne.s32.totalorder %s196, %s198
      %p202 = scmp.eq.s32.totalorder %s26, 0
      %p203 = por %p201, %p202
      %p204 = scmp.ne.s32.totalorder %s196, %s198
      %p205 = scmp.eq.s32.totalorder %s31, 2
      %p206 = por %p204, %p205
      %p207 = scmp.ne.s32.totalorder %s198, %s199
      %p208 = scmp.eq.s32.totalorder %s31, 0
      %p209 = por %p207, %p208
      %p210 = scmp.ne.s32.totalorder %s198, %s199
      %p211 = scmp.eq.s32.totalorder %s32, 2
      %p212 = por %p210, %p211
      %p214 = scmp.ne.s32.totalorder %s199, %s213
      %p215 = scmp.eq.s32.totalorder %s32, 0
      %p216 = por %p214, %p215
      %s218 = sadd.s32 %s217, 1
      %p221 = scmp.eq.s32.totalorder %s26, 2
      %p222 = scmp.ne.s32.totalorder %s217, %s219
      %p223 = scmp.eq.s32.totalorder %s26, 0
      %p224 = por %p222, %p223
      %p225 = scmp.ne.s32.totalorder %s217, %s219
      %p226 = scmp.eq.s32.totalorder %s31, 2
      %p227 = por %p225, %p226
      %p228 = scmp.ne.s32.totalorder %s219, %s220
      %p229 = scmp.eq.s32.totalorder %s31, 0
      %p230 = por %p228, %p229
      %p231 = scmp.ne.s32.totalorder %s219, %s220
      %p232 = scmp.eq.s32.totalorder %s32, 2
      %p233 = por %p231, %p232
      %p235 = scmp.ne.s32.totalorder %s220, %s234
      %p236 = scmp.eq.s32.totalorder %s32, 0
      %p237 = por %p235, %p236
      %s238 = ssub.s32 %s26, %s33
      %p239 = scmp.eq.s32.totalorder %s238, 0
      %s241 = sadd.s32 %s240, 1
      %s242 = scalar_select %p239, %s240, %s241
      %p245 = pneg %p239
      %p246 = scmp.eq.s32.totalorder %s26, 2
      %p247 = por %p245, %p246
      %p248 = scmp.ne.s32.totalorder %s240, %s243
      %p249 = scmp.eq.s32.totalorder %s26, 0
      %p250 = por %p248, %p249
      %p251 = scmp.ne.s32.totalorder %s240, %s243
      %p252 = scmp.eq.s32.totalorder %s31, 2
      %p253 = por %p251, %p252
      %p254 = scmp.ne.s32.totalorder %s243, %s244
      %p255 = scmp.eq.s32.totalorder %s31, 0
      %p256 = por %p254, %p255
      %p257 = scmp.ne.s32.totalorder %s243, %s244
      %p258 = scmp.eq.s32.totalorder %s32, 2
      %p259 = por %p257, %p258
      %p261 = scmp.ne.s32.totalorder %s244, %s260
      %p262 = scmp.eq.s32.totalorder %s32, 0
      %p263 = por %p261, %p262
      %p264 = scmp.le.s32.totalorder 1, %s26
      %p265 = scmp.lt.s32.totalorder %s26, 4
      %p266 = pnand %p264, %p265
      %p267 = pneg %p266
      // Predicated region
      $region9: #{tpu_custom_call.1} parent=5 // pred_check
        _
      $region10: #{tpu_custom_call.1} parent=5 // pred_check_branch
        %269 = sbr.rel (%p266) target = $region12
      $region11: #{tpu_custom_call.1} parent=5 // pred_region
        %s270 = ssub.s32 %s26, 1
        // Predicated region
        $region13: #{tpu_custom_call.1} parent=11 // pred_check
          %p271 = pneg %p125
        $region14: #{tpu_custom_call.1} parent=11 // pred_check_branch
          %273 = sbr.rel (%p271) target = $region16
        $region15: #{tpu_custom_call.1} parent=11 // pred_region
          %s275 = ssub.s32 2048, 2048
          %276 = vsyncadd [#allocation14], %s275
          %s277 = sshll.u32 [#allocation13], 4
          %s278 = int_to_ptr.vmem [resolvable:$true] %s277
          %283 = dma.hbm_to_vmem [thread:$0]  %s3, 2048, %s278, [#allocation14], 128, 128, 8
        $region16: #{tpu_custom_call.1} parent=11 // pred_fallthru
          _
        // Predicated region
        $region17: #{tpu_custom_call.1} parent=11 // pred_check
          %p284 = pneg %p146
        $region18: #{tpu_custom_call.1} parent=11 // pred_check_branch
          %286 = sbr.rel (%p284) target = $region20
        $region19: #{tpu_custom_call.1} parent=11 // pred_region
          _
        $region20: #{tpu_custom_call.1} parent=11 // pred_fallthru
          _
        // Predicated region
        $region21: #{tpu_custom_call.1} parent=11 // pred_check
          %p287 = pneg %p167
        $region22: #{tpu_custom_call.1} parent=11 // pred_check_branch
          %289 = sbr.rel (%p287) target = $region24
        $region23: #{tpu_custom_call.1} parent=11 // pred_region
          %s291 = ssub.s32 4096, 4096
          %292 = vsyncadd [#allocation14], %s291
          %s293 = sshll.u32 [#allocation15], 4
          %s294 = int_to_ptr.vmem [resolvable:$true] %s293
          %299 = dma.hbm_to_vmem [thread:$0]  %s5, 4096, %s294, [#allocation14], 128, 128, 8
        $region24: #{tpu_custom_call.1} parent=11 // pred_fallthru
          _
        // Predicated region
        $region25: #{tpu_custom_call.1} parent=11 // pred_check
          %p300 = pneg %p188
        $region26: #{tpu_custom_call.1} parent=11 // pred_check_branch
          %302 = sbr.rel (%p300) target = $region28
        $region27: #{tpu_custom_call.1} parent=11 // pred_region
          _
        $region28: #{tpu_custom_call.1} parent=11 // pred_fallthru
          _
        // Predicated region
        $region29: #{tpu_custom_call.1} parent=11 // pred_check
          %p303 = pneg %p209
        $region30: #{tpu_custom_call.1} parent=11 // pred_check_branch
          %305 = sbr.rel (%p303) target = $region32
        $region31: #{tpu_custom_call.1} parent=11 // pred_region
          %s307 = ssub.s32 2048, 2048
          %308 = vsyncadd [#allocation17], %s307
          %s309 = sshll.u32 [#allocation16], 4
          %s310 = int_to_ptr.vmem [resolvable:$true] %s309
          %315 = dma.hbm_to_vmem [thread:$0]  %s7, 2048, %s310, [#allocation17], 128, 128, 8
        $region32: #{tpu_custom_call.1} parent=11 // pred_fallthru
          _
        // Predicated region
        $region33: #{tpu_custom_call.1} parent=11 // pred_check
          %p316 = pneg %p230
        $region34: #{tpu_custom_call.1} parent=11 // pred_check_branch
          %318 = sbr.rel (%p316) target = $region36
        $region35: #{tpu_custom_call.1} parent=11 // pred_region
          _
        $region36: #{tpu_custom_call.1} parent=11 // pred_fallthru
          _
      $region12: #{tpu_custom_call.1} parent=5 // pred_fallthru
        _
      %p319 = scmp.lt.s32.totalorder %s26, 3
      // Predicated region
      $region37: #{tpu_custom_call.1} parent=5 // pred_check
        %p320 = pneg %p319
      $region38: #{tpu_custom_call.1} parent=5 // pred_check_branch
        %322 = sbr.rel (%p320) target = $region40
      $region39: #{tpu_custom_call.1} parent=5 // pred_region
        // Predicated region
        $region41: #{tpu_custom_call.1} parent=39 // pred_check
          %p323 = pneg %p46
        $region42: #{tpu_custom_call.1} parent=39 // pred_check_branch
          %325 = sbr.rel (%p323) target = $region44
        $region43: #{tpu_custom_call.1} parent=39 // pred_region
          %s326 = sand.u32 %s36, 1
          %s327 = scalar_lea.sflag [#allocation8], %s326
          %s328 = sand.u32 %s36, 1
          %s329 = smul.addr %s328, 16
          %s330 = scalar_lea.vmem [#allocation7], %s329
          %s331 = smul.u32 2, %s26
          %s333 = ssub.s32 256, 256
          %334 = vsyncadd %s327, %s333
          %s335 = smul.addr %s331, 128
          %s336 = scalar_lea.hbm %s0, %s335
          %s337 = sshll.u32 %s330, 4
          %s338 = int_to_ptr.vmem [resolvable:$true] %s337
          %343 = dma.hbm_to_vmem [thread:$0]  %s336, 256, %s338, %s327, 128, 128, 8
        $region44: #{tpu_custom_call.1} parent=39 // pred_fallthru
          _
        // Predicated region
        $region45: #{tpu_custom_call.1} parent=39 // pred_check
          %p344 = pneg %p72
        $region46: #{tpu_custom_call.1} parent=39 // pred_check_branch
          %346 = sbr.rel (%p344) target = $region48
        $region47: #{tpu_custom_call.1} parent=39 // pred_region
          %s347 = sand.u32 %s26, 1
          %s348 = scalar_lea.sflag [#allocation11], %s347
          %s349 = sand.u32 %s62, 1
          %s350 = smul.addr %s349, 16
          %s351 = scalar_lea.vmem [#allocation10], %s350
          %s352 = smul.u32 2, %s26
          %s354 = ssub.s32 256, 256
          %355 = vsyncadd %s348, %s354
          %s356 = smul.addr %s352, 128
          %s357 = scalar_lea.hbm %s1, %s356
          %s358 = sshll.u32 %s351, 4
          %s359 = int_to_ptr.vmem [resolvable:$true] %s358
          %364 = dma.hbm_to_vmem [thread:$0]  %s357, 256, %s359, %s348, 128, 128, 8
        $region48: #{tpu_custom_call.1} parent=39 // pred_fallthru
          _
        // Predicated region
        $region49: #{tpu_custom_call.1} parent=39 // pred_check
          %p365 = pneg %p98
        $region50: #{tpu_custom_call.1} parent=39 // pred_check_branch
          %367 = sbr.rel (%p365) target = $region52
        $region51: #{tpu_custom_call.1} parent=39 // pred_region
          %s368 = sand.u32 %s26, 1
          %s369 = scalar_lea.sflag [#allocation11], %s368
          %s370 = sand.u32 %s88, 1
          %s371 = smul.addr %s370, 16
          %s372 = scalar_lea.vmem [#allocation12], %s371
          %s373 = smul.u32 2, %s26
          %s375 = ssub.s32 256, 256
          %376 = vsyncadd %s369, %s375
          %s377 = smul.addr %s373, 128
          %s378 = scalar_lea.hbm %s2, %s377
          %s379 = sshll.u32 %s372, 4
          %s380 = int_to_ptr.vmem [resolvable:$true] %s379
          %385 = dma.hbm_to_vmem [thread:$0]  %s378, 256, %s380, %s369, 128, 128, 8
        $region52: #{tpu_custom_call.1} parent=39 // pred_fallthru
          _
      $region40: #{tpu_custom_call.1} parent=5 // pred_fallthru
        _
      %p386 = scmp.le.s32.totalorder 1, %s26
      %p387 = scmp.lt.s32.totalorder %s26, 4
      %p388 = pnand %p386, %p387
      %p389 = pneg %p388
      // Predicated region
      $region53: #{tpu_custom_call.1} parent=5 // pred_check
        _
      $region54: #{tpu_custom_call.1} parent=5 // pred_check_branch
        %391 = sbr.rel (%p388) target = $region56
      $region55: #{tpu_custom_call.1} parent=5 // pred_region
        %s392 = ssub.s32 %s26, 1
        %s393 = sand.u32 %s39, 1
        %s394 = scalar_lea.sflag [#allocation8], %s393
        %s395 = sand.u32 %s39, 1
        %s396 = smul.addr %s395, 16
        %s397 = scalar_lea.vmem [#allocation7], %s396
        // Predicated region
        $region57: #{tpu_custom_call.1} parent=55 // pred_check
          %p398 = pneg %p52
        $region58: #{tpu_custom_call.1} parent=55 // pred_check_branch
          %400 = sbr.rel (%p398) target = $region60
        $region59: #{tpu_custom_call.1} parent=55 // pred_region
          %401 = dma.done %s394, 256
        $region60: #{tpu_custom_call.1} parent=55 // pred_fallthru
          _
        %s402 = sand.u32 %s31, 1
        %s403 = scalar_lea.sflag [#allocation11], %s402
        %s404 = sand.u32 %s65, 1
        %s405 = smul.addr %s404, 16
        %s406 = scalar_lea.vmem [#allocation10], %s405
        // Predicated region
        $region61: #{tpu_custom_call.1} parent=55 // pred_check
          %p407 = pneg %p78
        $region62: #{tpu_custom_call.1} parent=55 // pred_check_branch
          %409 = sbr.rel (%p407) target = $region64
        $region63: #{tpu_custom_call.1} parent=55 // pred_region
          %410 = dma.done %s403, 256
        $region64: #{tpu_custom_call.1} parent=55 // pred_fallthru
          _
        %s411 = sand.u32 %s31, 1
        %s412 = scalar_lea.sflag [#allocation11], %s411
        %s413 = sand.u32 %s91, 1
        %s414 = smul.addr %s413, 16
        %s415 = scalar_lea.vmem [#allocation12], %s414
        // Predicated region
        $region65: #{tpu_custom_call.1} parent=55 // pred_check
          %p416 = pneg %p104
        $region66: #{tpu_custom_call.1} parent=55 // pred_check_branch
          %418 = sbr.rel (%p416) target = $region68
        $region67: #{tpu_custom_call.1} parent=55 // pred_region
          %419 = dma.done %s412, 256
        $region68: #{tpu_custom_call.1} parent=55 // pred_fallthru
          _
        // Predicated region
        $region69: #{tpu_custom_call.1} parent=55 // pred_check
          %p420 = pneg %p125
        $region70: #{tpu_custom_call.1} parent=55 // pred_check_branch
          %422 = sbr.rel (%p420) target = $region72
        $region71: #{tpu_custom_call.1} parent=55 // pred_region
          %423 = dma.done [#allocation14], 2048
        $region72: #{tpu_custom_call.1} parent=55 // pred_fallthru
          _
        // Predicated region
        $region73: #{tpu_custom_call.1} parent=55 // pred_check
          %p424 = pneg %p167
        $region74: #{tpu_custom_call.1} parent=55 // pred_check_branch
          %426 = sbr.rel (%p424) target = $region76
        $region75: #{tpu_custom_call.1} parent=55 // pred_region
          %427 = dma.done [#allocation14], 4096
        $region76: #{tpu_custom_call.1} parent=55 // pred_fallthru
          _
        // Predicated region
        $region77: #{tpu_custom_call.1} parent=55 // pred_check
          %p428 = pneg %p209
        $region78: #{tpu_custom_call.1} parent=55 // pred_check_branch
          %430 = sbr.rel (%p428) target = $region80
        $region79: #{tpu_custom_call.1} parent=55 // pred_region
          %431 = dma.done [#allocation17], 2048
        $region80: #{tpu_custom_call.1} parent=55 // pred_fallthru
          _
        %s432 = sand.u32 %s39, 1
        %s433 = scalar_lea.sflag [#allocation8], %s432
        %s434 = sand.u32 %s39, 1
        %s435 = smul.addr %s434, 16
        %s436 = scalar_lea.vmem [#allocation7], %s435
        %p437 = pneg %p52
        %p438 = pneg %p49
        %s439 = sand.u32 %s31, 1
        %s440 = scalar_lea.sflag [#allocation11], %s439
        %s441 = sand.u32 %s65, 1
        %s442 = smul.addr %s441, 16
        %s443 = scalar_lea.vmem [#allocation10], %s442
        %p444 = pneg %p78
        %p445 = pneg %p75
        %s446 = sand.u32 %s31, 1
        %s447 = scalar_lea.sflag [#allocation11], %s446
        %s448 = sand.u32 %s91, 1
        %s449 = smul.addr %s448, 16
        %s450 = scalar_lea.vmem [#allocation12], %s449
        %p451 = pneg %p104
        %p452 = pneg %p101
        %p453 = pneg %p125
        %p454 = pneg %p122
        %p455 = pneg %p146
        %p456 = pneg %p143
        %p457 = pneg %p167
        %p458 = pneg %p164
        %p459 = pneg %p188
        %p460 = pneg %p185
        %p461 = pneg %p209
        %p462 = pneg %p206
        %p463 = pneg %p230
        %p464 = pneg %p227
        %p465 = pneg %p256
        %p466 = pneg %p253
        %s467 = sand.u32 %s243, 1
        %s468 = scalar_lea.sflag [#allocation9], %s467
        %s469 = sand.u32 %s243, 1
        %s470 = smul.addr %s469, 16
        %s471 = scalar_lea.vmem [#allocation18], %s470
        %s472 = smul.u32 2, %s31
        %s473 = smul.u32 2, %s31
        %s474 = smul.u32 2, %s31
        %s475 = smul.u32 2, %s31
        %v476 = vld [vmem:[%s397] sm:$0xff]
        %v477 = vld [vmem:[%s397 + $0x8] sm:$0xff]
        %v478 = vld [vmem:[%s406] sm:$0xff]
        %v479 = vld [vmem:[%s406 + $0x8] sm:$0xff]
        %v480 = vld [vmem:[#allocation13] sm:$0xff]
        %v481 = vld [vmem:[#allocation13 + $0x8] sm:$0xff]
        %v482 = vld [vmem:[#allocation13 + $0x10] sm:$0xff]
        %v483 = vld [vmem:[#allocation13 + $0x18] sm:$0xff]
        %v484 = vld [vmem:[#allocation13 + $0x20] sm:$0xff]
        %v485 = vld [vmem:[#allocation13 + $0x28] sm:$0xff]
        %v486 = vld [vmem:[#allocation13 + $0x30] sm:$0xff]
        %v487 = vld [vmem:[#allocation13 + $0x38] sm:$0xff]
        %v488 = vld [vmem:[#allocation13 + $0x40] sm:$0xff]
        %v489 = vld [vmem:[#allocation13 + $0x48] sm:$0xff]
        %v490 = vld [vmem:[#allocation13 + $0x50] sm:$0xff]
        %v491 = vld [vmem:[#allocation13 + $0x58] sm:$0xff]
        %v492 = vld [vmem:[#allocation13 + $0x60] sm:$0xff]
        %v493 = vld [vmem:[#allocation13 + $0x68] sm:$0xff]
        %v494 = vld [vmem:[#allocation13 + $0x70] sm:$0xff]
        %v495 = vld [vmem:[#allocation13 + $0x78] sm:$0xff]
        %v496 = vld [vmem:[%s4] sm:$0x1]
        %v498 = vlaneseq
        %v499 = vshrl.u32 %v498, 7
        %v500 = vsub.s32 0, %v499
        %v501 = vrot.slane %v496, %v500
        %503 = vmatprep.subr.mxu0 0.0
        %504 = vmatpush1.xpose.msra.mxu0 %v480
        %505 = vmatprep.subr.mxu0 0.0
        %506 = vmatpush1.xpose.msra.mxu0 %v481
        %507 = vmatprep.subr.mxu0 0.0
        %508 = vmatpush1.xpose.msra.mxu0 %v482
        %509 = vmatprep.subr.mxu0 0.0
        %510 = vmatpush1.xpose.msra.mxu0 %v483
        %511 = vmatprep.subr.mxu0 0.0
        %512 = vmatpush1.xpose.msra.mxu0 %v484
        %513 = vmatprep.subr.mxu0 0.0
        %514 = vmatpush1.xpose.msra.mxu0 %v485
        %515 = vmatprep.subr.mxu0 0.0
        %516 = vmatpush1.xpose.msra.mxu0 %v486
        %517 = vmatprep.subr.mxu0 0.0
        %518 = vmatpush1.xpose.msra.mxu0 %v487
        %519 = vmatprep.subr.mxu0 0.0
        %520 = vmatpush1.xpose.msra.mxu0 %v488
        %521 = vmatprep.subr.mxu0 0.0
        %522 = vmatpush1.xpose.msra.mxu0 %v489
        %523 = vmatprep.subr.mxu0 0.0
        %524 = vmatpush1.xpose.msra.mxu0 %v490
        %525 = vmatprep.subr.mxu0 0.0
        %526 = vmatpush1.xpose.msra.mxu0 %v491
        %527 = vmatprep.subr.mxu0 0.0
        %528 = vmatpush1.xpose.msra.mxu0 %v492
        %529 = vmatprep.subr.mxu0 0.0
        %530 = vmatpush1.xpose.msra.mxu0 %v493
        %531 = vmatprep.subr.mxu0 0.0
        %532 = vmatpush1.xpose.msra.mxu0 %v494
        %533 = vmatprep.subr.mxu0 0.0
        %534 = vmatpush1.xpose.msra.mxu0 %v495
        %535 = vmatprep.subr.mxu0 0.0
        %536 = vmatpush1.xpose.msra.mxu0 0.0
        %537 = vmatprep.subr.mxu0 0.0
        %538 = vmatpush1.xpose.msra.mxu0 0.0
        %539 = vmatprep.subr.mxu0 0.0
        %540 = vmatpush1.xpose.msra.mxu0 0.0
        %541 = vmatprep.subr.mxu0 0.0
        %542 = vmatpush1.xpose.msra.mxu0 0.0
        %543 = vmatprep.subr.mxu0 0.0
        %544 = vmatpush1.xpose.msra.mxu0 0.0
        %545 = vmatprep.subr.mxu0 0.0
        %546 = vmatpush1.xpose.msra.mxu0 0.0
        %547 = vmatprep.subr.mxu0 0.0
        %548 = vmatpush1.xpose.msra.mxu0 0.0
        %549 = vmatprep.subr.mxu0 0.0
        %550 = vmatpush1.xpose.msra.mxu0 0.0
        %551 = vmatprep.subr.mxu0 0.0
        %552 = vmatpush1.xpose.msra.mxu0 0.0
        %553 = vmatprep.subr.mxu0 0.0
        %554 = vmatpush1.xpose.msra.mxu0 0.0
        %555 = vmatprep.subr.mxu0 0.0
        %556 = vmatpush1.xpose.msra.mxu0 0.0
        %557 = vmatprep.subr.mxu0 0.0
        %558 = vmatpush1.xpose.msra.mxu0 0.0
        %559 = vmatprep.subr.mxu0 0.0
        %560 = vmatpush1.xpose.msra.mxu0 0.0
        %561 = vmatprep.subr.mxu0 0.0
        %562 = vmatpush1.xpose.msra.mxu0 0.0
        %563 = vmatprep.subr.mxu0 0.0
        %564 = vmatpush1.xpose.msra.mxu0 0.0
        %565 = vmatprep.subr.mxu0 0.0
        %566 = vmatpush1.xpose.msra.mxu0 0.0
        %567 = vmatprep.mubr.f32.mxu0 0.0
        %568 = vmatmul.mubr.f32.gmra.mrb[0].mxu0 %v478
        %v569 = vpop.f32.mrb[0].mxu0
        %v570 = vadd.f32 %v501, %v569
        %v571 = vpop.f32.mrb[0].mxu0
        %572 = vmatprep.mubr.f32.mxu0 0.0
        %573 = vmatmul.mubr.f32.gmra.mrb[0].mxu0 %v479
        %v574 = vpop.f32.mrb[0].mxu0
        %v575 = vadd.f32 %v501, %v574
        %v576 = vpop.f32.mrb[0].mxu0
        %577 = vdwg.mxu0
        %v578 = vld [vmem:[#allocation15] sm:$0xff]
        %v579 = vld [vmem:[#allocation15 + $0x8] sm:$0xff]
        %v580 = vld [vmem:[#allocation15 + $0x10] sm:$0xff]
        %v581 = vld [vmem:[#allocation15 + $0x18] sm:$0xff]
        %v582 = vld [vmem:[#allocation15 + $0x20] sm:$0xff]
        %v583 = vld [vmem:[#allocation15 + $0x28] sm:$0xff]
        %v584 = vld [vmem:[#allocation15 + $0x30] sm:$0xff]
        %v585 = vld [vmem:[#allocation15 + $0x38] sm:$0xff]
        %v586 = vld [vmem:[#allocation15 + $0x40] sm:$0xff]
        %v587 = vld [vmem:[#allocation15 + $0x48] sm:$0xff]
        %v588 = vld [vmem:[#allocation15 + $0x50] sm:$0xff]
        %v589 = vld [vmem:[#allocation15 + $0x58] sm:$0xff]
        %v590 = vld [vmem:[#allocation15 + $0x60] sm:$0xff]
        %v591 = vld [vmem:[#allocation15 + $0x68] sm:$0xff]
        %v592 = vld [vmem:[#allocation15 + $0x70] sm:$0xff]
        %v593 = vld [vmem:[#allocation15 + $0x78] sm:$0xff]
        %v594 = vld [vmem:[#allocation15 + $0x80] sm:$0xff]
        %v595 = vld [vmem:[#allocation15 + $0x88] sm:$0xff]
        %v596 = vld [vmem:[#allocation15 + $0x90] sm:$0xff]
        %v597 = vld [vmem:[#allocation15 + $0x98] sm:$0xff]
        %v598 = vld [vmem:[#allocation15 + $0xa0] sm:$0xff]
        %v599 = vld [vmem:[#allocation15 + $0xa8] sm:$0xff]
        %v600 = vld [vmem:[#allocation15 + $0xb0] sm:$0xff]
        %v601 = vld [vmem:[#allocation15 + $0xb8] sm:$0xff]
        %v602 = vld [vmem:[#allocation15 + $0xc0] sm:$0xff]
        %v603 = vld [vmem:[#allocation15 + $0xc8] sm:$0xff]
        %v604 = vld [vmem:[#allocation15 + $0xd0] sm:$0xff]
        %v605 = vld [vmem:[#allocation15 + $0xd8] sm:$0xff]
        %v606 = vld [vmem:[#allocation15 + $0xe0] sm:$0xff]
        %v607 = vld [vmem:[#allocation15 + $0xe8] sm:$0xff]
        %v608 = vld [vmem:[#allocation15 + $0xf0] sm:$0xff]
        %v609 = vld [vmem:[#allocation15 + $0xf8] sm:$0xff]
        %v610 = vld [vmem:[%s6] sm:$0x3]
        %v612 = vlaneseq
        %v613 = vshrl.u32 %v612, 7
        %v614 = vsub.s32 0, %v613
        %v615 = vrot.slane %v610, %v614
        %v616 = vlaneseq
        %v617 = vshrl.u32 %v616, 7
        %v618 = vsub.s32 1, %v617
        %v619 = vrot.slane %v610, %v618
        %622 = vmatprep.subr.mxu0 0.0
        %623 = vmatpush1.xpose.msra.mxu0 %v578
        %624 = vmatprep.subr.mxu0 0.0
        %625 = vmatpush1.xpose.msra.mxu0 %v579
        %626 = vmatprep.subr.mxu0 0.0
        %627 = vmatpush1.xpose.msra.mxu0 %v580
        %628 = vmatprep.subr.mxu0 0.0
        %629 = vmatpush1.xpose.msra.mxu0 %v581
        %630 = vmatprep.subr.mxu0 0.0
        %631 = vmatpush1.xpose.msra.mxu0 %v582
        %632 = vmatprep.subr.mxu0 0.0
        %633 = vmatpush1.xpose.msra.mxu0 %v583
        %634 = vmatprep.subr.mxu0 0.0
        %635 = vmatpush1.xpose.msra.mxu0 %v584
        %636 = vmatprep.subr.mxu0 0.0
        %637 = vmatpush1.xpose.msra.mxu0 %v585
        %638 = vmatprep.subr.mxu0 0.0
        %639 = vmatpush1.xpose.msra.mxu0 %v586
        %640 = vmatprep.subr.mxu0 0.0
        %641 = vmatpush1.xpose.msra.mxu0 %v587
        %642 = vmatprep.subr.mxu0 0.0
        %643 = vmatpush1.xpose.msra.mxu0 %v588
        %644 = vmatprep.subr.mxu0 0.0
        %645 = vmatpush1.xpose.msra.mxu0 %v589
        %646 = vmatprep.subr.mxu0 0.0
        %647 = vmatpush1.xpose.msra.mxu0 %v590
        %648 = vmatprep.subr.mxu0 0.0
        %649 = vmatpush1.xpose.msra.mxu0 %v591
        %650 = vmatprep.subr.mxu0 0.0
        %651 = vmatpush1.xpose.msra.mxu0 %v592
        %652 = vmatprep.subr.mxu0 0.0
        %653 = vmatpush1.xpose.msra.mxu0 %v593
        %654 = vmatprep.subr.mxu0 0.0
        %655 = vmatpush1.xpose.msra.mxu0 %v594
        %656 = vmatprep.subr.mxu0 0.0
        %657 = vmatpush1.xpose.msra.mxu0 %v595
        %658 = vmatprep.subr.mxu0 0.0
        %659 = vmatpush1.xpose.msra.mxu0 %v596
        %660 = vmatprep.subr.mxu0 0.0
        %661 = vmatpush1.xpose.msra.mxu0 %v597
        %662 = vmatprep.subr.mxu0 0.0
        %663 = vmatpush1.xpose.msra.mxu0 %v598
        %664 = vmatprep.subr.mxu0 0.0
        %665 = vmatpush1.xpose.msra.mxu0 %v599
        %666 = vmatprep.subr.mxu0 0.0
        %667 = vmatpush1.xpose.msra.mxu0 %v600
        %668 = vmatprep.subr.mxu0 0.0
        %669 = vmatpush1.xpose.msra.mxu0 %v601
        %670 = vmatprep.subr.mxu0 0.0
        %671 = vmatpush1.xpose.msra.mxu0 %v602
        %672 = vmatprep.subr.mxu0 0.0
        %673 = vmatpush1.xpose.msra.mxu0 %v603
        %674 = vmatprep.subr.mxu0 0.0
        %675 = vmatpush1.xpose.msra.mxu0 %v604
        %676 = vmatprep.subr.mxu0 0.0
        %677 = vmatpush1.xpose.msra.mxu0 %v605
        %678 = vmatprep.subr.mxu0 0.0
        %679 = vmatpush1.xpose.msra.mxu0 %v606
        %680 = vmatprep.subr.mxu0 0.0
        %681 = vmatpush1.xpose.msra.mxu0 %v607
        %682 = vmatprep.subr.mxu0 0.0
        %683 = vmatpush1.xpose.msra.mxu0 %v608
        %684 = vmatprep.subr.mxu0 0.0
        %685 = vmatpush1.xpose.msra.mxu0 %v609
        %686 = vmatprep.mubr.f32.mxu0 0.0
        %687 = vmatmul.mubr.f32.gmra.mrb[0].mxu0 %v476
        %v688 = vpop.f32.mrb[0].mxu0
        %v689 = vadd.f32 %v615, %v688
        %v690 = vpop.f32.mrb[0].mxu0
        %v691 = vadd.f32 %v619, %v690
        %692 = vmatprep.mubr.f32.mxu0 0.0
        %693 = vmatmul.mubr.f32.gmra.mrb[0].mxu0 %v477
        %v694 = vpop.f32.mrb[0].mxu0
        %v695 = vadd.f32 %v615, %v694
        %v696 = vpop.f32.mrb[0].mxu0
        %v697 = vadd.f32 %v619, %v696
        %698 = vdwg.mxu0
        %v699 = vmul.f32 %v689, 0.088388346
        %v700 = vmul.f32 %v695, 0.088388346
        %701 = vmax.xlane.f32.xlu0 %v699
        %v702 = vpop.xlane.xlu0 %701
        %703 = vmax.xlane.f32.xlu0 %v700
        %v704 = vpop.xlane.xlu0 %703
        %705 = vmin.xlane.f32.xlu0 %v699
        %v706 = vpop.xlane.xlu0 %705
        %707 = vmin.xlane.f32.xlu0 %v700
        %v708 = vpop.xlane.xlu0 %707
        %vm709 = vcmp.ge.f32.partialorder %v570, 0.0
        %vm710 = vcmp.ge.f32.partialorder %v575, 0.0
        %v711 = vmul.f32 %v570, %v702
        %v712 = vmul.f32 %v575, %v704
        %v713 = vmul.f32 %v570, %v706
        %v714 = vmul.f32 %v575, %v708
        %v715 = vsel %vm709, %v711, %v713
        %v716 = vsel %vm710, %v712, %v714
        %717 = vst [vmem:[#allocation2] sm:$0xff] %v570
        %718 = vst [vmem:[#allocation2 + $0x8] sm:$0xff] %v575
        %719 = vst [vmem:[#allocation3] sm:$0xff] %v699
        %720 = vst [vmem:[#allocation3 + $0x8] sm:$0xff] %v700
        %721 = vst [vmem:[#allocation4] sm:$0xff] %v715
        %722 = vst [vmem:[#allocation4 + $0x8] sm:$0xff] %v716
        %723 = vst [vmem:[#allocation5] sm:$0xff] %v691
        %724 = vst [vmem:[#allocation5 + $0x8] sm:$0xff] %v697
        loop: start=0, step=1, limit=2
        $region81: #{tpu_custom_call.1} parent=55 // loop_pre_header
          _
        $region82: #{tpu_custom_call.1} parent=55 // loop_header
          %s726 = sphi 0, %s730
          %p727 = scmp.ge.s32.totalorder %s726, 2
        $region83: #{tpu_custom_call.1} parent=55 // loop_header_branch
          %729 = sbr.rel (%p727) target = $region87
        $region84: #{tpu_custom_call.1} parent=55 // loop_body
          %s731 = smul.u32 %s726, 8
          %s732 = scalar_lea.vmem [#allocation2], %s731
          %v733 = vld [vmem:[%s732] sm:$0xff]
          %s734 = scalar_lea.vmem [#allocation4], %s731
          %v735 = vld [vmem:[%s734] sm:$0xff]
          %s736 = scalar_lea.vmem [#allocation5], %s731
          %v737 = vld [vmem:[%s736] sm:$0xff]
          %s738 = scalar_lea.vmem [#allocation3], %s731
          %v739 = vld [vmem:[%s738] sm:$0xff]
          %740 = vxpose.xlu0.b32.start [1/16] %v739, 128
          %741 = vxpose.xlu0.b32.cont [2/16] 0.0, 128
          %742 = vxpose.xlu0.b32.cont [3/16] 0.0, 128
          %743 = vxpose.xlu0.b32.cont [4/16] 0.0, 128
          %744 = vxpose.xlu0.b32.cont [5/16] 0.0, 128
          %745 = vxpose.xlu0.b32.cont [6/16] 0.0, 128
          %746 = vxpose.xlu0.b32.cont [7/16] 0.0, 128
          %747 = vxpose.xlu0.b32.cont [8/16] 0.0, 128
          %748 = vxpose.xlu0.b32.cont [9/16] 0.0, 128
          %749 = vxpose.xlu0.b32.cont [10/16] 0.0, 128
          %750 = vxpose.xlu0.b32.cont [11/16] 0.0, 128
          %751 = vxpose.xlu0.b32.cont [12/16] 0.0, 128
          %752 = vxpose.xlu0.b32.cont [13/16] 0.0, 128
          %753 = vxpose.xlu0.b32.cont [14/16] 0.0, 128
          %754 = vxpose.xlu0.b32.cont [15/16] 0.0, 128
          %755 = vxpose.xlu0.b32.end [16/16] 0.0, 128
          %v756 = vpop.trf.xlu0
          %v757 = vpop.trf.xlu0
          %v758 = vpop.trf.xlu0
          %v759 = vpop.trf.xlu0
          %v760 = vpop.trf.xlu0
          %v761 = vpop.trf.xlu0
          %v762 = vpop.trf.xlu0
          %v763 = vpop.trf.xlu0
          %v764 = vpop.trf.xlu0
          %v765 = vpop.trf.xlu0
          %v766 = vpop.trf.xlu0
          %v767 = vpop.trf.xlu0
          %v768 = vpop.trf.xlu0
          %v769 = vpop.trf.xlu0
          %v770 = vpop.trf.xlu0
          %v771 = vpop.trf.xlu0
          %773 = vset.pattern.permute.xlu0 0
          %774 = vperm.xlu0 %773, %v756
          %v775 = vpop.permute.xlu0 %774
          %778 = vset.pattern.permute.xlu0 0
          %779 = vperm.xlu0 %778, %v757
          %v780 = vpop.permute.xlu0 %779
          %783 = vset.pattern.permute.xlu0 0
          %784 = vperm.xlu0 %783, %v758
          %v785 = vpop.permute.xlu0 %784
          %788 = vset.pattern.permute.xlu0 0
          %789 = vperm.xlu0 %788, %v759
          %v790 = vpop.permute.xlu0 %789
          %793 = vset.pattern.permute.xlu0 0
          %794 = vperm.xlu0 %793, %v760
          %v795 = vpop.permute.xlu0 %794
          %798 = vset.pattern.permute.xlu0 0
          %799 = vperm.xlu0 %798, %v761
          %v800 = vpop.permute.xlu0 %799
          %803 = vset.pattern.permute.xlu0 0
          %804 = vperm.xlu0 %803, %v762
          %v805 = vpop.permute.xlu0 %804
          %808 = vset.pattern.permute.xlu0 0
          %809 = vperm.xlu0 %808, %v763
          %v810 = vpop.permute.xlu0 %809
          %813 = vset.pattern.permute.xlu0 0
          %814 = vperm.xlu0 %813, %v764
          %v815 = vpop.permute.xlu0 %814
          %818 = vset.pattern.permute.xlu0 0
          %819 = vperm.xlu0 %818, %v765
          %v820 = vpop.permute.xlu0 %819
          %823 = vset.pattern.permute.xlu0 0
          %824 = vperm.xlu0 %823, %v766
          %v825 = vpop.permute.xlu0 %824
          %828 = vset.pattern.permute.xlu0 0
          %829 = vperm.xlu0 %828, %v767
          %v830 = vpop.permute.xlu0 %829
          %833 = vset.pattern.permute.xlu0 0
          %834 = vperm.xlu0 %833, %v768
          %v835 = vpop.permute.xlu0 %834
          %838 = vset.pattern.permute.xlu0 0
          %839 = vperm.xlu0 %838, %v769
          %v840 = vpop.permute.xlu0 %839
          %843 = vset.pattern.permute.xlu0 0
          %844 = vperm.xlu0 %843, %v770
          %v845 = vpop.permute.xlu0 %844
          %848 = vset.pattern.permute.xlu0 0
          %849 = vperm.xlu0 %848, %v771
          %v850 = vpop.permute.xlu0 %849
          %v852 = vlaneseq
          %v853 = vshrl.u32 %v852, 7
          %v854 = vsub.s32 0, %v853
          %v855 = vrot.slane %v733, %v854
          %v856 = vmul.f32 %v775, %v855
          %v857 = vmul.f32 %v780, %v855
          %v858 = vmul.f32 %v785, %v855
          %v859 = vmul.f32 %v790, %v855
          %v860 = vmul.f32 %v795, %v855
          %v861 = vmul.f32 %v800, %v855
          %v862 = vmul.f32 %v805, %v855
          %v863 = vmul.f32 %v810, %v855
          %v864 = vmul.f32 %v815, %v855
          %v865 = vmul.f32 %v820, %v855
          %v866 = vmul.f32 %v825, %v855
          %v867 = vmul.f32 %v830, %v855
          %v868 = vmul.f32 %v835, %v855
          %v869 = vmul.f32 %v840, %v855
          %v870 = vmul.f32 %v845, %v855
          %v871 = vmul.f32 %v850, %v855
          %v872 = vlaneseq
          %v873 = vshrl.u32 %v872, 7
          %v874 = vsub.s32 0, %v873
          %v875 = vrot.slane %v735, %v874
          %v876 = vsub.f32 %v856, %v875
          %v877 = vsub.f32 %v857, %v875
          %v878 = vsub.f32 %v858, %v875
          %v879 = vsub.f32 %v859, %v875
          %v880 = vsub.f32 %v860, %v875
          %v881 = vsub.f32 %v861, %v875
          %v882 = vsub.f32 %v862, %v875
          %v883 = vsub.f32 %v863, %v875
          %v884 = vsub.f32 %v864, %v875
          %v885 = vsub.f32 %v865, %v875
          %v886 = vsub.f32 %v866, %v875
          %v887 = vsub.f32 %v867, %v875
          %v888 = vsub.f32 %v868, %v875
          %v889 = vsub.f32 %v869, %v875
          %v890 = vsub.f32 %v870, %v875
          %v891 = vsub.f32 %v871, %v875
          %v892 = vmul.f32 %v876, 1.442695
          %v893 = vpow.pop %v892
          %v894 = vmul.f32 %v877, 1.442695
          %v895 = vpow.pop %v894
          %v896 = vmul.f32 %v878, 1.442695
          %v897 = vpow.pop %v896
          %v898 = vmul.f32 %v879, 1.442695
          %v899 = vpow.pop %v898
          %v900 = vmul.f32 %v880, 1.442695
          %v901 = vpow.pop %v900
          %v902 = vmul.f32 %v881, 1.442695
          %v903 = vpow.pop %v902
          %v904 = vmul.f32 %v882, 1.442695
          %v905 = vpow.pop %v904
          %v906 = vmul.f32 %v883, 1.442695
          %v907 = vpow.pop %v906
          %v908 = vmul.f32 %v884, 1.442695
          %v909 = vpow.pop %v908
          %v910 = vmul.f32 %v885, 1.442695
          %v911 = vpow.pop %v910
          %v912 = vmul.f32 %v886, 1.442695
          %v913 = vpow.pop %v912
          %v914 = vmul.f32 %v887, 1.442695
          %v915 = vpow.pop %v914
          %v916 = vmul.f32 %v888, 1.442695
          %v917 = vpow.pop %v916
          %v918 = vmul.f32 %v889, 1.442695
          %v919 = vpow.pop %v918
          %v920 = vmul.f32 %v890, 1.442695
          %v921 = vpow.pop %v920
          %v922 = vmul.f32 %v891, 1.442695
          %v923 = vpow.pop %v922
          %vm924 = vcmask 1040384
          %v925 = vsel %vm924, %v737, 1.0
          %926 = vmatprep.subr.mxu0 0.0
          %927 = vmatpush1.msra.mxu0 %v893
          %928 = vmatprep.subr.mxu0 0.0
          %929 = vmatpush1.msra.mxu0 %v895
          %930 = vmatprep.subr.mxu0 0.0
          %931 = vmatpush1.msra.mxu0 %v897
          %932 = vmatprep.subr.mxu0 0.0
          %933 = vmatpush1.msra.mxu0 %v899
          %934 = vmatprep.subr.mxu0 0.0
          %935 = vmatpush1.msra.mxu0 %v901
          %936 = vmatprep.subr.mxu0 0.0
          %937 = vmatpush1.msra.mxu0 %v903
          %938 = vmatprep.subr.mxu0 0.0
          %939 = vmatpush1.msra.mxu0 %v905
          %940 = vmatprep.subr.mxu0 0.0
          %941 = vmatpush1.msra.mxu0 %v907
          %942 = vmatprep.subr.mxu0 0.0
          %943 = vmatpush1.msra.mxu0 %v909
          %944 = vmatprep.subr.mxu0 0.0
          %945 = vmatpush1.msra.mxu0 %v911
          %946 = vmatprep.subr.mxu0 0.0
          %947 = vmatpush1.msra.mxu0 %v913
          %948 = vmatprep.subr.mxu0 0.0
          %949 = vmatpush1.msra.mxu0 %v915
          %950 = vmatprep.subr.mxu0 0.0
          %951 = vmatpush1.msra.mxu0 %v917
          %952 = vmatprep.subr.mxu0 0.0
          %953 = vmatpush1.msra.mxu0 %v919
          %954 = vmatprep.subr.mxu0 0.0
          %955 = vmatpush1.msra.mxu0 %v921
          %956 = vmatprep.subr.mxu0 0.0
          %957 = vmatpush1.msra.mxu0 %v923
          %958 = vmatprep.subr.mxu0 0.0
          %959 = vmatpush1.msra.mxu0 0.0
          %960 = vmatprep.subr.mxu0 0.0
          %961 = vmatpush1.msra.mxu0 0.0
          %962 = vmatprep.subr.mxu0 0.0
          %963 = vmatpush1.msra.mxu0 0.0
          %964 = vmatprep.subr.mxu0 0.0
          %965 = vmatpush1.msra.mxu0 0.0
          %966 = vmatprep.subr.mxu0 0.0
          %967 = vmatpush1.msra.mxu0 0.0
          %968 = vmatprep.subr.mxu0 0.0
          %969 = vmatpush1.msra.mxu0 0.0
          %970 = vmatprep.subr.mxu0 0.0
          %971 = vmatpush1.msra.mxu0 0.0
          %972 = vmatprep.subr.mxu0 0.0
          %973 = vmatpush1.msra.mxu0 0.0
          %974 = vmatprep.subr.mxu0 0.0
          %975 = vmatpush1.msra.mxu0 0.0
          %976 = vmatprep.subr.mxu0 0.0
          %977 = vmatpush1.msra.mxu0 0.0
          %978 = vmatprep.subr.mxu0 0.0
          %979 = vmatpush1.msra.mxu0 0.0
          %980 = vmatprep.subr.mxu0 0.0
          %981 = vmatpush1.msra.mxu0 0.0
          %982 = vmatprep.subr.mxu0 0.0
          %983 = vmatpush1.msra.mxu0 0.0
          %984 = vmatprep.subr.mxu0 0.0
          %985 = vmatpush1.msra.mxu0 0.0
          %986 = vmatprep.subr.mxu0 0.0
          %987 = vmatpush1.msra.mxu0 0.0
          %988 = vmatprep.subr.mxu0 0.0
          %989 = vmatpush1.msra.mxu0 0.0
          %990 = vmatprep.mubr.f32.mxu0 0.0
          %991 = vmatmul.mubr.f32.gmra.mrb[0].mxu0 %v925
          %v992 = vpop.f32.mrb[0].mxu0
          %v993 = vadd.f32 0.0, %v992
          %v994 = vpop.f32.mrb[0].mxu0
          %995 = vdwg.mxu0
          %v996 = vrcp.pop %v993
          %v998 = vrot.slane %v996, 1
          %v1000 = vmul.f32 %v993, %v998
          %1001 = vset.pattern.permute.xlu0 1
          %1002 = vperm.xlu0 %1001, %v756
          %v1003 = vpop.permute.xlu0 %1002
          %1005 = vset.pattern.permute.xlu0 1
          %1006 = vperm.xlu0 %1005, %v757
          %v1007 = vpop.permute.xlu0 %1006
          %1009 = vset.pattern.permute.xlu0 1
          %1010 = vperm.xlu0 %1009, %v758
          %v1011 = vpop.permute.xlu0 %1010
          %1013 = vset.pattern.permute.xlu0 1
          %1014 = vperm.xlu0 %1013, %v759
          %v1015 = vpop.permute.xlu0 %1014
          %1017 = vset.pattern.permute.xlu0 1
          %1018 = vperm.xlu0 %1017, %v760
          %v1019 = vpop.permute.xlu0 %1018
          %1021 = vset.pattern.permute.xlu0 1
          %1022 = vperm.xlu0 %1021, %v761
          %v1023 = vpop.permute.xlu0 %1022
          %1025 = vset.pattern.permute.xlu0 1
          %1026 = vperm.xlu0 %1025, %v762
          %v1027 = vpop.permute.xlu0 %1026
          %1029 = vset.pattern.permute.xlu0 1
          %1030 = vperm.xlu0 %1029, %v763
          %v1031 = vpop.permute.xlu0 %1030
          %1033 = vset.pattern.permute.xlu0 1
          %1034 = vperm.xlu0 %1033, %v764
          %v1035 = vpop.permute.xlu0 %1034
          %1037 = vset.pattern.permute.xlu0 1
          %1038 = vperm.xlu0 %1037, %v765
          %v1039 = vpop.permute.xlu0 %1038
          %1041 = vset.pattern.permute.xlu0 1
          %1042 = vperm.xlu0 %1041, %v766
          %v1043 = vpop.permute.xlu0 %1042
          %1045 = vset.pattern.permute.xlu0 1
          %1046 = vperm.xlu0 %1045, %v767
          %v1047 = vpop.permute.xlu0 %1046
          %1049 = vset.pattern.permute.xlu0 1
          %1050 = vperm.xlu0 %1049, %v768
          %v1051 = vpop.permute.xlu0 %1050
          %1053 = vset.pattern.permute.xlu0 1
          %1054 = vperm.xlu0 %1053, %v769
          %v1055 = vpop.permute.xlu0 %1054
          %1057 = vset.pattern.permute.xlu0 1
          %1058 = vperm.xlu0 %1057, %v770
          %v1059 = vpop.permute.xlu0 %1058
          %1061 = vset.pattern.permute.xlu0 1
          %1062 = vperm.xlu0 %1061, %v771
          %v1063 = vpop.permute.xlu0 %1062
          %v1065 = vlaneseq
          %v1066 = vshrl.u32 %v1065, 7
          %v1067 = vsub.s32 1, %v1066
          %v1068 = vrot.slane %v733, %v1067
          %v1069 = vmul.f32 %v1003, %v1068
          %v1070 = vmul.f32 %v1007, %v1068
          %v1071 = vmul.f32 %v1011, %v1068
          %v1072 = vmul.f32 %v1015, %v1068
          %v1073 = vmul.f32 %v1019, %v1068
          %v1074 = vmul.f32 %v1023, %v1068
          %v1075 = vmul.f32 %v1027, %v1068
          %v1076 = vmul.f32 %v1031, %v1068
          %v1077 = vmul.f32 %v1035, %v1068
          %v1078 = vmul.f32 %v1039, %v1068
          %v1079 = vmul.f32 %v1043, %v1068
          %v1080 = vmul.f32 %v1047, %v1068
          %v1081 = vmul.f32 %v1051, %v1068
          %v1082 = vmul.f32 %v1055, %v1068
          %v1083 = vmul.f32 %v1059, %v1068
          %v1084 = vmul.f32 %v1063, %v1068
          %v1085 = vlaneseq
          %v1086 = vshrl.u32 %v1085, 7
          %v1087 = vsub.s32 1, %v1086
          %v1088 = vrot.slane %v735, %v1087
          %v1089 = vsub.f32 %v1069, %v1088
          %v1090 = vsub.f32 %v1070, %v1088
          %v1091 = vsub.f32 %v1071, %v1088
          %v1092 = vsub.f32 %v1072, %v1088
          %v1093 = vsub.f32 %v1073, %v1088
          %v1094 = vsub.f32 %v1074, %v1088
          %v1095 = vsub.f32 %v1075, %v1088
          %v1096 = vsub.f32 %v1076, %v1088
          %v1097 = vsub.f32 %v1077, %v1088
          %v1098 = vsub.f32 %v1078, %v1088
          %v1099 = vsub.f32 %v1079, %v1088
          %v1100 = vsub.f32 %v1080, %v1088
          %v1101 = vsub.f32 %v1081, %v1088
          %v1102 = vsub.f32 %v1082, %v1088
          %v1103 = vsub.f32 %v1083, %v1088
          %v1104 = vsub.f32 %v1084, %v1088
          %v1105 = vmul.f32 %v1089, 1.442695
          %v1106 = vpow.pop %v1105
          %v1107 = vmul.f32 %v1090, 1.442695
          %v1108 = vpow.pop %v1107
          %v1109 = vmul.f32 %v1091, 1.442695
          %v1110 = vpow.pop %v1109
          %v1111 = vmul.f32 %v1092, 1.442695
          %v1112 = vpow.pop %v1111
          %v1113 = vmul.f32 %v1093, 1.442695
          %v1114 = vpow.pop %v1113
          %v1115 = vmul.f32 %v1094, 1.442695
          %v1116 = vpow.pop %v1115
          %v1117 = vmul.f32 %v1095, 1.442695
          %v1118 = vpow.pop %v1117
          %v1119 = vmul.f32 %v1096, 1.442695
          %v1120 = vpow.pop %v1119
          %v1121 = vmul.f32 %v1097, 1.442695
          %v1122 = vpow.pop %v1121
          %v1123 = vmul.f32 %v1098, 1.442695
          %v1124 = vpow.pop %v1123
          %v1125 = vmul.f32 %v1099, 1.442695
          %v1126 = vpow.pop %v1125
          %v1127 = vmul.f32 %v1100, 1.442695
          %v1128 = vpow.pop %v1127
          %v1129 = vmul.f32 %v1101, 1.442695
          %v1130 = vpow.pop %v1129
          %v1131 = vmul.f32 %v1102, 1.442695
          %v1132 = vpow.pop %v1131
          %v1133 = vmul.f32 %v1103, 1.442695
          %v1134 = vpow.pop %v1133
          %v1135 = vmul.f32 %v1104, 1.442695
          %v1136 = vpow.pop %v1135
          %v1138 = vrot.slane %v737, 1
          %v1140 = vsel %vm924, %v1138, 1.0
          %1141 = vmatprep.subr.mxu0 0.0
          %1142 = vmatpush1.msra.mxu0 %v1106
          %1143 = vmatprep.subr.mxu0 0.0
          %1144 = vmatpush1.msra.mxu0 %v1108
          %1145 = vmatprep.subr.mxu0 0.0
          %1146 = vmatpush1.msra.mxu0 %v1110
          %1147 = vmatprep.subr.mxu0 0.0
          %1148 = vmatpush1.msra.mxu0 %v1112
          %1149 = vmatprep.subr.mxu0 0.0
          %1150 = vmatpush1.msra.mxu0 %v1114
          %1151 = vmatprep.subr.mxu0 0.0
          %1152 = vmatpush1.msra.mxu0 %v1116
          %1153 = vmatprep.subr.mxu0 0.0
          %1154 = vmatpush1.msra.mxu0 %v1118
          %1155 = vmatprep.subr.mxu0 0.0
          %1156 = vmatpush1.msra.mxu0 %v1120
          %1157 = vmatprep.subr.mxu0 0.0
          %1158 = vmatpush1.msra.mxu0 %v1122
          %1159 = vmatprep.subr.mxu0 0.0
          %1160 = vmatpush1.msra.mxu0 %v1124
          %1161 = vmatprep.subr.mxu0 0.0
          %1162 = vmatpush1.msra.mxu0 %v1126
          %1163 = vmatprep.subr.mxu0 0.0
          %1164 = vmatpush1.msra.mxu0 %v1128
          %1165 = vmatprep.subr.mxu0 0.0
          %1166 = vmatpush1.msra.mxu0 %v1130
          %1167 = vmatprep.subr.mxu0 0.0
          %1168 = vmatpush1.msra.mxu0 %v1132
          %1169 = vmatprep.subr.mxu0 0.0
          %1170 = vmatpush1.msra.mxu0 %v1134
          %1171 = vmatprep.subr.mxu0 0.0
          %1172 = vmatpush1.msra.mxu0 %v1136
          %1173 = vmatprep.subr.mxu0 0.0
          %1174 = vmatpush1.msra.mxu0 0.0
          %1175 = vmatprep.subr.mxu0 0.0
          %1176 = vmatpush1.msra.mxu0 0.0
          %1177 = vmatprep.subr.mxu0 0.0
          %1178 = vmatpush1.msra.mxu0 0.0
          %1179 = vmatprep.subr.mxu0 0.0
          %1180 = vmatpush1.msra.mxu0 0.0
          %1181 = vmatprep.subr.mxu0 0.0
          %1182 = vmatpush1.msra.mxu0 0.0
          %1183 = vmatprep.subr.mxu0 0.0
          %1184 = vmatpush1.msra.mxu0 0.0
          %1185 = vmatprep.subr.mxu0 0.0
          %1186 = vmatpush1.msra.mxu0 0.0
          %1187 = vmatprep.subr.mxu0 0.0
          %1188 = vmatpush1.msra.mxu0 0.0
          %1189 = vmatprep.subr.mxu0 0.0
          %1190 = vmatpush1.msra.mxu0 0.0
          %1191 = vmatprep.subr.mxu0 0.0
          %1192 = vmatpush1.msra.mxu0 0.0
          %1193 = vmatprep.subr.mxu0 0.0
          %1194 = vmatpush1.msra.mxu0 0.0
          %1195 = vmatprep.subr.mxu0 0.0
          %1196 = vmatpush1.msra.mxu0 0.0
          %1197 = vmatprep.subr.mxu0 0.0
          %1198 = vmatpush1.msra.mxu0 0.0
          %1199 = vmatprep.subr.mxu0 0.0
          %1200 = vmatpush1.msra.mxu0 0.0
          %1201 = vmatprep.subr.mxu0 0.0
          %1202 = vmatpush1.msra.mxu0 0.0
          %1203 = vmatprep.subr.mxu0 0.0
          %1204 = vmatpush1.msra.mxu0 0.0
          %1205 = vmatprep.mubr.f32.mxu0 0.0
          %1206 = vmatmul.mubr.f32.gmra.mrb[0].mxu0 %v1140
          %v1207 = vpop.f32.mrb[0].mxu0
          %v1208 = vadd.f32 0.0, %v1207
          %v1209 = vpop.f32.mrb[0].mxu0
          %1210 = vdwg.mxu0
          %v1211 = vrcp.pop %v1208
          %v1213 = vrot.slane %v1211, 1
          %v1215 = vmul.f32 %v1208, %v1213
          %1216 = vset.pattern.permute.xlu0 2
          %1217 = vperm.xlu0 %1216, %v756
          %v1218 = vpop.permute.xlu0 %1217
          %1220 = vset.pattern.permute.xlu0 2
          %1221 = vperm.xlu0 %1220, %v757
          %v1222 = vpop.permute.xlu0 %1221
          %1224 = vset.pattern.permute.xlu0 2
          %1225 = vperm.xlu0 %1224, %v758
          %v1226 = vpop.permute.xlu0 %1225
          %1228 = vset.pattern.permute.xlu0 2
          %1229 = vperm.xlu0 %1228, %v759
          %v1230 = vpop.permute.xlu0 %1229
          %1232 = vset.pattern.permute.xlu0 2
          %1233 = vperm.xlu0 %1232, %v760
          %v1234 = vpop.permute.xlu0 %1233
          %1236 = vset.pattern.permute.xlu0 2
          %1237 = vperm.xlu0 %1236, %v761
          %v1238 = vpop.permute.xlu0 %1237
          %1240 = vset.pattern.permute.xlu0 2
          %1241 = vperm.xlu0 %1240, %v762
          %v1242 = vpop.permute.xlu0 %1241
          %1244 = vset.pattern.permute.xlu0 2
          %1245 = vperm.xlu0 %1244, %v763
          %v1246 = vpop.permute.xlu0 %1245
          %1248 = vset.pattern.permute.xlu0 2
          %1249 = vperm.xlu0 %1248, %v764
          %v1250 = vpop.permute.xlu0 %1249
          %1252 = vset.pattern.permute.xlu0 2
          %1253 = vperm.xlu0 %1252, %v765
          %v1254 = vpop.permute.xlu0 %1253
          %1256 = vset.pattern.permute.xlu0 2
          %1257 = vperm.xlu0 %1256, %v766
          %v1258 = vpop.permute.xlu0 %1257
          %1260 = vset.pattern.permute.xlu0 2
          %1261 = vperm.xlu0 %1260, %v767
          %v1262 = vpop.permute.xlu0 %1261
          %1264 = vset.pattern.permute.xlu0 2
          %1265 = vperm.xlu0 %1264, %v768
          %v1266 = vpop.permute.xlu0 %1265
          %1268 = vset.pattern.permute.xlu0 2
          %1269 = vperm.xlu0 %1268, %v769
          %v1270 = vpop.permute.xlu0 %1269
          %1272 = vset.pattern.permute.xlu0 2
          %1273 = vperm.xlu0 %1272, %v770
          %v1274 = vpop.permute.xlu0 %1273
          %1276 = vset.pattern.permute.xlu0 2
          %1277 = vperm.xlu0 %1276, %v771
          %v1278 = vpop.permute.xlu0 %1277
          %v1280 = vlaneseq
          %v1281 = vshrl.u32 %v1280, 7
          %v1282 = vsub.s32 2, %v1281
          %v1283 = vrot.slane %v733, %v1282
          %v1284 = vmul.f32 %v1218, %v1283
          %v1285 = vmul.f32 %v1222, %v1283
          %v1286 = vmul.f32 %v1226, %v1283
          %v1287 = vmul.f32 %v1230, %v1283
          %v1288 = vmul.f32 %v1234, %v1283
          %v1289 = vmul.f32 %v1238, %v1283
          %v1290 = vmul.f32 %v1242, %v1283
          %v1291 = vmul.f32 %v1246, %v1283
          %v1292 = vmul.f32 %v1250, %v1283
          %v1293 = vmul.f32 %v1254, %v1283
          %v1294 = vmul.f32 %v1258, %v1283
          %v1295 = vmul.f32 %v1262, %v1283
          %v1296 = vmul.f32 %v1266, %v1283
          %v1297 = vmul.f32 %v1270, %v1283
          %v1298 = vmul.f32 %v1274, %v1283
          %v1299 = vmul.f32 %v1278, %v1283
          %v1300 = vlaneseq
          %v1301 = vshrl.u32 %v1300, 7
          %v1302 = vsub.s32 2, %v1301
          %v1303 = vrot.slane %v735, %v1302
          %v1304 = vsub.f32 %v1284, %v1303
          %v1305 = vsub.f32 %v1285, %v1303
          %v1306 = vsub.f32 %v1286, %v1303
          %v1307 = vsub.f32 %v1287, %v1303
          %v1308 = vsub.f32 %v1288, %v1303
          %v1309 = vsub.f32 %v1289, %v1303
          %v1310 = vsub.f32 %v1290, %v1303
          %v1311 = vsub.f32 %v1291, %v1303
          %v1312 = vsub.f32 %v1292, %v1303
          %v1313 = vsub.f32 %v1293, %v1303
          %v1314 = vsub.f32 %v1294, %v1303
          %v1315 = vsub.f32 %v1295, %v1303
          %v1316 = vsub.f32 %v1296, %v1303
          %v1317 = vsub.f32 %v1297, %v1303
          %v1318 = vsub.f32 %v1298, %v1303
          %v1319 = vsub.f32 %v1299, %v1303
          %v1320 = vmul.f32 %v1304, 1.442695
          %v1321 = vpow.pop %v1320
          %v1322 = vmul.f32 %v1305, 1.442695
          %v1323 = vpow.pop %v1322
          %v1324 = vmul.f32 %v1306, 1.442695
          %v1325 = vpow.pop %v1324
          %v1326 = vmul.f32 %v1307, 1.442695
          %v1327 = vpow.pop %v1326
          %v1328 = vmul.f32 %v1308, 1.442695
          %v1329 = vpow.pop %v1328
          %v1330 = vmul.f32 %v1309, 1.442695
          %v1331 = vpow.pop %v1330
          %v1332 = vmul.f32 %v1310, 1.442695
          %v1333 = vpow.pop %v1332
          %v1334 = vmul.f32 %v1311, 1.442695
          %v1335 = vpow.pop %v1334
          %v1336 = vmul.f32 %v1312, 1.442695
          %v1337 = vpow.pop %v1336
          %v1338 = vmul.f32 %v1313, 1.442695
          %v1339 = vpow.pop %v1338
          %v1340 = vmul.f32 %v1314, 1.442695
          %v1341 = vpow.pop %v1340
          %v1342 = vmul.f32 %v1315, 1.442695
          %v1343 = vpow.pop %v1342
          %v1344 = vmul.f32 %v1316, 1.442695
          %v1345 = vpow.pop %v1344
          %v1346 = vmul.f32 %v1317, 1.442695
          %v1347 = vpow.pop %v1346
          %v1348 = vmul.f32 %v1318, 1.442695
          %v1349 = vpow.pop %v1348
          %v1350 = vmul.f32 %v1319, 1.442695
          %v1351 = vpow.pop %v1350
          %v1352 = vrot.slane %v737, 2
          %v1354 = vsel %vm924, %v1352, 1.0
          %1355 = vmatprep.subr.mxu0 0.0
          %1356 = vmatpush1.msra.mxu0 %v1321
          %1357 = vmatprep.subr.mxu0 0.0
          %1358 = vmatpush1.msra.mxu0 %v1323
          %1359 = vmatprep.subr.mxu0 0.0
          %1360 = vmatpush1.msra.mxu0 %v1325
          %1361 = vmatprep.subr.mxu0 0.0
          %1362 = vmatpush1.msra.mxu0 %v1327
          %1363 = vmatprep.subr.mxu0 0.0
          %1364 = vmatpush1.msra.mxu0 %v1329
          %1365 = vmatprep.subr.mxu0 0.0
          %1366 = vmatpush1.msra.mxu0 %v1331
          %1367 = vmatprep.subr.mxu0 0.0
          %1368 = vmatpush1.msra.mxu0 %v1333
          %1369 = vmatprep.subr.mxu0 0.0
          %1370 = vmatpush1.msra.mxu0 %v1335
          %1371 = vmatprep.subr.mxu0 0.0
          %1372 = vmatpush1.msra.mxu0 %v1337
          %1373 = vmatprep.subr.mxu0 0.0
          %1374 = vmatpush1.msra.mxu0 %v1339
          %1375 = vmatprep.subr.mxu0 0.0
          %1376 = vmatpush1.msra.mxu0 %v1341
          %1377 = vmatprep.subr.mxu0 0.0
          %1378 = vmatpush1.msra.mxu0 %v1343
          %1379 = vmatprep.subr.mxu0 0.0
          %1380 = vmatpush1.msra.mxu0 %v1345
          %1381 = vmatprep.subr.mxu0 0.0
          %1382 = vmatpush1.msra.mxu0 %v1347
          %1383 = vmatprep.subr.mxu0 0.0
          %1384 = vmatpush1.msra.mxu0 %v1349
          %1385 = vmatprep.subr.mxu0 0.0
          %1386 = vmatpush1.msra.mxu0 %v1351
          %1387 = vmatprep.subr.mxu0 0.0
          %1388 = vmatpush1.msra.mxu0 0.0
          %1389 = vmatprep.subr.mxu0 0.0
          %1390 = vmatpush1.msra.mxu0 0.0
          %1391 = vmatprep.subr.mxu0 0.0
          %1392 = vmatpush1.msra.mxu0 0.0
          %1393 = vmatprep.subr.mxu0 0.0
          %1394 = vmatpush1.msra.mxu0 0.0
          %1395 = vmatprep.subr.mxu0 0.0
          %1396 = vmatpush1.msra.mxu0 0.0
          %1397 = vmatprep.subr.mxu0 0.0
          %1398 = vmatpush1.msra.mxu0 0.0
          %1399 = vmatprep.subr.mxu0 0.0
          %1400 = vmatpush1.msra.mxu0 0.0
          %1401 = vmatprep.subr.mxu0 0.0
          %1402 = vmatpush1.msra.mxu0 0.0
          %1403 = vmatprep.subr.mxu0 0.0
          %1404 = vmatpush1.msra.mxu0 0.0
          %1405 = vmatprep.subr.mxu0 0.0
          %1406 = vmatpush1.msra.mxu0 0.0
          %1407 = vmatprep.subr.mxu0 0.0
          %1408 = vmatpush1.msra.mxu0 0.0
          %1409 = vmatprep.subr.mxu0 0.0
          %1410 = vmatpush1.msra.mxu0 0.0
          %1411 = vmatprep.subr.mxu0 0.0
          %1412 = vmatpush1.msra.mxu0 0.0
          %1413 = vmatprep.subr.mxu0 0.0
          %1414 = vmatpush1.msra.mxu0 0.0
          %1415 = vmatprep.subr.mxu0 0.0
          %1416 = vmatpush1.msra.mxu0 0.0
          %1417 = vmatprep.subr.mxu0 0.0
          %1418 = vmatpush1.msra.mxu0 0.0
          %1419 = vmatprep.mubr.f32.mxu0 0.0
          %1420 = vmatmul.mubr.f32.gmra.mrb[0].mxu0 %v1354
          %v1421 = vpop.f32.mrb[0].mxu0
          %v1422 = vadd.f32 0.0, %v1421
          %v1423 = vpop.f32.mrb[0].mxu0
          %1424 = vdwg.mxu0
          %v1425 = vrcp.pop %v1422
          %v1427 = vrot.slane %v1425, 1
          %v1429 = vmul.f32 %v1422, %v1427
          %1430 = vset.pattern.permute.xlu0 3
          %1431 = vperm.xlu0 %1430, %v756
          %v1432 = vpop.permute.xlu0 %1431
          %1434 = vset.pattern.permute.xlu0 3
          %1435 = vperm.xlu0 %1434, %v757
          %v1436 = vpop.permute.xlu0 %1435
          %1438 = vset.pattern.permute.xlu0 3
          %1439 = vperm.xlu0 %1438, %v758
          %v1440 = vpop.permute.xlu0 %1439
          %1442 = vset.pattern.permute.xlu0 3
          %1443 = vperm.xlu0 %1442, %v759
          %v1444 = vpop.permute.xlu0 %1443
          %1446 = vset.pattern.permute.xlu0 3
          %1447 = vperm.xlu0 %1446, %v760
          %v1448 = vpop.permute.xlu0 %1447
          %1450 = vset.pattern.permute.xlu0 3
          %1451 = vperm.xlu0 %1450, %v761
          %v1452 = vpop.permute.xlu0 %1451
          %1454 = vset.pattern.permute.xlu0 3
          %1455 = vperm.xlu0 %1454, %v762
          %v1456 = vpop.permute.xlu0 %1455
          %1458 = vset.pattern.permute.xlu0 3
          %1459 = vperm.xlu0 %1458, %v763
          %v1460 = vpop.permute.xlu0 %1459
          %1462 = vset.pattern.permute.xlu0 3
          %1463 = vperm.xlu0 %1462, %v764
          %v1464 = vpop.permute.xlu0 %1463
          %1466 = vset.pattern.permute.xlu0 3
          %1467 = vperm.xlu0 %1466, %v765
          %v1468 = vpop.permute.xlu0 %1467
          %1470 = vset.pattern.permute.xlu0 3
          %1471 = vperm.xlu0 %1470, %v766
          %v1472 = vpop.permute.xlu0 %1471
          %1474 = vset.pattern.permute.xlu0 3
          %1475 = vperm.xlu0 %1474, %v767
          %v1476 = vpop.permute.xlu0 %1475
          %1478 = vset.pattern.permute.xlu0 3
          %1479 = vperm.xlu0 %1478, %v768
          %v1480 = vpop.permute.xlu0 %1479
          %1482 = vset.pattern.permute.xlu0 3
          %1483 = vperm.xlu0 %1482, %v769
          %v1484 = vpop.permute.xlu0 %1483
          %1486 = vset.pattern.permute.xlu0 3
          %1487 = vperm.xlu0 %1486, %v770
          %v1488 = vpop.permute.xlu0 %1487
          %1490 = vset.pattern.permute.xlu0 3
          %1491 = vperm.xlu0 %1490, %v771
          %v1492 = vpop.permute.xlu0 %1491
          %v1494 = vlaneseq
          %v1495 = vshrl.u32 %v1494, 7
          %v1496 = vsub.s32 3, %v1495
          %v1497 = vrot.slane %v733, %v1496
          %v1498 = vmul.f32 %v1432, %v1497
          %v1499 = vmul.f32 %v1436, %v1497
          %v1500 = vmul.f32 %v1440, %v1497
          %v1501 = vmul.f32 %v1444, %v1497
          %v1502 = vmul.f32 %v1448, %v1497
          %v1503 = vmul.f32 %v1452, %v1497
          %v1504 = vmul.f32 %v1456, %v1497
          %v1505 = vmul.f32 %v1460, %v1497
          %v1506 = vmul.f32 %v1464, %v1497
          %v1507 = vmul.f32 %v1468, %v1497
          %v1508 = vmul.f32 %v1472, %v1497
          %v1509 = vmul.f32 %v1476, %v1497
          %v1510 = vmul.f32 %v1480, %v1497
          %v1511 = vmul.f32 %v1484, %v1497
          %v1512 = vmul.f32 %v1488, %v1497
          %v1513 = vmul.f32 %v1492, %v1497
          %v1514 = vlaneseq
          %v1515 = vshrl.u32 %v1514, 7
          %v1516 = vsub.s32 3, %v1515
          %v1517 = vrot.slane %v735, %v1516
          %v1518 = vsub.f32 %v1498, %v1517
          %v1519 = vsub.f32 %v1499, %v1517
          %v1520 = vsub.f32 %v1500, %v1517
          %v1521 = vsub.f32 %v1501, %v1517
          %v1522 = vsub.f32 %v1502, %v1517
          %v1523 = vsub.f32 %v1503, %v1517
          %v1524 = vsub.f32 %v1504, %v1517
          %v1525 = vsub.f32 %v1505, %v1517
          %v1526 = vsub.f32 %v1506, %v1517
          %v1527 = vsub.f32 %v1507, %v1517
          %v1528 = vsub.f32 %v1508, %v1517
          %v1529 = vsub.f32 %v1509, %v1517
          %v1530 = vsub.f32 %v1510, %v1517
          %v1531 = vsub.f32 %v1511, %v1517
          %v1532 = vsub.f32 %v1512, %v1517
          %v1533 = vsub.f32 %v1513, %v1517
          %v1534 = vmul.f32 %v1518, 1.442695
          %v1535 = vpow.pop %v1534
          %v1536 = vmul.f32 %v1519, 1.442695
          %v1537 = vpow.pop %v1536
          %v1538 = vmul.f32 %v1520, 1.442695
          %v1539 = vpow.pop %v1538
          %v1540 = vmul.f32 %v1521, 1.442695
          %v1541 = vpow.pop %v1540
          %v1542 = vmul.f32 %v1522, 1.442695
          %v1543 = vpow.pop %v1542
          %v1544 = vmul.f32 %v1523, 1.442695
          %v1545 = vpow.pop %v1544
          %v1546 = vmul.f32 %v1524, 1.442695
          %v1547 = vpow.pop %v1546
          %v1548 = vmul.f32 %v1525, 1.442695
          %v1549 = vpow.pop %v1548
          %v1550 = vmul.f32 %v1526, 1.442695
          %v1551 = vpow.pop %v1550
          %v1552 = vmul.f32 %v1527, 1.442695
          %v1553 = vpow.pop %v1552
          %v1554 = vmul.f32 %v1528, 1.442695
          %v1555 = vpow.pop %v1554
          %v1556 = vmul.f32 %v1529, 1.442695
          %v1557 = vpow.pop %v1556
          %v1558 = vmul.f32 %v1530, 1.442695
          %v1559 = vpow.pop %v1558
          %v1560 = vmul.f32 %v1531, 1.442695
          %v1561 = vpow.pop %v1560
          %v1562 = vmul.f32 %v1532, 1.442695
          %v1563 = vpow.pop %v1562
          %v1564 = vmul.f32 %v1533, 1.442695
          %v1565 = vpow.pop %v1564
          %v1566 = vrot.slane %v737, 3
          %v1568 = vsel %vm924, %v1566, 1.0
          %1569 = vmatprep.subr.mxu0 0.0
          %1570 = vmatpush1.msra.mxu0 %v1535
          %1571 = vmatprep.subr.mxu0 0.0
          %1572 = vmatpush1.msra.mxu0 %v1537
          %1573 = vmatprep.subr.mxu0 0.0
          %1574 = vmatpush1.msra.mxu0 %v1539
          %1575 = vmatprep.subr.mxu0 0.0
          %1576 = vmatpush1.msra.mxu0 %v1541
          %1577 = vmatprep.subr.mxu0 0.0
          %1578 = vmatpush1.msra.mxu0 %v1543
          %1579 = vmatprep.subr.mxu0 0.0
          %1580 = vmatpush1.msra.mxu0 %v1545
          %1581 = vmatprep.subr.mxu0 0.0
          %1582 = vmatpush1.msra.mxu0 %v1547
          %1583 = vmatprep.subr.mxu0 0.0
          %1584 = vmatpush1.msra.mxu0 %v1549
          %1585 = vmatprep.subr.mxu0 0.0
          %1586 = vmatpush1.msra.mxu0 %v1551
          %1587 = vmatprep.subr.mxu0 0.0
          %1588 = vmatpush1.msra.mxu0 %v1553
          %1589 = vmatprep.subr.mxu0 0.0
          %1590 = vmatpush1.msra.mxu0 %v1555
          %1591 = vmatprep.subr.mxu0 0.0
          %1592 = vmatpush1.msra.mxu0 %v1557
          %1593 = vmatprep.subr.mxu0 0.0
          %1594 = vmatpush1.msra.mxu0 %v1559
          %1595 = vmatprep.subr.mxu0 0.0
          %1596 = vmatpush1.msra.mxu0 %v1561
          %1597 = vmatprep.subr.mxu0 0.0
          %1598 = vmatpush1.msra.mxu0 %v1563
          %1599 = vmatprep.subr.mxu0 0.0
          %1600 = vmatpush1.msra.mxu0 %v1565
          %1601 = vmatprep.subr.mxu0 0.0
          %1602 = vmatpush1.msra.mxu0 0.0
          %1603 = vmatprep.subr.mxu0 0.0
          %1604 = vmatpush1.msra.mxu0 0.0
          %1605 = vmatprep.subr.mxu0 0.0
          %1606 = vmatpush1.msra.mxu0 0.0
          %1607 = vmatprep.subr.mxu0 0.0
          %1608 = vmatpush1.msra.mxu0 0.0
          %1609 = vmatprep.subr.mxu0 0.0
          %1610 = vmatpush1.msra.mxu0 0.0
          %1611 = vmatprep.subr.mxu0 0.0
          %1612 = vmatpush1.msra.mxu0 0.0
          %1613 = vmatprep.subr.mxu0 0.0
          %1614 = vmatpush1.msra.mxu0 0.0
          %1615 = vmatprep.subr.mxu0 0.0
          %1616 = vmatpush1.msra.mxu0 0.0
          %1617 = vmatprep.subr.mxu0 0.0
          %1618 = vmatpush1.msra.mxu0 0.0
          %1619 = vmatprep.subr.mxu0 0.0
          %1620 = vmatpush1.msra.mxu0 0.0
          %1621 = vmatprep.subr.mxu0 0.0
          %1622 = vmatpush1.msra.mxu0 0.0
          %1623 = vmatprep.subr.mxu0 0.0
          %1624 = vmatpush1.msra.mxu0 0.0
          %1625 = vmatprep.subr.mxu0 0.0
          %1626 = vmatpush1.msra.mxu0 0.0
          %1627 = vmatprep.subr.mxu0 0.0
          %1628 = vmatpush1.msra.mxu0 0.0
          %1629 = vmatprep.subr.mxu0 0.0
          %1630 = vmatpush1.msra.mxu0 0.0
          %1631 = vmatprep.subr.mxu0 0.0
          %1632 = vmatpush1.msra.mxu0 0.0
          %1633 = vmatprep.mubr.f32.mxu0 0.0
          %1634 = vmatmul.mubr.f32.gmra.mrb[0].mxu0 %v1568
          %v1635 = vpop.f32.mrb[0].mxu0
          %v1636 = vadd.f32 0.0, %v1635
          %v1637 = vpop.f32.mrb[0].mxu0
          %1638 = vdwg.mxu0
          %v1639 = vrcp.pop %v1636
          %v1641 = vrot.slane %v1639, 1
          %v1643 = vmul.f32 %v1636, %v1641
          %1644 = vset.pattern.permute.xlu0 4
          %1645 = vperm.xlu0 %1644, %v756
          %v1646 = vpop.permute.xlu0 %1645
          %1648 = vset.pattern.permute.xlu0 4
          %1649 = vperm.xlu0 %1648, %v757
          %v1650 = vpop.permute.xlu0 %1649
          %1652 = vset.pattern.permute.xlu0 4
          %1653 = vperm.xlu0 %1652, %v758
          %v1654 = vpop.permute.xlu0 %1653
          %1656 = vset.pattern.permute.xlu0 4
          %1657 = vperm.xlu0 %1656, %v759
          %v1658 = vpop.permute.xlu0 %1657
          %1660 = vset.pattern.permute.xlu0 4
          %1661 = vperm.xlu0 %1660, %v760
          %v1662 = vpop.permute.xlu0 %1661
          %1664 = vset.pattern.permute.xlu0 4
          %1665 = vperm.xlu0 %1664, %v761
          %v1666 = vpop.permute.xlu0 %1665
          %1668 = vset.pattern.permute.xlu0 4
          %1669 = vperm.xlu0 %1668, %v762
          %v1670 = vpop.permute.xlu0 %1669
          %1672 = vset.pattern.permute.xlu0 4
          %1673 = vperm.xlu0 %1672, %v763
          %v1674 = vpop.permute.xlu0 %1673
          %1676 = vset.pattern.permute.xlu0 4
          %1677 = vperm.xlu0 %1676, %v764
          %v1678 = vpop.permute.xlu0 %1677
          %1680 = vset.pattern.permute.xlu0 4
          %1681 = vperm.xlu0 %1680, %v765
          %v1682 = vpop.permute.xlu0 %1681
          %1684 = vset.pattern.permute.xlu0 4
          %1685 = vperm.xlu0 %1684, %v766
          %v1686 = vpop.permute.xlu0 %1685
          %1688 = vset.pattern.permute.xlu0 4
          %1689 = vperm.xlu0 %1688, %v767
          %v1690 = vpop.permute.xlu0 %1689
          %1692 = vset.pattern.permute.xlu0 4
          %1693 = vperm.xlu0 %1692, %v768
          %v1694 = vpop.permute.xlu0 %1693
          %1696 = vset.pattern.permute.xlu0 4
          %1697 = vperm.xlu0 %1696, %v769
          %v1698 = vpop.permute.xlu0 %1697
          %1700 = vset.pattern.permute.xlu0 4
          %1701 = vperm.xlu0 %1700, %v770
          %v1702 = vpop.permute.xlu0 %1701
          %1704 = vset.pattern.permute.xlu0 4
          %1705 = vperm.xlu0 %1704, %v771
          %v1706 = vpop.permute.xlu0 %1705
          %v1708 = vlaneseq
          %v1709 = vshrl.u32 %v1708, 7
          %v1710 = vsub.s32 4, %v1709
          %v1711 = vrot.slane %v733, %v1710
          %v1712 = vmul.f32 %v1646, %v1711
          %v1713 = vmul.f32 %v1650, %v1711
          %v1714 = vmul.f32 %v1654, %v1711
          %v1715 = vmul.f32 %v1658, %v1711
          %v1716 = vmul.f32 %v1662, %v1711
          %v1717 = vmul.f32 %v1666, %v1711
          %v1718 = vmul.f32 %v1670, %v1711
          %v1719 = vmul.f32 %v1674, %v1711
          %v1720 = vmul.f32 %v1678, %v1711
          %v1721 = vmul.f32 %v1682, %v1711
          %v1722 = vmul.f32 %v1686, %v1711
          %v1723 = vmul.f32 %v1690, %v1711
          %v1724 = vmul.f32 %v1694, %v1711
          %v1725 = vmul.f32 %v1698, %v1711
          %v1726 = vmul.f32 %v1702, %v1711
          %v1727 = vmul.f32 %v1706, %v1711
          %v1728 = vlaneseq
          %v1729 = vshrl.u32 %v1728, 7
          %v1730 = vsub.s32 4, %v1729
          %v1731 = vrot.slane %v735, %v1730
          %v1732 = vsub.f32 %v1712, %v1731
          %v1733 = vsub.f32 %v1713, %v1731
          %v1734 = vsub.f32 %v1714, %v1731
          %v1735 = vsub.f32 %v1715, %v1731
          %v1736 = vsub.f32 %v1716, %v1731
          %v1737 = vsub.f32 %v1717, %v1731
          %v1738 = vsub.f32 %v1718, %v1731
          %v1739 = vsub.f32 %v1719, %v1731
          %v1740 = vsub.f32 %v1720, %v1731
          %v1741 = vsub.f32 %v1721, %v1731
          %v1742 = vsub.f32 %v1722, %v1731
          %v1743 = vsub.f32 %v1723, %v1731
          %v1744 = vsub.f32 %v1724, %v1731
          %v1745 = vsub.f32 %v1725, %v1731
          %v1746 = vsub.f32 %v1726, %v1731
          %v1747 = vsub.f32 %v1727, %v1731
          %v1748 = vmul.f32 %v1732, 1.442695
          %v1749 = vpow.pop %v1748
          %v1750 = vmul.f32 %v1733, 1.442695
          %v1751 = vpow.pop %v1750
          %v1752 = vmul.f32 %v1734, 1.442695
          %v1753 = vpow.pop %v1752
          %v1754 = vmul.f32 %v1735, 1.442695
          %v1755 = vpow.pop %v1754
          %v1756 = vmul.f32 %v1736, 1.442695
          %v1757 = vpow.pop %v1756
          %v1758 = vmul.f32 %v1737, 1.442695
          %v1759 = vpow.pop %v1758
          %v1760 = vmul.f32 %v1738, 1.442695
          %v1761 = vpow.pop %v1760
          %v1762 = vmul.f32 %v1739, 1.442695
          %v1763 = vpow.pop %v1762
          %v1764 = vmul.f32 %v1740, 1.442695
          %v1765 = vpow.pop %v1764
          %v1766 = vmul.f32 %v1741, 1.442695
          %v1767 = vpow.pop %v1766
          %v1768 = vmul.f32 %v1742, 1.442695
          %v1769 = vpow.pop %v1768
          %v1770 = vmul.f32 %v1743, 1.442695
          %v1771 = vpow.pop %v1770
          %v1772 = vmul.f32 %v1744, 1.442695
          %v1773 = vpow.pop %v1772
          %v1774 = vmul.f32 %v1745, 1.442695
          %v1775 = vpow.pop %v1774
          %v1776 = vmul.f32 %v1746, 1.442695
          %v1777 = vpow.pop %v1776
          %v1778 = vmul.f32 %v1747, 1.442695
          %v1779 = vpow.pop %v1778
          %v1780 = vrot.slane %v737, 4
          %v1782 = vsel %vm924, %v1780, 1.0
          %1783 = vmatprep.subr.mxu0 0.0
          %1784 = vmatpush1.msra.mxu0 %v1749
          %1785 = vmatprep.subr.mxu0 0.0
          %1786 = vmatpush1.msra.mxu0 %v1751
          %1787 = vmatprep.subr.mxu0 0.0
          %1788 = vmatpush1.msra.mxu0 %v1753
          %1789 = vmatprep.subr.mxu0 0.0
          %1790 = vmatpush1.msra.mxu0 %v1755
          %1791 = vmatprep.subr.mxu0 0.0
          %1792 = vmatpush1.msra.mxu0 %v1757
          %1793 = vmatprep.subr.mxu0 0.0
          %1794 = vmatpush1.msra.mxu0 %v1759
          %1795 = vmatprep.subr.mxu0 0.0
          %1796 = vmatpush1.msra.mxu0 %v1761
          %1797 = vmatprep.subr.mxu0 0.0
          %1798 = vmatpush1.msra.mxu0 %v1763
          %1799 = vmatprep.subr.mxu0 0.0
          %1800 = vmatpush1.msra.mxu0 %v1765
          %1801 = vmatprep.subr.mxu0 0.0
          %1802 = vmatpush1.msra.mxu0 %v1767
          %1803 = vmatprep.subr.mxu0 0.0
          %1804 = vmatpush1.msra.mxu0 %v1769
          %1805 = vmatprep.subr.mxu0 0.0
          %1806 = vmatpush1.msra.mxu0 %v1771
          %1807 = vmatprep.subr.mxu0 0.0
          %1808 = vmatpush1.msra.mxu0 %v1773
          %1809 = vmatprep.subr.mxu0 0.0
          %1810 = vmatpush1.msra.mxu0 %v1775
          %1811 = vmatprep.subr.mxu0 0.0
          %1812 = vmatpush1.msra.mxu0 %v1777
          %1813 = vmatprep.subr.mxu0 0.0
          %1814 = vmatpush1.msra.mxu0 %v1779
          %1815 = vmatprep.subr.mxu0 0.0
          %1816 = vmatpush1.msra.mxu0 0.0
          %1817 = vmatprep.subr.mxu0 0.0
          %1818 = vmatpush1.msra.mxu0 0.0
          %1819 = vmatprep.subr.mxu0 0.0
          %1820 = vmatpush1.msra.mxu0 0.0
          %1821 = vmatprep.subr.mxu0 0.0
          %1822 = vmatpush1.msra.mxu0 0.0
          %1823 = vmatprep.subr.mxu0 0.0
          %1824 = vmatpush1.msra.mxu0 0.0
          %1825 = vmatprep.subr.mxu0 0.0
          %1826 = vmatpush1.msra.mxu0 0.0
          %1827 = vmatprep.subr.mxu0 0.0
          %1828 = vmatpush1.msra.mxu0 0.0
          %1829 = vmatprep.subr.mxu0 0.0
          %1830 = vmatpush1.msra.mxu0 0.0
          %1831 = vmatprep.subr.mxu0 0.0
          %1832 = vmatpush1.msra.mxu0 0.0
          %1833 = vmatprep.subr.mxu0 0.0
          %1834 = vmatpush1.msra.mxu0 0.0
          %1835 = vmatprep.subr.mxu0 0.0
          %1836 = vmatpush1.msra.mxu0 0.0
          %1837 = vmatprep.subr.mxu0 0.0
          %1838 = vmatpush1.msra.mxu0 0.0
          %1839 = vmatprep.subr.mxu0 0.0
          %1840 = vmatpush1.msra.mxu0 0.0
          %1841 = vmatprep.subr.mxu0 0.0
          %1842 = vmatpush1.msra.mxu0 0.0
          %1843 = vmatprep.subr.mxu0 0.0
          %1844 = vmatpush1.msra.mxu0 0.0
          %1845 = vmatprep.subr.mxu0 0.0
          %1846 = vmatpush1.msra.mxu0 0.0
          %1847 = vmatprep.mubr.f32.mxu0 0.0
          %1848 = vmatmul.mubr.f32.gmra.mrb[0].mxu0 %v1782
          %v1849 = vpop.f32.mrb[0].mxu0
          %v1850 = vadd.f32 0.0, %v1849
          %v1851 = vpop.f32.mrb[0].mxu0
          %1852 = vdwg.mxu0
          %v1853 = vrcp.pop %v1850
          %v1855 = vrot.slane %v1853, 1
          %v1857 = vmul.f32 %v1850, %v1855
          %1858 = vset.pattern.permute.xlu0 5
          %1859 = vperm.xlu0 %1858, %v756
          %v1860 = vpop.permute.xlu0 %1859
          %1862 = vset.pattern.permute.xlu0 5
          %1863 = vperm.xlu0 %1862, %v757
          %v1864 = vpop.permute.xlu0 %1863
          %1866 = vset.pattern.permute.xlu0 5
          %1867 = vperm.xlu0 %1866, %v758
          %v1868 = vpop.permute.xlu0 %1867
          %1870 = vset.pattern.permute.xlu0 5
          %1871 = vperm.xlu0 %1870, %v759
          %v1872 = vpop.permute.xlu0 %1871
          %1874 = vset.pattern.permute.xlu0 5
          %1875 = vperm.xlu0 %1874, %v760
          %v1876 = vpop.permute.xlu0 %1875
          %1878 = vset.pattern.permute.xlu0 5
          %1879 = vperm.xlu0 %1878, %v761
          %v1880 = vpop.permute.xlu0 %1879
          %1882 = vset.pattern.permute.xlu0 5
          %1883 = vperm.xlu0 %1882, %v762
          %v1884 = vpop.permute.xlu0 %1883
          %1886 = vset.pattern.permute.xlu0 5
          %1887 = vperm.xlu0 %1886, %v763
          %v1888 = vpop.permute.xlu0 %1887
          %1890 = vset.pattern.permute.xlu0 5
          %1891 = vperm.xlu0 %1890, %v764
          %v1892 = vpop.permute.xlu0 %1891
          %1894 = vset.pattern.permute.xlu0 5
          %1895 = vperm.xlu0 %1894, %v765
          %v1896 = vpop.permute.xlu0 %1895
          %1898 = vset.pattern.permute.xlu0 5
          %1899 = vperm.xlu0 %1898, %v766
          %v1900 = vpop.permute.xlu0 %1899
          %1902 = vset.pattern.permute.xlu0 5
          %1903 = vperm.xlu0 %1902, %v767
          %v1904 = vpop.permute.xlu0 %1903
          %1906 = vset.pattern.permute.xlu0 5
          %1907 = vperm.xlu0 %1906, %v768
          %v1908 = vpop.permute.xlu0 %1907
          %1910 = vset.pattern.permute.xlu0 5
          %1911 = vperm.xlu0 %1910, %v769
          %v1912 = vpop.permute.xlu0 %1911
          %1914 = vset.pattern.permute.xlu0 5
          %1915 = vperm.xlu0 %1914, %v770
          %v1916 = vpop.permute.xlu0 %1915
          %1918 = vset.pattern.permute.xlu0 5
          %1919 = vperm.xlu0 %1918, %v771
          %v1920 = vpop.permute.xlu0 %1919
          %v1922 = vlaneseq
          %v1923 = vshrl.u32 %v1922, 7
          %v1924 = vsub.s32 5, %v1923
          %v1925 = vrot.slane %v733, %v1924
          %v1926 = vmul.f32 %v1860, %v1925
          %v1927 = vmul.f32 %v1864, %v1925
          %v1928 = vmul.f32 %v1868, %v1925
          %v1929 = vmul.f32 %v1872, %v1925
          %v1930 = vmul.f32 %v1876, %v1925
          %v1931 = vmul.f32 %v1880, %v1925
          %v1932 = vmul.f32 %v1884, %v1925
          %v1933 = vmul.f32 %v1888, %v1925
          %v1934 = vmul.f32 %v1892, %v1925
          %v1935 = vmul.f32 %v1896, %v1925
          %v1936 = vmul.f32 %v1900, %v1925
          %v1937 = vmul.f32 %v1904, %v1925
          %v1938 = vmul.f32 %v1908, %v1925
          %v1939 = vmul.f32 %v1912, %v1925
          %v1940 = vmul.f32 %v1916, %v1925
          %v1941 = vmul.f32 %v1920, %v1925
          %v1942 = vlaneseq
          %v1943 = vshrl.u32 %v1942, 7
          %v1944 = vsub.s32 5, %v1943
          %v1945 = vrot.slane %v735, %v1944
          %v1946 = vsub.f32 %v1926, %v1945
          %v1947 = vsub.f32 %v1927, %v1945
          %v1948 = vsub.f32 %v1928, %v1945
          %v1949 = vsub.f32 %v1929, %v1945
          %v1950 = vsub.f32 %v1930, %v1945
          %v1951 = vsub.f32 %v1931, %v1945
          %v1952 = vsub.f32 %v1932, %v1945
          %v1953 = vsub.f32 %v1933, %v1945
          %v1954 = vsub.f32 %v1934, %v1945
          %v1955 = vsub.f32 %v1935, %v1945
          %v1956 = vsub.f32 %v1936, %v1945
          %v1957 = vsub.f32 %v1937, %v1945
          %v1958 = vsub.f32 %v1938, %v1945
          %v1959 = vsub.f32 %v1939, %v1945
          %v1960 = vsub.f32 %v1940, %v1945
          %v1961 = vsub.f32 %v1941, %v1945
          %v1962 = vmul.f32 %v1946, 1.442695
          %v1963 = vpow.pop %v1962
          %v1964 = vmul.f32 %v1947, 1.442695
          %v1965 = vpow.pop %v1964
          %v1966 = vmul.f32 %v1948, 1.442695
          %v1967 = vpow.pop %v1966
          %v1968 = vmul.f32 %v1949, 1.442695
          %v1969 = vpow.pop %v1968
          %v1970 = vmul.f32 %v1950, 1.442695
          %v1971 = vpow.pop %v1970
          %v1972 = vmul.f32 %v1951, 1.442695
          %v1973 = vpow.pop %v1972
          %v1974 = vmul.f32 %v1952, 1.442695
          %v1975 = vpow.pop %v1974
          %v1976 = vmul.f32 %v1953, 1.442695
          %v1977 = vpow.pop %v1976
          %v1978 = vmul.f32 %v1954, 1.442695
          %v1979 = vpow.pop %v1978
          %v1980 = vmul.f32 %v1955, 1.442695
          %v1981 = vpow.pop %v1980
          %v1982 = vmul.f32 %v1956, 1.442695
          %v1983 = vpow.pop %v1982
          %v1984 = vmul.f32 %v1957, 1.442695
          %v1985 = vpow.pop %v1984
          %v1986 = vmul.f32 %v1958, 1.442695
          %v1987 = vpow.pop %v1986
          %v1988 = vmul.f32 %v1959, 1.442695
          %v1989 = vpow.pop %v1988
          %v1990 = vmul.f32 %v1960, 1.442695
          %v1991 = vpow.pop %v1990
          %v1992 = vmul.f32 %v1961, 1.442695
          %v1993 = vpow.pop %v1992
          %v1994 = vrot.slane %v737, 5
          %v1996 = vsel %vm924, %v1994, 1.0
          %1997 = vmatprep.subr.mxu0 0.0
          %1998 = vmatpush1.msra.mxu0 %v1963
          %1999 = vmatprep.subr.mxu0 0.0
          %2000 = vmatpush1.msra.mxu0 %v1965
          %2001 = vmatprep.subr.mxu0 0.0
          %2002 = vmatpush1.msra.mxu0 %v1967
          %2003 = vmatprep.subr.mxu0 0.0
          %2004 = vmatpush1.msra.mxu0 %v1969
          %2005 = vmatprep.subr.mxu0 0.0
          %2006 = vmatpush1.msra.mxu0 %v1971
          %2007 = vmatprep.subr.mxu0 0.0
          %2008 = vmatpush1.msra.mxu0 %v1973
          %2009 = vmatprep.subr.mxu0 0.0
          %2010 = vmatpush1.msra.mxu0 %v1975
          %2011 = vmatprep.subr.mxu0 0.0
          %2012 = vmatpush1.msra.mxu0 %v1977
          %2013 = vmatprep.subr.mxu0 0.0
          %2014 = vmatpush1.msra.mxu0 %v1979
          %2015 = vmatprep.subr.mxu0 0.0
          %2016 = vmatpush1.msra.mxu0 %v1981
          %2017 = vmatprep.subr.mxu0 0.0
          %2018 = vmatpush1.msra.mxu0 %v1983
          %2019 = vmatprep.subr.mxu0 0.0
          %2020 = vmatpush1.msra.mxu0 %v1985
          %2021 = vmatprep.subr.mxu0 0.0
          %2022 = vmatpush1.msra.mxu0 %v1987
          %2023 = vmatprep.subr.mxu0 0.0
          %2024 = vmatpush1.msra.mxu0 %v1989
          %2025 = vmatprep.subr.mxu0 0.0
          %2026 = vmatpush1.msra.mxu0 %v1991
          %2027 = vmatprep.subr.mxu0 0.0
          %2028 = vmatpush1.msra.mxu0 %v1993
          %2029 = vmatprep.subr.mxu0 0.0
          %2030 = vmatpush1.msra.mxu0 0.0
          %2031 = vmatprep.subr.mxu0 0.0
          %2032 = vmatpush1.msra.mxu0 0.0
          %2033 = vmatprep.subr.mxu0 0.0
          %2034 = vmatpush1.msra.mxu0 0.0
          %2035 = vmatprep.subr.mxu0 0.0
          %2036 = vmatpush1.msra.mxu0 0.0
          %2037 = vmatprep.subr.mxu0 0.0
          %2038 = vmatpush1.msra.mxu0 0.0
          %2039 = vmatprep.subr.mxu0 0.0
          %2040 = vmatpush1.msra.mxu0 0.0
          %2041 = vmatprep.subr.mxu0 0.0
          %2042 = vmatpush1.msra.mxu0 0.0
          %2043 = vmatprep.subr.mxu0 0.0
          %2044 = vmatpush1.msra.mxu0 0.0
          %2045 = vmatprep.subr.mxu0 0.0
          %2046 = vmatpush1.msra.mxu0 0.0
          %2047 = vmatprep.subr.mxu0 0.0
          %2048 = vmatpush1.msra.mxu0 0.0
          %2049 = vmatprep.subr.mxu0 0.0
          %2050 = vmatpush1.msra.mxu0 0.0
          %2051 = vmatprep.subr.mxu0 0.0
          %2052 = vmatpush1.msra.mxu0 0.0
          %2053 = vmatprep.subr.mxu0 0.0
          %2054 = vmatpush1.msra.mxu0 0.0
          %2055 = vmatprep.subr.mxu0 0.0
          %2056 = vmatpush1.msra.mxu0 0.0
          %2057 = vmatprep.subr.mxu0 0.0
          %2058 = vmatpush1.msra.mxu0 0.0
          %2059 = vmatprep.subr.mxu0 0.0
          %2060 = vmatpush1.msra.mxu0 0.0
          %2061 = vmatprep.mubr.f32.mxu0 0.0
          %2062 = vmatmul.mubr.f32.gmra.mrb[0].mxu0 %v1996
          %v2063 = vpop.f32.mrb[0].mxu0
          %v2064 = vadd.f32 0.0, %v2063
          %v2065 = vpop.f32.mrb[0].mxu0
          %2066 = vdwg.mxu0
          %v2067 = vrcp.pop %v2064
          %v2069 = vrot.slane %v2067, 1
          %v2071 = vmul.f32 %v2064, %v2069
          %2072 = vset.pattern.permute.xlu0 6
          %2073 = vperm.xlu0 %2072, %v756
          %v2074 = vpop.permute.xlu0 %2073
          %2076 = vset.pattern.permute.xlu0 6
          %2077 = vperm.xlu0 %2076, %v757
          %v2078 = vpop.permute.xlu0 %2077
          %2080 = vset.pattern.permute.xlu0 6
          %2081 = vperm.xlu0 %2080, %v758
          %v2082 = vpop.permute.xlu0 %2081
          %2084 = vset.pattern.permute.xlu0 6
          %2085 = vperm.xlu0 %2084, %v759
          %v2086 = vpop.permute.xlu0 %2085
          %2088 = vset.pattern.permute.xlu0 6
          %2089 = vperm.xlu0 %2088, %v760
          %v2090 = vpop.permute.xlu0 %2089
          %2092 = vset.pattern.permute.xlu0 6
          %2093 = vperm.xlu0 %2092, %v761
          %v2094 = vpop.permute.xlu0 %2093
          %2096 = vset.pattern.permute.xlu0 6
          %2097 = vperm.xlu0 %2096, %v762
          %v2098 = vpop.permute.xlu0 %2097
          %2100 = vset.pattern.permute.xlu0 6
          %2101 = vperm.xlu0 %2100, %v763
          %v2102 = vpop.permute.xlu0 %2101
          %2104 = vset.pattern.permute.xlu0 6
          %2105 = vperm.xlu0 %2104, %v764
          %v2106 = vpop.permute.xlu0 %2105
          %2108 = vset.pattern.permute.xlu0 6
          %2109 = vperm.xlu0 %2108, %v765
          %v2110 = vpop.permute.xlu0 %2109
          %2112 = vset.pattern.permute.xlu0 6
          %2113 = vperm.xlu0 %2112, %v766
          %v2114 = vpop.permute.xlu0 %2113
          %2116 = vset.pattern.permute.xlu0 6
          %2117 = vperm.xlu0 %2116, %v767
          %v2118 = vpop.permute.xlu0 %2117
          %2120 = vset.pattern.permute.xlu0 6
          %2121 = vperm.xlu0 %2120, %v768
          %v2122 = vpop.permute.xlu0 %2121
          %2124 = vset.pattern.permute.xlu0 6
          %2125 = vperm.xlu0 %2124, %v769
          %v2126 = vpop.permute.xlu0 %2125
          %2128 = vset.pattern.permute.xlu0 6
          %2129 = vperm.xlu0 %2128, %v770
          %v2130 = vpop.permute.xlu0 %2129
          %2132 = vset.pattern.permute.xlu0 6
          %2133 = vperm.xlu0 %2132, %v771
          %v2134 = vpop.permute.xlu0 %2133
          %v2136 = vlaneseq
          %v2137 = vshrl.u32 %v2136, 7
          %v2138 = vsub.s32 6, %v2137
          %v2139 = vrot.slane %v733, %v2138
          %v2140 = vmul.f32 %v2074, %v2139
          %v2141 = vmul.f32 %v2078, %v2139
          %v2142 = vmul.f32 %v2082, %v2139
          %v2143 = vmul.f32 %v2086, %v2139
          %v2144 = vmul.f32 %v2090, %v2139
          %v2145 = vmul.f32 %v2094, %v2139
          %v2146 = vmul.f32 %v2098, %v2139
          %v2147 = vmul.f32 %v2102, %v2139
          %v2148 = vmul.f32 %v2106, %v2139
          %v2149 = vmul.f32 %v2110, %v2139
          %v2150 = vmul.f32 %v2114, %v2139
          %v2151 = vmul.f32 %v2118, %v2139
          %v2152 = vmul.f32 %v2122, %v2139
          %v2153 = vmul.f32 %v2126, %v2139
          %v2154 = vmul.f32 %v2130, %v2139
          %v2155 = vmul.f32 %v2134, %v2139
          %v2156 = vlaneseq
          %v2157 = vshrl.u32 %v2156, 7
          %v2158 = vsub.s32 6, %v2157
          %v2159 = vrot.slane %v735, %v2158
          %v2160 = vsub.f32 %v2140, %v2159
          %v2161 = vsub.f32 %v2141, %v2159
          %v2162 = vsub.f32 %v2142, %v2159
          %v2163 = vsub.f32 %v2143, %v2159
          %v2164 = vsub.f32 %v2144, %v2159
          %v2165 = vsub.f32 %v2145, %v2159
          %v2166 = vsub.f32 %v2146, %v2159
          %v2167 = vsub.f32 %v2147, %v2159
          %v2168 = vsub.f32 %v2148, %v2159
          %v2169 = vsub.f32 %v2149, %v2159
          %v2170 = vsub.f32 %v2150, %v2159
          %v2171 = vsub.f32 %v2151, %v2159
          %v2172 = vsub.f32 %v2152, %v2159
          %v2173 = vsub.f32 %v2153, %v2159
          %v2174 = vsub.f32 %v2154, %v2159
          %v2175 = vsub.f32 %v2155, %v2159
          %v2176 = vmul.f32 %v2160, 1.442695
          %v2177 = vpow.pop %v2176
          %v2178 = vmul.f32 %v2161, 1.442695
          %v2179 = vpow.pop %v2178
          %v2180 = vmul.f32 %v2162, 1.442695
          %v2181 = vpow.pop %v2180
          %v2182 = vmul.f32 %v2163, 1.442695
          %v2183 = vpow.pop %v2182
          %v2184 = vmul.f32 %v2164, 1.442695
          %v2185 = vpow.pop %v2184
          %v2186 = vmul.f32 %v2165, 1.442695
          %v2187 = vpow.pop %v2186
          %v2188 = vmul.f32 %v2166, 1.442695
          %v2189 = vpow.pop %v2188
          %v2190 = vmul.f32 %v2167, 1.442695
          %v2191 = vpow.pop %v2190
          %v2192 = vmul.f32 %v2168, 1.442695
          %v2193 = vpow.pop %v2192
          %v2194 = vmul.f32 %v2169, 1.442695
          %v2195 = vpow.pop %v2194
          %v2196 = vmul.f32 %v2170, 1.442695
          %v2197 = vpow.pop %v2196
          %v2198 = vmul.f32 %v2171, 1.442695
          %v2199 = vpow.pop %v2198
          %v2200 = vmul.f32 %v2172, 1.442695
          %v2201 = vpow.pop %v2200
          %v2202 = vmul.f32 %v2173, 1.442695
          %v2203 = vpow.pop %v2202
          %v2204 = vmul.f32 %v2174, 1.442695
          %v2205 = vpow.pop %v2204
          %v2206 = vmul.f32 %v2175, 1.442695
          %v2207 = vpow.pop %v2206
          %v2208 = vrot.slane %v737, 6
          %v2210 = vsel %vm924, %v2208, 1.0
          %2211 = vmatprep.subr.mxu0 0.0
          %2212 = vmatpush1.msra.mxu0 %v2177
          %2213 = vmatprep.subr.mxu0 0.0
          %2214 = vmatpush1.msra.mxu0 %v2179
          %2215 = vmatprep.subr.mxu0 0.0
          %2216 = vmatpush1.msra.mxu0 %v2181
          %2217 = vmatprep.subr.mxu0 0.0
          %2218 = vmatpush1.msra.mxu0 %v2183
          %2219 = vmatprep.subr.mxu0 0.0
          %2220 = vmatpush1.msra.mxu0 %v2185
          %2221 = vmatprep.subr.mxu0 0.0
          %2222 = vmatpush1.msra.mxu0 %v2187
          %2223 = vmatprep.subr.mxu0 0.0
          %2224 = vmatpush1.msra.mxu0 %v2189
          %2225 = vmatprep.subr.mxu0 0.0
          %2226 = vmatpush1.msra.mxu0 %v2191
          %2227 = vmatprep.subr.mxu0 0.0
          %2228 = vmatpush1.msra.mxu0 %v2193
          %2229 = vmatprep.subr.mxu0 0.0
          %2230 = vmatpush1.msra.mxu0 %v2195
          %2231 = vmatprep.subr.mxu0 0.0
          %2232 = vmatpush1.msra.mxu0 %v2197
          %2233 = vmatprep.subr.mxu0 0.0
          %2234 = vmatpush1.msra.mxu0 %v2199
          %2235 = vmatprep.subr.mxu0 0.0
          %2236 = vmatpush1.msra.mxu0 %v2201
          %2237 = vmatprep.subr.mxu0 0.0
          %2238 = vmatpush1.msra.mxu0 %v2203
          %2239 = vmatprep.subr.mxu0 0.0
          %2240 = vmatpush1.msra.mxu0 %v2205
          %2241 = vmatprep.subr.mxu0 0.0
          %2242 = vmatpush1.msra.mxu0 %v2207
          %2243 = vmatprep.subr.mxu0 0.0
          %2244 = vmatpush1.msra.mxu0 0.0
          %2245 = vmatprep.subr.mxu0 0.0
          %2246 = vmatpush1.msra.mxu0 0.0
          %2247 = vmatprep.subr.mxu0 0.0
          %2248 = vmatpush1.msra.mxu0 0.0
          %2249 = vmatprep.subr.mxu0 0.0
          %2250 = vmatpush1.msra.mxu0 0.0
          %2251 = vmatprep.subr.mxu0 0.0
          %2252 = vmatpush1.msra.mxu0 0.0
          %2253 = vmatprep.subr.mxu0 0.0
          %2254 = vmatpush1.msra.mxu0 0.0
          %2255 = vmatprep.subr.mxu0 0.0
          %2256 = vmatpush1.msra.mxu0 0.0
          %2257 = vmatprep.subr.mxu0 0.0
          %2258 = vmatpush1.msra.mxu0 0.0
          %2259 = vmatprep.subr.mxu0 0.0
          %2260 = vmatpush1.msra.mxu0 0.0
          %2261 = vmatprep.subr.mxu0 0.0
          %2262 = vmatpush1.msra.mxu0 0.0
          %2263 = vmatprep.subr.mxu0 0.0
          %2264 = vmatpush1.msra.mxu0 0.0
          %2265 = vmatprep.subr.mxu0 0.0
          %2266 = vmatpush1.msra.mxu0 0.0
          %2267 = vmatprep.subr.mxu0 0.0
          %2268 = vmatpush1.msra.mxu0 0.0
          %2269 = vmatprep.subr.mxu0 0.0
          %2270 = vmatpush1.msra.mxu0 0.0
          %2271 = vmatprep.subr.mxu0 0.0
          %2272 = vmatpush1.msra.mxu0 0.0
          %2273 = vmatprep.subr.mxu0 0.0
          %2274 = vmatpush1.msra.mxu0 0.0
          %2275 = vmatprep.mubr.f32.mxu0 0.0
          %2276 = vmatmul.mubr.f32.gmra.mrb[0].mxu0 %v2210
          %v2277 = vpop.f32.mrb[0].mxu0
          %v2278 = vadd.f32 0.0, %v2277
          %v2279 = vpop.f32.mrb[0].mxu0
          %2280 = vdwg.mxu0
          %v2281 = vrcp.pop %v2278
          %v2283 = vrot.slane %v2281, 1
          %v2285 = vmul.f32 %v2278, %v2283
          %2286 = vset.pattern.permute.xlu0 7
          %2287 = vperm.xlu0 %2286, %v756
          %v2288 = vpop.permute.xlu0 %2287
          %2290 = vset.pattern.permute.xlu0 7
          %2291 = vperm.xlu0 %2290, %v757
          %v2292 = vpop.permute.xlu0 %2291
          %2294 = vset.pattern.permute.xlu0 7
          %2295 = vperm.xlu0 %2294, %v758
          %v2296 = vpop.permute.xlu0 %2295
          %2298 = vset.pattern.permute.xlu0 7
          %2299 = vperm.xlu0 %2298, %v759
          %v2300 = vpop.permute.xlu0 %2299
          %2302 = vset.pattern.permute.xlu0 7
          %2303 = vperm.xlu0 %2302, %v760
          %v2304 = vpop.permute.xlu0 %2303
          %2306 = vset.pattern.permute.xlu0 7
          %2307 = vperm.xlu0 %2306, %v761
          %v2308 = vpop.permute.xlu0 %2307
          %2310 = vset.pattern.permute.xlu0 7
          %2311 = vperm.xlu0 %2310, %v762
          %v2312 = vpop.permute.xlu0 %2311
          %2314 = vset.pattern.permute.xlu0 7
          %2315 = vperm.xlu0 %2314, %v763
          %v2316 = vpop.permute.xlu0 %2315
          %2318 = vset.pattern.permute.xlu0 7
          %2319 = vperm.xlu0 %2318, %v764
          %v2320 = vpop.permute.xlu0 %2319
          %2322 = vset.pattern.permute.xlu0 7
          %2323 = vperm.xlu0 %2322, %v765
          %v2324 = vpop.permute.xlu0 %2323
          %2326 = vset.pattern.permute.xlu0 7
          %2327 = vperm.xlu0 %2326, %v766
          %v2328 = vpop.permute.xlu0 %2327
          %2330 = vset.pattern.permute.xlu0 7
          %2331 = vperm.xlu0 %2330, %v767
          %v2332 = vpop.permute.xlu0 %2331
          %2334 = vset.pattern.permute.xlu0 7
          %2335 = vperm.xlu0 %2334, %v768
          %v2336 = vpop.permute.xlu0 %2335
          %2338 = vset.pattern.permute.xlu0 7
          %2339 = vperm.xlu0 %2338, %v769
          %v2340 = vpop.permute.xlu0 %2339
          %2342 = vset.pattern.permute.xlu0 7
          %2343 = vperm.xlu0 %2342, %v770
          %v2344 = vpop.permute.xlu0 %2343
          %2346 = vset.pattern.permute.xlu0 7
          %2347 = vperm.xlu0 %2346, %v771
          %v2348 = vpop.permute.xlu0 %2347
          %v2350 = vlaneseq
          %v2351 = vshrl.u32 %v2350, 7
          %v2352 = vsub.s32 7, %v2351
          %v2353 = vrot.slane %v733, %v2352
          %v2354 = vmul.f32 %v2288, %v2353
          %v2355 = vmul.f32 %v2292, %v2353
          %v2356 = vmul.f32 %v2296, %v2353
          %v2357 = vmul.f32 %v2300, %v2353
          %v2358 = vmul.f32 %v2304, %v2353
          %v2359 = vmul.f32 %v2308, %v2353
          %v2360 = vmul.f32 %v2312, %v2353
          %v2361 = vmul.f32 %v2316, %v2353
          %v2362 = vmul.f32 %v2320, %v2353
          %v2363 = vmul.f32 %v2324, %v2353
          %v2364 = vmul.f32 %v2328, %v2353
          %v2365 = vmul.f32 %v2332, %v2353
          %v2366 = vmul.f32 %v2336, %v2353
          %v2367 = vmul.f32 %v2340, %v2353
          %v2368 = vmul.f32 %v2344, %v2353
          %v2369 = vmul.f32 %v2348, %v2353
          %v2370 = vlaneseq
          %v2371 = vshrl.u32 %v2370, 7
          %v2372 = vsub.s32 7, %v2371
          %v2373 = vrot.slane %v735, %v2372
          %v2374 = vsub.f32 %v2354, %v2373
          %v2375 = vsub.f32 %v2355, %v2373
          %v2376 = vsub.f32 %v2356, %v2373
          %v2377 = vsub.f32 %v2357, %v2373
          %v2378 = vsub.f32 %v2358, %v2373
          %v2379 = vsub.f32 %v2359, %v2373
          %v2380 = vsub.f32 %v2360, %v2373
          %v2381 = vsub.f32 %v2361, %v2373
          %v2382 = vsub.f32 %v2362, %v2373
          %v2383 = vsub.f32 %v2363, %v2373
          %v2384 = vsub.f32 %v2364, %v2373
          %v2385 = vsub.f32 %v2365, %v2373
          %v2386 = vsub.f32 %v2366, %v2373
          %v2387 = vsub.f32 %v2367, %v2373
          %v2388 = vsub.f32 %v2368, %v2373
          %v2389 = vsub.f32 %v2369, %v2373
          %v2390 = vmul.f32 %v2374, 1.442695
          %v2391 = vpow.pop %v2390
          %v2392 = vmul.f32 %v2375, 1.442695
          %v2393 = vpow.pop %v2392
          %v2394 = vmul.f32 %v2376, 1.442695
          %v2395 = vpow.pop %v2394
          %v2396 = vmul.f32 %v2377, 1.442695
          %v2397 = vpow.pop %v2396
          %v2398 = vmul.f32 %v2378, 1.442695
          %v2399 = vpow.pop %v2398
          %v2400 = vmul.f32 %v2379, 1.442695
          %v2401 = vpow.pop %v2400
          %v2402 = vmul.f32 %v2380, 1.442695
          %v2403 = vpow.pop %v2402
          %v2404 = vmul.f32 %v2381, 1.442695
          %v2405 = vpow.pop %v2404
          %v2406 = vmul.f32 %v2382, 1.442695
          %v2407 = vpow.pop %v2406
          %v2408 = vmul.f32 %v2383, 1.442695
          %v2409 = vpow.pop %v2408
          %v2410 = vmul.f32 %v2384, 1.442695
          %v2411 = vpow.pop %v2410
          %v2412 = vmul.f32 %v2385, 1.442695
          %v2413 = vpow.pop %v2412
          %v2414 = vmul.f32 %v2386, 1.442695
          %v2415 = vpow.pop %v2414
          %v2416 = vmul.f32 %v2387, 1.442695
          %v2417 = vpow.pop %v2416
          %v2418 = vmul.f32 %v2388, 1.442695
          %v2419 = vpow.pop %v2418
          %v2420 = vmul.f32 %v2389, 1.442695
          %v2421 = vpow.pop %v2420
          %v2422 = vrot.slane %v737, 7
          %v2424 = vsel %vm924, %v2422, 1.0
          %2425 = vmatprep.subr.mxu0 0.0
          %2426 = vmatpush1.msra.mxu0 %v2391
          %2427 = vmatprep.subr.mxu0 0.0
          %2428 = vmatpush1.msra.mxu0 %v2393
          %2429 = vmatprep.subr.mxu0 0.0
          %2430 = vmatpush1.msra.mxu0 %v2395
          %2431 = vmatprep.subr.mxu0 0.0
          %2432 = vmatpush1.msra.mxu0 %v2397
          %2433 = vmatprep.subr.mxu0 0.0
          %2434 = vmatpush1.msra.mxu0 %v2399
          %2435 = vmatprep.subr.mxu0 0.0
          %2436 = vmatpush1.msra.mxu0 %v2401
          %2437 = vmatprep.subr.mxu0 0.0
          %2438 = vmatpush1.msra.mxu0 %v2403
          %2439 = vmatprep.subr.mxu0 0.0
          %2440 = vmatpush1.msra.mxu0 %v2405
          %2441 = vmatprep.subr.mxu0 0.0
          %2442 = vmatpush1.msra.mxu0 %v2407
          %2443 = vmatprep.subr.mxu0 0.0
          %2444 = vmatpush1.msra.mxu0 %v2409
          %2445 = vmatprep.subr.mxu0 0.0
          %2446 = vmatpush1.msra.mxu0 %v2411
          %2447 = vmatprep.subr.mxu0 0.0
          %2448 = vmatpush1.msra.mxu0 %v2413
          %2449 = vmatprep.subr.mxu0 0.0
          %2450 = vmatpush1.msra.mxu0 %v2415
          %2451 = vmatprep.subr.mxu0 0.0
          %2452 = vmatpush1.msra.mxu0 %v2417
          %2453 = vmatprep.subr.mxu0 0.0
          %2454 = vmatpush1.msra.mxu0 %v2419
          %2455 = vmatprep.subr.mxu0 0.0
          %2456 = vmatpush1.msra.mxu0 %v2421
          %2457 = vmatprep.subr.mxu0 0.0
          %2458 = vmatpush1.msra.mxu0 0.0
          %2459 = vmatprep.subr.mxu0 0.0
          %2460 = vmatpush1.msra.mxu0 0.0
          %2461 = vmatprep.subr.mxu0 0.0
          %2462 = vmatpush1.msra.mxu0 0.0
          %2463 = vmatprep.subr.mxu0 0.0
          %2464 = vmatpush1.msra.mxu0 0.0
          %2465 = vmatprep.subr.mxu0 0.0
          %2466 = vmatpush1.msra.mxu0 0.0
          %2467 = vmatprep.subr.mxu0 0.0
          %2468 = vmatpush1.msra.mxu0 0.0
          %2469 = vmatprep.subr.mxu0 0.0
          %2470 = vmatpush1.msra.mxu0 0.0
          %2471 = vmatprep.subr.mxu0 0.0
          %2472 = vmatpush1.msra.mxu0 0.0
          %2473 = vmatprep.subr.mxu0 0.0
          %2474 = vmatpush1.msra.mxu0 0.0
          %2475 = vmatprep.subr.mxu0 0.0
          %2476 = vmatpush1.msra.mxu0 0.0
          %2477 = vmatprep.subr.mxu0 0.0
          %2478 = vmatpush1.msra.mxu0 0.0
          %2479 = vmatprep.subr.mxu0 0.0
          %2480 = vmatpush1.msra.mxu0 0.0
          %2481 = vmatprep.subr.mxu0 0.0
          %2482 = vmatpush1.msra.mxu0 0.0
          %2483 = vmatprep.subr.mxu0 0.0
          %2484 = vmatpush1.msra.mxu0 0.0
          %2485 = vmatprep.subr.mxu0 0.0
          %2486 = vmatpush1.msra.mxu0 0.0
          %2487 = vmatprep.subr.mxu0 0.0
          %2488 = vmatpush1.msra.mxu0 0.0
          %2489 = vmatprep.mubr.f32.mxu0 0.0
          %2490 = vmatmul.mubr.f32.gmra.mrb[0].mxu0 %v2424
          %v2491 = vpop.f32.mrb[0].mxu0
          %v2492 = vadd.f32 0.0, %v2491
          %v2493 = vpop.f32.mrb[0].mxu0
          %2494 = vdwg.mxu0
          %v2495 = vrcp.pop %v2492
          %v2497 = vrot.slane %v2495, 1
          %v2499 = vmul.f32 %v2492, %v2497
          %v2501 = vrot.slane %v1215, 7
          %v2504 = vrot.slane %v1429, 6
          %v2507 = vrot.slane %v1643, 5
          %v2510 = vrot.slane %v1857, 4
          %v2513 = vrot.slane %v2071, 3
          %v2516 = vrot.slane %v2285, 2
          %v2519 = vrot.slane %v2499, 1
          %v2521 = vsel %vm924, %v1000, %v2501
          %vm2522 = vcmask 1041408
          %v2523 = vsel %vm2522, %v2521, %v2504
          %vm2524 = vcmask 1042432
          %v2525 = vsel %vm2524, %v2523, %v2507
          %vm2526 = vcmask 1043456
          %v2527 = vsel %vm2526, %v2525, %v2510
          %vm2528 = vcmask 1044480
          %v2529 = vsel %vm2528, %v2527, %v2513
          %vm2530 = vcmask 1045504
          %v2531 = vsel %vm2530, %v2529, %v2516
          %vm2532 = vcmask 1046528
          %v2533 = vsel %vm2532, %v2531, %v2519
          %s2534 = scalar_lea.vmem [#allocation6], %s731
          %2535 = vst [vmem:[%s2534] sm:$0xff] %v2533
        $region85: #{tpu_custom_call.1} parent=55 // loop_footer
          %s730 = sadd.s32 1, %s726
        $region86: #{tpu_custom_call.1} parent=55 // loop_footer_branch
          %725 = sbr.rel target = $region82
        $region87: #{tpu_custom_call.1} parent=55 // loop_exit
          _
        %v2536 = vld [vmem:[#allocation6] sm:$0xff]
        %v2537 = vld [vmem:[#allocation6 + $0x8] sm:$0xff]
        %v2538 = vld [vmem:[#allocation16] sm:$0xff]
        %v2539 = vld [vmem:[#allocation16 + $0x8] sm:$0xff]
        %v2540 = vld [vmem:[#allocation16 + $0x10] sm:$0xff]
        %v2541 = vld [vmem:[#allocation16 + $0x18] sm:$0xff]
        %v2542 = vld [vmem:[#allocation16 + $0x20] sm:$0xff]
        %v2543 = vld [vmem:[#allocation16 + $0x28] sm:$0xff]
        %v2544 = vld [vmem:[#allocation16 + $0x30] sm:$0xff]
        %v2545 = vld [vmem:[#allocation16 + $0x38] sm:$0xff]
        %v2546 = vld [vmem:[#allocation16 + $0x40] sm:$0xff]
        %v2547 = vld [vmem:[#allocation16 + $0x48] sm:$0xff]
        %v2548 = vld [vmem:[#allocation16 + $0x50] sm:$0xff]
        %v2549 = vld [vmem:[#allocation16 + $0x58] sm:$0xff]
        %v2550 = vld [vmem:[#allocation16 + $0x60] sm:$0xff]
        %v2551 = vld [vmem:[#allocation16 + $0x68] sm:$0xff]
        %v2552 = vld [vmem:[#allocation16 + $0x70] sm:$0xff]
        %v2553 = vld [vmem:[#allocation16 + $0x78] sm:$0xff]
        %v2554 = vld [vmem:[%s8] sm:$0x1]
        %v2556 = vlaneseq
        %v2557 = vshrl.u32 %v2556, 7
        %v2558 = vsub.s32 0, %v2557
        %v2559 = vrot.slane %v2554, %v2558
        %2561 = vmatprep.subr.mxu0 0.0
        %2562 = vmatpush1.xpose.msra.mxu0 %v2538
        %2563 = vmatprep.subr.mxu0 0.0
        %2564 = vmatpush1.xpose.msra.mxu0 %v2539
        %2565 = vmatprep.subr.mxu0 0.0
        %2566 = vmatpush1.xpose.msra.mxu0 %v2540
        %2567 = vmatprep.subr.mxu0 0.0
        %2568 = vmatpush1.xpose.msra.mxu0 %v2541
        %2569 = vmatprep.subr.mxu0 0.0
        %2570 = vmatpush1.xpose.msra.mxu0 %v2542
        %2571 = vmatprep.subr.mxu0 0.0
        %2572 = vmatpush1.xpose.msra.mxu0 %v2543
        %2573 = vmatprep.subr.mxu0 0.0
        %2574 = vmatpush1.xpose.msra.mxu0 %v2544
        %2575 = vmatprep.subr.mxu0 0.0
        %2576 = vmatpush1.xpose.msra.mxu0 %v2545
        %2577 = vmatprep.subr.mxu0 0.0
        %2578 = vmatpush1.xpose.msra.mxu0 %v2546
        %2579 = vmatprep.subr.mxu0 0.0
        %2580 = vmatpush1.xpose.msra.mxu0 %v2547
        %2581 = vmatprep.subr.mxu0 0.0
        %2582 = vmatpush1.xpose.msra.mxu0 %v2548
        %2583 = vmatprep.subr.mxu0 0.0
        %2584 = vmatpush1.xpose.msra.mxu0 %v2549
        %2585 = vmatprep.subr.mxu0 0.0
        %2586 = vmatpush1.xpose.msra.mxu0 %v2550
        %2587 = vmatprep.subr.mxu0 0.0
        %2588 = vmatpush1.xpose.msra.mxu0 %v2551
        %2589 = vmatprep.subr.mxu0 0.0
        %2590 = vmatpush1.xpose.msra.mxu0 %v2552
        %2591 = vmatprep.subr.mxu0 0.0
        %2592 = vmatpush1.xpose.msra.mxu0 %v2553
        %2593 = vmatprep.subr.mxu0 0.0
        %2594 = vmatpush1.xpose.msra.mxu0 0.0
        %2595 = vmatprep.subr.mxu0 0.0
        %2596 = vmatpush1.xpose.msra.mxu0 0.0
        %2597 = vmatprep.subr.mxu0 0.0
        %2598 = vmatpush1.xpose.msra.mxu0 0.0
        %2599 = vmatprep.subr.mxu0 0.0
        %2600 = vmatpush1.xpose.msra.mxu0 0.0
        %2601 = vmatprep.subr.mxu0 0.0
        %2602 = vmatpush1.xpose.msra.mxu0 0.0
        %2603 = vmatprep.subr.mxu0 0.0
        %2604 = vmatpush1.xpose.msra.mxu0 0.0
        %2605 = vmatprep.subr.mxu0 0.0
        %2606 = vmatpush1.xpose.msra.mxu0 0.0
        %2607 = vmatprep.subr.mxu0 0.0
        %2608 = vmatpush1.xpose.msra.mxu0 0.0
        %2609 = vmatprep.subr.mxu0 0.0
        %2610 = vmatpush1.xpose.msra.mxu0 0.0
        %2611 = vmatprep.subr.mxu0 0.0
        %2612 = vmatpush1.xpose.msra.mxu0 0.0
        %2613 = vmatprep.subr.mxu0 0.0
        %2614 = vmatpush1.xpose.msra.mxu0 0.0
        %2615 = vmatprep.subr.mxu0 0.0
        %2616 = vmatpush1.xpose.msra.mxu0 0.0
        %2617 = vmatprep.subr.mxu0 0.0
        %2618 = vmatpush1.xpose.msra.mxu0 0.0
        %2619 = vmatprep.subr.mxu0 0.0
        %2620 = vmatpush1.xpose.msra.mxu0 0.0
        %2621 = vmatprep.subr.mxu0 0.0
        %2622 = vmatpush1.xpose.msra.mxu0 0.0
        %2623 = vmatprep.subr.mxu0 0.0
        %2624 = vmatpush1.xpose.msra.mxu0 0.0
        %2625 = vmatprep.mubr.f32.mxu0 0.0
        %2626 = vmatmul.mubr.f32.gmra.mrb[0].mxu0 %v2536
        %v2627 = vpop.f32.mrb[0].mxu0
        %v2628 = vadd.f32 %v2559, %v2627
        %v2629 = vpop.f32.mrb[0].mxu0
        %2630 = vmatprep.mubr.f32.mxu0 0.0
        %2631 = vmatmul.mubr.f32.gmra.mrb[0].mxu0 %v2537
        %v2632 = vpop.f32.mrb[0].mxu0
        %v2633 = vadd.f32 %v2559, %v2632
        %v2634 = vpop.f32.mrb[0].mxu0
        %2635 = vdwg.mxu0
        %v2636 = vadd.f32 %v476, %v2628
        %v2637 = vadd.f32 %v477, %v2633
        %v2638 = vld [vmem:[#allocation13] sm:$0xff]
        %v2639 = vld [vmem:[#allocation13 + $0x8] sm:$0xff]
        %v2640 = vld [vmem:[#allocation13 + $0x10] sm:$0xff]
        %v2641 = vld [vmem:[#allocation13 + $0x18] sm:$0xff]
        %v2642 = vld [vmem:[#allocation13 + $0x20] sm:$0xff]
        %v2643 = vld [vmem:[#allocation13 + $0x28] sm:$0xff]
        %v2644 = vld [vmem:[#allocation13 + $0x30] sm:$0xff]
        %v2645 = vld [vmem:[#allocation13 + $0x38] sm:$0xff]
        %v2646 = vld [vmem:[#allocation13 + $0x40] sm:$0xff]
        %v2647 = vld [vmem:[#allocation13 + $0x48] sm:$0xff]
        %v2648 = vld [vmem:[#allocation13 + $0x50] sm:$0xff]
        %v2649 = vld [vmem:[#allocation13 + $0x58] sm:$0xff]
        %v2650 = vld [vmem:[#allocation13 + $0x60] sm:$0xff]
        %v2651 = vld [vmem:[#allocation13 + $0x68] sm:$0xff]
        %v2652 = vld [vmem:[#allocation13 + $0x70] sm:$0xff]
        %v2653 = vld [vmem:[#allocation13 + $0x78] sm:$0xff]
        %v2654 = vld [vmem:[%s4] sm:$0x1]
        %v2656 = vlaneseq
        %v2657 = vshrl.u32 %v2656, 7
        %v2658 = vsub.s32 0, %v2657
        %v2659 = vrot.slane %v2654, %v2658
        %2661 = vmatprep.subr.mxu0 0.0
        %2662 = vmatpush1.xpose.msra.mxu0 %v2638
        %2663 = vmatprep.subr.mxu0 0.0
        %2664 = vmatpush1.xpose.msra.mxu0 %v2639
        %2665 = vmatprep.subr.mxu0 0.0
        %2666 = vmatpush1.xpose.msra.mxu0 %v2640
        %2667 = vmatprep.subr.mxu0 0.0
        %2668 = vmatpush1.xpose.msra.mxu0 %v2641
        %2669 = vmatprep.subr.mxu0 0.0
        %2670 = vmatpush1.xpose.msra.mxu0 %v2642
        %2671 = vmatprep.subr.mxu0 0.0
        %2672 = vmatpush1.xpose.msra.mxu0 %v2643
        %2673 = vmatprep.subr.mxu0 0.0
        %2674 = vmatpush1.xpose.msra.mxu0 %v2644
        %2675 = vmatprep.subr.mxu0 0.0
        %2676 = vmatpush1.xpose.msra.mxu0 %v2645
        %2677 = vmatprep.subr.mxu0 0.0
        %2678 = vmatpush1.xpose.msra.mxu0 %v2646
        %2679 = vmatprep.subr.mxu0 0.0
        %2680 = vmatpush1.xpose.msra.mxu0 %v2647
        %2681 = vmatprep.subr.mxu0 0.0
        %2682 = vmatpush1.xpose.msra.mxu0 %v2648
        %2683 = vmatprep.subr.mxu0 0.0
        %2684 = vmatpush1.xpose.msra.mxu0 %v2649
        %2685 = vmatprep.subr.mxu0 0.0
        %2686 = vmatpush1.xpose.msra.mxu0 %v2650
        %2687 = vmatprep.subr.mxu0 0.0
        %2688 = vmatpush1.xpose.msra.mxu0 %v2651
        %2689 = vmatprep.subr.mxu0 0.0
        %2690 = vmatpush1.xpose.msra.mxu0 %v2652
        %2691 = vmatprep.subr.mxu0 0.0
        %2692 = vmatpush1.xpose.msra.mxu0 %v2653
        %2693 = vmatprep.subr.mxu0 0.0
        %2694 = vmatpush1.xpose.msra.mxu0 0.0
        %2695 = vmatprep.subr.mxu0 0.0
        %2696 = vmatpush1.xpose.msra.mxu0 0.0
        %2697 = vmatprep.subr.mxu0 0.0
        %2698 = vmatpush1.xpose.msra.mxu0 0.0
        %2699 = vmatprep.subr.mxu0 0.0
        %2700 = vmatpush1.xpose.msra.mxu0 0.0
        %2701 = vmatprep.subr.mxu0 0.0
        %2702 = vmatpush1.xpose.msra.mxu0 0.0
        %2703 = vmatprep.subr.mxu0 0.0
        %2704 = vmatpush1.xpose.msra.mxu0 0.0
        %2705 = vmatprep.subr.mxu0 0.0
        %2706 = vmatpush1.xpose.msra.mxu0 0.0
        %2707 = vmatprep.subr.mxu0 0.0
        %2708 = vmatpush1.xpose.msra.mxu0 0.0
        %2709 = vmatprep.subr.mxu0 0.0
        %2710 = vmatpush1.xpose.msra.mxu0 0.0
        %2711 = vmatprep.subr.mxu0 0.0
        %2712 = vmatpush1.xpose.msra.mxu0 0.0
        %2713 = vmatprep.subr.mxu0 0.0
        %2714 = vmatpush1.xpose.msra.mxu0 0.0
        %2715 = vmatprep.subr.mxu0 0.0
        %2716 = vmatpush1.xpose.msra.mxu0 0.0
        %2717 = vmatprep.subr.mxu0 0.0
        %2718 = vmatpush1.xpose.msra.mxu0 0.0
        %2719 = vmatprep.subr.mxu0 0.0
        %2720 = vmatpush1.xpose.msra.mxu0 0.0
        %2721 = vmatprep.subr.mxu0 0.0
        %2722 = vmatpush1.xpose.msra.mxu0 0.0
        %2723 = vmatprep.subr.mxu0 0.0
        %2724 = vmatpush1.xpose.msra.mxu0 0.0
        %2725 = vmatprep.mubr.f32.mxu0 0.0
        %2726 = vmatmul.mubr.f32.gmra.mrb[0].mxu0 %v2636
        %v2727 = vpop.f32.mrb[0].mxu0
        %v2728 = vadd.f32 %v2659, %v2727
        %v2729 = vpop.f32.mrb[0].mxu0
        %2730 = vmatprep.mubr.f32.mxu0 0.0
        %2731 = vmatmul.mubr.f32.gmra.mrb[0].mxu0 %v2637
        %v2732 = vpop.f32.mrb[0].mxu0
        %v2733 = vadd.f32 %v2659, %v2732
        %v2734 = vpop.f32.mrb[0].mxu0
        %2735 = vdwg.mxu0
        %v2736 = vld [vmem:[#allocation15] sm:$0xff]
        %v2737 = vld [vmem:[#allocation15 + $0x8] sm:$0xff]
        %v2738 = vld [vmem:[#allocation15 + $0x10] sm:$0xff]
        %v2739 = vld [vmem:[#allocation15 + $0x18] sm:$0xff]
        %v2740 = vld [vmem:[#allocation15 + $0x20] sm:$0xff]
        %v2741 = vld [vmem:[#allocation15 + $0x28] sm:$0xff]
        %v2742 = vld [vmem:[#allocation15 + $0x30] sm:$0xff]
        %v2743 = vld [vmem:[#allocation15 + $0x38] sm:$0xff]
        %v2744 = vld [vmem:[#allocation15 + $0x40] sm:$0xff]
        %v2745 = vld [vmem:[#allocation15 + $0x48] sm:$0xff]
        %v2746 = vld [vmem:[#allocation15 + $0x50] sm:$0xff]
        %v2747 = vld [vmem:[#allocation15 + $0x58] sm:$0xff]
        %v2748 = vld [vmem:[#allocation15 + $0x60] sm:$0xff]
        %v2749 = vld [vmem:[#allocation15 + $0x68] sm:$0xff]
        %v2750 = vld [vmem:[#allocation15 + $0x70] sm:$0xff]
        %v2751 = vld [vmem:[#allocation15 + $0x78] sm:$0xff]
        %v2752 = vld [vmem:[#allocation15 + $0x80] sm:$0xff]
        %v2753 = vld [vmem:[#allocation15 + $0x88] sm:$0xff]
        %v2754 = vld [vmem:[#allocation15 + $0x90] sm:$0xff]
        %v2755 = vld [vmem:[#allocation15 + $0x98] sm:$0xff]
        %v2756 = vld [vmem:[#allocation15 + $0xa0] sm:$0xff]
        %v2757 = vld [vmem:[#allocation15 + $0xa8] sm:$0xff]
        %v2758 = vld [vmem:[#allocation15 + $0xb0] sm:$0xff]
        %v2759 = vld [vmem:[#allocation15 + $0xb8] sm:$0xff]
        %v2760 = vld [vmem:[#allocation15 + $0xc0] sm:$0xff]
        %v2761 = vld [vmem:[#allocation15 + $0xc8] sm:$0xff]
        %v2762 = vld [vmem:[#allocation15 + $0xd0] sm:$0xff]
        %v2763 = vld [vmem:[#allocation15 + $0xd8] sm:$0xff]
        %v2764 = vld [vmem:[#allocation15 + $0xe0] sm:$0xff]
        %v2765 = vld [vmem:[#allocation15 + $0xe8] sm:$0xff]
        %v2766 = vld [vmem:[#allocation15 + $0xf0] sm:$0xff]
        %v2767 = vld [vmem:[#allocation15 + $0xf8] sm:$0xff]
        %v2768 = vld [vmem:[%s6] sm:$0x3]
        %v2770 = vlaneseq
        %v2771 = vshrl.u32 %v2770, 7
        %v2772 = vsub.s32 0, %v2771
        %v2773 = vrot.slane %v2768, %v2772
        %v2774 = vlaneseq
        %v2775 = vshrl.u32 %v2774, 7
        %v2776 = vsub.s32 1, %v2775
        %v2777 = vrot.slane %v2768, %v2776
        %2780 = vmatprep.subr.mxu0 0.0
        %2781 = vmatpush1.xpose.msra.mxu0 %v2736
        %2782 = vmatprep.subr.mxu0 0.0
        %2783 = vmatpush1.xpose.msra.mxu0 %v2737
        %2784 = vmatprep.subr.mxu0 0.0
        %2785 = vmatpush1.xpose.msra.mxu0 %v2738
        %2786 = vmatprep.subr.mxu0 0.0
        %2787 = vmatpush1.xpose.msra.mxu0 %v2739
        %2788 = vmatprep.subr.mxu0 0.0
        %2789 = vmatpush1.xpose.msra.mxu0 %v2740
        %2790 = vmatprep.subr.mxu0 0.0
        %2791 = vmatpush1.xpose.msra.mxu0 %v2741
        %2792 = vmatprep.subr.mxu0 0.0
        %2793 = vmatpush1.xpose.msra.mxu0 %v2742
        %2794 = vmatprep.subr.mxu0 0.0
        %2795 = vmatpush1.xpose.msra.mxu0 %v2743
        %2796 = vmatprep.subr.mxu0 0.0
        %2797 = vmatpush1.xpose.msra.mxu0 %v2744
        %2798 = vmatprep.subr.mxu0 0.0
        %2799 = vmatpush1.xpose.msra.mxu0 %v2745
        %2800 = vmatprep.subr.mxu0 0.0
        %2801 = vmatpush1.xpose.msra.mxu0 %v2746
        %2802 = vmatprep.subr.mxu0 0.0
        %2803 = vmatpush1.xpose.msra.mxu0 %v2747
        %2804 = vmatprep.subr.mxu0 0.0
        %2805 = vmatpush1.xpose.msra.mxu0 %v2748
        %2806 = vmatprep.subr.mxu0 0.0
        %2807 = vmatpush1.xpose.msra.mxu0 %v2749
        %2808 = vmatprep.subr.mxu0 0.0
        %2809 = vmatpush1.xpose.msra.mxu0 %v2750
        %2810 = vmatprep.subr.mxu0 0.0
        %2811 = vmatpush1.xpose.msra.mxu0 %v2751
        %2812 = vmatprep.subr.mxu0 0.0
        %2813 = vmatpush1.xpose.msra.mxu0 %v2752
        %2814 = vmatprep.subr.mxu0 0.0
        %2815 = vmatpush1.xpose.msra.mxu0 %v2753
        %2816 = vmatprep.subr.mxu0 0.0
        %2817 = vmatpush1.xpose.msra.mxu0 %v2754
        %2818 = vmatprep.subr.mxu0 0.0
        %2819 = vmatpush1.xpose.msra.mxu0 %v2755
        %2820 = vmatprep.subr.mxu0 0.0
        %2821 = vmatpush1.xpose.msra.mxu0 %v2756
        %2822 = vmatprep.subr.mxu0 0.0
        %2823 = vmatpush1.xpose.msra.mxu0 %v2757
        %2824 = vmatprep.subr.mxu0 0.0
        %2825 = vmatpush1.xpose.msra.mxu0 %v2758
        %2826 = vmatprep.subr.mxu0 0.0
        %2827 = vmatpush1.xpose.msra.mxu0 %v2759
        %2828 = vmatprep.subr.mxu0 0.0
        %2829 = vmatpush1.xpose.msra.mxu0 %v2760
        %2830 = vmatprep.subr.mxu0 0.0
        %2831 = vmatpush1.xpose.msra.mxu0 %v2761
        %2832 = vmatprep.subr.mxu0 0.0
        %2833 = vmatpush1.xpose.msra.mxu0 %v2762
        %2834 = vmatprep.subr.mxu0 0.0
        %2835 = vmatpush1.xpose.msra.mxu0 %v2763
        %2836 = vmatprep.subr.mxu0 0.0
        %2837 = vmatpush1.xpose.msra.mxu0 %v2764
        %2838 = vmatprep.subr.mxu0 0.0
        %2839 = vmatpush1.xpose.msra.mxu0 %v2765
        %2840 = vmatprep.subr.mxu0 0.0
        %2841 = vmatpush1.xpose.msra.mxu0 %v2766
        %2842 = vmatprep.subr.mxu0 0.0
        %2843 = vmatpush1.xpose.msra.mxu0 %v2767
        %2844 = vmatprep.mubr.f32.mxu0 0.0
        %2845 = vmatmul.mubr.f32.gmra.mrb[0].mxu0 %v2636
        %v2846 = vpop.f32.mrb[0].mxu0
        %v2847 = vadd.f32 %v2773, %v2846
        %v2848 = vpop.f32.mrb[0].mxu0
        %v2849 = vadd.f32 %v2777, %v2848
        %2850 = vmatprep.mubr.f32.mxu0 0.0
        %2851 = vmatmul.mubr.f32.gmra.mrb[0].mxu0 %v2637
        %v2852 = vpop.f32.mrb[0].mxu0
        %v2853 = vadd.f32 %v2773, %v2852
        %v2854 = vpop.f32.mrb[0].mxu0
        %v2855 = vadd.f32 %v2777, %v2854
        %2856 = vdwg.mxu0
        %v2857 = vmul.f32 %v2847, 0.088388346
        %v2858 = vmul.f32 %v2853, 0.088388346
        %2859 = vmax.xlane.f32.xlu0 %v2857
        %v2860 = vpop.xlane.xlu0 %2859
        %2861 = vmax.xlane.f32.xlu0 %v2858
        %v2862 = vpop.xlane.xlu0 %2861
        %2863 = vmin.xlane.f32.xlu0 %v2857
        %v2864 = vpop.xlane.xlu0 %2863
        %2865 = vmin.xlane.f32.xlu0 %v2858
        %v2866 = vpop.xlane.xlu0 %2865
        %vm2867 = vcmp.ge.f32.partialorder %v2728, 0.0
        %vm2868 = vcmp.ge.f32.partialorder %v2733, 0.0
        %v2869 = vmul.f32 %v2728, %v2860
        %v2870 = vmul.f32 %v2733, %v2862
        %v2871 = vmul.f32 %v2728, %v2864
        %v2872 = vmul.f32 %v2733, %v2866
        %v2873 = vsel %vm2867, %v2869, %v2871
        %v2874 = vsel %vm2868, %v2870, %v2872
        %2875 = vst [vmem:[#allocation2] sm:$0xff] %v2728
        %2876 = vst [vmem:[#allocation2 + $0x8] sm:$0xff] %v2733
        %2877 = vst [vmem:[#allocation3] sm:$0xff] %v2857
        %2878 = vst [vmem:[#allocation3 + $0x8] sm:$0xff] %v2858
        %2879 = vst [vmem:[#allocation4] sm:$0xff] %v2873
        %2880 = vst [vmem:[#allocation4 + $0x8] sm:$0xff] %v2874
        %2881 = vst [vmem:[#allocation5] sm:$0xff] %v2849
        %2882 = vst [vmem:[#allocation5 + $0x8] sm:$0xff] %v2855
        loop: start=0, step=1, limit=2
        $region88: #{tpu_custom_call.1} parent=55 // loop_pre_header
          _
        $region89: #{tpu_custom_call.1} parent=55 // loop_header
          %s2884 = sphi 0, %s2888
          %p2885 = scmp.ge.s32.totalorder %s2884, 2
        $region90: #{tpu_custom_call.1} parent=55 // loop_header_branch
          %2887 = sbr.rel (%p2885) target = $region94
        $region91: #{tpu_custom_call.1} parent=55 // loop_body
          %s2889 = smul.u32 %s2884, 8
          %s2890 = scalar_lea.vmem [#allocation2], %s2889
          %v2891 = vld [vmem:[%s2890] sm:$0xff]
          %s2892 = scalar_lea.vmem [#allocation4], %s2889
          %v2893 = vld [vmem:[%s2892] sm:$0xff]
          %s2894 = scalar_lea.vmem [#allocation5], %s2889
          %v2895 = vld [vmem:[%s2894] sm:$0xff]
          %s2896 = scalar_lea.vmem [#allocation3], %s2889
          %v2897 = vld [vmem:[%s2896] sm:$0xff]
          %2898 = vxpose.xlu0.b32.start [1/16] %v2897, 128
          %2899 = vxpose.xlu0.b32.cont [2/16] 0.0, 128
          %2900 = vxpose.xlu0.b32.cont [3/16] 0.0, 128
          %2901 = vxpose.xlu0.b32.cont [4/16] 0.0, 128
          %2902 = vxpose.xlu0.b32.cont [5/16] 0.0, 128
          %2903 = vxpose.xlu0.b32.cont [6/16] 0.0, 128
          %2904 = vxpose.xlu0.b32.cont [7/16] 0.0, 128
          %2905 = vxpose.xlu0.b32.cont [8/16] 0.0, 128
          %2906 = vxpose.xlu0.b32.cont [9/16] 0.0, 128
          %2907 = vxpose.xlu0.b32.cont [10/16] 0.0, 128
          %2908 = vxpose.xlu0.b32.cont [11/16] 0.0, 128
          %2909 = vxpose.xlu0.b32.cont [12/16] 0.0, 128
          %2910 = vxpose.xlu0.b32.cont [13/16] 0.0, 128
          %2911 = vxpose.xlu0.b32.cont [14/16] 0.0, 128
          %2912 = vxpose.xlu0.b32.cont [15/16] 0.0, 128
          %2913 = vxpose.xlu0.b32.end [16/16] 0.0, 128
          %v2914 = vpop.trf.xlu0
          %v2915 = vpop.trf.xlu0
          %v2916 = vpop.trf.xlu0
          %v2917 = vpop.trf.xlu0
          %v2918 = vpop.trf.xlu0
          %v2919 = vpop.trf.xlu0
          %v2920 = vpop.trf.xlu0
          %v2921 = vpop.trf.xlu0
          %v2922 = vpop.trf.xlu0
          %v2923 = vpop.trf.xlu0
          %v2924 = vpop.trf.xlu0
          %v2925 = vpop.trf.xlu0
          %v2926 = vpop.trf.xlu0
          %v2927 = vpop.trf.xlu0
          %v2928 = vpop.trf.xlu0
          %v2929 = vpop.trf.xlu0
          %2931 = vset.pattern.permute.xlu0 0
          %2932 = vperm.xlu0 %2931, %v2914
          %v2933 = vpop.permute.xlu0 %2932
          %2936 = vset.pattern.permute.xlu0 0
          %2937 = vperm.xlu0 %2936, %v2915
          %v2938 = vpop.permute.xlu0 %2937
          %2941 = vset.pattern.permute.xlu0 0
          %2942 = vperm.xlu0 %2941, %v2916
          %v2943 = vpop.permute.xlu0 %2942
          %2946 = vset.pattern.permute.xlu0 0
          %2947 = vperm.xlu0 %2946, %v2917
          %v2948 = vpop.permute.xlu0 %2947
          %2951 = vset.pattern.permute.xlu0 0
          %2952 = vperm.xlu0 %2951, %v2918
          %v2953 = vpop.permute.xlu0 %2952
          %2956 = vset.pattern.permute.xlu0 0
          %2957 = vperm.xlu0 %2956, %v2919
          %v2958 = vpop.permute.xlu0 %2957
          %2961 = vset.pattern.permute.xlu0 0
          %2962 = vperm.xlu0 %2961, %v2920
          %v2963 = vpop.permute.xlu0 %2962
          %2966 = vset.pattern.permute.xlu0 0
          %2967 = vperm.xlu0 %2966, %v2921
          %v2968 = vpop.permute.xlu0 %2967
          %2971 = vset.pattern.permute.xlu0 0
          %2972 = vperm.xlu0 %2971, %v2922
          %v2973 = vpop.permute.xlu0 %2972
          %2976 = vset.pattern.permute.xlu0 0
          %2977 = vperm.xlu0 %2976, %v2923
          %v2978 = vpop.permute.xlu0 %2977
          %2981 = vset.pattern.permute.xlu0 0
          %2982 = vperm.xlu0 %2981, %v2924
          %v2983 = vpop.permute.xlu0 %2982
          %2986 = vset.pattern.permute.xlu0 0
          %2987 = vperm.xlu0 %2986, %v2925
          %v2988 = vpop.permute.xlu0 %2987
          %2991 = vset.pattern.permute.xlu0 0
          %2992 = vperm.xlu0 %2991, %v2926
          %v2993 = vpop.permute.xlu0 %2992
          %2996 = vset.pattern.permute.xlu0 0
          %2997 = vperm.xlu0 %2996, %v2927
          %v2998 = vpop.permute.xlu0 %2997
          %3001 = vset.pattern.permute.xlu0 0
          %3002 = vperm.xlu0 %3001, %v2928
          %v3003 = vpop.permute.xlu0 %3002
          %3006 = vset.pattern.permute.xlu0 0
          %3007 = vperm.xlu0 %3006, %v2929
          %v3008 = vpop.permute.xlu0 %3007
          %v3010 = vlaneseq
          %v3011 = vshrl.u32 %v3010, 7
          %v3012 = vsub.s32 0, %v3011
          %v3013 = vrot.slane %v2891, %v3012
          %v3014 = vmul.f32 %v2933, %v3013
          %v3015 = vmul.f32 %v2938, %v3013
          %v3016 = vmul.f32 %v2943, %v3013
          %v3017 = vmul.f32 %v2948, %v3013
          %v3018 = vmul.f32 %v2953, %v3013
          %v3019 = vmul.f32 %v2958, %v3013
          %v3020 = vmul.f32 %v2963, %v3013
          %v3021 = vmul.f32 %v2968, %v3013
          %v3022 = vmul.f32 %v2973, %v3013
          %v3023 = vmul.f32 %v2978, %v3013
          %v3024 = vmul.f32 %v2983, %v3013
          %v3025 = vmul.f32 %v2988, %v3013
          %v3026 = vmul.f32 %v2993, %v3013
          %v3027 = vmul.f32 %v2998, %v3013
          %v3028 = vmul.f32 %v3003, %v3013
          %v3029 = vmul.f32 %v3008, %v3013
          %v3030 = vlaneseq
          %v3031 = vshrl.u32 %v3030, 7
          %v3032 = vsub.s32 0, %v3031
          %v3033 = vrot.slane %v2893, %v3032
          %v3034 = vsub.f32 %v3014, %v3033
          %v3035 = vsub.f32 %v3015, %v3033
          %v3036 = vsub.f32 %v3016, %v3033
          %v3037 = vsub.f32 %v3017, %v3033
          %v3038 = vsub.f32 %v3018, %v3033
          %v3039 = vsub.f32 %v3019, %v3033
          %v3040 = vsub.f32 %v3020, %v3033
          %v3041 = vsub.f32 %v3021, %v3033
          %v3042 = vsub.f32 %v3022, %v3033
          %v3043 = vsub.f32 %v3023, %v3033
          %v3044 = vsub.f32 %v3024, %v3033
          %v3045 = vsub.f32 %v3025, %v3033
          %v3046 = vsub.f32 %v3026, %v3033
          %v3047 = vsub.f32 %v3027, %v3033
          %v3048 = vsub.f32 %v3028, %v3033
          %v3049 = vsub.f32 %v3029, %v3033
          %v3050 = vmul.f32 %v3034, 1.442695
          %v3051 = vpow.pop %v3050
          %v3052 = vmul.f32 %v3035, 1.442695
          %v3053 = vpow.pop %v3052
          %v3054 = vmul.f32 %v3036, 1.442695
          %v3055 = vpow.pop %v3054
          %v3056 = vmul.f32 %v3037, 1.442695
          %v3057 = vpow.pop %v3056
          %v3058 = vmul.f32 %v3038, 1.442695
          %v3059 = vpow.pop %v3058
          %v3060 = vmul.f32 %v3039, 1.442695
          %v3061 = vpow.pop %v3060
          %v3062 = vmul.f32 %v3040, 1.442695
          %v3063 = vpow.pop %v3062
          %v3064 = vmul.f32 %v3041, 1.442695
          %v3065 = vpow.pop %v3064
          %v3066 = vmul.f32 %v3042, 1.442695
          %v3067 = vpow.pop %v3066
          %v3068 = vmul.f32 %v3043, 1.442695
          %v3069 = vpow.pop %v3068
          %v3070 = vmul.f32 %v3044, 1.442695
          %v3071 = vpow.pop %v3070
          %v3072 = vmul.f32 %v3045, 1.442695
          %v3073 = vpow.pop %v3072
          %v3074 = vmul.f32 %v3046, 1.442695
          %v3075 = vpow.pop %v3074
          %v3076 = vmul.f32 %v3047, 1.442695
          %v3077 = vpow.pop %v3076
          %v3078 = vmul.f32 %v3048, 1.442695
          %v3079 = vpow.pop %v3078
          %v3080 = vmul.f32 %v3049, 1.442695
          %v3081 = vpow.pop %v3080
          %vm3082 = vcmask 1040384
          %v3083 = vsel %vm3082, %v2895, 1.0
          %3084 = vmatprep.subr.mxu0 0.0
          %3085 = vmatpush1.msra.mxu0 %v3051
          %3086 = vmatprep.subr.mxu0 0.0
          %3087 = vmatpush1.msra.mxu0 %v3053
          %3088 = vmatprep.subr.mxu0 0.0
          %3089 = vmatpush1.msra.mxu0 %v3055
          %3090 = vmatprep.subr.mxu0 0.0
          %3091 = vmatpush1.msra.mxu0 %v3057
          %3092 = vmatprep.subr.mxu0 0.0
          %3093 = vmatpush1.msra.mxu0 %v3059
          %3094 = vmatprep.subr.mxu0 0.0
          %3095 = vmatpush1.msra.mxu0 %v3061
          %3096 = vmatprep.subr.mxu0 0.0
          %3097 = vmatpush1.msra.mxu0 %v3063
          %3098 = vmatprep.subr.mxu0 0.0
          %3099 = vmatpush1.msra.mxu0 %v3065
          %3100 = vmatprep.subr.mxu0 0.0
          %3101 = vmatpush1.msra.mxu0 %v3067
          %3102 = vmatprep.subr.mxu0 0.0
          %3103 = vmatpush1.msra.mxu0 %v3069
          %3104 = vmatprep.subr.mxu0 0.0
          %3105 = vmatpush1.msra.mxu0 %v3071
          %3106 = vmatprep.subr.mxu0 0.0
          %3107 = vmatpush1.msra.mxu0 %v3073
          %3108 = vmatprep.subr.mxu0 0.0
          %3109 = vmatpush1.msra.mxu0 %v3075
          %3110 = vmatprep.subr.mxu0 0.0
          %3111 = vmatpush1.msra.mxu0 %v3077
          %3112 = vmatprep.subr.mxu0 0.0
          %3113 = vmatpush1.msra.mxu0 %v3079
          %3114 = vmatprep.subr.mxu0 0.0
          %3115 = vmatpush1.msra.mxu0 %v3081
          %3116 = vmatprep.subr.mxu0 0.0
          %3117 = vmatpush1.msra.mxu0 0.0
          %3118 = vmatprep.subr.mxu0 0.0
          %3119 = vmatpush1.msra.mxu0 0.0
          %3120 = vmatprep.subr.mxu0 0.0
          %3121 = vmatpush1.msra.mxu0 0.0
          %3122 = vmatprep.subr.mxu0 0.0
          %3123 = vmatpush1.msra.mxu0 0.0
          %3124 = vmatprep.subr.mxu0 0.0
          %3125 = vmatpush1.msra.mxu0 0.0
          %3126 = vmatprep.subr.mxu0 0.0
          %3127 = vmatpush1.msra.mxu0 0.0
          %3128 = vmatprep.subr.mxu0 0.0
          %3129 = vmatpush1.msra.mxu0 0.0
          %3130 = vmatprep.subr.mxu0 0.0
          %3131 = vmatpush1.msra.mxu0 0.0
          %3132 = vmatprep.subr.mxu0 0.0
          %3133 = vmatpush1.msra.mxu0 0.0
          %3134 = vmatprep.subr.mxu0 0.0
          %3135 = vmatpush1.msra.mxu0 0.0
          %3136 = vmatprep.subr.mxu0 0.0
          %3137 = vmatpush1.msra.mxu0 0.0
          %3138 = vmatprep.subr.mxu0 0.0
          %3139 = vmatpush1.msra.mxu0 0.0
          %3140 = vmatprep.subr.mxu0 0.0
          %3141 = vmatpush1.msra.mxu0 0.0
          %3142 = vmatprep.subr.mxu0 0.0
          %3143 = vmatpush1.msra.mxu0 0.0
          %3144 = vmatprep.subr.mxu0 0.0
          %3145 = vmatpush1.msra.mxu0 0.0
          %3146 = vmatprep.subr.mxu0 0.0
          %3147 = vmatpush1.msra.mxu0 0.0
          %3148 = vmatprep.mubr.f32.mxu0 0.0
          %3149 = vmatmul.mubr.f32.gmra.mrb[0].mxu0 %v3083
          %v3150 = vpop.f32.mrb[0].mxu0
          %v3151 = vadd.f32 0.0, %v3150
          %v3152 = vpop.f32.mrb[0].mxu0
          %3153 = vdwg.mxu0
          %v3154 = vrcp.pop %v3151
          %v3156 = vrot.slane %v3154, 1
          %v3158 = vmul.f32 %v3151, %v3156
          %3159 = vset.pattern.permute.xlu0 1
          %3160 = vperm.xlu0 %3159, %v2914
          %v3161 = vpop.permute.xlu0 %3160
          %3163 = vset.pattern.permute.xlu0 1
          %3164 = vperm.xlu0 %3163, %v2915
          %v3165 = vpop.permute.xlu0 %3164
          %3167 = vset.pattern.permute.xlu0 1
          %3168 = vperm.xlu0 %3167, %v2916
          %v3169 = vpop.permute.xlu0 %3168
          %3171 = vset.pattern.permute.xlu0 1
          %3172 = vperm.xlu0 %3171, %v2917
          %v3173 = vpop.permute.xlu0 %3172
          %3175 = vset.pattern.permute.xlu0 1
          %3176 = vperm.xlu0 %3175, %v2918
          %v3177 = vpop.permute.xlu0 %3176
          %3179 = vset.pattern.permute.xlu0 1
          %3180 = vperm.xlu0 %3179, %v2919
          %v3181 = vpop.permute.xlu0 %3180
          %3183 = vset.pattern.permute.xlu0 1
          %3184 = vperm.xlu0 %3183, %v2920
          %v3185 = vpop.permute.xlu0 %3184
          %3187 = vset.pattern.permute.xlu0 1
          %3188 = vperm.xlu0 %3187, %v2921
          %v3189 = vpop.permute.xlu0 %3188
          %3191 = vset.pattern.permute.xlu0 1
          %3192 = vperm.xlu0 %3191, %v2922
          %v3193 = vpop.permute.xlu0 %3192
          %3195 = vset.pattern.permute.xlu0 1
          %3196 = vperm.xlu0 %3195, %v2923
          %v3197 = vpop.permute.xlu0 %3196
          %3199 = vset.pattern.permute.xlu0 1
          %3200 = vperm.xlu0 %3199, %v2924
          %v3201 = vpop.permute.xlu0 %3200
          %3203 = vset.pattern.permute.xlu0 1
          %3204 = vperm.xlu0 %3203, %v2925
          %v3205 = vpop.permute.xlu0 %3204
          %3207 = vset.pattern.permute.xlu0 1
          %3208 = vperm.xlu0 %3207, %v2926
          %v3209 = vpop.permute.xlu0 %3208
          %3211 = vset.pattern.permute.xlu0 1
          %3212 = vperm.xlu0 %3211, %v2927
          %v3213 = vpop.permute.xlu0 %3212
          %3215 = vset.pattern.permute.xlu0 1
          %3216 = vperm.xlu0 %3215, %v2928
          %v3217 = vpop.permute.xlu0 %3216
          %3219 = vset.pattern.permute.xlu0 1
          %3220 = vperm.xlu0 %3219, %v2929
          %v3221 = vpop.permute.xlu0 %3220
          %v3223 = vlaneseq
          %v3224 = vshrl.u32 %v3223, 7
          %v3225 = vsub.s32 1, %v3224
          %v3226 = vrot.slane %v2891, %v3225
          %v3227 = vmul.f32 %v3161, %v3226
          %v3228 = vmul.f32 %v3165, %v3226
          %v3229 = vmul.f32 %v3169, %v3226
          %v3230 = vmul.f32 %v3173, %v3226
          %v3231 = vmul.f32 %v3177, %v3226
          %v3232 = vmul.f32 %v3181, %v3226
          %v3233 = vmul.f32 %v3185, %v3226
          %v3234 = vmul.f32 %v3189, %v3226
          %v3235 = vmul.f32 %v3193, %v3226
          %v3236 = vmul.f32 %v3197, %v3226
          %v3237 = vmul.f32 %v3201, %v3226
          %v3238 = vmul.f32 %v3205, %v3226
          %v3239 = vmul.f32 %v3209, %v3226
          %v3240 = vmul.f32 %v3213, %v3226
          %v3241 = vmul.f32 %v3217, %v3226
          %v3242 = vmul.f32 %v3221, %v3226
          %v3243 = vlaneseq
          %v3244 = vshrl.u32 %v3243, 7
          %v3245 = vsub.s32 1, %v3244
          %v3246 = vrot.slane %v2893, %v3245
          %v3247 = vsub.f32 %v3227, %v3246
          %v3248 = vsub.f32 %v3228, %v3246
          %v3249 = vsub.f32 %v3229, %v3246
          %v3250 = vsub.f32 %v3230, %v3246
          %v3251 = vsub.f32 %v3231, %v3246
          %v3252 = vsub.f32 %v3232, %v3246
          %v3253 = vsub.f32 %v3233, %v3246
          %v3254 = vsub.f32 %v3234, %v3246
          %v3255 = vsub.f32 %v3235, %v3246
          %v3256 = vsub.f32 %v3236, %v3246
          %v3257 = vsub.f32 %v3237, %v3246
          %v3258 = vsub.f32 %v3238, %v3246
          %v3259 = vsub.f32 %v3239, %v3246
          %v3260 = vsub.f32 %v3240, %v3246
          %v3261 = vsub.f32 %v3241, %v3246
          %v3262 = vsub.f32 %v3242, %v3246
          %v3263 = vmul.f32 %v3247, 1.442695
          %v3264 = vpow.pop %v3263
          %v3265 = vmul.f32 %v3248, 1.442695
          %v3266 = vpow.pop %v3265
          %v3267 = vmul.f32 %v3249, 1.442695
          %v3268 = vpow.pop %v3267
          %v3269 = vmul.f32 %v3250, 1.442695
          %v3270 = vpow.pop %v3269
          %v3271 = vmul.f32 %v3251, 1.442695
          %v3272 = vpow.pop %v3271
          %v3273 = vmul.f32 %v3252, 1.442695
          %v3274 = vpow.pop %v3273
          %v3275 = vmul.f32 %v3253, 1.442695
          %v3276 = vpow.pop %v3275
          %v3277 = vmul.f32 %v3254, 1.442695
          %v3278 = vpow.pop %v3277
          %v3279 = vmul.f32 %v3255, 1.442695
          %v3280 = vpow.pop %v3279
          %v3281 = vmul.f32 %v3256, 1.442695
          %v3282 = vpow.pop %v3281
          %v3283 = vmul.f32 %v3257, 1.442695
          %v3284 = vpow.pop %v3283
          %v3285 = vmul.f32 %v3258, 1.442695
          %v3286 = vpow.pop %v3285
          %v3287 = vmul.f32 %v3259, 1.442695
          %v3288 = vpow.pop %v3287
          %v3289 = vmul.f32 %v3260, 1.442695
          %v3290 = vpow.pop %v3289
          %v3291 = vmul.f32 %v3261, 1.442695
          %v3292 = vpow.pop %v3291
          %v3293 = vmul.f32 %v3262, 1.442695
          %v3294 = vpow.pop %v3293
          %v3296 = vrot.slane %v2895, 1
          %v3298 = vsel %vm3082, %v3296, 1.0
          %3299 = vmatprep.subr.mxu0 0.0
          %3300 = vmatpush1.msra.mxu0 %v3264
          %3301 = vmatprep.subr.mxu0 0.0
          %3302 = vmatpush1.msra.mxu0 %v3266
          %3303 = vmatprep.subr.mxu0 0.0
          %3304 = vmatpush1.msra.mxu0 %v3268
          %3305 = vmatprep.subr.mxu0 0.0
          %3306 = vmatpush1.msra.mxu0 %v3270
          %3307 = vmatprep.subr.mxu0 0.0
          %3308 = vmatpush1.msra.mxu0 %v3272
          %3309 = vmatprep.subr.mxu0 0.0
          %3310 = vmatpush1.msra.mxu0 %v3274
          %3311 = vmatprep.subr.mxu0 0.0
          %3312 = vmatpush1.msra.mxu0 %v3276
          %3313 = vmatprep.subr.mxu0 0.0
          %3314 = vmatpush1.msra.mxu0 %v3278
          %3315 = vmatprep.subr.mxu0 0.0
          %3316 = vmatpush1.msra.mxu0 %v3280
          %3317 = vmatprep.subr.mxu0 0.0
          %3318 = vmatpush1.msra.mxu0 %v3282
          %3319 = vmatprep.subr.mxu0 0.0
          %3320 = vmatpush1.msra.mxu0 %v3284
          %3321 = vmatprep.subr.mxu0 0.0
          %3322 = vmatpush1.msra.mxu0 %v3286
          %3323 = vmatprep.subr.mxu0 0.0
          %3324 = vmatpush1.msra.mxu0 %v3288
          %3325 = vmatprep.subr.mxu0 0.0
          %3326 = vmatpush1.msra.mxu0 %v3290
          %3327 = vmatprep.subr.mxu0 0.0
          %3328 = vmatpush1.msra.mxu0 %v3292
          %3329 = vmatprep.subr.mxu0 0.0
          %3330 = vmatpush1.msra.mxu0 %v3294
          %3331 = vmatprep.subr.mxu0 0.0
          %3332 = vmatpush1.msra.mxu0 0.0
          %3333 = vmatprep.subr.mxu0 0.0
          %3334 = vmatpush1.msra.mxu0 0.0
          %3335 = vmatprep.subr.mxu0 0.0
          %3336 = vmatpush1.msra.mxu0 0.0
          %3337 = vmatprep.subr.mxu0 0.0
          %3338 = vmatpush1.msra.mxu0 0.0
          %3339 = vmatprep.subr.mxu0 0.0
          %3340 = vmatpush1.msra.mxu0 0.0
          %3341 = vmatprep.subr.mxu0 0.0
          %3342 = vmatpush1.msra.mxu0 0.0
          %3343 = vmatprep.subr.mxu0 0.0
          %3344 = vmatpush1.msra.mxu0 0.0
          %3345 = vmatprep.subr.mxu0 0.0
          %3346 = vmatpush1.msra.mxu0 0.0
          %3347 = vmatprep.subr.mxu0 0.0
          %3348 = vmatpush1.msra.mxu0 0.0
          %3349 = vmatprep.subr.mxu0 0.0
          %3350 = vmatpush1.msra.mxu0 0.0
          %3351 = vmatprep.subr.mxu0 0.0
          %3352 = vmatpush1.msra.mxu0 0.0
          %3353 = vmatprep.subr.mxu0 0.0
          %3354 = vmatpush1.msra.mxu0 0.0
          %3355 = vmatprep.subr.mxu0 0.0
          %3356 = vmatpush1.msra.mxu0 0.0
          %3357 = vmatprep.subr.mxu0 0.0
          %3358 = vmatpush1.msra.mxu0 0.0
          %3359 = vmatprep.subr.mxu0 0.0
          %3360 = vmatpush1.msra.mxu0 0.0
          %3361 = vmatprep.subr.mxu0 0.0
          %3362 = vmatpush1.msra.mxu0 0.0
          %3363 = vmatprep.mubr.f32.mxu0 0.0
          %3364 = vmatmul.mubr.f32.gmra.mrb[0].mxu0 %v3298
          %v3365 = vpop.f32.mrb[0].mxu0
          %v3366 = vadd.f32 0.0, %v3365
          %v3367 = vpop.f32.mrb[0].mxu0
          %3368 = vdwg.mxu0
          %v3369 = vrcp.pop %v3366
          %v3371 = vrot.slane %v3369, 1
          %v3373 = vmul.f32 %v3366, %v3371
          %3374 = vset.pattern.permute.xlu0 2
          %3375 = vperm.xlu0 %3374, %v2914
          %v3376 = vpop.permute.xlu0 %3375
          %3378 = vset.pattern.permute.xlu0 2
          %3379 = vperm.xlu0 %3378, %v2915
          %v3380 = vpop.permute.xlu0 %3379
          %3382 = vset.pattern.permute.xlu0 2
          %3383 = vperm.xlu0 %3382, %v2916
          %v3384 = vpop.permute.xlu0 %3383
          %3386 = vset.pattern.permute.xlu0 2
          %3387 = vperm.xlu0 %3386, %v2917
          %v3388 = vpop.permute.xlu0 %3387
          %3390 = vset.pattern.permute.xlu0 2
          %3391 = vperm.xlu0 %3390, %v2918
          %v3392 = vpop.permute.xlu0 %3391
          %3394 = vset.pattern.permute.xlu0 2
          %3395 = vperm.xlu0 %3394, %v2919
          %v3396 = vpop.permute.xlu0 %3395
          %3398 = vset.pattern.permute.xlu0 2
          %3399 = vperm.xlu0 %3398, %v2920
          %v3400 = vpop.permute.xlu0 %3399
          %3402 = vset.pattern.permute.xlu0 2
          %3403 = vperm.xlu0 %3402, %v2921
          %v3404 = vpop.permute.xlu0 %3403
          %3406 = vset.pattern.permute.xlu0 2
          %3407 = vperm.xlu0 %3406, %v2922
          %v3408 = vpop.permute.xlu0 %3407
          %3410 = vset.pattern.permute.xlu0 2
          %3411 = vperm.xlu0 %3410, %v2923
          %v3412 = vpop.permute.xlu0 %3411
          %3414 = vset.pattern.permute.xlu0 2
          %3415 = vperm.xlu0 %3414, %v2924
          %v3416 = vpop.permute.xlu0 %3415
          %3418 = vset.pattern.permute.xlu0 2
          %3419 = vperm.xlu0 %3418, %v2925
          %v3420 = vpop.permute.xlu0 %3419
          %3422 = vset.pattern.permute.xlu0 2
          %3423 = vperm.xlu0 %3422, %v2926
          %v3424 = vpop.permute.xlu0 %3423
          %3426 = vset.pattern.permute.xlu0 2
          %3427 = vperm.xlu0 %3426, %v2927
          %v3428 = vpop.permute.xlu0 %3427
          %3430 = vset.pattern.permute.xlu0 2
          %3431 = vperm.xlu0 %3430, %v2928
          %v3432 = vpop.permute.xlu0 %3431
          %3434 = vset.pattern.permute.xlu0 2
          %3435 = vperm.xlu0 %3434, %v2929
          %v3436 = vpop.permute.xlu0 %3435
          %v3438 = vlaneseq
          %v3439 = vshrl.u32 %v3438, 7
          %v3440 = vsub.s32 2, %v3439
          %v3441 = vrot.slane %v2891, %v3440
          %v3442 = vmul.f32 %v3376, %v3441
          %v3443 = vmul.f32 %v3380, %v3441
          %v3444 = vmul.f32 %v3384, %v3441
          %v3445 = vmul.f32 %v3388, %v3441
          %v3446 = vmul.f32 %v3392, %v3441
          %v3447 = vmul.f32 %v3396, %v3441
          %v3448 = vmul.f32 %v3400, %v3441
          %v3449 = vmul.f32 %v3404, %v3441
          %v3450 = vmul.f32 %v3408, %v3441
          %v3451 = vmul.f32 %v3412, %v3441
          %v3452 = vmul.f32 %v3416, %v3441
          %v3453 = vmul.f32 %v3420, %v3441
          %v3454 = vmul.f32 %v3424, %v3441
          %v3455 = vmul.f32 %v3428, %v3441
          %v3456 = vmul.f32 %v3432, %v3441
          %v3457 = vmul.f32 %v3436, %v3441
          %v3458 = vlaneseq
          %v3459 = vshrl.u32 %v3458, 7
          %v3460 = vsub.s32 2, %v3459
          %v3461 = vrot.slane %v2893, %v3460
          %v3462 = vsub.f32 %v3442, %v3461
          %v3463 = vsub.f32 %v3443, %v3461
          %v3464 = vsub.f32 %v3444, %v3461
          %v3465 = vsub.f32 %v3445, %v3461
          %v3466 = vsub.f32 %v3446, %v3461
          %v3467 = vsub.f32 %v3447, %v3461
          %v3468 = vsub.f32 %v3448, %v3461
          %v3469 = vsub.f32 %v3449, %v3461
          %v3470 = vsub.f32 %v3450, %v3461
          %v3471 = vsub.f32 %v3451, %v3461
          %v3472 = vsub.f32 %v3452, %v3461
          %v3473 = vsub.f32 %v3453, %v3461
          %v3474 = vsub.f32 %v3454, %v3461
          %v3475 = vsub.f32 %v3455, %v3461
          %v3476 = vsub.f32 %v3456, %v3461
          %v3477 = vsub.f32 %v3457, %v3461
          %v3478 = vmul.f32 %v3462, 1.442695
          %v3479 = vpow.pop %v3478
          %v3480 = vmul.f32 %v3463, 1.442695
          %v3481 = vpow.pop %v3480
          %v3482 = vmul.f32 %v3464, 1.442695
          %v3483 = vpow.pop %v3482
          %v3484 = vmul.f32 %v3465, 1.442695
          %v3485 = vpow.pop %v3484
          %v3486 = vmul.f32 %v3466, 1.442695
          %v3487 = vpow.pop %v3486
          %v3488 = vmul.f32 %v3467, 1.442695
          %v3489 = vpow.pop %v3488
          %v3490 = vmul.f32 %v3468, 1.442695
          %v3491 = vpow.pop %v3490
          %v3492 = vmul.f32 %v3469, 1.442695
          %v3493 = vpow.pop %v3492
          %v3494 = vmul.f32 %v3470, 1.442695
          %v3495 = vpow.pop %v3494
          %v3496 = vmul.f32 %v3471, 1.442695
          %v3497 = vpow.pop %v3496
          %v3498 = vmul.f32 %v3472, 1.442695
          %v3499 = vpow.pop %v3498
          %v3500 = vmul.f32 %v3473, 1.442695
          %v3501 = vpow.pop %v3500
          %v3502 = vmul.f32 %v3474, 1.442695
          %v3503 = vpow.pop %v3502
          %v3504 = vmul.f32 %v3475, 1.442695
          %v3505 = vpow.pop %v3504
          %v3506 = vmul.f32 %v3476, 1.442695
          %v3507 = vpow.pop %v3506
          %v3508 = vmul.f32 %v3477, 1.442695
          %v3509 = vpow.pop %v3508
          %v3510 = vrot.slane %v2895, 2
          %v3512 = vsel %vm3082, %v3510, 1.0
          %3513 = vmatprep.subr.mxu0 0.0
          %3514 = vmatpush1.msra.mxu0 %v3479
          %3515 = vmatprep.subr.mxu0 0.0
          %3516 = vmatpush1.msra.mxu0 %v3481
          %3517 = vmatprep.subr.mxu0 0.0
          %3518 = vmatpush1.msra.mxu0 %v3483
          %3519 = vmatprep.subr.mxu0 0.0
          %3520 = vmatpush1.msra.mxu0 %v3485
          %3521 = vmatprep.subr.mxu0 0.0
          %3522 = vmatpush1.msra.mxu0 %v3487
          %3523 = vmatprep.subr.mxu0 0.0
          %3524 = vmatpush1.msra.mxu0 %v3489
          %3525 = vmatprep.subr.mxu0 0.0
          %3526 = vmatpush1.msra.mxu0 %v3491
          %3527 = vmatprep.subr.mxu0 0.0
          %3528 = vmatpush1.msra.mxu0 %v3493
          %3529 = vmatprep.subr.mxu0 0.0
          %3530 = vmatpush1.msra.mxu0 %v3495
          %3531 = vmatprep.subr.mxu0 0.0
          %3532 = vmatpush1.msra.mxu0 %v3497
          %3533 = vmatprep.subr.mxu0 0.0
          %3534 = vmatpush1.msra.mxu0 %v3499
          %3535 = vmatprep.subr.mxu0 0.0
          %3536 = vmatpush1.msra.mxu0 %v3501
          %3537 = vmatprep.subr.mxu0 0.0
          %3538 = vmatpush1.msra.mxu0 %v3503
          %3539 = vmatprep.subr.mxu0 0.0
          %3540 = vmatpush1.msra.mxu0 %v3505
          %3541 = vmatprep.subr.mxu0 0.0
          %3542 = vmatpush1.msra.mxu0 %v3507
          %3543 = vmatprep.subr.mxu0 0.0
          %3544 = vmatpush1.msra.mxu0 %v3509
          %3545 = vmatprep.subr.mxu0 0.0
          %3546 = vmatpush1.msra.mxu0 0.0
          %3547 = vmatprep.subr.mxu0 0.0
          %3548 = vmatpush1.msra.mxu0 0.0
          %3549 = vmatprep.subr.mxu0 0.0
          %3550 = vmatpush1.msra.mxu0 0.0
          %3551 = vmatprep.subr.mxu0 0.0
          %3552 = vmatpush1.msra.mxu0 0.0
          %3553 = vmatprep.subr.mxu0 0.0
          %3554 = vmatpush1.msra.mxu0 0.0
          %3555 = vmatprep.subr.mxu0 0.0
          %3556 = vmatpush1.msra.mxu0 0.0
          %3557 = vmatprep.subr.mxu0 0.0
          %3558 = vmatpush1.msra.mxu0 0.0
          %3559 = vmatprep.subr.mxu0 0.0
          %3560 = vmatpush1.msra.mxu0 0.0
          %3561 = vmatprep.subr.mxu0 0.0
          %3562 = vmatpush1.msra.mxu0 0.0
          %3563 = vmatprep.subr.mxu0 0.0
          %3564 = vmatpush1.msra.mxu0 0.0
          %3565 = vmatprep.subr.mxu0 0.0
          %3566 = vmatpush1.msra.mxu0 0.0
          %3567 = vmatprep.subr.mxu0 0.0
          %3568 = vmatpush1.msra.mxu0 0.0
          %3569 = vmatprep.subr.mxu0 0.0
          %3570 = vmatpush1.msra.mxu0 0.0
          %3571 = vmatprep.subr.mxu0 0.0
          %3572 = vmatpush1.msra.mxu0 0.0
          %3573 = vmatprep.subr.mxu0 0.0
          %3574 = vmatpush1.msra.mxu0 0.0
          %3575 = vmatprep.subr.mxu0 0.0
          %3576 = vmatpush1.msra.mxu0 0.0
          %3577 = vmatprep.mubr.f32.mxu0 0.0
          %3578 = vmatmul.mubr.f32.gmra.mrb[0].mxu0 %v3512
          %v3579 = vpop.f32.mrb[0].mxu0
          %v3580 = vadd.f32 0.0, %v3579
          %v3581 = vpop.f32.mrb[0].mxu0
          %3582 = vdwg.mxu0
          %v3583 = vrcp.pop %v3580
          %v3585 = vrot.slane %v3583, 1
          %v3587 = vmul.f32 %v3580, %v3585
          %3588 = vset.pattern.permute.xlu0 3
          %3589 = vperm.xlu0 %3588, %v2914
          %v3590 = vpop.permute.xlu0 %3589
          %3592 = vset.pattern.permute.xlu0 3
          %3593 = vperm.xlu0 %3592, %v2915
          %v3594 = vpop.permute.xlu0 %3593
          %3596 = vset.pattern.permute.xlu0 3
          %3597 = vperm.xlu0 %3596, %v2916
          %v3598 = vpop.permute.xlu0 %3597
          %3600 = vset.pattern.permute.xlu0 3
          %3601 = vperm.xlu0 %3600, %v2917
          %v3602 = vpop.permute.xlu0 %3601
          %3604 = vset.pattern.permute.xlu0 3
          %3605 = vperm.xlu0 %3604, %v2918
          %v3606 = vpop.permute.xlu0 %3605
          %3608 = vset.pattern.permute.xlu0 3
          %3609 = vperm.xlu0 %3608, %v2919
          %v3610 = vpop.permute.xlu0 %3609
          %3612 = vset.pattern.permute.xlu0 3
          %3613 = vperm.xlu0 %3612, %v2920
          %v3614 = vpop.permute.xlu0 %3613
          %3616 = vset.pattern.permute.xlu0 3
          %3617 = vperm.xlu0 %3616, %v2921
          %v3618 = vpop.permute.xlu0 %3617
          %3620 = vset.pattern.permute.xlu0 3
          %3621 = vperm.xlu0 %3620, %v2922
          %v3622 = vpop.permute.xlu0 %3621
          %3624 = vset.pattern.permute.xlu0 3
          %3625 = vperm.xlu0 %3624, %v2923
          %v3626 = vpop.permute.xlu0 %3625
          %3628 = vset.pattern.permute.xlu0 3
          %3629 = vperm.xlu0 %3628, %v2924
          %v3630 = vpop.permute.xlu0 %3629
          %3632 = vset.pattern.permute.xlu0 3
          %3633 = vperm.xlu0 %3632, %v2925
          %v3634 = vpop.permute.xlu0 %3633
          %3636 = vset.pattern.permute.xlu0 3
          %3637 = vperm.xlu0 %3636, %v2926
          %v3638 = vpop.permute.xlu0 %3637
          %3640 = vset.pattern.permute.xlu0 3
          %3641 = vperm.xlu0 %3640, %v2927
          %v3642 = vpop.permute.xlu0 %3641
          %3644 = vset.pattern.permute.xlu0 3
          %3645 = vperm.xlu0 %3644, %v2928
          %v3646 = vpop.permute.xlu0 %3645
          %3648 = vset.pattern.permute.xlu0 3
          %3649 = vperm.xlu0 %3648, %v2929
          %v3650 = vpop.permute.xlu0 %3649
          %v3652 = vlaneseq
          %v3653 = vshrl.u32 %v3652, 7
          %v3654 = vsub.s32 3, %v3653
          %v3655 = vrot.slane %v2891, %v3654
          %v3656 = vmul.f32 %v3590, %v3655
          %v3657 = vmul.f32 %v3594, %v3655
          %v3658 = vmul.f32 %v3598, %v3655
          %v3659 = vmul.f32 %v3602, %v3655
          %v3660 = vmul.f32 %v3606, %v3655
          %v3661 = vmul.f32 %v3610, %v3655
          %v3662 = vmul.f32 %v3614, %v3655
          %v3663 = vmul.f32 %v3618, %v3655
          %v3664 = vmul.f32 %v3622, %v3655
          %v3665 = vmul.f32 %v3626, %v3655
          %v3666 = vmul.f32 %v3630, %v3655
          %v3667 = vmul.f32 %v3634, %v3655
          %v3668 = vmul.f32 %v3638, %v3655
          %v3669 = vmul.f32 %v3642, %v3655
          %v3670 = vmul.f32 %v3646, %v3655
          %v3671 = vmul.f32 %v3650, %v3655
          %v3672 = vlaneseq
          %v3673 = vshrl.u32 %v3672, 7
          %v3674 = vsub.s32 3, %v3673
          %v3675 = vrot.slane %v2893, %v3674
          %v3676 = vsub.f32 %v3656, %v3675
          %v3677 = vsub.f32 %v3657, %v3675
          %v3678 = vsub.f32 %v3658, %v3675
          %v3679 = vsub.f32 %v3659, %v3675
          %v3680 = vsub.f32 %v3660, %v3675
          %v3681 = vsub.f32 %v3661, %v3675
          %v3682 = vsub.f32 %v3662, %v3675
          %v3683 = vsub.f32 %v3663, %v3675
          %v3684 = vsub.f32 %v3664, %v3675
          %v3685 = vsub.f32 %v3665, %v3675
          %v3686 = vsub.f32 %v3666, %v3675
          %v3687 = vsub.f32 %v3667, %v3675
          %v3688 = vsub.f32 %v3668, %v3675
          %v3689 = vsub.f32 %v3669, %v3675
          %v3690 = vsub.f32 %v3670, %v3675
          %v3691 = vsub.f32 %v3671, %v3675
          %v3692 = vmul.f32 %v3676, 1.442695
          %v3693 = vpow.pop %v3692
          %v3694 = vmul.f32 %v3677, 1.442695
          %v3695 = vpow.pop %v3694
          %v3696 = vmul.f32 %v3678, 1.442695
          %v3697 = vpow.pop %v3696
          %v3698 = vmul.f32 %v3679, 1.442695
          %v3699 = vpow.pop %v3698
          %v3700 = vmul.f32 %v3680, 1.442695
          %v3701 = vpow.pop %v3700
          %v3702 = vmul.f32 %v3681, 1.442695
          %v3703 = vpow.pop %v3702
          %v3704 = vmul.f32 %v3682, 1.442695
          %v3705 = vpow.pop %v3704
          %v3706 = vmul.f32 %v3683, 1.442695
          %v3707 = vpow.pop %v3706
          %v3708 = vmul.f32 %v3684, 1.442695
          %v3709 = vpow.pop %v3708
          %v3710 = vmul.f32 %v3685, 1.442695
          %v3711 = vpow.pop %v3710
          %v3712 = vmul.f32 %v3686, 1.442695
          %v3713 = vpow.pop %v3712
          %v3714 = vmul.f32 %v3687, 1.442695
          %v3715 = vpow.pop %v3714
          %v3716 = vmul.f32 %v3688, 1.442695
          %v3717 = vpow.pop %v3716
          %v3718 = vmul.f32 %v3689, 1.442695
          %v3719 = vpow.pop %v3718
          %v3720 = vmul.f32 %v3690, 1.442695
          %v3721 = vpow.pop %v3720
          %v3722 = vmul.f32 %v3691, 1.442695
          %v3723 = vpow.pop %v3722
          %v3724 = vrot.slane %v2895, 3
          %v3726 = vsel %vm3082, %v3724, 1.0
          %3727 = vmatprep.subr.mxu0 0.0
          %3728 = vmatpush1.msra.mxu0 %v3693
          %3729 = vmatprep.subr.mxu0 0.0
          %3730 = vmatpush1.msra.mxu0 %v3695
          %3731 = vmatprep.subr.mxu0 0.0
          %3732 = vmatpush1.msra.mxu0 %v3697
          %3733 = vmatprep.subr.mxu0 0.0
          %3734 = vmatpush1.msra.mxu0 %v3699
          %3735 = vmatprep.subr.mxu0 0.0
          %3736 = vmatpush1.msra.mxu0 %v3701
          %3737 = vmatprep.subr.mxu0 0.0
          %3738 = vmatpush1.msra.mxu0 %v3703
          %3739 = vmatprep.subr.mxu0 0.0
          %3740 = vmatpush1.msra.mxu0 %v3705
          %3741 = vmatprep.subr.mxu0 0.0
          %3742 = vmatpush1.msra.mxu0 %v3707
          %3743 = vmatprep.subr.mxu0 0.0
          %3744 = vmatpush1.msra.mxu0 %v3709
          %3745 = vmatprep.subr.mxu0 0.0
          %3746 = vmatpush1.msra.mxu0 %v3711
          %3747 = vmatprep.subr.mxu0 0.0
          %3748 = vmatpush1.msra.mxu0 %v3713
          %3749 = vmatprep.subr.mxu0 0.0
          %3750 = vmatpush1.msra.mxu0 %v3715
          %3751 = vmatprep.subr.mxu0 0.0
          %3752 = vmatpush1.msra.mxu0 %v3717
          %3753 = vmatprep.subr.mxu0 0.0
          %3754 = vmatpush1.msra.mxu0 %v3719
          %3755 = vmatprep.subr.mxu0 0.0
          %3756 = vmatpush1.msra.mxu0 %v3721
          %3757 = vmatprep.subr.mxu0 0.0
          %3758 = vmatpush1.msra.mxu0 %v3723
          %3759 = vmatprep.subr.mxu0 0.0
          %3760 = vmatpush1.msra.mxu0 0.0
          %3761 = vmatprep.subr.mxu0 0.0
          %3762 = vmatpush1.msra.mxu0 0.0
          %3763 = vmatprep.subr.mxu0 0.0
          %3764 = vmatpush1.msra.mxu0 0.0
          %3765 = vmatprep.subr.mxu0 0.0
          %3766 = vmatpush1.msra.mxu0 0.0
          %3767 = vmatprep.subr.mxu0 0.0
          %3768 = vmatpush1.msra.mxu0 0.0
          %3769 = vmatprep.subr.mxu0 0.0
          %3770 = vmatpush1.msra.mxu0 0.0
          %3771 = vmatprep.subr.mxu0 0.0
          %3772 = vmatpush1.msra.mxu0 0.0
          %3773 = vmatprep.subr.mxu0 0.0
          %3774 = vmatpush1.msra.mxu0 0.0
          %3775 = vmatprep.subr.mxu0 0.0
          %3776 = vmatpush1.msra.mxu0 0.0
          %3777 = vmatprep.subr.mxu0 0.0
          %3778 = vmatpush1.msra.mxu0 0.0
          %3779 = vmatprep.subr.mxu0 0.0
          %3780 = vmatpush1.msra.mxu0 0.0
          %3781 = vmatprep.subr.mxu0 0.0
          %3782 = vmatpush1.msra.mxu0 0.0
          %3783 = vmatprep.subr.mxu0 0.0
          %3784 = vmatpush1.msra.mxu0 0.0
          %3785 = vmatprep.subr.mxu0 0.0
          %3786 = vmatpush1.msra.mxu0 0.0
          %3787 = vmatprep.subr.mxu0 0.0
          %3788 = vmatpush1.msra.mxu0 0.0
          %3789 = vmatprep.subr.mxu0 0.0
          %3790 = vmatpush1.msra.mxu0 0.0
          %3791 = vmatprep.mubr.f32.mxu0 0.0
          %3792 = vmatmul.mubr.f32.gmra.mrb[0].mxu0 %v3726
          %v3793 = vpop.f32.mrb[0].mxu0
          %v3794 = vadd.f32 0.0, %v3793
          %v3795 = vpop.f32.mrb[0].mxu0
          %3796 = vdwg.mxu0
          %v3797 = vrcp.pop %v3794
          %v3799 = vrot.slane %v3797, 1
          %v3801 = vmul.f32 %v3794, %v3799
          %3802 = vset.pattern.permute.xlu0 4
          %3803 = vperm.xlu0 %3802, %v2914
          %v3804 = vpop.permute.xlu0 %3803
          %3806 = vset.pattern.permute.xlu0 4
          %3807 = vperm.xlu0 %3806, %v2915
          %v3808 = vpop.permute.xlu0 %3807
          %3810 = vset.pattern.permute.xlu0 4
          %3811 = vperm.xlu0 %3810, %v2916
          %v3812 = vpop.permute.xlu0 %3811
          %3814 = vset.pattern.permute.xlu0 4
          %3815 = vperm.xlu0 %3814, %v2917
          %v3816 = vpop.permute.xlu0 %3815
          %3818 = vset.pattern.permute.xlu0 4
          %3819 = vperm.xlu0 %3818, %v2918
          %v3820 = vpop.permute.xlu0 %3819
          %3822 = vset.pattern.permute.xlu0 4
          %3823 = vperm.xlu0 %3822, %v2919
          %v3824 = vpop.permute.xlu0 %3823
          %3826 = vset.pattern.permute.xlu0 4
          %3827 = vperm.xlu0 %3826, %v2920
          %v3828 = vpop.permute.xlu0 %3827
          %3830 = vset.pattern.permute.xlu0 4
          %3831 = vperm.xlu0 %3830, %v2921
          %v3832 = vpop.permute.xlu0 %3831
          %3834 = vset.pattern.permute.xlu0 4
          %3835 = vperm.xlu0 %3834, %v2922
          %v3836 = vpop.permute.xlu0 %3835
          %3838 = vset.pattern.permute.xlu0 4
          %3839 = vperm.xlu0 %3838, %v2923
          %v3840 = vpop.permute.xlu0 %3839
          %3842 = vset.pattern.permute.xlu0 4
          %3843 = vperm.xlu0 %3842, %v2924
          %v3844 = vpop.permute.xlu0 %3843
          %3846 = vset.pattern.permute.xlu0 4
          %3847 = vperm.xlu0 %3846, %v2925
          %v3848 = vpop.permute.xlu0 %3847
          %3850 = vset.pattern.permute.xlu0 4
          %3851 = vperm.xlu0 %3850, %v2926
          %v3852 = vpop.permute.xlu0 %3851
          %3854 = vset.pattern.permute.xlu0 4
          %3855 = vperm.xlu0 %3854, %v2927
          %v3856 = vpop.permute.xlu0 %3855
          %3858 = vset.pattern.permute.xlu0 4
          %3859 = vperm.xlu0 %3858, %v2928
          %v3860 = vpop.permute.xlu0 %3859
          %3862 = vset.pattern.permute.xlu0 4
          %3863 = vperm.xlu0 %3862, %v2929
          %v3864 = vpop.permute.xlu0 %3863
          %v3866 = vlaneseq
          %v3867 = vshrl.u32 %v3866, 7
          %v3868 = vsub.s32 4, %v3867
          %v3869 = vrot.slane %v2891, %v3868
          %v3870 = vmul.f32 %v3804, %v3869
          %v3871 = vmul.f32 %v3808, %v3869
          %v3872 = vmul.f32 %v3812, %v3869
          %v3873 = vmul.f32 %v3816, %v3869
          %v3874 = vmul.f32 %v3820, %v3869
          %v3875 = vmul.f32 %v3824, %v3869
          %v3876 = vmul.f32 %v3828, %v3869
          %v3877 = vmul.f32 %v3832, %v3869
          %v3878 = vmul.f32 %v3836, %v3869
          %v3879 = vmul.f32 %v3840, %v3869
          %v3880 = vmul.f32 %v3844, %v3869
          %v3881 = vmul.f32 %v3848, %v3869
          %v3882 = vmul.f32 %v3852, %v3869
          %v3883 = vmul.f32 %v3856, %v3869
          %v3884 = vmul.f32 %v3860, %v3869
          %v3885 = vmul.f32 %v3864, %v3869
          %v3886 = vlaneseq
          %v3887 = vshrl.u32 %v3886, 7
          %v3888 = vsub.s32 4, %v3887
          %v3889 = vrot.slane %v2893, %v3888
          %v3890 = vsub.f32 %v3870, %v3889
          %v3891 = vsub.f32 %v3871, %v3889
          %v3892 = vsub.f32 %v3872, %v3889
          %v3893 = vsub.f32 %v3873, %v3889
          %v3894 = vsub.f32 %v3874, %v3889
          %v3895 = vsub.f32 %v3875, %v3889
          %v3896 = vsub.f32 %v3876, %v3889
          %v3897 = vsub.f32 %v3877, %v3889
          %v3898 = vsub.f32 %v3878, %v3889
          %v3899 = vsub.f32 %v3879, %v3889
          %v3900 = vsub.f32 %v3880, %v3889
          %v3901 = vsub.f32 %v3881, %v3889
          %v3902 = vsub.f32 %v3882, %v3889
          %v3903 = vsub.f32 %v3883, %v3889
          %v3904 = vsub.f32 %v3884, %v3889
          %v3905 = vsub.f32 %v3885, %v3889
          %v3906 = vmul.f32 %v3890, 1.442695
          %v3907 = vpow.pop %v3906
          %v3908 = vmul.f32 %v3891, 1.442695
          %v3909 = vpow.pop %v3908
          %v3910 = vmul.f32 %v3892, 1.442695
          %v3911 = vpow.pop %v3910
          %v3912 = vmul.f32 %v3893, 1.442695
          %v3913 = vpow.pop %v3912
          %v3914 = vmul.f32 %v3894, 1.442695
          %v3915 = vpow.pop %v3914
          %v3916 = vmul.f32 %v3895, 1.442695
          %v3917 = vpow.pop %v3916
          %v3918 = vmul.f32 %v3896, 1.442695
          %v3919 = vpow.pop %v3918
          %v3920 = vmul.f32 %v3897, 1.442695
          %v3921 = vpow.pop %v3920
          %v3922 = vmul.f32 %v3898, 1.442695
          %v3923 = vpow.pop %v3922
          %v3924 = vmul.f32 %v3899, 1.442695
          %v3925 = vpow.pop %v3924
          %v3926 = vmul.f32 %v3900, 1.442695
          %v3927 = vpow.pop %v3926
          %v3928 = vmul.f32 %v3901, 1.442695
          %v3929 = vpow.pop %v3928
          %v3930 = vmul.f32 %v3902, 1.442695
          %v3931 = vpow.pop %v3930
          %v3932 = vmul.f32 %v3903, 1.442695
          %v3933 = vpow.pop %v3932
          %v3934 = vmul.f32 %v3904, 1.442695
          %v3935 = vpow.pop %v3934
          %v3936 = vmul.f32 %v3905, 1.442695
          %v3937 = vpow.pop %v3936
          %v3938 = vrot.slane %v2895, 4
          %v3940 = vsel %vm3082, %v3938, 1.0
          %3941 = vmatprep.subr.mxu0 0.0
          %3942 = vmatpush1.msra.mxu0 %v3907
          %3943 = vmatprep.subr.mxu0 0.0
          %3944 = vmatpush1.msra.mxu0 %v3909
          %3945 = vmatprep.subr.mxu0 0.0
          %3946 = vmatpush1.msra.mxu0 %v3911
          %3947 = vmatprep.subr.mxu0 0.0
          %3948 = vmatpush1.msra.mxu0 %v3913
          %3949 = vmatprep.subr.mxu0 0.0
          %3950 = vmatpush1.msra.mxu0 %v3915
          %3951 = vmatprep.subr.mxu0 0.0
          %3952 = vmatpush1.msra.mxu0 %v3917
          %3953 = vmatprep.subr.mxu0 0.0
          %3954 = vmatpush1.msra.mxu0 %v3919
          %3955 = vmatprep.subr.mxu0 0.0
          %3956 = vmatpush1.msra.mxu0 %v3921
          %3957 = vmatprep.subr.mxu0 0.0
          %3958 = vmatpush1.msra.mxu0 %v3923
          %3959 = vmatprep.subr.mxu0 0.0
          %3960 = vmatpush1.msra.mxu0 %v3925
          %3961 = vmatprep.subr.mxu0 0.0
          %3962 = vmatpush1.msra.mxu0 %v3927
          %3963 = vmatprep.subr.mxu0 0.0
          %3964 = vmatpush1.msra.mxu0 %v3929
          %3965 = vmatprep.subr.mxu0 0.0
          %3966 = vmatpush1.msra.mxu0 %v3931
          %3967 = vmatprep.subr.mxu0 0.0
          %3968 = vmatpush1.msra.mxu0 %v3933
          %3969 = vmatprep.subr.mxu0 0.0
          %3970 = vmatpush1.msra.mxu0 %v3935
          %3971 = vmatprep.subr.mxu0 0.0
          %3972 = vmatpush1.msra.mxu0 %v3937
          %3973 = vmatprep.subr.mxu0 0.0
          %3974 = vmatpush1.msra.mxu0 0.0
          %3975 = vmatprep.subr.mxu0 0.0
          %3976 = vmatpush1.msra.mxu0 0.0
          %3977 = vmatprep.subr.mxu0 0.0
          %3978 = vmatpush1.msra.mxu0 0.0
          %3979 = vmatprep.subr.mxu0 0.0
          %3980 = vmatpush1.msra.mxu0 0.0
          %3981 = vmatprep.subr.mxu0 0.0
          %3982 = vmatpush1.msra.mxu0 0.0
          %3983 = vmatprep.subr.mxu0 0.0
          %3984 = vmatpush1.msra.mxu0 0.0
          %3985 = vmatprep.subr.mxu0 0.0
          %3986 = vmatpush1.msra.mxu0 0.0
          %3987 = vmatprep.subr.mxu0 0.0
          %3988 = vmatpush1.msra.mxu0 0.0
          %3989 = vmatprep.subr.mxu0 0.0
          %3990 = vmatpush1.msra.mxu0 0.0
          %3991 = vmatprep.subr.mxu0 0.0
          %3992 = vmatpush1.msra.mxu0 0.0
          %3993 = vmatprep.subr.mxu0 0.0
          %3994 = vmatpush1.msra.mxu0 0.0
          %3995 = vmatprep.subr.mxu0 0.0
          %3996 = vmatpush1.msra.mxu0 0.0
          %3997 = vmatprep.subr.mxu0 0.0
          %3998 = vmatpush1.msra.mxu0 0.0
          %3999 = vmatprep.subr.mxu0 0.0
          %4000 = vmatpush1.msra.mxu0 0.0
          %4001 = vmatprep.subr.mxu0 0.0
          %4002 = vmatpush1.msra.mxu0 0.0
          %4003 = vmatprep.subr.mxu0 0.0
          %4004 = vmatpush1.msra.mxu0 0.0
          %4005 = vmatprep.mubr.f32.mxu0 0.0
          %4006 = vmatmul.mubr.f32.gmra.mrb[0].mxu0 %v3940
          %v4007 = vpop.f32.mrb[0].mxu0
          %v4008 = vadd.f32 0.0, %v4007
          %v4009 = vpop.f32.mrb[0].mxu0
          %4010 = vdwg.mxu0
          %v4011 = vrcp.pop %v4008
          %v4013 = vrot.slane %v4011, 1
          %v4015 = vmul.f32 %v4008, %v4013
          %4016 = vset.pattern.permute.xlu0 5
          %4017 = vperm.xlu0 %4016, %v2914
          %v4018 = vpop.permute.xlu0 %4017
          %4020 = vset.pattern.permute.xlu0 5
          %4021 = vperm.xlu0 %4020, %v2915
          %v4022 = vpop.permute.xlu0 %4021
          %4024 = vset.pattern.permute.xlu0 5
          %4025 = vperm.xlu0 %4024, %v2916
          %v4026 = vpop.permute.xlu0 %4025
          %4028 = vset.pattern.permute.xlu0 5
          %4029 = vperm.xlu0 %4028, %v2917
          %v4030 = vpop.permute.xlu0 %4029
          %4032 = vset.pattern.permute.xlu0 5
          %4033 = vperm.xlu0 %4032, %v2918
          %v4034 = vpop.permute.xlu0 %4033
          %4036 = vset.pattern.permute.xlu0 5
          %4037 = vperm.xlu0 %4036, %v2919
          %v4038 = vpop.permute.xlu0 %4037
          %4040 = vset.pattern.permute.xlu0 5
          %4041 = vperm.xlu0 %4040, %v2920
          %v4042 = vpop.permute.xlu0 %4041
          %4044 = vset.pattern.permute.xlu0 5
          %4045 = vperm.xlu0 %4044, %v2921
          %v4046 = vpop.permute.xlu0 %4045
          %4048 = vset.pattern.permute.xlu0 5
          %4049 = vperm.xlu0 %4048, %v2922
          %v4050 = vpop.permute.xlu0 %4049
          %4052 = vset.pattern.permute.xlu0 5
          %4053 = vperm.xlu0 %4052, %v2923
          %v4054 = vpop.permute.xlu0 %4053
          %4056 = vset.pattern.permute.xlu0 5
          %4057 = vperm.xlu0 %4056, %v2924
          %v4058 = vpop.permute.xlu0 %4057
          %4060 = vset.pattern.permute.xlu0 5
          %4061 = vperm.xlu0 %4060, %v2925
          %v4062 = vpop.permute.xlu0 %4061
          %4064 = vset.pattern.permute.xlu0 5
          %4065 = vperm.xlu0 %4064, %v2926
          %v4066 = vpop.permute.xlu0 %4065
          %4068 = vset.pattern.permute.xlu0 5
          %4069 = vperm.xlu0 %4068, %v2927
          %v4070 = vpop.permute.xlu0 %4069
          %4072 = vset.pattern.permute.xlu0 5
          %4073 = vperm.xlu0 %4072, %v2928
          %v4074 = vpop.permute.xlu0 %4073
          %4076 = vset.pattern.permute.xlu0 5
          %4077 = vperm.xlu0 %4076, %v2929
          %v4078 = vpop.permute.xlu0 %4077
          %v4080 = vlaneseq
          %v4081 = vshrl.u32 %v4080, 7
          %v4082 = vsub.s32 5, %v4081
          %v4083 = vrot.slane %v2891, %v4082
          %v4084 = vmul.f32 %v4018, %v4083
          %v4085 = vmul.f32 %v4022, %v4083
          %v4086 = vmul.f32 %v4026, %v4083
          %v4087 = vmul.f32 %v4030, %v4083
          %v4088 = vmul.f32 %v4034, %v4083
          %v4089 = vmul.f32 %v4038, %v4083
          %v4090 = vmul.f32 %v4042, %v4083
          %v4091 = vmul.f32 %v4046, %v4083
          %v4092 = vmul.f32 %v4050, %v4083
          %v4093 = vmul.f32 %v4054, %v4083
          %v4094 = vmul.f32 %v4058, %v4083
          %v4095 = vmul.f32 %v4062, %v4083
          %v4096 = vmul.f32 %v4066, %v4083
          %v4097 = vmul.f32 %v4070, %v4083
          %v4098 = vmul.f32 %v4074, %v4083
          %v4099 = vmul.f32 %v4078, %v4083
          %v4100 = vlaneseq
          %v4101 = vshrl.u32 %v4100, 7
          %v4102 = vsub.s32 5, %v4101
          %v4103 = vrot.slane %v2893, %v4102
          %v4104 = vsub.f32 %v4084, %v4103
          %v4105 = vsub.f32 %v4085, %v4103
          %v4106 = vsub.f32 %v4086, %v4103
          %v4107 = vsub.f32 %v4087, %v4103
          %v4108 = vsub.f32 %v4088, %v4103
          %v4109 = vsub.f32 %v4089, %v4103
          %v4110 = vsub.f32 %v4090, %v4103
          %v4111 = vsub.f32 %v4091, %v4103
          %v4112 = vsub.f32 %v4092, %v4103
          %v4113 = vsub.f32 %v4093, %v4103
          %v4114 = vsub.f32 %v4094, %v4103
          %v4115 = vsub.f32 %v4095, %v4103
          %v4116 = vsub.f32 %v4096, %v4103
          %v4117 = vsub.f32 %v4097, %v4103
          %v4118 = vsub.f32 %v4098, %v4103
          %v4119 = vsub.f32 %v4099, %v4103
          %v4120 = vmul.f32 %v4104, 1.442695
          %v4121 = vpow.pop %v4120
          %v4122 = vmul.f32 %v4105, 1.442695
          %v4123 = vpow.pop %v4122
          %v4124 = vmul.f32 %v4106, 1.442695
          %v4125 = vpow.pop %v4124
          %v4126 = vmul.f32 %v4107, 1.442695
          %v4127 = vpow.pop %v4126
          %v4128 = vmul.f32 %v4108, 1.442695
          %v4129 = vpow.pop %v4128
          %v4130 = vmul.f32 %v4109, 1.442695
          %v4131 = vpow.pop %v4130
          %v4132 = vmul.f32 %v4110, 1.442695
          %v4133 = vpow.pop %v4132
          %v4134 = vmul.f32 %v4111, 1.442695
          %v4135 = vpow.pop %v4134
          %v4136 = vmul.f32 %v4112, 1.442695
          %v4137 = vpow.pop %v4136
          %v4138 = vmul.f32 %v4113, 1.442695
          %v4139 = vpow.pop %v4138
          %v4140 = vmul.f32 %v4114, 1.442695
          %v4141 = vpow.pop %v4140
          %v4142 = vmul.f32 %v4115, 1.442695
          %v4143 = vpow.pop %v4142
          %v4144 = vmul.f32 %v4116, 1.442695
          %v4145 = vpow.pop %v4144
          %v4146 = vmul.f32 %v4117, 1.442695
          %v4147 = vpow.pop %v4146
          %v4148 = vmul.f32 %v4118, 1.442695
          %v4149 = vpow.pop %v4148
          %v4150 = vmul.f32 %v4119, 1.442695
          %v4151 = vpow.pop %v4150
          %v4152 = vrot.slane %v2895, 5
          %v4154 = vsel %vm3082, %v4152, 1.0
          %4155 = vmatprep.subr.mxu0 0.0
          %4156 = vmatpush1.msra.mxu0 %v4121
          %4157 = vmatprep.subr.mxu0 0.0
          %4158 = vmatpush1.msra.mxu0 %v4123
          %4159 = vmatprep.subr.mxu0 0.0
          %4160 = vmatpush1.msra.mxu0 %v4125
          %4161 = vmatprep.subr.mxu0 0.0
          %4162 = vmatpush1.msra.mxu0 %v4127
          %4163 = vmatprep.subr.mxu0 0.0
          %4164 = vmatpush1.msra.mxu0 %v4129
          %4165 = vmatprep.subr.mxu0 0.0
          %4166 = vmatpush1.msra.mxu0 %v4131
          %4167 = vmatprep.subr.mxu0 0.0
          %4168 = vmatpush1.msra.mxu0 %v4133
          %4169 = vmatprep.subr.mxu0 0.0
          %4170 = vmatpush1.msra.mxu0 %v4135
          %4171 = vmatprep.subr.mxu0 0.0
          %4172 = vmatpush1.msra.mxu0 %v4137
          %4173 = vmatprep.subr.mxu0 0.0
          %4174 = vmatpush1.msra.mxu0 %v4139
          %4175 = vmatprep.subr.mxu0 0.0
          %4176 = vmatpush1.msra.mxu0 %v4141
          %4177 = vmatprep.subr.mxu0 0.0
          %4178 = vmatpush1.msra.mxu0 %v4143
          %4179 = vmatprep.subr.mxu0 0.0
          %4180 = vmatpush1.msra.mxu0 %v4145
          %4181 = vmatprep.subr.mxu0 0.0
          %4182 = vmatpush1.msra.mxu0 %v4147
          %4183 = vmatprep.subr.mxu0 0.0
          %4184 = vmatpush1.msra.mxu0 %v4149
          %4185 = vmatprep.subr.mxu0 0.0
          %4186 = vmatpush1.msra.mxu0 %v4151
          %4187 = vmatprep.subr.mxu0 0.0
          %4188 = vmatpush1.msra.mxu0 0.0
          %4189 = vmatprep.subr.mxu0 0.0
          %4190 = vmatpush1.msra.mxu0 0.0
          %4191 = vmatprep.subr.mxu0 0.0
          %4192 = vmatpush1.msra.mxu0 0.0
          %4193 = vmatprep.subr.mxu0 0.0
          %4194 = vmatpush1.msra.mxu0 0.0
          %4195 = vmatprep.subr.mxu0 0.0
          %4196 = vmatpush1.msra.mxu0 0.0
          %4197 = vmatprep.subr.mxu0 0.0
          %4198 = vmatpush1.msra.mxu0 0.0
          %4199 = vmatprep.subr.mxu0 0.0
          %4200 = vmatpush1.msra.mxu0 0.0
          %4201 = vmatprep.subr.mxu0 0.0
          %4202 = vmatpush1.msra.mxu0 0.0
          %4203 = vmatprep.subr.mxu0 0.0
          %4204 = vmatpush1.msra.mxu0 0.0
          %4205 = vmatprep.subr.mxu0 0.0
          %4206 = vmatpush1.msra.mxu0 0.0
          %4207 = vmatprep.subr.mxu0 0.0
          %4208 = vmatpush1.msra.mxu0 0.0
          %4209 = vmatprep.subr.mxu0 0.0
          %4210 = vmatpush1.msra.mxu0 0.0
          %4211 = vmatprep.subr.mxu0 0.0
          %4212 = vmatpush1.msra.mxu0 0.0
          %4213 = vmatprep.subr.mxu0 0.0
          %4214 = vmatpush1.msra.mxu0 0.0
          %4215 = vmatprep.subr.mxu0 0.0
          %4216 = vmatpush1.msra.mxu0 0.0
          %4217 = vmatprep.subr.mxu0 0.0
          %4218 = vmatpush1.msra.mxu0 0.0
          %4219 = vmatprep.mubr.f32.mxu0 0.0
          %4220 = vmatmul.mubr.f32.gmra.mrb[0].mxu0 %v4154
          %v4221 = vpop.f32.mrb[0].mxu0
          %v4222 = vadd.f32 0.0, %v4221
          %v4223 = vpop.f32.mrb[0].mxu0
          %4224 = vdwg.mxu0
          %v4225 = vrcp.pop %v4222
          %v4227 = vrot.slane %v4225, 1
          %v4229 = vmul.f32 %v4222, %v4227
          %4230 = vset.pattern.permute.xlu0 6
          %4231 = vperm.xlu0 %4230, %v2914
          %v4232 = vpop.permute.xlu0 %4231
          %4234 = vset.pattern.permute.xlu0 6
          %4235 = vperm.xlu0 %4234, %v2915
          %v4236 = vpop.permute.xlu0 %4235
          %4238 = vset.pattern.permute.xlu0 6
          %4239 = vperm.xlu0 %4238, %v2916
          %v4240 = vpop.permute.xlu0 %4239
          %4242 = vset.pattern.permute.xlu0 6
          %4243 = vperm.xlu0 %4242, %v2917
          %v4244 = vpop.permute.xlu0 %4243
          %4246 = vset.pattern.permute.xlu0 6
          %4247 = vperm.xlu0 %4246, %v2918
          %v4248 = vpop.permute.xlu0 %4247
          %4250 = vset.pattern.permute.xlu0 6
          %4251 = vperm.xlu0 %4250, %v2919
          %v4252 = vpop.permute.xlu0 %4251
          %4254 = vset.pattern.permute.xlu0 6
          %4255 = vperm.xlu0 %4254, %v2920
          %v4256 = vpop.permute.xlu0 %4255
          %4258 = vset.pattern.permute.xlu0 6
          %4259 = vperm.xlu0 %4258, %v2921
          %v4260 = vpop.permute.xlu0 %4259
          %4262 = vset.pattern.permute.xlu0 6
          %4263 = vperm.xlu0 %4262, %v2922
          %v4264 = vpop.permute.xlu0 %4263
          %4266 = vset.pattern.permute.xlu0 6
          %4267 = vperm.xlu0 %4266, %v2923
          %v4268 = vpop.permute.xlu0 %4267
          %4270 = vset.pattern.permute.xlu0 6
          %4271 = vperm.xlu0 %4270, %v2924
          %v4272 = vpop.permute.xlu0 %4271
          %4274 = vset.pattern.permute.xlu0 6
          %4275 = vperm.xlu0 %4274, %v2925
          %v4276 = vpop.permute.xlu0 %4275
          %4278 = vset.pattern.permute.xlu0 6
          %4279 = vperm.xlu0 %4278, %v2926
          %v4280 = vpop.permute.xlu0 %4279
          %4282 = vset.pattern.permute.xlu0 6
          %4283 = vperm.xlu0 %4282, %v2927
          %v4284 = vpop.permute.xlu0 %4283
          %4286 = vset.pattern.permute.xlu0 6
          %4287 = vperm.xlu0 %4286, %v2928
          %v4288 = vpop.permute.xlu0 %4287
          %4290 = vset.pattern.permute.xlu0 6
          %4291 = vperm.xlu0 %4290, %v2929
          %v4292 = vpop.permute.xlu0 %4291
          %v4294 = vlaneseq
          %v4295 = vshrl.u32 %v4294, 7
          %v4296 = vsub.s32 6, %v4295
          %v4297 = vrot.slane %v2891, %v4296
          %v4298 = vmul.f32 %v4232, %v4297
          %v4299 = vmul.f32 %v4236, %v4297
          %v4300 = vmul.f32 %v4240, %v4297
          %v4301 = vmul.f32 %v4244, %v4297
          %v4302 = vmul.f32 %v4248, %v4297
          %v4303 = vmul.f32 %v4252, %v4297
          %v4304 = vmul.f32 %v4256, %v4297
          %v4305 = vmul.f32 %v4260, %v4297
          %v4306 = vmul.f32 %v4264, %v4297
          %v4307 = vmul.f32 %v4268, %v4297
          %v4308 = vmul.f32 %v4272, %v4297
          %v4309 = vmul.f32 %v4276, %v4297
          %v4310 = vmul.f32 %v4280, %v4297
          %v4311 = vmul.f32 %v4284, %v4297
          %v4312 = vmul.f32 %v4288, %v4297
          %v4313 = vmul.f32 %v4292, %v4297
          %v4314 = vlaneseq
          %v4315 = vshrl.u32 %v4314, 7
          %v4316 = vsub.s32 6, %v4315
          %v4317 = vrot.slane %v2893, %v4316
          %v4318 = vsub.f32 %v4298, %v4317
          %v4319 = vsub.f32 %v4299, %v4317
          %v4320 = vsub.f32 %v4300, %v4317
          %v4321 = vsub.f32 %v4301, %v4317
          %v4322 = vsub.f32 %v4302, %v4317
          %v4323 = vsub.f32 %v4303, %v4317
          %v4324 = vsub.f32 %v4304, %v4317
          %v4325 = vsub.f32 %v4305, %v4317
          %v4326 = vsub.f32 %v4306, %v4317
          %v4327 = vsub.f32 %v4307, %v4317
          %v4328 = vsub.f32 %v4308, %v4317
          %v4329 = vsub.f32 %v4309, %v4317
          %v4330 = vsub.f32 %v4310, %v4317
          %v4331 = vsub.f32 %v4311, %v4317
          %v4332 = vsub.f32 %v4312, %v4317
          %v4333 = vsub.f32 %v4313, %v4317
          %v4334 = vmul.f32 %v4318, 1.442695
          %v4335 = vpow.pop %v4334
          %v4336 = vmul.f32 %v4319, 1.442695
          %v4337 = vpow.pop %v4336
          %v4338 = vmul.f32 %v4320, 1.442695
          %v4339 = vpow.pop %v4338
          %v4340 = vmul.f32 %v4321, 1.442695
          %v4341 = vpow.pop %v4340
          %v4342 = vmul.f32 %v4322, 1.442695
          %v4343 = vpow.pop %v4342
          %v4344 = vmul.f32 %v4323, 1.442695
          %v4345 = vpow.pop %v4344
          %v4346 = vmul.f32 %v4324, 1.442695
          %v4347 = vpow.pop %v4346
          %v4348 = vmul.f32 %v4325, 1.442695
          %v4349 = vpow.pop %v4348
          %v4350 = vmul.f32 %v4326, 1.442695
          %v4351 = vpow.pop %v4350
          %v4352 = vmul.f32 %v4327, 1.442695
          %v4353 = vpow.pop %v4352
          %v4354 = vmul.f32 %v4328, 1.442695
          %v4355 = vpow.pop %v4354
          %v4356 = vmul.f32 %v4329, 1.442695
          %v4357 = vpow.pop %v4356
          %v4358 = vmul.f32 %v4330, 1.442695
          %v4359 = vpow.pop %v4358
          %v4360 = vmul.f32 %v4331, 1.442695
          %v4361 = vpow.pop %v4360
          %v4362 = vmul.f32 %v4332, 1.442695
          %v4363 = vpow.pop %v4362
          %v4364 = vmul.f32 %v4333, 1.442695
          %v4365 = vpow.pop %v4364
          %v4366 = vrot.slane %v2895, 6
          %v4368 = vsel %vm3082, %v4366, 1.0
          %4369 = vmatprep.subr.mxu0 0.0
          %4370 = vmatpush1.msra.mxu0 %v4335
          %4371 = vmatprep.subr.mxu0 0.0
          %4372 = vmatpush1.msra.mxu0 %v4337
          %4373 = vmatprep.subr.mxu0 0.0
          %4374 = vmatpush1.msra.mxu0 %v4339
          %4375 = vmatprep.subr.mxu0 0.0
          %4376 = vmatpush1.msra.mxu0 %v4341
          %4377 = vmatprep.subr.mxu0 0.0
          %4378 = vmatpush1.msra.mxu0 %v4343
          %4379 = vmatprep.subr.mxu0 0.0
          %4380 = vmatpush1.msra.mxu0 %v4345
          %4381 = vmatprep.subr.mxu0 0.0
          %4382 = vmatpush1.msra.mxu0 %v4347
          %4383 = vmatprep.subr.mxu0 0.0
          %4384 = vmatpush1.msra.mxu0 %v4349
          %4385 = vmatprep.subr.mxu0 0.0
          %4386 = vmatpush1.msra.mxu0 %v4351
          %4387 = vmatprep.subr.mxu0 0.0
          %4388 = vmatpush1.msra.mxu0 %v4353
          %4389 = vmatprep.subr.mxu0 0.0
          %4390 = vmatpush1.msra.mxu0 %v4355
          %4391 = vmatprep.subr.mxu0 0.0
          %4392 = vmatpush1.msra.mxu0 %v4357
          %4393 = vmatprep.subr.mxu0 0.0
          %4394 = vmatpush1.msra.mxu0 %v4359
          %4395 = vmatprep.subr.mxu0 0.0
          %4396 = vmatpush1.msra.mxu0 %v4361
          %4397 = vmatprep.subr.mxu0 0.0
          %4398 = vmatpush1.msra.mxu0 %v4363
          %4399 = vmatprep.subr.mxu0 0.0
          %4400 = vmatpush1.msra.mxu0 %v4365
          %4401 = vmatprep.subr.mxu0 0.0
          %4402 = vmatpush1.msra.mxu0 0.0
          %4403 = vmatprep.subr.mxu0 0.0
          %4404 = vmatpush1.msra.mxu0 0.0
          %4405 = vmatprep.subr.mxu0 0.0
          %4406 = vmatpush1.msra.mxu0 0.0
          %4407 = vmatprep.subr.mxu0 0.0
          %4408 = vmatpush1.msra.mxu0 0.0
          %4409 = vmatprep.subr.mxu0 0.0
          %4410 = vmatpush1.msra.mxu0 0.0
          %4411 = vmatprep.subr.mxu0 0.0
          %4412 = vmatpush1.msra.mxu0 0.0
          %4413 = vmatprep.subr.mxu0 0.0
          %4414 = vmatpush1.msra.mxu0 0.0
          %4415 = vmatprep.subr.mxu0 0.0
          %4416 = vmatpush1.msra.mxu0 0.0
          %4417 = vmatprep.subr.mxu0 0.0
          %4418 = vmatpush1.msra.mxu0 0.0
          %4419 = vmatprep.subr.mxu0 0.0
          %4420 = vmatpush1.msra.mxu0 0.0
          %4421 = vmatprep.subr.mxu0 0.0
          %4422 = vmatpush1.msra.mxu0 0.0
          %4423 = vmatprep.subr.mxu0 0.0
          %4424 = vmatpush1.msra.mxu0 0.0
          %4425 = vmatprep.subr.mxu0 0.0
          %4426 = vmatpush1.msra.mxu0 0.0
          %4427 = vmatprep.subr.mxu0 0.0
          %4428 = vmatpush1.msra.mxu0 0.0
          %4429 = vmatprep.subr.mxu0 0.0
          %4430 = vmatpush1.msra.mxu0 0.0
          %4431 = vmatprep.subr.mxu0 0.0
          %4432 = vmatpush1.msra.mxu0 0.0
          %4433 = vmatprep.mubr.f32.mxu0 0.0
          %4434 = vmatmul.mubr.f32.gmra.mrb[0].mxu0 %v4368
          %v4435 = vpop.f32.mrb[0].mxu0
          %v4436 = vadd.f32 0.0, %v4435
          %v4437 = vpop.f32.mrb[0].mxu0
          %4438 = vdwg.mxu0
          %v4439 = vrcp.pop %v4436
          %v4441 = vrot.slane %v4439, 1
          %v4443 = vmul.f32 %v4436, %v4441
          %4444 = vset.pattern.permute.xlu0 7
          %4445 = vperm.xlu0 %4444, %v2914
          %v4446 = vpop.permute.xlu0 %4445
          %4448 = vset.pattern.permute.xlu0 7
          %4449 = vperm.xlu0 %4448, %v2915
          %v4450 = vpop.permute.xlu0 %4449
          %4452 = vset.pattern.permute.xlu0 7
          %4453 = vperm.xlu0 %4452, %v2916
          %v4454 = vpop.permute.xlu0 %4453
          %4456 = vset.pattern.permute.xlu0 7
          %4457 = vperm.xlu0 %4456, %v2917
          %v4458 = vpop.permute.xlu0 %4457
          %4460 = vset.pattern.permute.xlu0 7
          %4461 = vperm.xlu0 %4460, %v2918
          %v4462 = vpop.permute.xlu0 %4461
          %4464 = vset.pattern.permute.xlu0 7
          %4465 = vperm.xlu0 %4464, %v2919
          %v4466 = vpop.permute.xlu0 %4465
          %4468 = vset.pattern.permute.xlu0 7
          %4469 = vperm.xlu0 %4468, %v2920
          %v4470 = vpop.permute.xlu0 %4469
          %4472 = vset.pattern.permute.xlu0 7
          %4473 = vperm.xlu0 %4472, %v2921
          %v4474 = vpop.permute.xlu0 %4473
          %4476 = vset.pattern.permute.xlu0 7
          %4477 = vperm.xlu0 %4476, %v2922
          %v4478 = vpop.permute.xlu0 %4477
          %4480 = vset.pattern.permute.xlu0 7
          %4481 = vperm.xlu0 %4480, %v2923
          %v4482 = vpop.permute.xlu0 %4481
          %4484 = vset.pattern.permute.xlu0 7
          %4485 = vperm.xlu0 %4484, %v2924
          %v4486 = vpop.permute.xlu0 %4485
          %4488 = vset.pattern.permute.xlu0 7
          %4489 = vperm.xlu0 %4488, %v2925
          %v4490 = vpop.permute.xlu0 %4489
          %4492 = vset.pattern.permute.xlu0 7
          %4493 = vperm.xlu0 %4492, %v2926
          %v4494 = vpop.permute.xlu0 %4493
          %4496 = vset.pattern.permute.xlu0 7
          %4497 = vperm.xlu0 %4496, %v2927
          %v4498 = vpop.permute.xlu0 %4497
          %4500 = vset.pattern.permute.xlu0 7
          %4501 = vperm.xlu0 %4500, %v2928
          %v4502 = vpop.permute.xlu0 %4501
          %4504 = vset.pattern.permute.xlu0 7
          %4505 = vperm.xlu0 %4504, %v2929
          %v4506 = vpop.permute.xlu0 %4505
          %v4508 = vlaneseq
          %v4509 = vshrl.u32 %v4508, 7
          %v4510 = vsub.s32 7, %v4509
          %v4511 = vrot.slane %v2891, %v4510
          %v4512 = vmul.f32 %v4446, %v4511
          %v4513 = vmul.f32 %v4450, %v4511
          %v4514 = vmul.f32 %v4454, %v4511
          %v4515 = vmul.f32 %v4458, %v4511
          %v4516 = vmul.f32 %v4462, %v4511
          %v4517 = vmul.f32 %v4466, %v4511
          %v4518 = vmul.f32 %v4470, %v4511
          %v4519 = vmul.f32 %v4474, %v4511
          %v4520 = vmul.f32 %v4478, %v4511
          %v4521 = vmul.f32 %v4482, %v4511
          %v4522 = vmul.f32 %v4486, %v4511
          %v4523 = vmul.f32 %v4490, %v4511
          %v4524 = vmul.f32 %v4494, %v4511
          %v4525 = vmul.f32 %v4498, %v4511
          %v4526 = vmul.f32 %v4502, %v4511
          %v4527 = vmul.f32 %v4506, %v4511
          %v4528 = vlaneseq
          %v4529 = vshrl.u32 %v4528, 7
          %v4530 = vsub.s32 7, %v4529
          %v4531 = vrot.slane %v2893, %v4530
          %v4532 = vsub.f32 %v4512, %v4531
          %v4533 = vsub.f32 %v4513, %v4531
          %v4534 = vsub.f32 %v4514, %v4531
          %v4535 = vsub.f32 %v4515, %v4531
          %v4536 = vsub.f32 %v4516, %v4531
          %v4537 = vsub.f32 %v4517, %v4531
          %v4538 = vsub.f32 %v4518, %v4531
          %v4539 = vsub.f32 %v4519, %v4531
          %v4540 = vsub.f32 %v4520, %v4531
          %v4541 = vsub.f32 %v4521, %v4531
          %v4542 = vsub.f32 %v4522, %v4531
          %v4543 = vsub.f32 %v4523, %v4531
          %v4544 = vsub.f32 %v4524, %v4531
          %v4545 = vsub.f32 %v4525, %v4531
          %v4546 = vsub.f32 %v4526, %v4531
          %v4547 = vsub.f32 %v4527, %v4531
          %v4548 = vmul.f32 %v4532, 1.442695
          %v4549 = vpow.pop %v4548
          %v4550 = vmul.f32 %v4533, 1.442695
          %v4551 = vpow.pop %v4550
          %v4552 = vmul.f32 %v4534, 1.442695
          %v4553 = vpow.pop %v4552
          %v4554 = vmul.f32 %v4535, 1.442695
          %v4555 = vpow.pop %v4554
          %v4556 = vmul.f32 %v4536, 1.442695
          %v4557 = vpow.pop %v4556
          %v4558 = vmul.f32 %v4537, 1.442695
          %v4559 = vpow.pop %v4558
          %v4560 = vmul.f32 %v4538, 1.442695
          %v4561 = vpow.pop %v4560
          %v4562 = vmul.f32 %v4539, 1.442695
          %v4563 = vpow.pop %v4562
          %v4564 = vmul.f32 %v4540, 1.442695
          %v4565 = vpow.pop %v4564
          %v4566 = vmul.f32 %v4541, 1.442695
          %v4567 = vpow.pop %v4566
          %v4568 = vmul.f32 %v4542, 1.442695
          %v4569 = vpow.pop %v4568
          %v4570 = vmul.f32 %v4543, 1.442695
          %v4571 = vpow.pop %v4570
          %v4572 = vmul.f32 %v4544, 1.442695
          %v4573 = vpow.pop %v4572
          %v4574 = vmul.f32 %v4545, 1.442695
          %v4575 = vpow.pop %v4574
          %v4576 = vmul.f32 %v4546, 1.442695
          %v4577 = vpow.pop %v4576
          %v4578 = vmul.f32 %v4547, 1.442695
          %v4579 = vpow.pop %v4578
          %v4580 = vrot.slane %v2895, 7
          %v4582 = vsel %vm3082, %v4580, 1.0
          %4583 = vmatprep.subr.mxu0 0.0
          %4584 = vmatpush1.msra.mxu0 %v4549
          %4585 = vmatprep.subr.mxu0 0.0
          %4586 = vmatpush1.msra.mxu0 %v4551
          %4587 = vmatprep.subr.mxu0 0.0
          %4588 = vmatpush1.msra.mxu0 %v4553
          %4589 = vmatprep.subr.mxu0 0.0
          %4590 = vmatpush1.msra.mxu0 %v4555
          %4591 = vmatprep.subr.mxu0 0.0
          %4592 = vmatpush1.msra.mxu0 %v4557
          %4593 = vmatprep.subr.mxu0 0.0
          %4594 = vmatpush1.msra.mxu0 %v4559
          %4595 = vmatprep.subr.mxu0 0.0
          %4596 = vmatpush1.msra.mxu0 %v4561
          %4597 = vmatprep.subr.mxu0 0.0
          %4598 = vmatpush1.msra.mxu0 %v4563
          %4599 = vmatprep.subr.mxu0 0.0
          %4600 = vmatpush1.msra.mxu0 %v4565
          %4601 = vmatprep.subr.mxu0 0.0
          %4602 = vmatpush1.msra.mxu0 %v4567
          %4603 = vmatprep.subr.mxu0 0.0
          %4604 = vmatpush1.msra.mxu0 %v4569
          %4605 = vmatprep.subr.mxu0 0.0
          %4606 = vmatpush1.msra.mxu0 %v4571
          %4607 = vmatprep.subr.mxu0 0.0
          %4608 = vmatpush1.msra.mxu0 %v4573
          %4609 = vmatprep.subr.mxu0 0.0
          %4610 = vmatpush1.msra.mxu0 %v4575
          %4611 = vmatprep.subr.mxu0 0.0
          %4612 = vmatpush1.msra.mxu0 %v4577
          %4613 = vmatprep.subr.mxu0 0.0
          %4614 = vmatpush1.msra.mxu0 %v4579
          %4615 = vmatprep.subr.mxu0 0.0
          %4616 = vmatpush1.msra.mxu0 0.0
          %4617 = vmatprep.subr.mxu0 0.0
          %4618 = vmatpush1.msra.mxu0 0.0
          %4619 = vmatprep.subr.mxu0 0.0
          %4620 = vmatpush1.msra.mxu0 0.0
          %4621 = vmatprep.subr.mxu0 0.0
          %4622 = vmatpush1.msra.mxu0 0.0
          %4623 = vmatprep.subr.mxu0 0.0
          %4624 = vmatpush1.msra.mxu0 0.0
          %4625 = vmatprep.subr.mxu0 0.0
          %4626 = vmatpush1.msra.mxu0 0.0
          %4627 = vmatprep.subr.mxu0 0.0
          %4628 = vmatpush1.msra.mxu0 0.0
          %4629 = vmatprep.subr.mxu0 0.0
          %4630 = vmatpush1.msra.mxu0 0.0
          %4631 = vmatprep.subr.mxu0 0.0
          %4632 = vmatpush1.msra.mxu0 0.0
          %4633 = vmatprep.subr.mxu0 0.0
          %4634 = vmatpush1.msra.mxu0 0.0
          %4635 = vmatprep.subr.mxu0 0.0
          %4636 = vmatpush1.msra.mxu0 0.0
          %4637 = vmatprep.subr.mxu0 0.0
          %4638 = vmatpush1.msra.mxu0 0.0
          %4639 = vmatprep.subr.mxu0 0.0
          %4640 = vmatpush1.msra.mxu0 0.0
          %4641 = vmatprep.subr.mxu0 0.0
          %4642 = vmatpush1.msra.mxu0 0.0
          %4643 = vmatprep.subr.mxu0 0.0
          %4644 = vmatpush1.msra.mxu0 0.0
          %4645 = vmatprep.subr.mxu0 0.0
          %4646 = vmatpush1.msra.mxu0 0.0
          %4647 = vmatprep.mubr.f32.mxu0 0.0
          %4648 = vmatmul.mubr.f32.gmra.mrb[0].mxu0 %v4582
          %v4649 = vpop.f32.mrb[0].mxu0
          %v4650 = vadd.f32 0.0, %v4649
          %v4651 = vpop.f32.mrb[0].mxu0
          %4652 = vdwg.mxu0
          %v4653 = vrcp.pop %v4650
          %v4655 = vrot.slane %v4653, 1
          %v4657 = vmul.f32 %v4650, %v4655
          %v4659 = vrot.slane %v3373, 7
          %v4662 = vrot.slane %v3587, 6
          %v4665 = vrot.slane %v3801, 5
          %v4668 = vrot.slane %v4015, 4
          %v4671 = vrot.slane %v4229, 3
          %v4674 = vrot.slane %v4443, 2
          %v4677 = vrot.slane %v4657, 1
          %v4679 = vsel %vm3082, %v3158, %v4659
          %vm4680 = vcmask 1041408
          %v4681 = vsel %vm4680, %v4679, %v4662
          %vm4682 = vcmask 1042432
          %v4683 = vsel %vm4682, %v4681, %v4665
          %vm4684 = vcmask 1043456
          %v4685 = vsel %vm4684, %v4683, %v4668
          %vm4686 = vcmask 1044480
          %v4687 = vsel %vm4686, %v4685, %v4671
          %vm4688 = vcmask 1045504
          %v4689 = vsel %vm4688, %v4687, %v4674
          %vm4690 = vcmask 1046528
          %v4691 = vsel %vm4690, %v4689, %v4677
          %s4692 = scalar_lea.vmem [#allocation6], %s2889
          %4693 = vst [vmem:[%s4692] sm:$0xff] %v4691
        $region92: #{tpu_custom_call.1} parent=55 // loop_footer
          %s2888 = sadd.s32 1, %s2884
        $region93: #{tpu_custom_call.1} parent=55 // loop_footer_branch
          %2883 = sbr.rel target = $region89
        $region94: #{tpu_custom_call.1} parent=55 // loop_exit
          _
        %v4694 = vld [vmem:[#allocation6] sm:$0xff]
        %v4695 = vld [vmem:[#allocation6 + $0x8] sm:$0xff]
        %v4696 = vld [vmem:[#allocation16] sm:$0xff]
        %v4697 = vld [vmem:[#allocation16 + $0x8] sm:$0xff]
        %v4698 = vld [vmem:[#allocation16 + $0x10] sm:$0xff]
        %v4699 = vld [vmem:[#allocation16 + $0x18] sm:$0xff]
        %v4700 = vld [vmem:[#allocation16 + $0x20] sm:$0xff]
        %v4701 = vld [vmem:[#allocation16 + $0x28] sm:$0xff]
        %v4702 = vld [vmem:[#allocation16 + $0x30] sm:$0xff]
        %v4703 = vld [vmem:[#allocation16 + $0x38] sm:$0xff]
        %v4704 = vld [vmem:[#allocation16 + $0x40] sm:$0xff]
        %v4705 = vld [vmem:[#allocation16 + $0x48] sm:$0xff]
        %v4706 = vld [vmem:[#allocation16 + $0x50] sm:$0xff]
        %v4707 = vld [vmem:[#allocation16 + $0x58] sm:$0xff]
        %v4708 = vld [vmem:[#allocation16 + $0x60] sm:$0xff]
        %v4709 = vld [vmem:[#allocation16 + $0x68] sm:$0xff]
        %v4710 = vld [vmem:[#allocation16 + $0x70] sm:$0xff]
        %v4711 = vld [vmem:[#allocation16 + $0x78] sm:$0xff]
        %v4712 = vld [vmem:[%s8] sm:$0x1]
        %v4714 = vlaneseq
        %v4715 = vshrl.u32 %v4714, 7
        %v4716 = vsub.s32 0, %v4715
        %v4717 = vrot.slane %v4712, %v4716
        %4719 = vmatprep.subr.mxu0 0.0
        %4720 = vmatpush1.xpose.msra.mxu0 %v4696
        %4721 = vmatprep.subr.mxu0 0.0
        %4722 = vmatpush1.xpose.msra.mxu0 %v4697
        %4723 = vmatprep.subr.mxu0 0.0
        %4724 = vmatpush1.xpose.msra.mxu0 %v4698
        %4725 = vmatprep.subr.mxu0 0.0
        %4726 = vmatpush1.xpose.msra.mxu0 %v4699
        %4727 = vmatprep.subr.mxu0 0.0
        %4728 = vmatpush1.xpose.msra.mxu0 %v4700
        %4729 = vmatprep.subr.mxu0 0.0
        %4730 = vmatpush1.xpose.msra.mxu0 %v4701
        %4731 = vmatprep.subr.mxu0 0.0
        %4732 = vmatpush1.xpose.msra.mxu0 %v4702
        %4733 = vmatprep.subr.mxu0 0.0
        %4734 = vmatpush1.xpose.msra.mxu0 %v4703
        %4735 = vmatprep.subr.mxu0 0.0
        %4736 = vmatpush1.xpose.msra.mxu0 %v4704
        %4737 = vmatprep.subr.mxu0 0.0
        %4738 = vmatpush1.xpose.msra.mxu0 %v4705
        %4739 = vmatprep.subr.mxu0 0.0
        %4740 = vmatpush1.xpose.msra.mxu0 %v4706
        %4741 = vmatprep.subr.mxu0 0.0
        %4742 = vmatpush1.xpose.msra.mxu0 %v4707
        %4743 = vmatprep.subr.mxu0 0.0
        %4744 = vmatpush1.xpose.msra.mxu0 %v4708
        %4745 = vmatprep.subr.mxu0 0.0
        %4746 = vmatpush1.xpose.msra.mxu0 %v4709
        %4747 = vmatprep.subr.mxu0 0.0
        %4748 = vmatpush1.xpose.msra.mxu0 %v4710
        %4749 = vmatprep.subr.mxu0 0.0
        %4750 = vmatpush1.xpose.msra.mxu0 %v4711
        %4751 = vmatprep.subr.mxu0 0.0
        %4752 = vmatpush1.xpose.msra.mxu0 0.0
        %4753 = vmatprep.subr.mxu0 0.0
        %4754 = vmatpush1.xpose.msra.mxu0 0.0
        %4755 = vmatprep.subr.mxu0 0.0
        %4756 = vmatpush1.xpose.msra.mxu0 0.0
        %4757 = vmatprep.subr.mxu0 0.0
        %4758 = vmatpush1.xpose.msra.mxu0 0.0
        %4759 = vmatprep.subr.mxu0 0.0
        %4760 = vmatpush1.xpose.msra.mxu0 0.0
        %4761 = vmatprep.subr.mxu0 0.0
        %4762 = vmatpush1.xpose.msra.mxu0 0.0
        %4763 = vmatprep.subr.mxu0 0.0
        %4764 = vmatpush1.xpose.msra.mxu0 0.0
        %4765 = vmatprep.subr.mxu0 0.0
        %4766 = vmatpush1.xpose.msra.mxu0 0.0
        %4767 = vmatprep.subr.mxu0 0.0
        %4768 = vmatpush1.xpose.msra.mxu0 0.0
        %4769 = vmatprep.subr.mxu0 0.0
        %4770 = vmatpush1.xpose.msra.mxu0 0.0
        %4771 = vmatprep.subr.mxu0 0.0
        %4772 = vmatpush1.xpose.msra.mxu0 0.0
        %4773 = vmatprep.subr.mxu0 0.0
        %4774 = vmatpush1.xpose.msra.mxu0 0.0
        %4775 = vmatprep.subr.mxu0 0.0
        %4776 = vmatpush1.xpose.msra.mxu0 0.0
        %4777 = vmatprep.subr.mxu0 0.0
        %4778 = vmatpush1.xpose.msra.mxu0 0.0
        %4779 = vmatprep.subr.mxu0 0.0
        %4780 = vmatpush1.xpose.msra.mxu0 0.0
        %4781 = vmatprep.subr.mxu0 0.0
        %4782 = vmatpush1.xpose.msra.mxu0 0.0
        %4783 = vmatprep.mubr.f32.mxu0 0.0
        %4784 = vmatmul.mubr.f32.gmra.mrb[0].mxu0 %v4694
        %v4785 = vpop.f32.mrb[0].mxu0
        %v4786 = vadd.f32 %v4717, %v4785
        %v4787 = vpop.f32.mrb[0].mxu0
        %4788 = vmatprep.mubr.f32.mxu0 0.0
        %4789 = vmatmul.mubr.f32.gmra.mrb[0].mxu0 %v4695
        %v4790 = vpop.f32.mrb[0].mxu0
        %v4791 = vadd.f32 %v4717, %v4790
        %v4792 = vpop.f32.mrb[0].mxu0
        %4793 = vdwg.mxu0
        %v4794 = vld [vmem:[%s415] sm:$0xff]
        %v4795 = vld [vmem:[%s415 + $0x8] sm:$0xff]
        %v4796 = vld [vmem:[#allocation13] sm:$0xff]
        %v4797 = vld [vmem:[#allocation13 + $0x8] sm:$0xff]
        %v4798 = vld [vmem:[#allocation13 + $0x10] sm:$0xff]
        %v4799 = vld [vmem:[#allocation13 + $0x18] sm:$0xff]
        %v4800 = vld [vmem:[#allocation13 + $0x20] sm:$0xff]
        %v4801 = vld [vmem:[#allocation13 + $0x28] sm:$0xff]
        %v4802 = vld [vmem:[#allocation13 + $0x30] sm:$0xff]
        %v4803 = vld [vmem:[#allocation13 + $0x38] sm:$0xff]
        %v4804 = vld [vmem:[#allocation13 + $0x40] sm:$0xff]
        %v4805 = vld [vmem:[#allocation13 + $0x48] sm:$0xff]
        %v4806 = vld [vmem:[#allocation13 + $0x50] sm:$0xff]
        %v4807 = vld [vmem:[#allocation13 + $0x58] sm:$0xff]
        %v4808 = vld [vmem:[#allocation13 + $0x60] sm:$0xff]
        %v4809 = vld [vmem:[#allocation13 + $0x68] sm:$0xff]
        %v4810 = vld [vmem:[#allocation13 + $0x70] sm:$0xff]
        %v4811 = vld [vmem:[#allocation13 + $0x78] sm:$0xff]
        %v4812 = vld [vmem:[%s4] sm:$0x1]
        %v4814 = vlaneseq
        %v4815 = vshrl.u32 %v4814, 7
        %v4816 = vsub.s32 0, %v4815
        %v4817 = vrot.slane %v4812, %v4816
        %4819 = vmatprep.subr.mxu0 0.0
        %4820 = vmatpush1.xpose.msra.mxu0 %v4796
        %4821 = vmatprep.subr.mxu0 0.0
        %4822 = vmatpush1.xpose.msra.mxu0 %v4797
        %4823 = vmatprep.subr.mxu0 0.0
        %4824 = vmatpush1.xpose.msra.mxu0 %v4798
        %4825 = vmatprep.subr.mxu0 0.0
        %4826 = vmatpush1.xpose.msra.mxu0 %v4799
        %4827 = vmatprep.subr.mxu0 0.0
        %4828 = vmatpush1.xpose.msra.mxu0 %v4800
        %4829 = vmatprep.subr.mxu0 0.0
        %4830 = vmatpush1.xpose.msra.mxu0 %v4801
        %4831 = vmatprep.subr.mxu0 0.0
        %4832 = vmatpush1.xpose.msra.mxu0 %v4802
        %4833 = vmatprep.subr.mxu0 0.0
        %4834 = vmatpush1.xpose.msra.mxu0 %v4803
        %4835 = vmatprep.subr.mxu0 0.0
        %4836 = vmatpush1.xpose.msra.mxu0 %v4804
        %4837 = vmatprep.subr.mxu0 0.0
        %4838 = vmatpush1.xpose.msra.mxu0 %v4805
        %4839 = vmatprep.subr.mxu0 0.0
        %4840 = vmatpush1.xpose.msra.mxu0 %v4806
        %4841 = vmatprep.subr.mxu0 0.0
        %4842 = vmatpush1.xpose.msra.mxu0 %v4807
        %4843 = vmatprep.subr.mxu0 0.0
        %4844 = vmatpush1.xpose.msra.mxu0 %v4808
        %4845 = vmatprep.subr.mxu0 0.0
        %4846 = vmatpush1.xpose.msra.mxu0 %v4809
        %4847 = vmatprep.subr.mxu0 0.0
        %4848 = vmatpush1.xpose.msra.mxu0 %v4810
        %4849 = vmatprep.subr.mxu0 0.0
        %4850 = vmatpush1.xpose.msra.mxu0 %v4811
        %4851 = vmatprep.subr.mxu0 0.0
        %4852 = vmatpush1.xpose.msra.mxu0 0.0
        %4853 = vmatprep.subr.mxu0 0.0
        %4854 = vmatpush1.xpose.msra.mxu0 0.0
        %4855 = vmatprep.subr.mxu0 0.0
        %4856 = vmatpush1.xpose.msra.mxu0 0.0
        %4857 = vmatprep.subr.mxu0 0.0
        %4858 = vmatpush1.xpose.msra.mxu0 0.0
        %4859 = vmatprep.subr.mxu0 0.0
        %4860 = vmatpush1.xpose.msra.mxu0 0.0
        %4861 = vmatprep.subr.mxu0 0.0
        %4862 = vmatpush1.xpose.msra.mxu0 0.0
        %4863 = vmatprep.subr.mxu0 0.0
        %4864 = vmatpush1.xpose.msra.mxu0 0.0
        %4865 = vmatprep.subr.mxu0 0.0
        %4866 = vmatpush1.xpose.msra.mxu0 0.0
        %4867 = vmatprep.subr.mxu0 0.0
        %4868 = vmatpush1.xpose.msra.mxu0 0.0
        %4869 = vmatprep.subr.mxu0 0.0
        %4870 = vmatpush1.xpose.msra.mxu0 0.0
        %4871 = vmatprep.subr.mxu0 0.0
        %4872 = vmatpush1.xpose.msra.mxu0 0.0
        %4873 = vmatprep.subr.mxu0 0.0
        %4874 = vmatpush1.xpose.msra.mxu0 0.0
        %4875 = vmatprep.subr.mxu0 0.0
        %4876 = vmatpush1.xpose.msra.mxu0 0.0
        %4877 = vmatprep.subr.mxu0 0.0
        %4878 = vmatpush1.xpose.msra.mxu0 0.0
        %4879 = vmatprep.subr.mxu0 0.0
        %4880 = vmatpush1.xpose.msra.mxu0 0.0
        %4881 = vmatprep.subr.mxu0 0.0
        %4882 = vmatpush1.xpose.msra.mxu0 0.0
        %4883 = vmatprep.mubr.f32.mxu0 0.0
        %4884 = vmatmul.mubr.f32.gmra.mrb[0].mxu0 %v4786
        %v4885 = vpop.f32.mrb[0].mxu0
        %v4886 = vadd.f32 %v4817, %v4885
        %v4887 = vpop.f32.mrb[0].mxu0
        %4888 = vmatprep.mubr.f32.mxu0 0.0
        %4889 = vmatmul.mubr.f32.gmra.mrb[0].mxu0 %v4791
        %v4890 = vpop.f32.mrb[0].mxu0
        %v4891 = vadd.f32 %v4817, %v4890
        %v4892 = vpop.f32.mrb[0].mxu0
        %4893 = vdwg.mxu0
        %v4894 = vld [vmem:[#allocation15] sm:$0xff]
        %v4895 = vld [vmem:[#allocation15 + $0x8] sm:$0xff]
        %v4896 = vld [vmem:[#allocation15 + $0x10] sm:$0xff]
        %v4897 = vld [vmem:[#allocation15 + $0x18] sm:$0xff]
        %v4898 = vld [vmem:[#allocation15 + $0x20] sm:$0xff]
        %v4899 = vld [vmem:[#allocation15 + $0x28] sm:$0xff]
        %v4900 = vld [vmem:[#allocation15 + $0x30] sm:$0xff]
        %v4901 = vld [vmem:[#allocation15 + $0x38] sm:$0xff]
        %v4902 = vld [vmem:[#allocation15 + $0x40] sm:$0xff]
        %v4903 = vld [vmem:[#allocation15 + $0x48] sm:$0xff]
        %v4904 = vld [vmem:[#allocation15 + $0x50] sm:$0xff]
        %v4905 = vld [vmem:[#allocation15 + $0x58] sm:$0xff]
        %v4906 = vld [vmem:[#allocation15 + $0x60] sm:$0xff]
        %v4907 = vld [vmem:[#allocation15 + $0x68] sm:$0xff]
        %v4908 = vld [vmem:[#allocation15 + $0x70] sm:$0xff]
        %v4909 = vld [vmem:[#allocation15 + $0x78] sm:$0xff]
        %v4910 = vld [vmem:[#allocation15 + $0x80] sm:$0xff]
        %v4911 = vld [vmem:[#allocation15 + $0x88] sm:$0xff]
        %v4912 = vld [vmem:[#allocation15 + $0x90] sm:$0xff]
        %v4913 = vld [vmem:[#allocation15 + $0x98] sm:$0xff]
        %v4914 = vld [vmem:[#allocation15 + $0xa0] sm:$0xff]
        %v4915 = vld [vmem:[#allocation15 + $0xa8] sm:$0xff]
        %v4916 = vld [vmem:[#allocation15 + $0xb0] sm:$0xff]
        %v4917 = vld [vmem:[#allocation15 + $0xb8] sm:$0xff]
        %v4918 = vld [vmem:[#allocation15 + $0xc0] sm:$0xff]
        %v4919 = vld [vmem:[#allocation15 + $0xc8] sm:$0xff]
        %v4920 = vld [vmem:[#allocation15 + $0xd0] sm:$0xff]
        %v4921 = vld [vmem:[#allocation15 + $0xd8] sm:$0xff]
        %v4922 = vld [vmem:[#allocation15 + $0xe0] sm:$0xff]
        %v4923 = vld [vmem:[#allocation15 + $0xe8] sm:$0xff]
        %v4924 = vld [vmem:[#allocation15 + $0xf0] sm:$0xff]
        %v4925 = vld [vmem:[#allocation15 + $0xf8] sm:$0xff]
        %v4926 = vld [vmem:[%s6] sm:$0x3]
        %v4928 = vlaneseq
        %v4929 = vshrl.u32 %v4928, 7
        %v4930 = vsub.s32 0, %v4929
        %v4931 = vrot.slane %v4926, %v4930
        %v4932 = vlaneseq
        %v4933 = vshrl.u32 %v4932, 7
        %v4934 = vsub.s32 1, %v4933
        %v4935 = vrot.slane %v4926, %v4934
        %4938 = vmatprep.subr.mxu0 0.0
        %4939 = vmatpush1.xpose.msra.mxu0 %v4894
        %4940 = vmatprep.subr.mxu0 0.0
        %4941 = vmatpush1.xpose.msra.mxu0 %v4895
        %4942 = vmatprep.subr.mxu0 0.0
        %4943 = vmatpush1.xpose.msra.mxu0 %v4896
        %4944 = vmatprep.subr.mxu0 0.0
        %4945 = vmatpush1.xpose.msra.mxu0 %v4897
        %4946 = vmatprep.subr.mxu0 0.0
        %4947 = vmatpush1.xpose.msra.mxu0 %v4898
        %4948 = vmatprep.subr.mxu0 0.0
        %4949 = vmatpush1.xpose.msra.mxu0 %v4899
        %4950 = vmatprep.subr.mxu0 0.0
        %4951 = vmatpush1.xpose.msra.mxu0 %v4900
        %4952 = vmatprep.subr.mxu0 0.0
        %4953 = vmatpush1.xpose.msra.mxu0 %v4901
        %4954 = vmatprep.subr.mxu0 0.0
        %4955 = vmatpush1.xpose.msra.mxu0 %v4902
        %4956 = vmatprep.subr.mxu0 0.0
        %4957 = vmatpush1.xpose.msra.mxu0 %v4903
        %4958 = vmatprep.subr.mxu0 0.0
        %4959 = vmatpush1.xpose.msra.mxu0 %v4904
        %4960 = vmatprep.subr.mxu0 0.0
        %4961 = vmatpush1.xpose.msra.mxu0 %v4905
        %4962 = vmatprep.subr.mxu0 0.0
        %4963 = vmatpush1.xpose.msra.mxu0 %v4906
        %4964 = vmatprep.subr.mxu0 0.0
        %4965 = vmatpush1.xpose.msra.mxu0 %v4907
        %4966 = vmatprep.subr.mxu0 0.0
        %4967 = vmatpush1.xpose.msra.mxu0 %v4908
        %4968 = vmatprep.subr.mxu0 0.0
        %4969 = vmatpush1.xpose.msra.mxu0 %v4909
        %4970 = vmatprep.subr.mxu0 0.0
        %4971 = vmatpush1.xpose.msra.mxu0 %v4910
        %4972 = vmatprep.subr.mxu0 0.0
        %4973 = vmatpush1.xpose.msra.mxu0 %v4911
        %4974 = vmatprep.subr.mxu0 0.0
        %4975 = vmatpush1.xpose.msra.mxu0 %v4912
        %4976 = vmatprep.subr.mxu0 0.0
        %4977 = vmatpush1.xpose.msra.mxu0 %v4913
        %4978 = vmatprep.subr.mxu0 0.0
        %4979 = vmatpush1.xpose.msra.mxu0 %v4914
        %4980 = vmatprep.subr.mxu0 0.0
        %4981 = vmatpush1.xpose.msra.mxu0 %v4915
        %4982 = vmatprep.subr.mxu0 0.0
        %4983 = vmatpush1.xpose.msra.mxu0 %v4916
        %4984 = vmatprep.subr.mxu0 0.0
        %4985 = vmatpush1.xpose.msra.mxu0 %v4917
        %4986 = vmatprep.subr.mxu0 0.0
        %4987 = vmatpush1.xpose.msra.mxu0 %v4918
        %4988 = vmatprep.subr.mxu0 0.0
        %4989 = vmatpush1.xpose.msra.mxu0 %v4919
        %4990 = vmatprep.subr.mxu0 0.0
        %4991 = vmatpush1.xpose.msra.mxu0 %v4920
        %4992 = vmatprep.subr.mxu0 0.0
        %4993 = vmatpush1.xpose.msra.mxu0 %v4921
        %4994 = vmatprep.subr.mxu0 0.0
        %4995 = vmatpush1.xpose.msra.mxu0 %v4922
        %4996 = vmatprep.subr.mxu0 0.0
        %4997 = vmatpush1.xpose.msra.mxu0 %v4923
        %4998 = vmatprep.subr.mxu0 0.0
        %4999 = vmatpush1.xpose.msra.mxu0 %v4924
        %5000 = vmatprep.subr.mxu0 0.0
        %5001 = vmatpush1.xpose.msra.mxu0 %v4925
        %5002 = vmatprep.mubr.f32.mxu0 0.0
        %5003 = vmatmul.mubr.f32.gmra.mrb[0].mxu0 %v4794
        %v5004 = vpop.f32.mrb[0].mxu0
        %v5005 = vadd.f32 %v4931, %v5004
        %v5006 = vpop.f32.mrb[0].mxu0
        %v5007 = vadd.f32 %v4935, %v5006
        %5008 = vmatprep.mubr.f32.mxu0 0.0
        %5009 = vmatmul.mubr.f32.gmra.mrb[0].mxu0 %v4795
        %v5010 = vpop.f32.mrb[0].mxu0
        %v5011 = vadd.f32 %v4931, %v5010
        %v5012 = vpop.f32.mrb[0].mxu0
        %v5013 = vadd.f32 %v4935, %v5012
        %5014 = vdwg.mxu0
        %v5015 = vmul.f32 %v5005, 0.088388346
        %v5016 = vmul.f32 %v5011, 0.088388346
        %5017 = vmax.xlane.f32.xlu0 %v5015
        %v5018 = vpop.xlane.xlu0 %5017
        %5019 = vmax.xlane.f32.xlu0 %v5016
        %v5020 = vpop.xlane.xlu0 %5019
        %5021 = vmin.xlane.f32.xlu0 %v5015
        %v5022 = vpop.xlane.xlu0 %5021
        %5023 = vmin.xlane.f32.xlu0 %v5016
        %v5024 = vpop.xlane.xlu0 %5023
        %vm5025 = vcmp.ge.f32.partialorder %v4886, 0.0
        %vm5026 = vcmp.ge.f32.partialorder %v4891, 0.0
        %v5027 = vmul.f32 %v4886, %v5018
        %v5028 = vmul.f32 %v4891, %v5020
        %v5029 = vmul.f32 %v4886, %v5022
        %v5030 = vmul.f32 %v4891, %v5024
        %v5031 = vsel %vm5025, %v5027, %v5029
        %v5032 = vsel %vm5026, %v5028, %v5030
        %5033 = vst [vmem:[#allocation2] sm:$0xff] %v4886
        %5034 = vst [vmem:[#allocation2 + $0x8] sm:$0xff] %v4891
        %5035 = vst [vmem:[#allocation3] sm:$0xff] %v5015
        %5036 = vst [vmem:[#allocation3 + $0x8] sm:$0xff] %v5016
        %5037 = vst [vmem:[#allocation4] sm:$0xff] %v5031
        %5038 = vst [vmem:[#allocation4 + $0x8] sm:$0xff] %v5032
        %5039 = vst [vmem:[#allocation5] sm:$0xff] %v5007
        %5040 = vst [vmem:[#allocation5 + $0x8] sm:$0xff] %v5013
        loop: start=0, step=1, limit=2
        $region95: #{tpu_custom_call.1} parent=55 // loop_pre_header
          _
        $region96: #{tpu_custom_call.1} parent=55 // loop_header
          %s5042 = sphi 0, %s5046
          %p5043 = scmp.ge.s32.totalorder %s5042, 2
        $region97: #{tpu_custom_call.1} parent=55 // loop_header_branch
          %5045 = sbr.rel (%p5043) target = $region101
        $region98: #{tpu_custom_call.1} parent=55 // loop_body
          %s5047 = smul.u32 %s5042, 8
          %s5048 = scalar_lea.vmem [#allocation2], %s5047
          %v5049 = vld [vmem:[%s5048] sm:$0xff]
          %s5050 = scalar_lea.vmem [#allocation4], %s5047
          %v5051 = vld [vmem:[%s5050] sm:$0xff]
          %s5052 = scalar_lea.vmem [#allocation5], %s5047
          %v5053 = vld [vmem:[%s5052] sm:$0xff]
          %s5054 = scalar_lea.vmem [#allocation3], %s5047
          %v5055 = vld [vmem:[%s5054] sm:$0xff]
          %5056 = vxpose.xlu0.b32.start [1/16] %v5055, 128
          %5057 = vxpose.xlu0.b32.cont [2/16] 0.0, 128
          %5058 = vxpose.xlu0.b32.cont [3/16] 0.0, 128
          %5059 = vxpose.xlu0.b32.cont [4/16] 0.0, 128
          %5060 = vxpose.xlu0.b32.cont [5/16] 0.0, 128
          %5061 = vxpose.xlu0.b32.cont [6/16] 0.0, 128
          %5062 = vxpose.xlu0.b32.cont [7/16] 0.0, 128
          %5063 = vxpose.xlu0.b32.cont [8/16] 0.0, 128
          %5064 = vxpose.xlu0.b32.cont [9/16] 0.0, 128
          %5065 = vxpose.xlu0.b32.cont [10/16] 0.0, 128
          %5066 = vxpose.xlu0.b32.cont [11/16] 0.0, 128
          %5067 = vxpose.xlu0.b32.cont [12/16] 0.0, 128
          %5068 = vxpose.xlu0.b32.cont [13/16] 0.0, 128
          %5069 = vxpose.xlu0.b32.cont [14/16] 0.0, 128
          %5070 = vxpose.xlu0.b32.cont [15/16] 0.0, 128
          %5071 = vxpose.xlu0.b32.end [16/16] 0.0, 128
          %v5072 = vpop.trf.xlu0
          %v5073 = vpop.trf.xlu0
          %v5074 = vpop.trf.xlu0
          %v5075 = vpop.trf.xlu0
          %v5076 = vpop.trf.xlu0
          %v5077 = vpop.trf.xlu0
          %v5078 = vpop.trf.xlu0
          %v5079 = vpop.trf.xlu0
          %v5080 = vpop.trf.xlu0
          %v5081 = vpop.trf.xlu0
          %v5082 = vpop.trf.xlu0
          %v5083 = vpop.trf.xlu0
          %v5084 = vpop.trf.xlu0
          %v5085 = vpop.trf.xlu0
          %v5086 = vpop.trf.xlu0
          %v5087 = vpop.trf.xlu0
          %5089 = vset.pattern.permute.xlu0 0
          %5090 = vperm.xlu0 %5089, %v5072
          %v5091 = vpop.permute.xlu0 %5090
          %5094 = vset.pattern.permute.xlu0 0
          %5095 = vperm.xlu0 %5094, %v5073
          %v5096 = vpop.permute.xlu0 %5095
          %5099 = vset.pattern.permute.xlu0 0
          %5100 = vperm.xlu0 %5099, %v5074
          %v5101 = vpop.permute.xlu0 %5100
          %5104 = vset.pattern.permute.xlu0 0
          %5105 = vperm.xlu0 %5104, %v5075
          %v5106 = vpop.permute.xlu0 %5105
          %5109 = vset.pattern.permute.xlu0 0
          %5110 = vperm.xlu0 %5109, %v5076
          %v5111 = vpop.permute.xlu0 %5110
          %5114 = vset.pattern.permute.xlu0 0
          %5115 = vperm.xlu0 %5114, %v5077
          %v5116 = vpop.permute.xlu0 %5115
          %5119 = vset.pattern.permute.xlu0 0
          %5120 = vperm.xlu0 %5119, %v5078
          %v5121 = vpop.permute.xlu0 %5120
          %5124 = vset.pattern.permute.xlu0 0
          %5125 = vperm.xlu0 %5124, %v5079
          %v5126 = vpop.permute.xlu0 %5125
          %5129 = vset.pattern.permute.xlu0 0
          %5130 = vperm.xlu0 %5129, %v5080
          %v5131 = vpop.permute.xlu0 %5130
          %5134 = vset.pattern.permute.xlu0 0
          %5135 = vperm.xlu0 %5134, %v5081
          %v5136 = vpop.permute.xlu0 %5135
          %5139 = vset.pattern.permute.xlu0 0
          %5140 = vperm.xlu0 %5139, %v5082
          %v5141 = vpop.permute.xlu0 %5140
          %5144 = vset.pattern.permute.xlu0 0
          %5145 = vperm.xlu0 %5144, %v5083
          %v5146 = vpop.permute.xlu0 %5145
          %5149 = vset.pattern.permute.xlu0 0
          %5150 = vperm.xlu0 %5149, %v5084
          %v5151 = vpop.permute.xlu0 %5150
          %5154 = vset.pattern.permute.xlu0 0
          %5155 = vperm.xlu0 %5154, %v5085
          %v5156 = vpop.permute.xlu0 %5155
          %5159 = vset.pattern.permute.xlu0 0
          %5160 = vperm.xlu0 %5159, %v5086
          %v5161 = vpop.permute.xlu0 %5160
          %5164 = vset.pattern.permute.xlu0 0
          %5165 = vperm.xlu0 %5164, %v5087
          %v5166 = vpop.permute.xlu0 %5165
          %v5168 = vlaneseq
          %v5169 = vshrl.u32 %v5168, 7
          %v5170 = vsub.s32 0, %v5169
          %v5171 = vrot.slane %v5049, %v5170
          %v5172 = vmul.f32 %v5091, %v5171
          %v5173 = vmul.f32 %v5096, %v5171
          %v5174 = vmul.f32 %v5101, %v5171
          %v5175 = vmul.f32 %v5106, %v5171
          %v5176 = vmul.f32 %v5111, %v5171
          %v5177 = vmul.f32 %v5116, %v5171
          %v5178 = vmul.f32 %v5121, %v5171
          %v5179 = vmul.f32 %v5126, %v5171
          %v5180 = vmul.f32 %v5131, %v5171
          %v5181 = vmul.f32 %v5136, %v5171
          %v5182 = vmul.f32 %v5141, %v5171
          %v5183 = vmul.f32 %v5146, %v5171
          %v5184 = vmul.f32 %v5151, %v5171
          %v5185 = vmul.f32 %v5156, %v5171
          %v5186 = vmul.f32 %v5161, %v5171
          %v5187 = vmul.f32 %v5166, %v5171
          %v5188 = vlaneseq
          %v5189 = vshrl.u32 %v5188, 7
          %v5190 = vsub.s32 0, %v5189
          %v5191 = vrot.slane %v5051, %v5190
          %v5192 = vsub.f32 %v5172, %v5191
          %v5193 = vsub.f32 %v5173, %v5191
          %v5194 = vsub.f32 %v5174, %v5191
          %v5195 = vsub.f32 %v5175, %v5191
          %v5196 = vsub.f32 %v5176, %v5191
          %v5197 = vsub.f32 %v5177, %v5191
          %v5198 = vsub.f32 %v5178, %v5191
          %v5199 = vsub.f32 %v5179, %v5191
          %v5200 = vsub.f32 %v5180, %v5191
          %v5201 = vsub.f32 %v5181, %v5191
          %v5202 = vsub.f32 %v5182, %v5191
          %v5203 = vsub.f32 %v5183, %v5191
          %v5204 = vsub.f32 %v5184, %v5191
          %v5205 = vsub.f32 %v5185, %v5191
          %v5206 = vsub.f32 %v5186, %v5191
          %v5207 = vsub.f32 %v5187, %v5191
          %v5208 = vmul.f32 %v5192, 1.442695
          %v5209 = vpow.pop %v5208
          %v5210 = vmul.f32 %v5193, 1.442695
          %v5211 = vpow.pop %v5210
          %v5212 = vmul.f32 %v5194, 1.442695
          %v5213 = vpow.pop %v5212
          %v5214 = vmul.f32 %v5195, 1.442695
          %v5215 = vpow.pop %v5214
          %v5216 = vmul.f32 %v5196, 1.442695
          %v5217 = vpow.pop %v5216
          %v5218 = vmul.f32 %v5197, 1.442695
          %v5219 = vpow.pop %v5218
          %v5220 = vmul.f32 %v5198, 1.442695
          %v5221 = vpow.pop %v5220
          %v5222 = vmul.f32 %v5199, 1.442695
          %v5223 = vpow.pop %v5222
          %v5224 = vmul.f32 %v5200, 1.442695
          %v5225 = vpow.pop %v5224
          %v5226 = vmul.f32 %v5201, 1.442695
          %v5227 = vpow.pop %v5226
          %v5228 = vmul.f32 %v5202, 1.442695
          %v5229 = vpow.pop %v5228
          %v5230 = vmul.f32 %v5203, 1.442695
          %v5231 = vpow.pop %v5230
          %v5232 = vmul.f32 %v5204, 1.442695
          %v5233 = vpow.pop %v5232
          %v5234 = vmul.f32 %v5205, 1.442695
          %v5235 = vpow.pop %v5234
          %v5236 = vmul.f32 %v5206, 1.442695
          %v5237 = vpow.pop %v5236
          %v5238 = vmul.f32 %v5207, 1.442695
          %v5239 = vpow.pop %v5238
          %vm5240 = vcmask 1040384
          %v5241 = vsel %vm5240, %v5053, 1.0
          %5242 = vmatprep.subr.mxu0 0.0
          %5243 = vmatpush1.msra.mxu0 %v5209
          %5244 = vmatprep.subr.mxu0 0.0
          %5245 = vmatpush1.msra.mxu0 %v5211
          %5246 = vmatprep.subr.mxu0 0.0
          %5247 = vmatpush1.msra.mxu0 %v5213
          %5248 = vmatprep.subr.mxu0 0.0
          %5249 = vmatpush1.msra.mxu0 %v5215
          %5250 = vmatprep.subr.mxu0 0.0
          %5251 = vmatpush1.msra.mxu0 %v5217
          %5252 = vmatprep.subr.mxu0 0.0
          %5253 = vmatpush1.msra.mxu0 %v5219
          %5254 = vmatprep.subr.mxu0 0.0
          %5255 = vmatpush1.msra.mxu0 %v5221
          %5256 = vmatprep.subr.mxu0 0.0
          %5257 = vmatpush1.msra.mxu0 %v5223
          %5258 = vmatprep.subr.mxu0 0.0
          %5259 = vmatpush1.msra.mxu0 %v5225
          %5260 = vmatprep.subr.mxu0 0.0
          %5261 = vmatpush1.msra.mxu0 %v5227
          %5262 = vmatprep.subr.mxu0 0.0
          %5263 = vmatpush1.msra.mxu0 %v5229
          %5264 = vmatprep.subr.mxu0 0.0
          %5265 = vmatpush1.msra.mxu0 %v5231
          %5266 = vmatprep.subr.mxu0 0.0
          %5267 = vmatpush1.msra.mxu0 %v5233
          %5268 = vmatprep.subr.mxu0 0.0
          %5269 = vmatpush1.msra.mxu0 %v5235
          %5270 = vmatprep.subr.mxu0 0.0
          %5271 = vmatpush1.msra.mxu0 %v5237
          %5272 = vmatprep.subr.mxu0 0.0
          %5273 = vmatpush1.msra.mxu0 %v5239
          %5274 = vmatprep.subr.mxu0 0.0
          %5275 = vmatpush1.msra.mxu0 0.0
          %5276 = vmatprep.subr.mxu0 0.0
          %5277 = vmatpush1.msra.mxu0 0.0
          %5278 = vmatprep.subr.mxu0 0.0
          %5279 = vmatpush1.msra.mxu0 0.0
          %5280 = vmatprep.subr.mxu0 0.0
          %5281 = vmatpush1.msra.mxu0 0.0
          %5282 = vmatprep.subr.mxu0 0.0
          %5283 = vmatpush1.msra.mxu0 0.0
          %5284 = vmatprep.subr.mxu0 0.0
          %5285 = vmatpush1.msra.mxu0 0.0
          %5286 = vmatprep.subr.mxu0 0.0
          %5287 = vmatpush1.msra.mxu0 0.0
          %5288 = vmatprep.subr.mxu0 0.0
          %5289 = vmatpush1.msra.mxu0 0.0
          %5290 = vmatprep.subr.mxu0 0.0
          %5291 = vmatpush1.msra.mxu0 0.0
          %5292 = vmatprep.subr.mxu0 0.0
          %5293 = vmatpush1.msra.mxu0 0.0
          %5294 = vmatprep.subr.mxu0 0.0
          %5295 = vmatpush1.msra.mxu0 0.0
          %5296 = vmatprep.subr.mxu0 0.0
          %5297 = vmatpush1.msra.mxu0 0.0
          %5298 = vmatprep.subr.mxu0 0.0
          %5299 = vmatpush1.msra.mxu0 0.0
          %5300 = vmatprep.subr.mxu0 0.0
          %5301 = vmatpush1.msra.mxu0 0.0
          %5302 = vmatprep.subr.mxu0 0.0
          %5303 = vmatpush1.msra.mxu0 0.0
          %5304 = vmatprep.subr.mxu0 0.0
          %5305 = vmatpush1.msra.mxu0 0.0
          %5306 = vmatprep.mubr.f32.mxu0 0.0
          %5307 = vmatmul.mubr.f32.gmra.mrb[0].mxu0 %v5241
          %v5308 = vpop.f32.mrb[0].mxu0
          %v5309 = vadd.f32 0.0, %v5308
          %v5310 = vpop.f32.mrb[0].mxu0
          %5311 = vdwg.mxu0
          %v5312 = vrcp.pop %v5309
          %v5314 = vrot.slane %v5312, 1
          %v5316 = vmul.f32 %v5309, %v5314
          %5317 = vset.pattern.permute.xlu0 1
          %5318 = vperm.xlu0 %5317, %v5072
          %v5319 = vpop.permute.xlu0 %5318
          %5321 = vset.pattern.permute.xlu0 1
          %5322 = vperm.xlu0 %5321, %v5073
          %v5323 = vpop.permute.xlu0 %5322
          %5325 = vset.pattern.permute.xlu0 1
          %5326 = vperm.xlu0 %5325, %v5074
          %v5327 = vpop.permute.xlu0 %5326
          %5329 = vset.pattern.permute.xlu0 1
          %5330 = vperm.xlu0 %5329, %v5075
          %v5331 = vpop.permute.xlu0 %5330
          %5333 = vset.pattern.permute.xlu0 1
          %5334 = vperm.xlu0 %5333, %v5076
          %v5335 = vpop.permute.xlu0 %5334
          %5337 = vset.pattern.permute.xlu0 1
          %5338 = vperm.xlu0 %5337, %v5077
          %v5339 = vpop.permute.xlu0 %5338
          %5341 = vset.pattern.permute.xlu0 1
          %5342 = vperm.xlu0 %5341, %v5078
          %v5343 = vpop.permute.xlu0 %5342
          %5345 = vset.pattern.permute.xlu0 1
          %5346 = vperm.xlu0 %5345, %v5079
          %v5347 = vpop.permute.xlu0 %5346
          %5349 = vset.pattern.permute.xlu0 1
          %5350 = vperm.xlu0 %5349, %v5080
          %v5351 = vpop.permute.xlu0 %5350
          %5353 = vset.pattern.permute.xlu0 1
          %5354 = vperm.xlu0 %5353, %v5081
          %v5355 = vpop.permute.xlu0 %5354
          %5357 = vset.pattern.permute.xlu0 1
          %5358 = vperm.xlu0 %5357, %v5082
          %v5359 = vpop.permute.xlu0 %5358
          %5361 = vset.pattern.permute.xlu0 1
          %5362 = vperm.xlu0 %5361, %v5083
          %v5363 = vpop.permute.xlu0 %5362
          %5365 = vset.pattern.permute.xlu0 1
          %5366 = vperm.xlu0 %5365, %v5084
          %v5367 = vpop.permute.xlu0 %5366
          %5369 = vset.pattern.permute.xlu0 1
          %5370 = vperm.xlu0 %5369, %v5085
          %v5371 = vpop.permute.xlu0 %5370
          %5373 = vset.pattern.permute.xlu0 1
          %5374 = vperm.xlu0 %5373, %v5086
          %v5375 = vpop.permute.xlu0 %5374
          %5377 = vset.pattern.permute.xlu0 1
          %5378 = vperm.xlu0 %5377, %v5087
          %v5379 = vpop.permute.xlu0 %5378
          %v5381 = vlaneseq
          %v5382 = vshrl.u32 %v5381, 7
          %v5383 = vsub.s32 1, %v5382
          %v5384 = vrot.slane %v5049, %v5383
          %v5385 = vmul.f32 %v5319, %v5384
          %v5386 = vmul.f32 %v5323, %v5384
          %v5387 = vmul.f32 %v5327, %v5384
          %v5388 = vmul.f32 %v5331, %v5384
          %v5389 = vmul.f32 %v5335, %v5384
          %v5390 = vmul.f32 %v5339, %v5384
          %v5391 = vmul.f32 %v5343, %v5384
          %v5392 = vmul.f32 %v5347, %v5384
          %v5393 = vmul.f32 %v5351, %v5384
          %v5394 = vmul.f32 %v5355, %v5384
          %v5395 = vmul.f32 %v5359, %v5384
          %v5396 = vmul.f32 %v5363, %v5384
          %v5397 = vmul.f32 %v5367, %v5384
          %v5398 = vmul.f32 %v5371, %v5384
          %v5399 = vmul.f32 %v5375, %v5384
          %v5400 = vmul.f32 %v5379, %v5384
          %v5401 = vlaneseq
          %v5402 = vshrl.u32 %v5401, 7
          %v5403 = vsub.s32 1, %v5402
          %v5404 = vrot.slane %v5051, %v5403
          %v5405 = vsub.f32 %v5385, %v5404
          %v5406 = vsub.f32 %v5386, %v5404
          %v5407 = vsub.f32 %v5387, %v5404
          %v5408 = vsub.f32 %v5388, %v5404
          %v5409 = vsub.f32 %v5389, %v5404
          %v5410 = vsub.f32 %v5390, %v5404
          %v5411 = vsub.f32 %v5391, %v5404
          %v5412 = vsub.f32 %v5392, %v5404
          %v5413 = vsub.f32 %v5393, %v5404
          %v5414 = vsub.f32 %v5394, %v5404
          %v5415 = vsub.f32 %v5395, %v5404
          %v5416 = vsub.f32 %v5396, %v5404
          %v5417 = vsub.f32 %v5397, %v5404
          %v5418 = vsub.f32 %v5398, %v5404
          %v5419 = vsub.f32 %v5399, %v5404
          %v5420 = vsub.f32 %v5400, %v5404
          %v5421 = vmul.f32 %v5405, 1.442695
          %v5422 = vpow.pop %v5421
          %v5423 = vmul.f32 %v5406, 1.442695
          %v5424 = vpow.pop %v5423
          %v5425 = vmul.f32 %v5407, 1.442695
          %v5426 = vpow.pop %v5425
          %v5427 = vmul.f32 %v5408, 1.442695
          %v5428 = vpow.pop %v5427
          %v5429 = vmul.f32 %v5409, 1.442695
          %v5430 = vpow.pop %v5429
          %v5431 = vmul.f32 %v5410, 1.442695
          %v5432 = vpow.pop %v5431
          %v5433 = vmul.f32 %v5411, 1.442695
          %v5434 = vpow.pop %v5433
          %v5435 = vmul.f32 %v5412, 1.442695
          %v5436 = vpow.pop %v5435
          %v5437 = vmul.f32 %v5413, 1.442695
          %v5438 = vpow.pop %v5437
          %v5439 = vmul.f32 %v5414, 1.442695
          %v5440 = vpow.pop %v5439
          %v5441 = vmul.f32 %v5415, 1.442695
          %v5442 = vpow.pop %v5441
          %v5443 = vmul.f32 %v5416, 1.442695
          %v5444 = vpow.pop %v5443
          %v5445 = vmul.f32 %v5417, 1.442695
          %v5446 = vpow.pop %v5445
          %v5447 = vmul.f32 %v5418, 1.442695
          %v5448 = vpow.pop %v5447
          %v5449 = vmul.f32 %v5419, 1.442695
          %v5450 = vpow.pop %v5449
          %v5451 = vmul.f32 %v5420, 1.442695
          %v5452 = vpow.pop %v5451
          %v5454 = vrot.slane %v5053, 1
          %v5456 = vsel %vm5240, %v5454, 1.0
          %5457 = vmatprep.subr.mxu0 0.0
          %5458 = vmatpush1.msra.mxu0 %v5422
          %5459 = vmatprep.subr.mxu0 0.0
          %5460 = vmatpush1.msra.mxu0 %v5424
          %5461 = vmatprep.subr.mxu0 0.0
          %5462 = vmatpush1.msra.mxu0 %v5426
          %5463 = vmatprep.subr.mxu0 0.0
          %5464 = vmatpush1.msra.mxu0 %v5428
          %5465 = vmatprep.subr.mxu0 0.0
          %5466 = vmatpush1.msra.mxu0 %v5430
          %5467 = vmatprep.subr.mxu0 0.0
          %5468 = vmatpush1.msra.mxu0 %v5432
          %5469 = vmatprep.subr.mxu0 0.0
          %5470 = vmatpush1.msra.mxu0 %v5434
          %5471 = vmatprep.subr.mxu0 0.0
          %5472 = vmatpush1.msra.mxu0 %v5436
          %5473 = vmatprep.subr.mxu0 0.0
          %5474 = vmatpush1.msra.mxu0 %v5438
          %5475 = vmatprep.subr.mxu0 0.0
          %5476 = vmatpush1.msra.mxu0 %v5440
          %5477 = vmatprep.subr.mxu0 0.0
          %5478 = vmatpush1.msra.mxu0 %v5442
          %5479 = vmatprep.subr.mxu0 0.0
          %5480 = vmatpush1.msra.mxu0 %v5444
          %5481 = vmatprep.subr.mxu0 0.0
          %5482 = vmatpush1.msra.mxu0 %v5446
          %5483 = vmatprep.subr.mxu0 0.0
          %5484 = vmatpush1.msra.mxu0 %v5448
          %5485 = vmatprep.subr.mxu0 0.0
          %5486 = vmatpush1.msra.mxu0 %v5450
          %5487 = vmatprep.subr.mxu0 0.0
          %5488 = vmatpush1.msra.mxu0 %v5452
          %5489 = vmatprep.subr.mxu0 0.0
          %5490 = vmatpush1.msra.mxu0 0.0
          %5491 = vmatprep.subr.mxu0 0.0
          %5492 = vmatpush1.msra.mxu0 0.0
          %5493 = vmatprep.subr.mxu0 0.0
          %5494 = vmatpush1.msra.mxu0 0.0
          %5495 = vmatprep.subr.mxu0 0.0
          %5496 = vmatpush1.msra.mxu0 0.0
          %5497 = vmatprep.subr.mxu0 0.0
          %5498 = vmatpush1.msra.mxu0 0.0
          %5499 = vmatprep.subr.mxu0 0.0
          %5500 = vmatpush1.msra.mxu0 0.0
          %5501 = vmatprep.subr.mxu0 0.0
          %5502 = vmatpush1.msra.mxu0 0.0
          %5503 = vmatprep.subr.mxu0 0.0
          %5504 = vmatpush1.msra.mxu0 0.0
          %5505 = vmatprep.subr.mxu0 0.0
          %5506 = vmatpush1.msra.mxu0 0.0
          %5507 = vmatprep.subr.mxu0 0.0
          %5508 = vmatpush1.msra.mxu0 0.0
          %5509 = vmatprep.subr.mxu0 0.0
          %5510 = vmatpush1.msra.mxu0 0.0
          %5511 = vmatprep.subr.mxu0 0.0
          %5512 = vmatpush1.msra.mxu0 0.0
          %5513 = vmatprep.subr.mxu0 0.0
          %5514 = vmatpush1.msra.mxu0 0.0
          %5515 = vmatprep.subr.mxu0 0.0
          %5516 = vmatpush1.msra.mxu0 0.0
          %5517 = vmatprep.subr.mxu0 0.0
          %5518 = vmatpush1.msra.mxu0 0.0
          %5519 = vmatprep.subr.mxu0 0.0
          %5520 = vmatpush1.msra.mxu0 0.0
          %5521 = vmatprep.mubr.f32.mxu0 0.0
          %5522 = vmatmul.mubr.f32.gmra.mrb[0].mxu0 %v5456
          %v5523 = vpop.f32.mrb[0].mxu0
          %v5524 = vadd.f32 0.0, %v5523
          %v5525 = vpop.f32.mrb[0].mxu0
          %5526 = vdwg.mxu0
          %v5527 = vrcp.pop %v5524
          %v5529 = vrot.slane %v5527, 1
          %v5531 = vmul.f32 %v5524, %v5529
          %5532 = vset.pattern.permute.xlu0 2
          %5533 = vperm.xlu0 %5532, %v5072
          %v5534 = vpop.permute.xlu0 %5533
          %5536 = vset.pattern.permute.xlu0 2
          %5537 = vperm.xlu0 %5536, %v5073
          %v5538 = vpop.permute.xlu0 %5537
          %5540 = vset.pattern.permute.xlu0 2
          %5541 = vperm.xlu0 %5540, %v5074
          %v5542 = vpop.permute.xlu0 %5541
          %5544 = vset.pattern.permute.xlu0 2
          %5545 = vperm.xlu0 %5544, %v5075
          %v5546 = vpop.permute.xlu0 %5545
          %5548 = vset.pattern.permute.xlu0 2
          %5549 = vperm.xlu0 %5548, %v5076
          %v5550 = vpop.permute.xlu0 %5549
          %5552 = vset.pattern.permute.xlu0 2
          %5553 = vperm.xlu0 %5552, %v5077
          %v5554 = vpop.permute.xlu0 %5553
          %5556 = vset.pattern.permute.xlu0 2
          %5557 = vperm.xlu0 %5556, %v5078
          %v5558 = vpop.permute.xlu0 %5557
          %5560 = vset.pattern.permute.xlu0 2
          %5561 = vperm.xlu0 %5560, %v5079
          %v5562 = vpop.permute.xlu0 %5561
          %5564 = vset.pattern.permute.xlu0 2
          %5565 = vperm.xlu0 %5564, %v5080
          %v5566 = vpop.permute.xlu0 %5565
          %5568 = vset.pattern.permute.xlu0 2
          %5569 = vperm.xlu0 %5568, %v5081
          %v5570 = vpop.permute.xlu0 %5569
          %5572 = vset.pattern.permute.xlu0 2
          %5573 = vperm.xlu0 %5572, %v5082
          %v5574 = vpop.permute.xlu0 %5573
          %5576 = vset.pattern.permute.xlu0 2
          %5577 = vperm.xlu0 %5576, %v5083
          %v5578 = vpop.permute.xlu0 %5577
          %5580 = vset.pattern.permute.xlu0 2
          %5581 = vperm.xlu0 %5580, %v5084
          %v5582 = vpop.permute.xlu0 %5581
          %5584 = vset.pattern.permute.xlu0 2
          %5585 = vperm.xlu0 %5584, %v5085
          %v5586 = vpop.permute.xlu0 %5585
          %5588 = vset.pattern.permute.xlu0 2
          %5589 = vperm.xlu0 %5588, %v5086
          %v5590 = vpop.permute.xlu0 %5589
          %5592 = vset.pattern.permute.xlu0 2
          %5593 = vperm.xlu0 %5592, %v5087
          %v5594 = vpop.permute.xlu0 %5593
          %v5596 = vlaneseq
          %v5597 = vshrl.u32 %v5596, 7
          %v5598 = vsub.s32 2, %v5597
          %v5599 = vrot.slane %v5049, %v5598
          %v5600 = vmul.f32 %v5534, %v5599
          %v5601 = vmul.f32 %v5538, %v5599
          %v5602 = vmul.f32 %v5542, %v5599
          %v5603 = vmul.f32 %v5546, %v5599
          %v5604 = vmul.f32 %v5550, %v5599
          %v5605 = vmul.f32 %v5554, %v5599
          %v5606 = vmul.f32 %v5558, %v5599
          %v5607 = vmul.f32 %v5562, %v5599
          %v5608 = vmul.f32 %v5566, %v5599
          %v5609 = vmul.f32 %v5570, %v5599
          %v5610 = vmul.f32 %v5574, %v5599
          %v5611 = vmul.f32 %v5578, %v5599
          %v5612 = vmul.f32 %v5582, %v5599
          %v5613 = vmul.f32 %v5586, %v5599
          %v5614 = vmul.f32 %v5590, %v5599
          %v5615 = vmul.f32 %v5594, %v5599
          %v5616 = vlaneseq
          %v5617 = vshrl.u32 %v5616, 7
          %v5618 = vsub.s32 2, %v5617
          %v5619 = vrot.slane %v5051, %v5618
          %v5620 = vsub.f32 %v5600, %v5619
          %v5621 = vsub.f32 %v5601, %v5619
          %v5622 = vsub.f32 %v5602, %v5619
          %v5623 = vsub.f32 %v5603, %v5619
          %v5624 = vsub.f32 %v5604, %v5619
          %v5625 = vsub.f32 %v5605, %v5619
          %v5626 = vsub.f32 %v5606, %v5619
          %v5627 = vsub.f32 %v5607, %v5619
          %v5628 = vsub.f32 %v5608, %v5619
          %v5629 = vsub.f32 %v5609, %v5619
          %v5630 = vsub.f32 %v5610, %v5619
          %v5631 = vsub.f32 %v5611, %v5619
          %v5632 = vsub.f32 %v5612, %v5619
          %v5633 = vsub.f32 %v5613, %v5619
          %v5634 = vsub.f32 %v5614, %v5619
          %v5635 = vsub.f32 %v5615, %v5619
          %v5636 = vmul.f32 %v5620, 1.442695
          %v5637 = vpow.pop %v5636
          %v5638 = vmul.f32 %v5621, 1.442695
          %v5639 = vpow.pop %v5638
          %v5640 = vmul.f32 %v5622, 1.442695
          %v5641 = vpow.pop %v5640
          %v5642 = vmul.f32 %v5623, 1.442695
          %v5643 = vpow.pop %v5642
          %v5644 = vmul.f32 %v5624, 1.442695
          %v5645 = vpow.pop %v5644
          %v5646 = vmul.f32 %v5625, 1.442695
          %v5647 = vpow.pop %v5646
          %v5648 = vmul.f32 %v5626, 1.442695
          %v5649 = vpow.pop %v5648
          %v5650 = vmul.f32 %v5627, 1.442695
          %v5651 = vpow.pop %v5650
          %v5652 = vmul.f32 %v5628, 1.442695
          %v5653 = vpow.pop %v5652
          %v5654 = vmul.f32 %v5629, 1.442695
          %v5655 = vpow.pop %v5654
          %v5656 = vmul.f32 %v5630, 1.442695
          %v5657 = vpow.pop %v5656
          %v5658 = vmul.f32 %v5631, 1.442695
          %v5659 = vpow.pop %v5658
          %v5660 = vmul.f32 %v5632, 1.442695
          %v5661 = vpow.pop %v5660
          %v5662 = vmul.f32 %v5633, 1.442695
          %v5663 = vpow.pop %v5662
          %v5664 = vmul.f32 %v5634, 1.442695
          %v5665 = vpow.pop %v5664
          %v5666 = vmul.f32 %v5635, 1.442695
          %v5667 = vpow.pop %v5666
          %v5668 = vrot.slane %v5053, 2
          %v5670 = vsel %vm5240, %v5668, 1.0
          %5671 = vmatprep.subr.mxu0 0.0
          %5672 = vmatpush1.msra.mxu0 %v5637
          %5673 = vmatprep.subr.mxu0 0.0
          %5674 = vmatpush1.msra.mxu0 %v5639
          %5675 = vmatprep.subr.mxu0 0.0
          %5676 = vmatpush1.msra.mxu0 %v5641
          %5677 = vmatprep.subr.mxu0 0.0
          %5678 = vmatpush1.msra.mxu0 %v5643
          %5679 = vmatprep.subr.mxu0 0.0
          %5680 = vmatpush1.msra.mxu0 %v5645
          %5681 = vmatprep.subr.mxu0 0.0
          %5682 = vmatpush1.msra.mxu0 %v5647
          %5683 = vmatprep.subr.mxu0 0.0
          %5684 = vmatpush1.msra.mxu0 %v5649
          %5685 = vmatprep.subr.mxu0 0.0
          %5686 = vmatpush1.msra.mxu0 %v5651
          %5687 = vmatprep.subr.mxu0 0.0
          %5688 = vmatpush1.msra.mxu0 %v5653
          %5689 = vmatprep.subr.mxu0 0.0
          %5690 = vmatpush1.msra.mxu0 %v5655
          %5691 = vmatprep.subr.mxu0 0.0
          %5692 = vmatpush1.msra.mxu0 %v5657
          %5693 = vmatprep.subr.mxu0 0.0
          %5694 = vmatpush1.msra.mxu0 %v5659
          %5695 = vmatprep.subr.mxu0 0.0
          %5696 = vmatpush1.msra.mxu0 %v5661
          %5697 = vmatprep.subr.mxu0 0.0
          %5698 = vmatpush1.msra.mxu0 %v5663
          %5699 = vmatprep.subr.mxu0 0.0
          %5700 = vmatpush1.msra.mxu0 %v5665
          %5701 = vmatprep.subr.mxu0 0.0
          %5702 = vmatpush1.msra.mxu0 %v5667
          %5703 = vmatprep.subr.mxu0 0.0
          %5704 = vmatpush1.msra.mxu0 0.0
          %5705 = vmatprep.subr.mxu0 0.0
          %5706 = vmatpush1.msra.mxu0 0.0
          %5707 = vmatprep.subr.mxu0 0.0
          %5708 = vmatpush1.msra.mxu0 0.0
          %5709 = vmatprep.subr.mxu0 0.0
          %5710 = vmatpush1.msra.mxu0 0.0
          %5711 = vmatprep.subr.mxu0 0.0
          %5712 = vmatpush1.msra.mxu0 0.0
          %5713 = vmatprep.subr.mxu0 0.0
          %5714 = vmatpush1.msra.mxu0 0.0
          %5715 = vmatprep.subr.mxu0 0.0
          %5716 = vmatpush1.msra.mxu0 0.0
          %5717 = vmatprep.subr.mxu0 0.0
          %5718 = vmatpush1.msra.mxu0 0.0
          %5719 = vmatprep.subr.mxu0 0.0
          %5720 = vmatpush1.msra.mxu0 0.0
          %5721 = vmatprep.subr.mxu0 0.0
          %5722 = vmatpush1.msra.mxu0 0.0
          %5723 = vmatprep.subr.mxu0 0.0
          %5724 = vmatpush1.msra.mxu0 0.0
          %5725 = vmatprep.subr.mxu0 0.0
          %5726 = vmatpush1.msra.mxu0 0.0
          %5727 = vmatprep.subr.mxu0 0.0
          %5728 = vmatpush1.msra.mxu0 0.0
          %5729 = vmatprep.subr.mxu0 0.0
          %5730 = vmatpush1.msra.mxu0 0.0
          %5731 = vmatprep.subr.mxu0 0.0
          %5732 = vmatpush1.msra.mxu0 0.0
          %5733 = vmatprep.subr.mxu0 0.0
          %5734 = vmatpush1.msra.mxu0 0.0
          %5735 = vmatprep.mubr.f32.mxu0 0.0
          %5736 = vmatmul.mubr.f32.gmra.mrb[0].mxu0 %v5670
          %v5737 = vpop.f32.mrb[0].mxu0
          %v5738 = vadd.f32 0.0, %v5737
          %v5739 = vpop.f32.mrb[0].mxu0
          %5740 = vdwg.mxu0
          %v5741 = vrcp.pop %v5738
          %v5743 = vrot.slane %v5741, 1
          %v5745 = vmul.f32 %v5738, %v5743
          %5746 = vset.pattern.permute.xlu0 3
          %5747 = vperm.xlu0 %5746, %v5072
          %v5748 = vpop.permute.xlu0 %5747
          %5750 = vset.pattern.permute.xlu0 3
          %5751 = vperm.xlu0 %5750, %v5073
          %v5752 = vpop.permute.xlu0 %5751
          %5754 = vset.pattern.permute.xlu0 3
          %5755 = vperm.xlu0 %5754, %v5074
          %v5756 = vpop.permute.xlu0 %5755
          %5758 = vset.pattern.permute.xlu0 3
          %5759 = vperm.xlu0 %5758, %v5075
          %v5760 = vpop.permute.xlu0 %5759
          %5762 = vset.pattern.permute.xlu0 3
          %5763 = vperm.xlu0 %5762, %v5076
          %v5764 = vpop.permute.xlu0 %5763
          %5766 = vset.pattern.permute.xlu0 3
          %5767 = vperm.xlu0 %5766, %v5077
          %v5768 = vpop.permute.xlu0 %5767
          %5770 = vset.pattern.permute.xlu0 3
          %5771 = vperm.xlu0 %5770, %v5078
          %v5772 = vpop.permute.xlu0 %5771
          %5774 = vset.pattern.permute.xlu0 3
          %5775 = vperm.xlu0 %5774, %v5079
          %v5776 = vpop.permute.xlu0 %5775
          %5778 = vset.pattern.permute.xlu0 3
          %5779 = vperm.xlu0 %5778, %v5080
          %v5780 = vpop.permute.xlu0 %5779
          %5782 = vset.pattern.permute.xlu0 3
          %5783 = vperm.xlu0 %5782, %v5081
          %v5784 = vpop.permute.xlu0 %5783
          %5786 = vset.pattern.permute.xlu0 3
          %5787 = vperm.xlu0 %5786, %v5082
          %v5788 = vpop.permute.xlu0 %5787
          %5790 = vset.pattern.permute.xlu0 3
          %5791 = vperm.xlu0 %5790, %v5083
          %v5792 = vpop.permute.xlu0 %5791
          %5794 = vset.pattern.permute.xlu0 3
          %5795 = vperm.xlu0 %5794, %v5084
          %v5796 = vpop.permute.xlu0 %5795
          %5798 = vset.pattern.permute.xlu0 3
          %5799 = vperm.xlu0 %5798, %v5085
          %v5800 = vpop.permute.xlu0 %5799
          %5802 = vset.pattern.permute.xlu0 3
          %5803 = vperm.xlu0 %5802, %v5086
          %v5804 = vpop.permute.xlu0 %5803
          %5806 = vset.pattern.permute.xlu0 3
          %5807 = vperm.xlu0 %5806, %v5087
          %v5808 = vpop.permute.xlu0 %5807
          %v5810 = vlaneseq
          %v5811 = vshrl.u32 %v5810, 7
          %v5812 = vsub.s32 3, %v5811
          %v5813 = vrot.slane %v5049, %v5812
          %v5814 = vmul.f32 %v5748, %v5813
          %v5815 = vmul.f32 %v5752, %v5813
          %v5816 = vmul.f32 %v5756, %v5813
          %v5817 = vmul.f32 %v5760, %v5813
          %v5818 = vmul.f32 %v5764, %v5813
          %v5819 = vmul.f32 %v5768, %v5813
          %v5820 = vmul.f32 %v5772, %v5813
          %v5821 = vmul.f32 %v5776, %v5813
          %v5822 = vmul.f32 %v5780, %v5813
          %v5823 = vmul.f32 %v5784, %v5813
          %v5824 = vmul.f32 %v5788, %v5813
          %v5825 = vmul.f32 %v5792, %v5813
          %v5826 = vmul.f32 %v5796, %v5813
          %v5827 = vmul.f32 %v5800, %v5813
          %v5828 = vmul.f32 %v5804, %v5813
          %v5829 = vmul.f32 %v5808, %v5813
          %v5830 = vlaneseq
          %v5831 = vshrl.u32 %v5830, 7
          %v5832 = vsub.s32 3, %v5831
          %v5833 = vrot.slane %v5051, %v5832
          %v5834 = vsub.f32 %v5814, %v5833
          %v5835 = vsub.f32 %v5815, %v5833
          %v5836 = vsub.f32 %v5816, %v5833
          %v5837 = vsub.f32 %v5817, %v5833
          %v5838 = vsub.f32 %v5818, %v5833
          %v5839 = vsub.f32 %v5819, %v5833
          %v5840 = vsub.f32 %v5820, %v5833
          %v5841 = vsub.f32 %v5821, %v5833
          %v5842 = vsub.f32 %v5822, %v5833
          %v5843 = vsub.f32 %v5823, %v5833
          %v5844 = vsub.f32 %v5824, %v5833
          %v5845 = vsub.f32 %v5825, %v5833
          %v5846 = vsub.f32 %v5826, %v5833
          %v5847 = vsub.f32 %v5827, %v5833
          %v5848 = vsub.f32 %v5828, %v5833
          %v5849 = vsub.f32 %v5829, %v5833
          %v5850 = vmul.f32 %v5834, 1.442695
          %v5851 = vpow.pop %v5850
          %v5852 = vmul.f32 %v5835, 1.442695
          %v5853 = vpow.pop %v5852
          %v5854 = vmul.f32 %v5836, 1.442695
          %v5855 = vpow.pop %v5854
          %v5856 = vmul.f32 %v5837, 1.442695
          %v5857 = vpow.pop %v5856
          %v5858 = vmul.f32 %v5838, 1.442695
          %v5859 = vpow.pop %v5858
          %v5860 = vmul.f32 %v5839, 1.442695
          %v5861 = vpow.pop %v5860
          %v5862 = vmul.f32 %v5840, 1.442695
          %v5863 = vpow.pop %v5862
          %v5864 = vmul.f32 %v5841, 1.442695
          %v5865 = vpow.pop %v5864
          %v5866 = vmul.f32 %v5842, 1.442695
          %v5867 = vpow.pop %v5866
          %v5868 = vmul.f32 %v5843, 1.442695
          %v5869 = vpow.pop %v5868
          %v5870 = vmul.f32 %v5844, 1.442695
          %v5871 = vpow.pop %v5870
          %v5872 = vmul.f32 %v5845, 1.442695
          %v5873 = vpow.pop %v5872
          %v5874 = vmul.f32 %v5846, 1.442695
          %v5875 = vpow.pop %v5874
          %v5876 = vmul.f32 %v5847, 1.442695
          %v5877 = vpow.pop %v5876
          %v5878 = vmul.f32 %v5848, 1.442695
          %v5879 = vpow.pop %v5878
          %v5880 = vmul.f32 %v5849, 1.442695
          %v5881 = vpow.pop %v5880
          %v5882 = vrot.slane %v5053, 3
          %v5884 = vsel %vm5240, %v5882, 1.0
          %5885 = vmatprep.subr.mxu0 0.0
          %5886 = vmatpush1.msra.mxu0 %v5851
          %5887 = vmatprep.subr.mxu0 0.0
          %5888 = vmatpush1.msra.mxu0 %v5853
          %5889 = vmatprep.subr.mxu0 0.0
          %5890 = vmatpush1.msra.mxu0 %v5855
          %5891 = vmatprep.subr.mxu0 0.0
          %5892 = vmatpush1.msra.mxu0 %v5857
          %5893 = vmatprep.subr.mxu0 0.0
          %5894 = vmatpush1.msra.mxu0 %v5859
          %5895 = vmatprep.subr.mxu0 0.0
          %5896 = vmatpush1.msra.mxu0 %v5861
          %5897 = vmatprep.subr.mxu0 0.0
          %5898 = vmatpush1.msra.mxu0 %v5863
          %5899 = vmatprep.subr.mxu0 0.0
          %5900 = vmatpush1.msra.mxu0 %v5865
          %5901 = vmatprep.subr.mxu0 0.0
          %5902 = vmatpush1.msra.mxu0 %v5867
          %5903 = vmatprep.subr.mxu0 0.0
          %5904 = vmatpush1.msra.mxu0 %v5869
          %5905 = vmatprep.subr.mxu0 0.0
          %5906 = vmatpush1.msra.mxu0 %v5871
          %5907 = vmatprep.subr.mxu0 0.0
          %5908 = vmatpush1.msra.mxu0 %v5873
          %5909 = vmatprep.subr.mxu0 0.0
          %5910 = vmatpush1.msra.mxu0 %v5875
          %5911 = vmatprep.subr.mxu0 0.0
          %5912 = vmatpush1.msra.mxu0 %v5877
          %5913 = vmatprep.subr.mxu0 0.0
          %5914 = vmatpush1.msra.mxu0 %v5879
          %5915 = vmatprep.subr.mxu0 0.0
          %5916 = vmatpush1.msra.mxu0 %v5881
          %5917 = vmatprep.subr.mxu0 0.0
          %5918 = vmatpush1.msra.mxu0 0.0
          %5919 = vmatprep.subr.mxu0 0.0
          %5920 = vmatpush1.msra.mxu0 0.0
          %5921 = vmatprep.subr.mxu0 0.0
          %5922 = vmatpush1.msra.mxu0 0.0
          %5923 = vmatprep.subr.mxu0 0.0
          %5924 = vmatpush1.msra.mxu0 0.0
          %5925 = vmatprep.subr.mxu0 0.0
          %5926 = vmatpush1.msra.mxu0 0.0
          %5927 = vmatprep.subr.mxu0 0.0
          %5928 = vmatpush1.msra.mxu0 0.0
          %5929 = vmatprep.subr.mxu0 0.0
          %5930 = vmatpush1.msra.mxu0 0.0
          %5931 = vmatprep.subr.mxu0 0.0
          %5932 = vmatpush1.msra.mxu0 0.0
          %5933 = vmatprep.subr.mxu0 0.0
          %5934 = vmatpush1.msra.mxu0 0.0
          %5935 = vmatprep.subr.mxu0 0.0
          %5936 = vmatpush1.msra.mxu0 0.0
          %5937 = vmatprep.subr.mxu0 0.0
          %5938 = vmatpush1.msra.mxu0 0.0
          %5939 = vmatprep.subr.mxu0 0.0
          %5940 = vmatpush1.msra.mxu0 0.0
          %5941 = vmatprep.subr.mxu0 0.0
          %5942 = vmatpush1.msra.mxu0 0.0
          %5943 = vmatprep.subr.mxu0 0.0
          %5944 = vmatpush1.msra.mxu0 0.0
          %5945 = vmatprep.subr.mxu0 0.0
          %5946 = vmatpush1.msra.mxu0 0.0
          %5947 = vmatprep.subr.mxu0 0.0
          %5948 = vmatpush1.msra.mxu0 0.0
          %5949 = vmatprep.mubr.f32.mxu0 0.0
          %5950 = vmatmul.mubr.f32.gmra.mrb[0].mxu0 %v5884
          %v5951 = vpop.f32.mrb[0].mxu0
          %v5952 = vadd.f32 0.0, %v5951
          %v5953 = vpop.f32.mrb[0].mxu0
          %5954 = vdwg.mxu0
          %v5955 = vrcp.pop %v5952
          %v5957 = vrot.slane %v5955, 1
          %v5959 = vmul.f32 %v5952, %v5957
          %5960 = vset.pattern.permute.xlu0 4
          %5961 = vperm.xlu0 %5960, %v5072
          %v5962 = vpop.permute.xlu0 %5961
          %5964 = vset.pattern.permute.xlu0 4
          %5965 = vperm.xlu0 %5964, %v5073
          %v5966 = vpop.permute.xlu0 %5965
          %5968 = vset.pattern.permute.xlu0 4
          %5969 = vperm.xlu0 %5968, %v5074
          %v5970 = vpop.permute.xlu0 %5969
          %5972 = vset.pattern.permute.xlu0 4
          %5973 = vperm.xlu0 %5972, %v5075
          %v5974 = vpop.permute.xlu0 %5973
          %5976 = vset.pattern.permute.xlu0 4
          %5977 = vperm.xlu0 %5976, %v5076
          %v5978 = vpop.permute.xlu0 %5977
          %5980 = vset.pattern.permute.xlu0 4
          %5981 = vperm.xlu0 %5980, %v5077
          %v5982 = vpop.permute.xlu0 %5981
          %5984 = vset.pattern.permute.xlu0 4
          %5985 = vperm.xlu0 %5984, %v5078
          %v5986 = vpop.permute.xlu0 %5985
          %5988 = vset.pattern.permute.xlu0 4
          %5989 = vperm.xlu0 %5988, %v5079
          %v5990 = vpop.permute.xlu0 %5989
          %5992 = vset.pattern.permute.xlu0 4
          %5993 = vperm.xlu0 %5992, %v5080
          %v5994 = vpop.permute.xlu0 %5993
          %5996 = vset.pattern.permute.xlu0 4
          %5997 = vperm.xlu0 %5996, %v5081
          %v5998 = vpop.permute.xlu0 %5997
          %6000 = vset.pattern.permute.xlu0 4
          %6001 = vperm.xlu0 %6000, %v5082
          %v6002 = vpop.permute.xlu0 %6001
          %6004 = vset.pattern.permute.xlu0 4
          %6005 = vperm.xlu0 %6004, %v5083
          %v6006 = vpop.permute.xlu0 %6005
          %6008 = vset.pattern.permute.xlu0 4
          %6009 = vperm.xlu0 %6008, %v5084
          %v6010 = vpop.permute.xlu0 %6009
          %6012 = vset.pattern.permute.xlu0 4
          %6013 = vperm.xlu0 %6012, %v5085
          %v6014 = vpop.permute.xlu0 %6013
          %6016 = vset.pattern.permute.xlu0 4
          %6017 = vperm.xlu0 %6016, %v5086
          %v6018 = vpop.permute.xlu0 %6017
          %6020 = vset.pattern.permute.xlu0 4
          %6021 = vperm.xlu0 %6020, %v5087
          %v6022 = vpop.permute.xlu0 %6021
          %v6024 = vlaneseq
          %v6025 = vshrl.u32 %v6024, 7
          %v6026 = vsub.s32 4, %v6025
          %v6027 = vrot.slane %v5049, %v6026
          %v6028 = vmul.f32 %v5962, %v6027
          %v6029 = vmul.f32 %v5966, %v6027
          %v6030 = vmul.f32 %v5970, %v6027
          %v6031 = vmul.f32 %v5974, %v6027
          %v6032 = vmul.f32 %v5978, %v6027
          %v6033 = vmul.f32 %v5982, %v6027
          %v6034 = vmul.f32 %v5986, %v6027
          %v6035 = vmul.f32 %v5990, %v6027
          %v6036 = vmul.f32 %v5994, %v6027
          %v6037 = vmul.f32 %v5998, %v6027
          %v6038 = vmul.f32 %v6002, %v6027
          %v6039 = vmul.f32 %v6006, %v6027
          %v6040 = vmul.f32 %v6010, %v6027
          %v6041 = vmul.f32 %v6014, %v6027
          %v6042 = vmul.f32 %v6018, %v6027
          %v6043 = vmul.f32 %v6022, %v6027
          %v6044 = vlaneseq
          %v6045 = vshrl.u32 %v6044, 7
          %v6046 = vsub.s32 4, %v6045
          %v6047 = vrot.slane %v5051, %v6046
          %v6048 = vsub.f32 %v6028, %v6047
          %v6049 = vsub.f32 %v6029, %v6047
          %v6050 = vsub.f32 %v6030, %v6047
          %v6051 = vsub.f32 %v6031, %v6047
          %v6052 = vsub.f32 %v6032, %v6047
          %v6053 = vsub.f32 %v6033, %v6047
          %v6054 = vsub.f32 %v6034, %v6047
          %v6055 = vsub.f32 %v6035, %v6047
          %v6056 = vsub.f32 %v6036, %v6047
          %v6057 = vsub.f32 %v6037, %v6047
          %v6058 = vsub.f32 %v6038, %v6047
          %v6059 = vsub.f32 %v6039, %v6047
          %v6060 = vsub.f32 %v6040, %v6047
          %v6061 = vsub.f32 %v6041, %v6047
          %v6062 = vsub.f32 %v6042, %v6047
          %v6063 = vsub.f32 %v6043, %v6047
          %v6064 = vmul.f32 %v6048, 1.442695
          %v6065 = vpow.pop %v6064
          %v6066 = vmul.f32 %v6049, 1.442695
          %v6067 = vpow.pop %v6066
          %v6068 = vmul.f32 %v6050, 1.442695
          %v6069 = vpow.pop %v6068
          %v6070 = vmul.f32 %v6051, 1.442695
          %v6071 = vpow.pop %v6070
          %v6072 = vmul.f32 %v6052, 1.442695
          %v6073 = vpow.pop %v6072
          %v6074 = vmul.f32 %v6053, 1.442695
          %v6075 = vpow.pop %v6074
          %v6076 = vmul.f32 %v6054, 1.442695
          %v6077 = vpow.pop %v6076
          %v6078 = vmul.f32 %v6055, 1.442695
          %v6079 = vpow.pop %v6078
          %v6080 = vmul.f32 %v6056, 1.442695
          %v6081 = vpow.pop %v6080
          %v6082 = vmul.f32 %v6057, 1.442695
          %v6083 = vpow.pop %v6082
          %v6084 = vmul.f32 %v6058, 1.442695
          %v6085 = vpow.pop %v6084
          %v6086 = vmul.f32 %v6059, 1.442695
          %v6087 = vpow.pop %v6086
          %v6088 = vmul.f32 %v6060, 1.442695
          %v6089 = vpow.pop %v6088
          %v6090 = vmul.f32 %v6061, 1.442695
          %v6091 = vpow.pop %v6090
          %v6092 = vmul.f32 %v6062, 1.442695
          %v6093 = vpow.pop %v6092
          %v6094 = vmul.f32 %v6063, 1.442695
          %v6095 = vpow.pop %v6094
          %v6096 = vrot.slane %v5053, 4
          %v6098 = vsel %vm5240, %v6096, 1.0
          %6099 = vmatprep.subr.mxu0 0.0
          %6100 = vmatpush1.msra.mxu0 %v6065
          %6101 = vmatprep.subr.mxu0 0.0
          %6102 = vmatpush1.msra.mxu0 %v6067
          %6103 = vmatprep.subr.mxu0 0.0
          %6104 = vmatpush1.msra.mxu0 %v6069
          %6105 = vmatprep.subr.mxu0 0.0
          %6106 = vmatpush1.msra.mxu0 %v6071
          %6107 = vmatprep.subr.mxu0 0.0
          %6108 = vmatpush1.msra.mxu0 %v6073
          %6109 = vmatprep.subr.mxu0 0.0
          %6110 = vmatpush1.msra.mxu0 %v6075
          %6111 = vmatprep.subr.mxu0 0.0
          %6112 = vmatpush1.msra.mxu0 %v6077
          %6113 = vmatprep.subr.mxu0 0.0
          %6114 = vmatpush1.msra.mxu0 %v6079
          %6115 = vmatprep.subr.mxu0 0.0
          %6116 = vmatpush1.msra.mxu0 %v6081
          %6117 = vmatprep.subr.mxu0 0.0
          %6118 = vmatpush1.msra.mxu0 %v6083
          %6119 = vmatprep.subr.mxu0 0.0
          %6120 = vmatpush1.msra.mxu0 %v6085
          %6121 = vmatprep.subr.mxu0 0.0
          %6122 = vmatpush1.msra.mxu0 %v6087
          %6123 = vmatprep.subr.mxu0 0.0
          %6124 = vmatpush1.msra.mxu0 %v6089
          %6125 = vmatprep.subr.mxu0 0.0
          %6126 = vmatpush1.msra.mxu0 %v6091
          %6127 = vmatprep.subr.mxu0 0.0
          %6128 = vmatpush1.msra.mxu0 %v6093
          %6129 = vmatprep.subr.mxu0 0.0
          %6130 = vmatpush1.msra.mxu0 %v6095
          %6131 = vmatprep.subr.mxu0 0.0
          %6132 = vmatpush1.msra.mxu0 0.0
          %6133 = vmatprep.subr.mxu0 0.0
          %6134 = vmatpush1.msra.mxu0 0.0
          %6135 = vmatprep.subr.mxu0 0.0
          %6136 = vmatpush1.msra.mxu0 0.0
          %6137 = vmatprep.subr.mxu0 0.0
          %6138 = vmatpush1.msra.mxu0 0.0
          %6139 = vmatprep.subr.mxu0 0.0
          %6140 = vmatpush1.msra.mxu0 0.0
          %6141 = vmatprep.subr.mxu0 0.0
          %6142 = vmatpush1.msra.mxu0 0.0
          %6143 = vmatprep.subr.mxu0 0.0
          %6144 = vmatpush1.msra.mxu0 0.0
          %6145 = vmatprep.subr.mxu0 0.0
          %6146 = vmatpush1.msra.mxu0 0.0
          %6147 = vmatprep.subr.mxu0 0.0
          %6148 = vmatpush1.msra.mxu0 0.0
          %6149 = vmatprep.subr.mxu0 0.0
          %6150 = vmatpush1.msra.mxu0 0.0
          %6151 = vmatprep.subr.mxu0 0.0
          %6152 = vmatpush1.msra.mxu0 0.0
          %6153 = vmatprep.subr.mxu0 0.0
          %6154 = vmatpush1.msra.mxu0 0.0
          %6155 = vmatprep.subr.mxu0 0.0
          %6156 = vmatpush1.msra.mxu0 0.0
          %6157 = vmatprep.subr.mxu0 0.0
          %6158 = vmatpush1.msra.mxu0 0.0
          %6159 = vmatprep.subr.mxu0 0.0
          %6160 = vmatpush1.msra.mxu0 0.0
          %6161 = vmatprep.subr.mxu0 0.0
          %6162 = vmatpush1.msra.mxu0 0.0
          %6163 = vmatprep.mubr.f32.mxu0 0.0
          %6164 = vmatmul.mubr.f32.gmra.mrb[0].mxu0 %v6098
          %v6165 = vpop.f32.mrb[0].mxu0
          %v6166 = vadd.f32 0.0, %v6165
          %v6167 = vpop.f32.mrb[0].mxu0
          %6168 = vdwg.mxu0
          %v6169 = vrcp.pop %v6166
          %v6171 = vrot.slane %v6169, 1
          %v6173 = vmul.f32 %v6166, %v6171
          %6174 = vset.pattern.permute.xlu0 5
          %6175 = vperm.xlu0 %6174, %v5072
          %v6176 = vpop.permute.xlu0 %6175
          %6178 = vset.pattern.permute.xlu0 5
          %6179 = vperm.xlu0 %6178, %v5073
          %v6180 = vpop.permute.xlu0 %6179
          %6182 = vset.pattern.permute.xlu0 5
          %6183 = vperm.xlu0 %6182, %v5074
          %v6184 = vpop.permute.xlu0 %6183
          %6186 = vset.pattern.permute.xlu0 5
          %6187 = vperm.xlu0 %6186, %v5075
          %v6188 = vpop.permute.xlu0 %6187
          %6190 = vset.pattern.permute.xlu0 5
          %6191 = vperm.xlu0 %6190, %v5076
          %v6192 = vpop.permute.xlu0 %6191
          %6194 = vset.pattern.permute.xlu0 5
          %6195 = vperm.xlu0 %6194, %v5077
          %v6196 = vpop.permute.xlu0 %6195
          %6198 = vset.pattern.permute.xlu0 5
          %6199 = vperm.xlu0 %6198, %v5078
          %v6200 = vpop.permute.xlu0 %6199
          %6202 = vset.pattern.permute.xlu0 5
          %6203 = vperm.xlu0 %6202, %v5079
          %v6204 = vpop.permute.xlu0 %6203
          %6206 = vset.pattern.permute.xlu0 5
          %6207 = vperm.xlu0 %6206, %v5080
          %v6208 = vpop.permute.xlu0 %6207
          %6210 = vset.pattern.permute.xlu0 5
          %6211 = vperm.xlu0 %6210, %v5081
          %v6212 = vpop.permute.xlu0 %6211
          %6214 = vset.pattern.permute.xlu0 5
          %6215 = vperm.xlu0 %6214, %v5082
          %v6216 = vpop.permute.xlu0 %6215
          %6218 = vset.pattern.permute.xlu0 5
          %6219 = vperm.xlu0 %6218, %v5083
          %v6220 = vpop.permute.xlu0 %6219
          %6222 = vset.pattern.permute.xlu0 5
          %6223 = vperm.xlu0 %6222, %v5084
          %v6224 = vpop.permute.xlu0 %6223
          %6226 = vset.pattern.permute.xlu0 5
          %6227 = vperm.xlu0 %6226, %v5085
          %v6228 = vpop.permute.xlu0 %6227
          %6230 = vset.pattern.permute.xlu0 5
          %6231 = vperm.xlu0 %6230, %v5086
          %v6232 = vpop.permute.xlu0 %6231
          %6234 = vset.pattern.permute.xlu0 5
          %6235 = vperm.xlu0 %6234, %v5087
          %v6236 = vpop.permute.xlu0 %6235
          %v6238 = vlaneseq
          %v6239 = vshrl.u32 %v6238, 7
          %v6240 = vsub.s32 5, %v6239
          %v6241 = vrot.slane %v5049, %v6240
          %v6242 = vmul.f32 %v6176, %v6241
          %v6243 = vmul.f32 %v6180, %v6241
          %v6244 = vmul.f32 %v6184, %v6241
          %v6245 = vmul.f32 %v6188, %v6241
          %v6246 = vmul.f32 %v6192, %v6241
          %v6247 = vmul.f32 %v6196, %v6241
          %v6248 = vmul.f32 %v6200, %v6241
          %v6249 = vmul.f32 %v6204, %v6241
          %v6250 = vmul.f32 %v6208, %v6241
          %v6251 = vmul.f32 %v6212, %v6241
          %v6252 = vmul.f32 %v6216, %v6241
          %v6253 = vmul.f32 %v6220, %v6241
          %v6254 = vmul.f32 %v6224, %v6241
          %v6255 = vmul.f32 %v6228, %v6241
          %v6256 = vmul.f32 %v6232, %v6241
          %v6257 = vmul.f32 %v6236, %v6241
          %v6258 = vlaneseq
          %v6259 = vshrl.u32 %v6258, 7
          %v6260 = vsub.s32 5, %v6259
          %v6261 = vrot.slane %v5051, %v6260
          %v6262 = vsub.f32 %v6242, %v6261
          %v6263 = vsub.f32 %v6243, %v6261
          %v6264 = vsub.f32 %v6244, %v6261
          %v6265 = vsub.f32 %v6245, %v6261
          %v6266 = vsub.f32 %v6246, %v6261
          %v6267 = vsub.f32 %v6247, %v6261
          %v6268 = vsub.f32 %v6248, %v6261
          %v6269 = vsub.f32 %v6249, %v6261
          %v6270 = vsub.f32 %v6250, %v6261
          %v6271 = vsub.f32 %v6251, %v6261
          %v6272 = vsub.f32 %v6252, %v6261
          %v6273 = vsub.f32 %v6253, %v6261
          %v6274 = vsub.f32 %v6254, %v6261
          %v6275 = vsub.f32 %v6255, %v6261
          %v6276 = vsub.f32 %v6256, %v6261
          %v6277 = vsub.f32 %v6257, %v6261
          %v6278 = vmul.f32 %v6262, 1.442695
          %v6279 = vpow.pop %v6278
          %v6280 = vmul.f32 %v6263, 1.442695
          %v6281 = vpow.pop %v6280
          %v6282 = vmul.f32 %v6264, 1.442695
          %v6283 = vpow.pop %v6282
          %v6284 = vmul.f32 %v6265, 1.442695
          %v6285 = vpow.pop %v6284
          %v6286 = vmul.f32 %v6266, 1.442695
          %v6287 = vpow.pop %v6286
          %v6288 = vmul.f32 %v6267, 1.442695
          %v6289 = vpow.pop %v6288
          %v6290 = vmul.f32 %v6268, 1.442695
          %v6291 = vpow.pop %v6290
          %v6292 = vmul.f32 %v6269, 1.442695
          %v6293 = vpow.pop %v6292
          %v6294 = vmul.f32 %v6270, 1.442695
          %v6295 = vpow.pop %v6294
          %v6296 = vmul.f32 %v6271, 1.442695
          %v6297 = vpow.pop %v6296
          %v6298 = vmul.f32 %v6272, 1.442695
          %v6299 = vpow.pop %v6298
          %v6300 = vmul.f32 %v6273, 1.442695
          %v6301 = vpow.pop %v6300
          %v6302 = vmul.f32 %v6274, 1.442695
          %v6303 = vpow.pop %v6302
          %v6304 = vmul.f32 %v6275, 1.442695
          %v6305 = vpow.pop %v6304
          %v6306 = vmul.f32 %v6276, 1.442695
          %v6307 = vpow.pop %v6306
          %v6308 = vmul.f32 %v6277, 1.442695
          %v6309 = vpow.pop %v6308
          %v6310 = vrot.slane %v5053, 5
          %v6312 = vsel %vm5240, %v6310, 1.0
          %6313 = vmatprep.subr.mxu0 0.0
          %6314 = vmatpush1.msra.mxu0 %v6279
          %6315 = vmatprep.subr.mxu0 0.0
          %6316 = vmatpush1.msra.mxu0 %v6281
          %6317 = vmatprep.subr.mxu0 0.0
          %6318 = vmatpush1.msra.mxu0 %v6283
          %6319 = vmatprep.subr.mxu0 0.0
          %6320 = vmatpush1.msra.mxu0 %v6285
          %6321 = vmatprep.subr.mxu0 0.0
          %6322 = vmatpush1.msra.mxu0 %v6287
          %6323 = vmatprep.subr.mxu0 0.0
          %6324 = vmatpush1.msra.mxu0 %v6289
          %6325 = vmatprep.subr.mxu0 0.0
          %6326 = vmatpush1.msra.mxu0 %v6291
          %6327 = vmatprep.subr.mxu0 0.0
          %6328 = vmatpush1.msra.mxu0 %v6293
          %6329 = vmatprep.subr.mxu0 0.0
          %6330 = vmatpush1.msra.mxu0 %v6295
          %6331 = vmatprep.subr.mxu0 0.0
          %6332 = vmatpush1.msra.mxu0 %v6297
          %6333 = vmatprep.subr.mxu0 0.0
          %6334 = vmatpush1.msra.mxu0 %v6299
          %6335 = vmatprep.subr.mxu0 0.0
          %6336 = vmatpush1.msra.mxu0 %v6301
          %6337 = vmatprep.subr.mxu0 0.0
          %6338 = vmatpush1.msra.mxu0 %v6303
          %6339 = vmatprep.subr.mxu0 0.0
          %6340 = vmatpush1.msra.mxu0 %v6305
          %6341 = vmatprep.subr.mxu0 0.0
          %6342 = vmatpush1.msra.mxu0 %v6307
          %6343 = vmatprep.subr.mxu0 0.0
          %6344 = vmatpush1.msra.mxu0 %v6309
          %6345 = vmatprep.subr.mxu0 0.0
          %6346 = vmatpush1.msra.mxu0 0.0
          %6347 = vmatprep.subr.mxu0 0.0
          %6348 = vmatpush1.msra.mxu0 0.0
          %6349 = vmatprep.subr.mxu0 0.0
          %6350 = vmatpush1.msra.mxu0 0.0
          %6351 = vmatprep.subr.mxu0 0.0
          %6352 = vmatpush1.msra.mxu0 0.0
          %6353 = vmatprep.subr.mxu0 0.0
          %6354 = vmatpush1.msra.mxu0 0.0
          %6355 = vmatprep.subr.mxu0 0.0
          %6356 = vmatpush1.msra.mxu0 0.0
          %6357 = vmatprep.subr.mxu0 0.0
          %6358 = vmatpush1.msra.mxu0 0.0
          %6359 = vmatprep.subr.mxu0 0.0
          %6360 = vmatpush1.msra.mxu0 0.0
          %6361 = vmatprep.subr.mxu0 0.0
          %6362 = vmatpush1.msra.mxu0 0.0
          %6363 = vmatprep.subr.mxu0 0.0
          %6364 = vmatpush1.msra.mxu0 0.0
          %6365 = vmatprep.subr.mxu0 0.0
          %6366 = vmatpush1.msra.mxu0 0.0
          %6367 = vmatprep.subr.mxu0 0.0
          %6368 = vmatpush1.msra.mxu0 0.0
          %6369 = vmatprep.subr.mxu0 0.0
          %6370 = vmatpush1.msra.mxu0 0.0
          %6371 = vmatprep.subr.mxu0 0.0
          %6372 = vmatpush1.msra.mxu0 0.0
          %6373 = vmatprep.subr.mxu0 0.0
          %6374 = vmatpush1.msra.mxu0 0.0
          %6375 = vmatprep.subr.mxu0 0.0
          %6376 = vmatpush1.msra.mxu0 0.0
          %6377 = vmatprep.mubr.f32.mxu0 0.0
          %6378 = vmatmul.mubr.f32.gmra.mrb[0].mxu0 %v6312
          %v6379 = vpop.f32.mrb[0].mxu0
          %v6380 = vadd.f32 0.0, %v6379
          %v6381 = vpop.f32.mrb[0].mxu0
          %6382 = vdwg.mxu0
          %v6383 = vrcp.pop %v6380
          %v6385 = vrot.slane %v6383, 1
          %v6387 = vmul.f32 %v6380, %v6385
          %6388 = vset.pattern.permute.xlu0 6
          %6389 = vperm.xlu0 %6388, %v5072
          %v6390 = vpop.permute.xlu0 %6389
          %6392 = vset.pattern.permute.xlu0 6
          %6393 = vperm.xlu0 %6392, %v5073
          %v6394 = vpop.permute.xlu0 %6393
          %6396 = vset.pattern.permute.xlu0 6
          %6397 = vperm.xlu0 %6396, %v5074
          %v6398 = vpop.permute.xlu0 %6397
          %6400 = vset.pattern.permute.xlu0 6
          %6401 = vperm.xlu0 %6400, %v5075
          %v6402 = vpop.permute.xlu0 %6401
          %6404 = vset.pattern.permute.xlu0 6
          %6405 = vperm.xlu0 %6404, %v5076
          %v6406 = vpop.permute.xlu0 %6405
          %6408 = vset.pattern.permute.xlu0 6
          %6409 = vperm.xlu0 %6408, %v5077
          %v6410 = vpop.permute.xlu0 %6409
          %6412 = vset.pattern.permute.xlu0 6
          %6413 = vperm.xlu0 %6412, %v5078
          %v6414 = vpop.permute.xlu0 %6413
          %6416 = vset.pattern.permute.xlu0 6
          %6417 = vperm.xlu0 %6416, %v5079
          %v6418 = vpop.permute.xlu0 %6417
          %6420 = vset.pattern.permute.xlu0 6
          %6421 = vperm.xlu0 %6420, %v5080
          %v6422 = vpop.permute.xlu0 %6421
          %6424 = vset.pattern.permute.xlu0 6
          %6425 = vperm.xlu0 %6424, %v5081
          %v6426 = vpop.permute.xlu0 %6425
          %6428 = vset.pattern.permute.xlu0 6
          %6429 = vperm.xlu0 %6428, %v5082
          %v6430 = vpop.permute.xlu0 %6429
          %6432 = vset.pattern.permute.xlu0 6
          %6433 = vperm.xlu0 %6432, %v5083
          %v6434 = vpop.permute.xlu0 %6433
          %6436 = vset.pattern.permute.xlu0 6
          %6437 = vperm.xlu0 %6436, %v5084
          %v6438 = vpop.permute.xlu0 %6437
          %6440 = vset.pattern.permute.xlu0 6
          %6441 = vperm.xlu0 %6440, %v5085
          %v6442 = vpop.permute.xlu0 %6441
          %6444 = vset.pattern.permute.xlu0 6
          %6445 = vperm.xlu0 %6444, %v5086
          %v6446 = vpop.permute.xlu0 %6445
          %6448 = vset.pattern.permute.xlu0 6
          %6449 = vperm.xlu0 %6448, %v5087
          %v6450 = vpop.permute.xlu0 %6449
          %v6452 = vlaneseq
          %v6453 = vshrl.u32 %v6452, 7
          %v6454 = vsub.s32 6, %v6453
          %v6455 = vrot.slane %v5049, %v6454
          %v6456 = vmul.f32 %v6390, %v6455
          %v6457 = vmul.f32 %v6394, %v6455
          %v6458 = vmul.f32 %v6398, %v6455
          %v6459 = vmul.f32 %v6402, %v6455
          %v6460 = vmul.f32 %v6406, %v6455
          %v6461 = vmul.f32 %v6410, %v6455
          %v6462 = vmul.f32 %v6414, %v6455
          %v6463 = vmul.f32 %v6418, %v6455
          %v6464 = vmul.f32 %v6422, %v6455
          %v6465 = vmul.f32 %v6426, %v6455
          %v6466 = vmul.f32 %v6430, %v6455
          %v6467 = vmul.f32 %v6434, %v6455
          %v6468 = vmul.f32 %v6438, %v6455
          %v6469 = vmul.f32 %v6442, %v6455
          %v6470 = vmul.f32 %v6446, %v6455
          %v6471 = vmul.f32 %v6450, %v6455
          %v6472 = vlaneseq
          %v6473 = vshrl.u32 %v6472, 7
          %v6474 = vsub.s32 6, %v6473
          %v6475 = vrot.slane %v5051, %v6474
          %v6476 = vsub.f32 %v6456, %v6475
          %v6477 = vsub.f32 %v6457, %v6475
          %v6478 = vsub.f32 %v6458, %v6475
          %v6479 = vsub.f32 %v6459, %v6475
          %v6480 = vsub.f32 %v6460, %v6475
          %v6481 = vsub.f32 %v6461, %v6475
          %v6482 = vsub.f32 %v6462, %v6475
          %v6483 = vsub.f32 %v6463, %v6475
          %v6484 = vsub.f32 %v6464, %v6475
          %v6485 = vsub.f32 %v6465, %v6475
          %v6486 = vsub.f32 %v6466, %v6475
          %v6487 = vsub.f32 %v6467, %v6475
          %v6488 = vsub.f32 %v6468, %v6475
          %v6489 = vsub.f32 %v6469, %v6475
          %v6490 = vsub.f32 %v6470, %v6475
          %v6491 = vsub.f32 %v6471, %v6475
          %v6492 = vmul.f32 %v6476, 1.442695
          %v6493 = vpow.pop %v6492
          %v6494 = vmul.f32 %v6477, 1.442695
          %v6495 = vpow.pop %v6494
          %v6496 = vmul.f32 %v6478, 1.442695
          %v6497 = vpow.pop %v6496
          %v6498 = vmul.f32 %v6479, 1.442695
          %v6499 = vpow.pop %v6498
          %v6500 = vmul.f32 %v6480, 1.442695
          %v6501 = vpow.pop %v6500
          %v6502 = vmul.f32 %v6481, 1.442695
          %v6503 = vpow.pop %v6502
          %v6504 = vmul.f32 %v6482, 1.442695
          %v6505 = vpow.pop %v6504
          %v6506 = vmul.f32 %v6483, 1.442695
          %v6507 = vpow.pop %v6506
          %v6508 = vmul.f32 %v6484, 1.442695
          %v6509 = vpow.pop %v6508
          %v6510 = vmul.f32 %v6485, 1.442695
          %v6511 = vpow.pop %v6510
          %v6512 = vmul.f32 %v6486, 1.442695
          %v6513 = vpow.pop %v6512
          %v6514 = vmul.f32 %v6487, 1.442695
          %v6515 = vpow.pop %v6514
          %v6516 = vmul.f32 %v6488, 1.442695
          %v6517 = vpow.pop %v6516
          %v6518 = vmul.f32 %v6489, 1.442695
          %v6519 = vpow.pop %v6518
          %v6520 = vmul.f32 %v6490, 1.442695
          %v6521 = vpow.pop %v6520
          %v6522 = vmul.f32 %v6491, 1.442695
          %v6523 = vpow.pop %v6522
          %v6524 = vrot.slane %v5053, 6
          %v6526 = vsel %vm5240, %v6524, 1.0
          %6527 = vmatprep.subr.mxu0 0.0
          %6528 = vmatpush1.msra.mxu0 %v6493
          %6529 = vmatprep.subr.mxu0 0.0
          %6530 = vmatpush1.msra.mxu0 %v6495
          %6531 = vmatprep.subr.mxu0 0.0
          %6532 = vmatpush1.msra.mxu0 %v6497
          %6533 = vmatprep.subr.mxu0 0.0
          %6534 = vmatpush1.msra.mxu0 %v6499
          %6535 = vmatprep.subr.mxu0 0.0
          %6536 = vmatpush1.msra.mxu0 %v6501
          %6537 = vmatprep.subr.mxu0 0.0
          %6538 = vmatpush1.msra.mxu0 %v6503
          %6539 = vmatprep.subr.mxu0 0.0
          %6540 = vmatpush1.msra.mxu0 %v6505
          %6541 = vmatprep.subr.mxu0 0.0
          %6542 = vmatpush1.msra.mxu0 %v6507
          %6543 = vmatprep.subr.mxu0 0.0
          %6544 = vmatpush1.msra.mxu0 %v6509
          %6545 = vmatprep.subr.mxu0 0.0
          %6546 = vmatpush1.msra.mxu0 %v6511
          %6547 = vmatprep.subr.mxu0 0.0
          %6548 = vmatpush1.msra.mxu0 %v6513
          %6549 = vmatprep.subr.mxu0 0.0
          %6550 = vmatpush1.msra.mxu0 %v6515
          %6551 = vmatprep.subr.mxu0 0.0
          %6552 = vmatpush1.msra.mxu0 %v6517
          %6553 = vmatprep.subr.mxu0 0.0
          %6554 = vmatpush1.msra.mxu0 %v6519
          %6555 = vmatprep.subr.mxu0 0.0
          %6556 = vmatpush1.msra.mxu0 %v6521
          %6557 = vmatprep.subr.mxu0 0.0
          %6558 = vmatpush1.msra.mxu0 %v6523
          %6559 = vmatprep.subr.mxu0 0.0
          %6560 = vmatpush1.msra.mxu0 0.0
          %6561 = vmatprep.subr.mxu0 0.0
          %6562 = vmatpush1.msra.mxu0 0.0
          %6563 = vmatprep.subr.mxu0 0.0
          %6564 = vmatpush1.msra.mxu0 0.0
          %6565 = vmatprep.subr.mxu0 0.0
          %6566 = vmatpush1.msra.mxu0 0.0
          %6567 = vmatprep.subr.mxu0 0.0
          %6568 = vmatpush1.msra.mxu0 0.0
          %6569 = vmatprep.subr.mxu0 0.0
          %6570 = vmatpush1.msra.mxu0 0.0
          %6571 = vmatprep.subr.mxu0 0.0
          %6572 = vmatpush1.msra.mxu0 0.0
          %6573 = vmatprep.subr.mxu0 0.0
          %6574 = vmatpush1.msra.mxu0 0.0
          %6575 = vmatprep.subr.mxu0 0.0
          %6576 = vmatpush1.msra.mxu0 0.0
          %6577 = vmatprep.subr.mxu0 0.0
          %6578 = vmatpush1.msra.mxu0 0.0
          %6579 = vmatprep.subr.mxu0 0.0
          %6580 = vmatpush1.msra.mxu0 0.0
          %6581 = vmatprep.subr.mxu0 0.0
          %6582 = vmatpush1.msra.mxu0 0.0
          %6583 = vmatprep.subr.mxu0 0.0
          %6584 = vmatpush1.msra.mxu0 0.0
          %6585 = vmatprep.subr.mxu0 0.0
          %6586 = vmatpush1.msra.mxu0 0.0
          %6587 = vmatprep.subr.mxu0 0.0
          %6588 = vmatpush1.msra.mxu0 0.0
          %6589 = vmatprep.subr.mxu0 0.0
          %6590 = vmatpush1.msra.mxu0 0.0
          %6591 = vmatprep.mubr.f32.mxu0 0.0
          %6592 = vmatmul.mubr.f32.gmra.mrb[0].mxu0 %v6526
          %v6593 = vpop.f32.mrb[0].mxu0
          %v6594 = vadd.f32 0.0, %v6593
          %v6595 = vpop.f32.mrb[0].mxu0
          %6596 = vdwg.mxu0
          %v6597 = vrcp.pop %v6594
          %v6599 = vrot.slane %v6597, 1
          %v6601 = vmul.f32 %v6594, %v6599
          %6602 = vset.pattern.permute.xlu0 7
          %6603 = vperm.xlu0 %6602, %v5072
          %v6604 = vpop.permute.xlu0 %6603
          %6606 = vset.pattern.permute.xlu0 7
          %6607 = vperm.xlu0 %6606, %v5073
          %v6608 = vpop.permute.xlu0 %6607
          %6610 = vset.pattern.permute.xlu0 7
          %6611 = vperm.xlu0 %6610, %v5074
          %v6612 = vpop.permute.xlu0 %6611
          %6614 = vset.pattern.permute.xlu0 7
          %6615 = vperm.xlu0 %6614, %v5075
          %v6616 = vpop.permute.xlu0 %6615
          %6618 = vset.pattern.permute.xlu0 7
          %6619 = vperm.xlu0 %6618, %v5076
          %v6620 = vpop.permute.xlu0 %6619
          %6622 = vset.pattern.permute.xlu0 7
          %6623 = vperm.xlu0 %6622, %v5077
          %v6624 = vpop.permute.xlu0 %6623
          %6626 = vset.pattern.permute.xlu0 7
          %6627 = vperm.xlu0 %6626, %v5078
          %v6628 = vpop.permute.xlu0 %6627
          %6630 = vset.pattern.permute.xlu0 7
          %6631 = vperm.xlu0 %6630, %v5079
          %v6632 = vpop.permute.xlu0 %6631
          %6634 = vset.pattern.permute.xlu0 7
          %6635 = vperm.xlu0 %6634, %v5080
          %v6636 = vpop.permute.xlu0 %6635
          %6638 = vset.pattern.permute.xlu0 7
          %6639 = vperm.xlu0 %6638, %v5081
          %v6640 = vpop.permute.xlu0 %6639
          %6642 = vset.pattern.permute.xlu0 7
          %6643 = vperm.xlu0 %6642, %v5082
          %v6644 = vpop.permute.xlu0 %6643
          %6646 = vset.pattern.permute.xlu0 7
          %6647 = vperm.xlu0 %6646, %v5083
          %v6648 = vpop.permute.xlu0 %6647
          %6650 = vset.pattern.permute.xlu0 7
          %6651 = vperm.xlu0 %6650, %v5084
          %v6652 = vpop.permute.xlu0 %6651
          %6654 = vset.pattern.permute.xlu0 7
          %6655 = vperm.xlu0 %6654, %v5085
          %v6656 = vpop.permute.xlu0 %6655
          %6658 = vset.pattern.permute.xlu0 7
          %6659 = vperm.xlu0 %6658, %v5086
          %v6660 = vpop.permute.xlu0 %6659
          %6662 = vset.pattern.permute.xlu0 7
          %6663 = vperm.xlu0 %6662, %v5087
          %v6664 = vpop.permute.xlu0 %6663
          %v6666 = vlaneseq
          %v6667 = vshrl.u32 %v6666, 7
          %v6668 = vsub.s32 7, %v6667
          %v6669 = vrot.slane %v5049, %v6668
          %v6670 = vmul.f32 %v6604, %v6669
          %v6671 = vmul.f32 %v6608, %v6669
          %v6672 = vmul.f32 %v6612, %v6669
          %v6673 = vmul.f32 %v6616, %v6669
          %v6674 = vmul.f32 %v6620, %v6669
          %v6675 = vmul.f32 %v6624, %v6669
          %v6676 = vmul.f32 %v6628, %v6669
          %v6677 = vmul.f32 %v6632, %v6669
          %v6678 = vmul.f32 %v6636, %v6669
          %v6679 = vmul.f32 %v6640, %v6669
          %v6680 = vmul.f32 %v6644, %v6669
          %v6681 = vmul.f32 %v6648, %v6669
          %v6682 = vmul.f32 %v6652, %v6669
          %v6683 = vmul.f32 %v6656, %v6669
          %v6684 = vmul.f32 %v6660, %v6669
          %v6685 = vmul.f32 %v6664, %v6669
          %v6686 = vlaneseq
          %v6687 = vshrl.u32 %v6686, 7
          %v6688 = vsub.s32 7, %v6687
          %v6689 = vrot.slane %v5051, %v6688
          %v6690 = vsub.f32 %v6670, %v6689
          %v6691 = vsub.f32 %v6671, %v6689
          %v6692 = vsub.f32 %v6672, %v6689
          %v6693 = vsub.f32 %v6673, %v6689
          %v6694 = vsub.f32 %v6674, %v6689
          %v6695 = vsub.f32 %v6675, %v6689
          %v6696 = vsub.f32 %v6676, %v6689
          %v6697 = vsub.f32 %v6677, %v6689
          %v6698 = vsub.f32 %v6678, %v6689
          %v6699 = vsub.f32 %v6679, %v6689
          %v6700 = vsub.f32 %v6680, %v6689
          %v6701 = vsub.f32 %v6681, %v6689
          %v6702 = vsub.f32 %v6682, %v6689
          %v6703 = vsub.f32 %v6683, %v6689
          %v6704 = vsub.f32 %v6684, %v6689
          %v6705 = vsub.f32 %v6685, %v6689
          %v6706 = vmul.f32 %v6690, 1.442695
          %v6707 = vpow.pop %v6706
          %v6708 = vmul.f32 %v6691, 1.442695
          %v6709 = vpow.pop %v6708
          %v6710 = vmul.f32 %v6692, 1.442695
          %v6711 = vpow.pop %v6710
          %v6712 = vmul.f32 %v6693, 1.442695
          %v6713 = vpow.pop %v6712
          %v6714 = vmul.f32 %v6694, 1.442695
          %v6715 = vpow.pop %v6714
          %v6716 = vmul.f32 %v6695, 1.442695
          %v6717 = vpow.pop %v6716
          %v6718 = vmul.f32 %v6696, 1.442695
          %v6719 = vpow.pop %v6718
          %v6720 = vmul.f32 %v6697, 1.442695
          %v6721 = vpow.pop %v6720
          %v6722 = vmul.f32 %v6698, 1.442695
          %v6723 = vpow.pop %v6722
          %v6724 = vmul.f32 %v6699, 1.442695
          %v6725 = vpow.pop %v6724
          %v6726 = vmul.f32 %v6700, 1.442695
          %v6727 = vpow.pop %v6726
          %v6728 = vmul.f32 %v6701, 1.442695
          %v6729 = vpow.pop %v6728
          %v6730 = vmul.f32 %v6702, 1.442695
          %v6731 = vpow.pop %v6730
          %v6732 = vmul.f32 %v6703, 1.442695
          %v6733 = vpow.pop %v6732
          %v6734 = vmul.f32 %v6704, 1.442695
          %v6735 = vpow.pop %v6734
          %v6736 = vmul.f32 %v6705, 1.442695
          %v6737 = vpow.pop %v6736
          %v6738 = vrot.slane %v5053, 7
          %v6740 = vsel %vm5240, %v6738, 1.0
          %6741 = vmatprep.subr.mxu0 0.0
          %6742 = vmatpush1.msra.mxu0 %v6707
          %6743 = vmatprep.subr.mxu0 0.0
          %6744 = vmatpush1.msra.mxu0 %v6709
          %6745 = vmatprep.subr.mxu0 0.0
          %6746 = vmatpush1.msra.mxu0 %v6711
          %6747 = vmatprep.subr.mxu0 0.0
          %6748 = vmatpush1.msra.mxu0 %v6713
          %6749 = vmatprep.subr.mxu0 0.0
          %6750 = vmatpush1.msra.mxu0 %v6715
          %6751 = vmatprep.subr.mxu0 0.0
          %6752 = vmatpush1.msra.mxu0 %v6717
          %6753 = vmatprep.subr.mxu0 0.0
          %6754 = vmatpush1.msra.mxu0 %v6719
          %6755 = vmatprep.subr.mxu0 0.0
          %6756 = vmatpush1.msra.mxu0 %v6721
          %6757 = vmatprep.subr.mxu0 0.0
          %6758 = vmatpush1.msra.mxu0 %v6723
          %6759 = vmatprep.subr.mxu0 0.0
          %6760 = vmatpush1.msra.mxu0 %v6725
          %6761 = vmatprep.subr.mxu0 0.0
          %6762 = vmatpush1.msra.mxu0 %v6727
          %6763 = vmatprep.subr.mxu0 0.0
          %6764 = vmatpush1.msra.mxu0 %v6729
          %6765 = vmatprep.subr.mxu0 0.0
          %6766 = vmatpush1.msra.mxu0 %v6731
          %6767 = vmatprep.subr.mxu0 0.0
          %6768 = vmatpush1.msra.mxu0 %v6733
          %6769 = vmatprep.subr.mxu0 0.0
          %6770 = vmatpush1.msra.mxu0 %v6735
          %6771 = vmatprep.subr.mxu0 0.0
          %6772 = vmatpush1.msra.mxu0 %v6737
          %6773 = vmatprep.subr.mxu0 0.0
          %6774 = vmatpush1.msra.mxu0 0.0
          %6775 = vmatprep.subr.mxu0 0.0
          %6776 = vmatpush1.msra.mxu0 0.0
          %6777 = vmatprep.subr.mxu0 0.0
          %6778 = vmatpush1.msra.mxu0 0.0
          %6779 = vmatprep.subr.mxu0 0.0
          %6780 = vmatpush1.msra.mxu0 0.0
          %6781 = vmatprep.subr.mxu0 0.0
          %6782 = vmatpush1.msra.mxu0 0.0
          %6783 = vmatprep.subr.mxu0 0.0
          %6784 = vmatpush1.msra.mxu0 0.0
          %6785 = vmatprep.subr.mxu0 0.0
          %6786 = vmatpush1.msra.mxu0 0.0
          %6787 = vmatprep.subr.mxu0 0.0
          %6788 = vmatpush1.msra.mxu0 0.0
          %6789 = vmatprep.subr.mxu0 0.0
          %6790 = vmatpush1.msra.mxu0 0.0
          %6791 = vmatprep.subr.mxu0 0.0
          %6792 = vmatpush1.msra.mxu0 0.0
          %6793 = vmatprep.subr.mxu0 0.0
          %6794 = vmatpush1.msra.mxu0 0.0
          %6795 = vmatprep.subr.mxu0 0.0
          %6796 = vmatpush1.msra.mxu0 0.0
          %6797 = vmatprep.subr.mxu0 0.0
          %6798 = vmatpush1.msra.mxu0 0.0
          %6799 = vmatprep.subr.mxu0 0.0
          %6800 = vmatpush1.msra.mxu0 0.0
          %6801 = vmatprep.subr.mxu0 0.0
          %6802 = vmatpush1.msra.mxu0 0.0
          %6803 = vmatprep.subr.mxu0 0.0
          %6804 = vmatpush1.msra.mxu0 0.0
          %6805 = vmatprep.mubr.f32.mxu0 0.0
          %6806 = vmatmul.mubr.f32.gmra.mrb[0].mxu0 %v6740
          %v6807 = vpop.f32.mrb[0].mxu0
          %v6808 = vadd.f32 0.0, %v6807
          %v6809 = vpop.f32.mrb[0].mxu0
          %6810 = vdwg.mxu0
          %v6811 = vrcp.pop %v6808
          %v6813 = vrot.slane %v6811, 1
          %v6815 = vmul.f32 %v6808, %v6813
          %v6817 = vrot.slane %v5531, 7
          %v6820 = vrot.slane %v5745, 6
          %v6823 = vrot.slane %v5959, 5
          %v6826 = vrot.slane %v6173, 4
          %v6829 = vrot.slane %v6387, 3
          %v6832 = vrot.slane %v6601, 2
          %v6835 = vrot.slane %v6815, 1
          %v6837 = vsel %vm5240, %v5316, %v6817
          %vm6838 = vcmask 1041408
          %v6839 = vsel %vm6838, %v6837, %v6820
          %vm6840 = vcmask 1042432
          %v6841 = vsel %vm6840, %v6839, %v6823
          %vm6842 = vcmask 1043456
          %v6843 = vsel %vm6842, %v6841, %v6826
          %vm6844 = vcmask 1044480
          %v6845 = vsel %vm6844, %v6843, %v6829
          %vm6846 = vcmask 1045504
          %v6847 = vsel %vm6846, %v6845, %v6832
          %vm6848 = vcmask 1046528
          %v6849 = vsel %vm6848, %v6847, %v6835
          %s6850 = scalar_lea.vmem [#allocation6], %s5047
          %6851 = vst [vmem:[%s6850] sm:$0xff] %v6849
        $region99: #{tpu_custom_call.1} parent=55 // loop_footer
          %s5046 = sadd.s32 1, %s5042
        $region100: #{tpu_custom_call.1} parent=55 // loop_footer_branch
          %5041 = sbr.rel target = $region96
        $region101: #{tpu_custom_call.1} parent=55 // loop_exit
          _
        %v6852 = vld [vmem:[#allocation6] sm:$0xff]
        %v6853 = vld [vmem:[#allocation6 + $0x8] sm:$0xff]
        %v6854 = vld [vmem:[#allocation16] sm:$0xff]
        %v6855 = vld [vmem:[#allocation16 + $0x8] sm:$0xff]
        %v6856 = vld [vmem:[#allocation16 + $0x10] sm:$0xff]
        %v6857 = vld [vmem:[#allocation16 + $0x18] sm:$0xff]
        %v6858 = vld [vmem:[#allocation16 + $0x20] sm:$0xff]
        %v6859 = vld [vmem:[#allocation16 + $0x28] sm:$0xff]
        %v6860 = vld [vmem:[#allocation16 + $0x30] sm:$0xff]
        %v6861 = vld [vmem:[#allocation16 + $0x38] sm:$0xff]
        %v6862 = vld [vmem:[#allocation16 + $0x40] sm:$0xff]
        %v6863 = vld [vmem:[#allocation16 + $0x48] sm:$0xff]
        %v6864 = vld [vmem:[#allocation16 + $0x50] sm:$0xff]
        %v6865 = vld [vmem:[#allocation16 + $0x58] sm:$0xff]
        %v6866 = vld [vmem:[#allocation16 + $0x60] sm:$0xff]
        %v6867 = vld [vmem:[#allocation16 + $0x68] sm:$0xff]
        %v6868 = vld [vmem:[#allocation16 + $0x70] sm:$0xff]
        %v6869 = vld [vmem:[#allocation16 + $0x78] sm:$0xff]
        %v6870 = vld [vmem:[%s8] sm:$0x1]
        %v6872 = vlaneseq
        %v6873 = vshrl.u32 %v6872, 7
        %v6874 = vsub.s32 0, %v6873
        %v6875 = vrot.slane %v6870, %v6874
        %6877 = vmatprep.subr.mxu0 0.0
        %6878 = vmatpush1.xpose.msra.mxu0 %v6854
        %6879 = vmatprep.subr.mxu0 0.0
        %6880 = vmatpush1.xpose.msra.mxu0 %v6855
        %6881 = vmatprep.subr.mxu0 0.0
        %6882 = vmatpush1.xpose.msra.mxu0 %v6856
        %6883 = vmatprep.subr.mxu0 0.0
        %6884 = vmatpush1.xpose.msra.mxu0 %v6857
        %6885 = vmatprep.subr.mxu0 0.0
        %6886 = vmatpush1.xpose.msra.mxu0 %v6858
        %6887 = vmatprep.subr.mxu0 0.0
        %6888 = vmatpush1.xpose.msra.mxu0 %v6859
        %6889 = vmatprep.subr.mxu0 0.0
        %6890 = vmatpush1.xpose.msra.mxu0 %v6860
        %6891 = vmatprep.subr.mxu0 0.0
        %6892 = vmatpush1.xpose.msra.mxu0 %v6861
        %6893 = vmatprep.subr.mxu0 0.0
        %6894 = vmatpush1.xpose.msra.mxu0 %v6862
        %6895 = vmatprep.subr.mxu0 0.0
        %6896 = vmatpush1.xpose.msra.mxu0 %v6863
        %6897 = vmatprep.subr.mxu0 0.0
        %6898 = vmatpush1.xpose.msra.mxu0 %v6864
        %6899 = vmatprep.subr.mxu0 0.0
        %6900 = vmatpush1.xpose.msra.mxu0 %v6865
        %6901 = vmatprep.subr.mxu0 0.0
        %6902 = vmatpush1.xpose.msra.mxu0 %v6866
        %6903 = vmatprep.subr.mxu0 0.0
        %6904 = vmatpush1.xpose.msra.mxu0 %v6867
        %6905 = vmatprep.subr.mxu0 0.0
        %6906 = vmatpush1.xpose.msra.mxu0 %v6868
        %6907 = vmatprep.subr.mxu0 0.0
        %6908 = vmatpush1.xpose.msra.mxu0 %v6869
        %6909 = vmatprep.subr.mxu0 0.0
        %6910 = vmatpush1.xpose.msra.mxu0 0.0
        %6911 = vmatprep.subr.mxu0 0.0
        %6912 = vmatpush1.xpose.msra.mxu0 0.0
        %6913 = vmatprep.subr.mxu0 0.0
        %6914 = vmatpush1.xpose.msra.mxu0 0.0
        %6915 = vmatprep.subr.mxu0 0.0
        %6916 = vmatpush1.xpose.msra.mxu0 0.0
        %6917 = vmatprep.subr.mxu0 0.0
        %6918 = vmatpush1.xpose.msra.mxu0 0.0
        %6919 = vmatprep.subr.mxu0 0.0
        %6920 = vmatpush1.xpose.msra.mxu0 0.0
        %6921 = vmatprep.subr.mxu0 0.0
        %6922 = vmatpush1.xpose.msra.mxu0 0.0
        %6923 = vmatprep.subr.mxu0 0.0
        %6924 = vmatpush1.xpose.msra.mxu0 0.0
        %6925 = vmatprep.subr.mxu0 0.0
        %6926 = vmatpush1.xpose.msra.mxu0 0.0
        %6927 = vmatprep.subr.mxu0 0.0
        %6928 = vmatpush1.xpose.msra.mxu0 0.0
        %6929 = vmatprep.subr.mxu0 0.0
        %6930 = vmatpush1.xpose.msra.mxu0 0.0
        %6931 = vmatprep.subr.mxu0 0.0
        %6932 = vmatpush1.xpose.msra.mxu0 0.0
        %6933 = vmatprep.subr.mxu0 0.0
        %6934 = vmatpush1.xpose.msra.mxu0 0.0
        %6935 = vmatprep.subr.mxu0 0.0
        %6936 = vmatpush1.xpose.msra.mxu0 0.0
        %6937 = vmatprep.subr.mxu0 0.0
        %6938 = vmatpush1.xpose.msra.mxu0 0.0
        %6939 = vmatprep.subr.mxu0 0.0
        %6940 = vmatpush1.xpose.msra.mxu0 0.0
        %6941 = vmatprep.mubr.f32.mxu0 0.0
        %6942 = vmatmul.mubr.f32.gmra.mrb[0].mxu0 %v6852
        %v6943 = vpop.f32.mrb[0].mxu0
        %v6944 = vadd.f32 %v6875, %v6943
        %v6945 = vpop.f32.mrb[0].mxu0
        %6946 = vmatprep.mubr.f32.mxu0 0.0
        %6947 = vmatmul.mubr.f32.gmra.mrb[0].mxu0 %v6853
        %v6948 = vpop.f32.mrb[0].mxu0
        %v6949 = vadd.f32 %v6875, %v6948
        %v6950 = vpop.f32.mrb[0].mxu0
        %6951 = vdwg.mxu0
        %6952 = vst [vmem:[%s471] sm:$0xff] %v6944
        %6953 = vst [vmem:[%s471 + $0x8] sm:$0xff] %v6949
        %s6954 = sand.u32 %s243, 1
        %s6955 = scalar_lea.sflag [#allocation9], %s6954
        %s6956 = sand.u32 %s243, 1
        %s6957 = smul.addr %s6956, 16
        %s6958 = scalar_lea.vmem [#allocation18], %s6957
        // Predicated region
        $region102: #{tpu_custom_call.1} parent=55 // pred_check
          %p6959 = pneg %p253
        $region103: #{tpu_custom_call.1} parent=55 // pred_check_branch
          %6961 = sbr.rel (%p6959) target = $region105
        $region104: #{tpu_custom_call.1} parent=55 // pred_region
          %s6962 = smul.u32 2, %s31
          %s6964 = ssub.s32 256, 256
          %6965 = vsyncadd %s6955, %s6964
          %s6966 = smul.addr %s6962, 128
          %s6967 = scalar_lea.hbm %s9, %s6966
          %s6968 = sshll.u32 %s6958, 4
          %s6969 = int_to_ptr.vmem [resolvable:$true] %s6968
          %6974 = dma.vmem_to_hbm [thread:$0]  %s6969, 256, %s6967, %s6955, 128, 128, 8
        $region105: #{tpu_custom_call.1} parent=55 // pred_fallthru
          _
      $region56: #{tpu_custom_call.1} parent=5 // pred_fallthru
        _
      %p6975 = scmp.le.s32.totalorder 2, %s26
      // Predicated region
      $region106: #{tpu_custom_call.1} parent=5 // pred_check
        %p6976 = pneg %p6975
      $region107: #{tpu_custom_call.1} parent=5 // pred_check_branch
        %6978 = sbr.rel (%p6976) target = $region109
      $region108: #{tpu_custom_call.1} parent=5 // pred_region
        %s6979 = ssub.s32 %s26, 2
        // Predicated region
        $region110: #{tpu_custom_call.1} parent=108 // pred_check
          %p6980 = pneg %p259
        $region111: #{tpu_custom_call.1} parent=108 // pred_check_branch
          %6982 = sbr.rel (%p6980) target = $region113
        $region112: #{tpu_custom_call.1} parent=108 // pred_region
          %s6983 = sand.u32 %s244, 1
          %s6984 = scalar_lea.sflag [#allocation9], %s6983
          %s6985 = sand.u32 %s244, 1
          %s6986 = smul.addr %s6985, 16
          %s6987 = scalar_lea.vmem [#allocation18], %s6986
          %6988 = dma.done %s6984, 256
        $region113: #{tpu_custom_call.1} parent=108 // pred_fallthru
          _
      $region109: #{tpu_custom_call.1} parent=5 // pred_fallthru
        _
    $region6: #{tpu_custom_call.1} parent=1 // loop_footer
      %s30 = sadd.s32 1, %s26
    $region7: #{tpu_custom_call.1} parent=1 // loop_footer_branch
      %25 = sbr.rel target = $region3
    $region8: #{tpu_custom_call.1} parent=1 // loop_exit
      _
    %6989 = vsyncpa [#allocation8], 1
    %s6990 = scalar_lea.sflag [#allocation8], 1
    %6991 = vsyncpa %s6990, 1
    %6992 = vsyncpa [#allocation11], 1
    %s6993 = scalar_lea.sflag [#allocation11], 1
    %6994 = vsyncpa %s6993, 1
    %6995 = vsyncpa [#allocation14], 1
    %6996 = vsyncpa [#allocation17], 1
    %6997 = vsyncpa [#allocation9], 1
    %s6998 = scalar_lea.sflag [#allocation9], 1
    %6999 = vsyncpa %s6998, 1

</llo_original>
